<compile_context>
chip_gen: v5e
topology: v5e:2x2
jax: 0.10.0
libtpu: 0.0.40
codegen_flags: <defaults>
</compile_context>

<pallas_src>
import jax
import jax.numpy as jnp
import numpy as np
from jax import lax
from jax.experimental import pallas as pl
from jax.experimental.pallas import tpu as pltpu


def _round_up(x, m):
    return (x + m - 1) // m * m


# -----------------------------------------------------------------------------
# Pallas kernel: time-blocked bidirectional LSTM recurrence + fused final FC.
# -----------------------------------------------------------------------------
def bilstm_kernel(maxlen_ref,                      # SMEM scalar prefetch: (1,) int32
                  gf_ref, gr_ref, len_ref,         # (Tt,Bp,4Hp) bf16 x2, (Bp,1) i32
                  whh_f_ref, whh_r_ref,            # (Hp,4Hp) bf16 x2
                  wfc_ref, bfc_ref,                # (2Hp,1) f32, (1,1) f32
                  out_ref,                         # (Bp,1) f32
                  hf, cf, hr, cr):                 # scratch (Bp,Hp) f32 x4
    i = pl.program_id(0)
    nblk = pl.num_programs(0)
    Tt = gf_ref.shape[0]
    Hp = hf.shape[1]
    T_pad = Tt * nblk

    @pl.when(i == 0)
    def _init():
        hf[...] = jnp.zeros_like(hf)
        cf[...] = jnp.zeros_like(cf)
        hr[...] = jnp.zeros_like(hr)
        cr[...] = jnp.zeros_like(cr)

    max_len = maxlen_ref[0]
    lens = len_ref[...]                            # (Bp, 1) int32

    def cell(gin, h_ref, c_ref, whh_ref, mask):
        # gates = (pre-projected x@W_ih + b) + h@W_hh ; bf16 MXU operands, f32 acc,
        # f32 elementwise gate math (PyTorch gate order i, f, g, o).
        gates = gin.astype(jnp.float32) + jnp.dot(
            h_ref[...].astype(jnp.bfloat16), whh_ref[...],
            preferred_element_type=jnp.float32)
        i_g = jax.nn.sigmoid(gates[:, 0 * Hp:1 * Hp])
        f_g = jax.nn.sigmoid(gates[:, 1 * Hp:2 * Hp])
        g_g = jnp.tanh(gates[:, 2 * Hp:3 * Hp])
        o_g = jax.nn.sigmoid(gates[:, 3 * Hp:4 * Hp])
        c_new = f_g * c_ref[...] + i_g * g_g
        h_new = o_g * jnp.tanh(c_new)
        h_ref[...] = jnp.where(mask, h_new, h_ref[...])
        c_ref[...] = jnp.where(mask, c_new, c_ref[...])

    # Skip blocks where BOTH directions are entirely past the longest sequence
    # (masking already makes such steps no-ops; skipping saves the MXU/EUP work).
    fwd_alive = (i * Tt) < max_len
    rev_alive = (T_pad - (i + 1) * Tt) < max_len

    @pl.when(jnp.logical_or(fwd_alive, rev_alive))
    def _run_block():
        def step(j, carry):
            t = i * Tt + j                 # forward time index
            s = T_pad - 1 - t              # reverse time index (gr is pre-reversed)
            cell(gf_ref[j], hf, cf, whh_f_ref, t < lens)
            cell(gr_ref[j], hr, cr, whh_r_ref, s < lens)
            return carry
        lax.fori_loop(0, Tt, step, 0, unroll=True)

    @pl.when(i == nblk - 1)
    def _finalize():
        # fc(concat(h_fwd_final, h_rev_final)) fused into the last grid step.
        out_ref[...] = (
            jnp.dot(hf[...], wfc_ref[0:Hp, :], preferred_element_type=jnp.float32)
            + jnp.dot(hr[...], wfc_ref[Hp:2 * Hp, :], preferred_element_type=jnp.float32)
            + bfc_ref[...])


# -----------------------------------------------------------------------------
# Preprocessing shared by the Pallas path and the mirror reference.
# -----------------------------------------------------------------------------
def _pad_gate_cols(w, H, Hp):
    """(R, 4H) -> (R, 4Hp): each gate block (i, f, g, o) zero-padded to Hp columns."""
    R = w.shape[0]
    w4 = w.reshape(R, 4, H)
    w4 = jnp.pad(w4, ((0, 0), (0, 0), (0, Hp - H)))
    return w4.reshape(R, 4 * Hp)


def _input_projection(x_tbe, wih_p, b_p):
    """Hoisted input projection: one large bf16 MXU matmul, f32 accumulate, bf16 out."""
    T, B, E = x_tbe.shape
    g = jnp.dot(x_tbe.reshape(T * B, E).astype(jnp.bfloat16),
                wih_p.astype(jnp.bfloat16),
                preferred_element_type=jnp.float32)
    g = g + b_p.astype(jnp.float32)
    return g.reshape(T, B, -1).astype(jnp.bfloat16)


def prepare_inputs(tokens, lengths, params, *, time_block=8):
    """Embedding gather, hoisted input projections, lane/sublane padding."""
    emb = params["emb"]
    wih_f, whh_f, b_f = params["wih_f"], params["whh_f"], params["b_f"]
    wih_r, whh_r, b_r = params["wih_r"], params["whh_r"], params["b_r"]
    wfc, bfc = params["wfc"], params["bfc"]

    B, T = tokens.shape
    H = whh_f.shape[0]
    Hp = _round_up(H, 128)     # lane-aligned gate slices
    Bp = _round_up(B, 8)       # sublane-aligned batch (use >=128 real rows for MXU util)
    Tt = min(time_block, T)
    T_pad = _round_up(T, Tt)

    # Embedding gather (plain JAX glue), time-major, zero-padded over T and B.
    x = emb[tokens].astype(jnp.float32)            # (B, T, E)
    x = jnp.transpose(x, (1, 0, 2))                # (T, B, E)
    x = jnp.pad(x, ((0, T_pad - T), (0, Bp - B), (0, 0)))

    # Gate-aligned zero padding (keeps padded h/c columns exactly 0 through time).
    wih_f_p = _pad_gate_cols(wih_f, H, Hp)
    wih_r_p = _pad_gate_cols(wih_r, H, Hp)
    b_f_p = _pad_gate_cols(b_f, H, Hp)
    b_r_p = _pad_gate_cols(b_r, H, Hp)
    whh_f_p = _pad_gate_cols(jnp.pad(whh_f, ((0, Hp - H), (0, 0))), H, Hp).astype(jnp.bfloat16)
    whh_r_p = _pad_gate_cols(jnp.pad(whh_r, ((0, Hp - H), (0, 0))), H, Hp).astype(jnp.bfloat16)
    wfc_p = jnp.pad(wfc.reshape(2, H, 1), ((0, 0), (0, Hp - H), (0, 0))).reshape(2 * Hp, 1)

    # Hoisted input projections (one big matmul per direction). The reverse
    # direction is pre-reversed in time so the kernel walks both tiles forward.
    gproj_f = _input_projection(x, wih_f_p, b_f_p)         # (T_pad, Bp, 4Hp) bf16
    gproj_r = _input_projection(x, wih_r_p, b_r_p)[::-1]   # time-reversed

    lens_p = jnp.pad(lengths.astype(jnp.int32), (0, Bp - B)).reshape(Bp, 1)
    max_len = jnp.max(lengths).astype(jnp.int32).reshape(1)

    dims = dict(B=B, Bp=Bp, H=H, Hp=Hp, Tt=Tt, T_pad=T_pad)
    ops = (max_len, gproj_f, gproj_r, lens_p, whh_f_p, whh_r_p,
           wfc_p, bfc.astype(jnp.float32))
    return ops, dims


# -----------------------------------------------------------------------------
# Pallas wrapper
# -----------------------------------------------------------------------------
def bilstm_forward_pallas(tokens, lengths, params, *, time_block=8):
    ops, d = prepare_inputs(tokens, lengths, params, time_block=time_block)
    max_len, gproj_f, gproj_r, lens_p, whh_f_p, whh_r_p, wfc_p, bfc = ops
    B, Bp, Hp, Tt, T_pad = d["B"], d["Bp"], d["Hp"], d["Tt"], d["T_pad"]

    const = lambda i, ml: (0, 0)  # noqa: E731  (index maps get the prefetch ref too)
    in_specs = [
        pl.BlockSpec((Tt, Bp, 4 * Hp), lambda i, ml: (i, 0, 0)),   # fwd gates_in tile
        pl.BlockSpec((Tt, Bp, 4 * Hp), lambda i, ml: (i, 0, 0)),   # rev gates_in tile
        pl.BlockSpec((Bp, 1), const),                              # lengths
        pl.BlockSpec((Hp, 4 * Hp), const),                         # W_hh fwd (bf16)
        pl.BlockSpec((Hp, 4 * Hp), const),                         # W_hh rev (bf16)
        pl.BlockSpec((2 * Hp, 1), const),                          # W_fc
        pl.BlockSpec((1, 1), const),                               # b_fc
    ]
    out_spec = pl.BlockSpec((Bp, 1), const)

    out = pl.pallas_call(
        bilstm_kernel,
        out_shape=jax.ShapeDtypeStruct((Bp, 1), jnp.float32),
        grid_spec=pltpu.PrefetchScalarGridSpec(
            num_scalar_prefetch=1,
            grid=(T_pad // Tt,),
            in_specs=in_specs,
            out_specs=out_spec,
            scratch_shapes=[pltpu.VMEM((Bp, Hp), jnp.float32)] * 4,
        ),
        compiler_params=pltpu.CompilerParams(
            dimension_semantics=("arbitrary",)),   # carried h/c -> sequential time axis
    )(max_len, gproj_f, gproj_r, lens_p, whh_f_p, whh_r_p, wfc_p, bfc)
    return out[:B, 0]   # torch.squeeze(text_fea, 1)


def lstm_model_forward(tokens, lengths, params):
    return bilstm_forward_pallas(tokens, lengths, params)


# -----------------------------------------------------------------------------
# Plain-JAX mirror reference: identical math & precision policy, no Pallas.
# -----------------------------------------------------------------------------
def lstm_model_reference(tokens, lengths, params, *, time_block=8):
    ops, d = prepare_inputs(tokens, lengths, params, time_block=time_block)
    _, gproj_f, gproj_r, lens_p, whh_f_p, whh_r_p, wfc_p, bfc = ops
    B, Bp, Hp, T_pad = d["B"], d["Bp"], d["Hp"], d["T_pad"]

    def cell(gin, h, c, whh, mask):
        gates = gin.astype(jnp.float32) + jnp.dot(
            h.astype(jnp.bfloat16), whh, preferred_element_type=jnp.float32)
        i_g = jax.nn.sigmoid(gates[:, 0 * Hp:1 * Hp])
        f_g = jax.nn.sigmoid(gates[:, 1 * Hp:2 * Hp])
        g_g = jnp.tanh(gates[:, 2 * Hp:3 * Hp])
        o_g = jax.nn.sigmoid(gates[:, 3 * Hp:4 * Hp])
        c_new = f_g * c + i_g * g_g
        h_new = o_g * jnp.tanh(c_new)
        return jnp.where(mask, h_new, h), jnp.where(mask, c_new, c)

    hf = cf = hr = cr = jnp.zeros((Bp, Hp), jnp.float32)
    for t in range(T_pad):
        s = T_pad - 1 - t
        hf, cf = cell(gproj_f[t], hf, cf, whh_f_p, t < lens_p)
        hr, cr = cell(gproj_r[t], hr, cr, whh_r_p, s < lens_p)

    out = (jnp.dot(hf, wfc_p[0:Hp], preferred_element_type=jnp.float32)
           + jnp.dot(hr, wfc_p[Hp:], preferred_element_type=jnp.float32)
           + bfc)
    return out[:B, 0]


# -----------------------------------------------------------------------------
# Deterministic parameter init (shapes from the nn.Module __init__)
# -----------------------------------------------------------------------------
def init_params(key, vocab_len, embed_dim, hidden_dim):
    keys = jax.random.split(key, 12)
    k = 1.0 / np.sqrt(hidden_dim)
    u = lambda kk, shape: jax.random.uniform(kk, shape, jnp.float32, -k, k)  # noqa: E731
    params = {
        "emb": jax.random.normal(keys[0], (vocab_len, embed_dim), jnp.float32),
        # forward direction (PyTorch weight_ih_l0 is (4H, E); stored transposed)
        "wih_f": u(keys[1], (embed_dim, 4 * hidden_dim)),
        "whh_f": u(keys[2], (hidden_dim, 4 * hidden_dim)),
        "b_f": u(keys[3], (1, 4 * hidden_dim)) + u(keys[4], (1, 4 * hidden_dim)),
        # reverse direction
        "wih_r": u(keys[5], (embed_dim, 4 * hidden_dim)),
        "whh_r": u(keys[6], (hidden_dim, 4 * hidden_dim)),
        "b_r": u(keys[7], (1, 4 * hidden_dim)) + u(keys[8], (1, 4 * hidden_dim)),
        # fc: nn.Linear(2H, 1)
        "wfc": u(keys[9], (2 * hidden_dim, 1)),
        "bfc": u(keys[10], (1, 1)),
    }
    return params


if __name__ == "__main__":
    VOCAB = 50
    EMBED = 300      # fixed by the module (nn.Embedding(vocab_len, 300))
    HIDDEN = 32      # "dimension" (small for the test; module default is 256)
    B, T = 2, 8

    key = jax.random.PRNGKey(0)
    kp, kt = jax.random.split(key)
    params = init_params(kp, VOCAB, EMBED, HIDDEN)

    tokens = jax.random.randint(kt, (B, T), 0, VOCAB, dtype=jnp.int32)
    text_len = jnp.array([T, 5], dtype=jnp.int32)   # variable lengths, len >= 1

    out = jax.block_until_ready(lstm_model_forward(tokens, text_len, params))
    ref = jax.block_until_ready(lstm_model_reference(tokens, text_len, params))

    # Mirror reference uses the same bf16-operand / f32-accumulate policy, so only
    # accumulation-order / transcendental-impl differences remain.
    np.testing.assert_allclose(np.asarray(out), np.asarray(ref), rtol=5e-3, atol=5e-3)
    assert out.shape == (B,)

    print("KERNEL_OK")
</pallas_src>

<mosaic_0001>
module attributes {stable_mosaic.version = 11 : i64} {
  func.func @bilstm_kernel(%arg0: i32, %arg1: memref<1xi32, #tpu.memory_space<smem>>, %arg2: memref<8x8x512xbf16, #tpu.memory_space<vmem>>, %arg3: memref<8x8x512xbf16, #tpu.memory_space<vmem>>, %arg4: memref<8x1xi32, #tpu.memory_space<vmem>>, %arg5: memref<128x512xbf16, #tpu.memory_space<vmem>>, %arg6: memref<128x512xbf16, #tpu.memory_space<vmem>>, %arg7: memref<256x1xf32, #tpu.memory_space<vmem>>, %arg8: memref<1x1xf32, #tpu.memory_space<vmem>>, %arg9: memref<8x1xf32, #tpu.memory_space<vmem>>, %arg10: memref<8x128xf32, #tpu.memory_space<vmem>>, %arg11: memref<8x128xf32, #tpu.memory_space<vmem>>, %arg12: memref<8x128xf32, #tpu.memory_space<vmem>>, %arg13: memref<8x128xf32, #tpu.memory_space<vmem>>) attributes {dimension_semantics = [#tpu.dimension_semantics<arbitrary>], iteration_bounds = array<i64: 1>, scalar_prefetch = 1 : i64, scratch_operands = 4 : i64, tpu.core_type = #tpu.core_type<tc>, window_params = [{transform_indices = @transform_0, window_bounds = array<i64: 8, 8, 512>}, {transform_indices = @transform_1, window_bounds = array<i64: 8, 8, 512>}, {pipeline_mode = #tpu.pipeline_mode<synchronous>, transform_indices = @transform_2, window_bounds = array<i64: 8, 1>}, {pipeline_mode = #tpu.pipeline_mode<synchronous>, transform_indices = @transform_3, window_bounds = array<i64: 128, 512>}, {pipeline_mode = #tpu.pipeline_mode<synchronous>, transform_indices = @transform_4, window_bounds = array<i64: 128, 512>}, {pipeline_mode = #tpu.pipeline_mode<synchronous>, transform_indices = @transform_5, window_bounds = array<i64: 256, 1>}, {pipeline_mode = #tpu.pipeline_mode<synchronous>, transform_indices = @transform_6, window_bounds = array<i64: 1, 1>}, {pipeline_mode = #tpu.pipeline_mode<synchronous>, transform_indices = @transform_7, window_bounds = array<i64: 8, 1>}]} {
    %c0_i32 = arith.constant 0 : i32
    %0 = arith.cmpi eq, %arg0, %c0_i32 : i32
    %1 = arith.extui %0 : i1 to i32
    %c0_i32_0 = arith.constant 0 : i32
    %2 = arith.cmpi ne, %1, %c0_i32_0 : i32
    scf.if %2 {
      %cst = arith.constant 0.000000e+00 : f32
      %17 = vector.broadcast %cst : f32 to vector<8x128xf32>
      %c0_8 = arith.constant 0 : index
      %c0_9 = arith.constant 0 : index
      %18 = vector.load %arg10[%c0_8, %c0_9] : memref<8x128xf32, #tpu.memory_space<vmem>>, vector<8x128xf32>
      tpu.vector_store %arg10[%c0_8, %c0_9], %17 {strides = array<i32>} : memref<8x128xf32, #tpu.memory_space<vmem>>, vector<8x128xf32>,
      %cst_10 = arith.constant 0.000000e+00 : f32
      %19 = vector.broadcast %cst_10 : f32 to vector<8x128xf32>
      %c0_11 = arith.constant 0 : index
      %c0_12 = arith.constant 0 : index
      %20 = vector.load %arg11[%c0_11, %c0_12] : memref<8x128xf32, #tpu.memory_space<vmem>>, vector<8x128xf32>
      tpu.vector_store %arg11[%c0_11, %c0_12], %19 {strides = array<i32>} : memref<8x128xf32, #tpu.memory_space<vmem>>, vector<8x128xf32>,
      %cst_13 = arith.constant 0.000000e+00 : f32
      %21 = vector.broadcast %cst_13 : f32 to vector<8x128xf32>
      %c0_14 = arith.constant 0 : index
      %c0_15 = arith.constant 0 : index
      %22 = vector.load %arg12[%c0_14, %c0_15] : memref<8x128xf32, #tpu.memory_space<vmem>>, vector<8x128xf32>
      tpu.vector_store %arg12[%c0_14, %c0_15], %21 {strides = array<i32>} : memref<8x128xf32, #tpu.memory_space<vmem>>, vector<8x128xf32>,
      %cst_16 = arith.constant 0.000000e+00 : f32
      %23 = vector.broadcast %cst_16 : f32 to vector<8x128xf32>
      %c0_17 = arith.constant 0 : index
      %c0_18 = arith.constant 0 : index
      %24 = vector.load %arg13[%c0_17, %c0_18] : memref<8x128xf32, #tpu.memory_space<vmem>>, vector<8x128xf32>
      tpu.vector_store %arg13[%c0_17, %c0_18], %23 {strides = array<i32>} : memref<8x128xf32, #tpu.memory_space<vmem>>, vector<8x128xf32>,
    } else {
    }
    %c0 = arith.constant 0 : index
    %3 = memref.load %arg1[%c0] : memref<1xi32, #tpu.memory_space<smem>>
    %c0_1 = arith.constant 0 : index
    %c0_2 = arith.constant 0 : index
    %4 = vector.load %arg4[%c0_1, %c0_2] : memref<8x1xi32, #tpu.memory_space<vmem>>, vector<8x1xi32>
    %c8_i32 = arith.constant 8 : i32
    %5 = arith.muli %arg0, %c8_i32 : i32
    %6 = arith.cmpi slt, %5, %3 : i32
    %c1_i32 = arith.constant 1 : i32
    %7 = arith.addi %arg0, %c1_i32 : i32
    %c8_i32_3 = arith.constant 8 : i32
    %8 = arith.muli %7, %c8_i32_3 : i32
    %c8_i32_4 = arith.constant 8 : i32
    %9 = arith.subi %c8_i32_4, %8 : i32
    %10 = arith.cmpi slt, %9, %3 : i32
    %11 = arith.ori %6, %10 : i1
    %12 = arith.extui %11 : i1 to i32
    %c0_i32_5 = arith.constant 0 : i32
    %13 = arith.cmpi ne, %12, %c0_i32_5 : i32
    scf.if %13 {
      %c0_i32_8 = arith.constant 0 : i32
      %c8_i32_9 = arith.constant 8 : i32
      %17 = arith.muli %arg0, %c8_i32_9 : i32
      %18 = arith.addi %17, %c0_i32_8 : i32
      %c7_i32 = arith.constant 7 : i32
      %19 = arith.subi %c7_i32, %18 : i32
      %20 = arith.index_cast %c0_i32_8 : i32 to index
      %c0_10 = arith.constant 0 : index
      %c0_11 = arith.constant 0 : index
      %21 = vector.load %arg2[%20, %c0_10, %c0_11] : memref<8x8x512xbf16, #tpu.memory_space<vmem>>, vector<1x8x512xbf16>
      %22 = vector.shape_cast %21 : vector<1x8x512xbf16> to vector<8x512xbf16>
      %23 = vector.broadcast %18 : i32 to vector<8x1xi32>
      %24 = arith.cmpi slt, %23, %4 : vector<8x1xi32>
      %25 = arith.extf %22 : vector<8x512xbf16> to vector<8x512xf32>
      %c0_12 = arith.constant 0 : index
      %c0_13 = arith.constant 0 : index
      %26 = vector.load %arg10[%c0_12, %c0_13] : memref<8x128xf32, #tpu.memory_space<vmem>>, vector<8x128xf32>
      %27 = arith.truncf %26 : vector<8x128xf32> to vector<8x128xbf16>
      %c0_14 = arith.constant 0 : index
      %c0_15 = arith.constant 0 : index
      %28 = vector.load %arg5[%c0_14, %c0_15] : memref<128x512xbf16, #tpu.memory_space<vmem>>, vector<128x512xbf16>
      %cst = arith.constant dense<0.000000e+00> : vector<8x512xf32>
      %29 = tpu.matmul %27, %28, %cst {dimension_numbers = #tpu.dot_dimension_numbers<[1], [0], [0], [1], [0, 0, 1, 1], [], []>} : vector<8x128xbf16>, vector<128x512xbf16>, vector<8x512xf32> -> vector<8x512xf32>
      %30 = arith.addf %25, %29 : vector<8x512xf32>
      %31 = vector.extract_strided_slice %30 {offsets = [0, 0], sizes = [8, 128], strides = [1, 1]} : vector<8x512xf32> to vector<8x128xf32>
      %32 = arith.negf %31 : vector<8x128xf32>
      %33 = math.exp %32 : vector<8x128xf32>
      %cst_16 = arith.constant 1.000000e+00 : f32
      %34 = vector.broadcast %cst_16 : f32 to vector<8x128xf32>
      %35 = arith.addf %34, %33 : vector<8x128xf32>
      %36 = arith.divf %34, %35 : vector<8x128xf32>
      %37 = vector.extract_strided_slice %30 {offsets = [0, 128], sizes = [8, 128], strides = [1, 1]} : vector<8x512xf32> to vector<8x128xf32>
      %38 = arith.negf %37 : vector<8x128xf32>
      %39 = math.exp %38 : vector<8x128xf32>
      %cst_17 = arith.constant 1.000000e+00 : f32
      %40 = vector.broadcast %cst_17 : f32 to vector<8x128xf32>
      %41 = arith.addf %40, %39 : vector<8x128xf32>
      %42 = arith.divf %40, %41 : vector<8x128xf32>
      %43 = vector.extract_strided_slice %30 {offsets = [0, 256], sizes = [8, 128], strides = [1, 1]} : vector<8x512xf32> to vector<8x128xf32>
      %44 = math.tanh %43 : vector<8x128xf32>
      %45 = vector.extract_strided_slice %30 {offsets = [0, 384], sizes = [8, 128], strides = [1, 1]} : vector<8x512xf32> to vector<8x128xf32>
      %46 = arith.negf %45 : vector<8x128xf32>
      %47 = math.exp %46 : vector<8x128xf32>
      %cst_18 = arith.constant 1.000000e+00 : f32
      %48 = vector.broadcast %cst_18 : f32 to vector<8x128xf32>
      %49 = arith.addf %48, %47 : vector<8x128xf32>
      %50 = arith.divf %48, %49 : vector<8x128xf32>
      %c0_19 = arith.constant 0 : index
      %c0_20 = arith.constant 0 : index
      %51 = vector.load %arg11[%c0_19, %c0_20] : memref<8x128xf32, #tpu.memory_space<vmem>>, vector<8x128xf32>
      %52 = arith.mulf %42, %51 : vector<8x128xf32>
      %53 = arith.mulf %36, %44 : vector<8x128xf32>
      %54 = arith.addf %52, %53 : vector<8x128xf32>
      %55 = math.tanh %54 : vector<8x128xf32>
      %56 = arith.mulf %50, %55 : vector<8x128xf32>
      %c0_21 = arith.constant 0 : index
      %c0_22 = arith.constant 0 : index
      %57 = vector.load %arg10[%c0_21, %c0_22] : memref<8x128xf32, #tpu.memory_space<vmem>>, vector<8x128xf32>
      %58 = vector.shape_cast %24 : vector<8x1xi1> to vector<8x1xi1>
      %59 = vector.broadcast %58 : vector<8x1xi1> to vector<8x128xi1>
      %60 = arith.select %59, %56, %57 : vector<8x128xi1>, vector<8x128xf32>
      %c0_23 = arith.constant 0 : index
      %c0_24 = arith.constant 0 : index
      %61 = vector.load %arg10[%c0_23, %c0_24] : memref<8x128xf32, #tpu.memory_space<vmem>>, vector<8x128xf32>
      tpu.vector_store %arg10[%c0_23, %c0_24], %60 {strides = array<i32>} : memref<8x128xf32, #tpu.memory_space<vmem>>, vector<8x128xf32>,
      %c0_25 = arith.constant 0 : index
      %c0_26 = arith.constant 0 : index
      %62 = vector.load %arg11[%c0_25, %c0_26] : memref<8x128xf32, #tpu.memory_space<vmem>>, vector<8x128xf32>
      %63 = vector.shape_cast %24 : vector<8x1xi1> to vector<8x1xi1>
      %64 = vector.broadcast %63 : vector<8x1xi1> to vector<8x128xi1>
      %65 = arith.select %64, %54, %62 : vector<8x128xi1>, vector<8x128xf32>
      %c0_27 = arith.constant 0 : index
      %c0_28 = arith.constant 0 : index
      %66 = vector.load %arg11[%c0_27, %c0_28] : memref<8x128xf32, #tpu.memory_space<vmem>>, vector<8x128xf32>
      tpu.vector_store %arg11[%c0_27, %c0_28], %65 {strides = array<i32>} : memref<8x128xf32, #tpu.memory_space<vmem>>, vector<8x128xf32>,
      %67 = arith.index_cast %c0_i32_8 : i32 to index
      %c0_29 = arith.constant 0 : index
      %c0_30 = arith.constant 0 : index
      %68 = vector.load %arg3[%67, %c0_29, %c0_30] : memref<8x8x512xbf16, #tpu.memory_space<vmem>>, vector<1x8x512xbf16>
      %69 = vector.shape_cast %68 : vector<1x8x512xbf16> to vector<8x512xbf16>
      %70 = vector.broadcast %19 : i32 to vector<8x1xi32>
      %71 = arith.cmpi slt, %70, %4 : vector<8x1xi32>
      %72 = arith.extf %69 : vector<8x512xbf16> to vector<8x512xf32>
      %c0_31 = arith.constant 0 : index
      %c0_32 = arith.constant 0 : index
      %73 = vector.load %arg12[%c0_31, %c0_32] : memref<8x128xf32, #tpu.memory_space<vmem>>, vector<8x128xf32>
      %74 = arith.truncf %73 : vector<8x128xf32> to vector<8x128xbf16>
      %c0_33 = arith.constant 0 : index
      %c0_34 = arith.constant 0 : index
      %75 = vector.load %arg6[%c0_33, %c0_34] : memref<128x512xbf16, #tpu.memory_space<vmem>>, vector<128x512xbf16>
      %cst_35 = arith.constant dense<0.000000e+00> : vector<8x512xf32>
      %76 = tpu.matmul %74, %75, %cst_35 {dimension_numbers = #tpu.dot_dimension_numbers<[1], [0], [0], [1], [0, 0, 1, 1], [], []>} : vector<8x128xbf16>, vector<128x512xbf16>, vector<8x512xf32> -> vector<8x512xf32>
      %77 = arith.addf %72, %76 : vector<8x512xf32>
      %78 = vector.extract_strided_slice %77 {offsets = [0, 0], sizes = [8, 128], strides = [1, 1]} : vector<8x512xf32> to vector<8x128xf32>
      %79 = arith.negf %78 : vector<8x128xf32>
      %80 = math.exp %79 : vector<8x128xf32>
      %cst_36 = arith.constant 1.000000e+00 : f32
      %81 = vector.broadcast %cst_36 : f32 to vector<8x128xf32>
      %82 = arith.addf %81, %80 : vector<8x128xf32>
      %83 = arith.divf %81, %82 : vector<8x128xf32>
      %84 = vector.extract_strided_slice %77 {offsets = [0, 128], sizes = [8, 128], strides = [1, 1]} : vector<8x512xf32> to vector<8x128xf32>
      %85 = arith.negf %84 : vector<8x128xf32>
      %86 = math.exp %85 : vector<8x128xf32>
      %cst_37 = arith.constant 1.000000e+00 : f32
      %87 = vector.broadcast %cst_37 : f32 to vector<8x128xf32>
      %88 = arith.addf %87, %86 : vector<8x128xf32>
      %89 = arith.divf %87, %88 : vector<8x128xf32>
      %90 = vector.extract_strided_slice %77 {offsets = [0, 256], sizes = [8, 128], strides = [1, 1]} : vector<8x512xf32> to vector<8x128xf32>
      %91 = math.tanh %90 : vector<8x128xf32>
      %92 = vector.extract_strided_slice %77 {offsets = [0, 384], sizes = [8, 128], strides = [1, 1]} : vector<8x512xf32> to vector<8x128xf32>
      %93 = arith.negf %92 : vector<8x128xf32>
      %94 = math.exp %93 : vector<8x128xf32>
      %cst_38 = arith.constant 1.000000e+00 : f32
      %95 = vector.broadcast %cst_38 : f32 to vector<8x128xf32>
      %96 = arith.addf %95, %94 : vector<8x128xf32>
      %97 = arith.divf %95, %96 : vector<8x128xf32>
      %c0_39 = arith.constant 0 : index
      %c0_40 = arith.constant 0 : index
      %98 = vector.load %arg13[%c0_39, %c0_40] : memref<8x128xf32, #tpu.memory_space<vmem>>, vector<8x128xf32>
      %99 = arith.mulf %89, %98 : vector<8x128xf32>
      %100 = arith.mulf %83, %91 : vector<8x128xf32>
      %101 = arith.addf %99, %100 : vector<8x128xf32>
      %102 = math.tanh %101 : vector<8x128xf32>
      %103 = arith.mulf %97, %102 : vector<8x128xf32>
      %c0_41 = arith.constant 0 : index
      %c0_42 = arith.constant 0 : index
      %104 = vector.load %arg12[%c0_41, %c0_42] : memref<8x128xf32, #tpu.memory_space<vmem>>, vector<8x128xf32>
      %105 = vector.shape_cast %71 : vector<8x1xi1> to vector<8x1xi1>
      %106 = vector.broadcast %105 : vector<8x1xi1> to vector<8x128xi1>
      %107 = arith.select %106, %103, %104 : vector<8x128xi1>, vector<8x128xf32>
      %c0_43 = arith.constant 0 : index
      %c0_44 = arith.constant 0 : index
      %108 = vector.load %arg12[%c0_43, %c0_44] : memref<8x128xf32, #tpu.memory_space<vmem>>, vector<8x128xf32>
      tpu.vector_store %arg12[%c0_43, %c0_44], %107 {strides = array<i32>} : memref<8x128xf32, #tpu.memory_space<vmem>>, vector<8x128xf32>,
      %c0_45 = arith.constant 0 : index
      %c0_46 = arith.constant 0 : index
      %109 = vector.load %arg13[%c0_45, %c0_46] : memref<8x128xf32, #tpu.memory_space<vmem>>, vector<8x128xf32>
      %110 = vector.shape_cast %71 : vector<8x1xi1> to vector<8x1xi1>
      %111 = vector.broadcast %110 : vector<8x1xi1> to vector<8x128xi1>
      %112 = arith.select %111, %101, %109 : vector<8x128xi1>, vector<8x128xf32>
      %c0_47 = arith.constant 0 : index
      %c0_48 = arith.constant 0 : index
      %113 = vector.load %arg13[%c0_47, %c0_48] : memref<8x128xf32, #tpu.memory_space<vmem>>, vector<8x128xf32>
      tpu.vector_store %arg13[%c0_47, %c0_48], %112 {strides = array<i32>} : memref<8x128xf32, #tpu.memory_space<vmem>>, vector<8x128xf32>,
      %c1_i32_49 = arith.constant 1 : i32
      %c8_i32_50 = arith.constant 8 : i32
      %114 = arith.muli %arg0, %c8_i32_50 : i32
      %115 = arith.addi %114, %c1_i32_49 : i32
      %c7_i32_51 = arith.constant 7 : i32
      %116 = arith.subi %c7_i32_51, %115 : i32
      %117 = arith.index_cast %c1_i32_49 : i32 to index
      %c0_52 = arith.constant 0 : index
      %c0_53 = arith.constant 0 : index
      %118 = vector.load %arg2[%117, %c0_52, %c0_53] : memref<8x8x512xbf16, #tpu.memory_space<vmem>>, vector<1x8x512xbf16>
      %119 = vector.shape_cast %118 : vector<1x8x512xbf16> to vector<8x512xbf16>
      %120 = vector.broadcast %115 : i32 to vector<8x1xi32>
      %121 = arith.cmpi slt, %120, %4 : vector<8x1xi32>
      %122 = arith.extf %119 : vector<8x512xbf16> to vector<8x512xf32>
      %c0_54 = arith.constant 0 : index
      %c0_55 = arith.constant 0 : index
      %123 = vector.load %arg10[%c0_54, %c0_55] : memref<8x128xf32, #tpu.memory_space<vmem>>, vector<8x128xf32>
      %124 = arith.truncf %123 : vector<8x128xf32> to vector<8x128xbf16>
      %c0_56 = arith.constant 0 : index
      %c0_57 = arith.constant 0 : index
      %125 = vector.load %arg5[%c0_56, %c0_57] : memref<128x512xbf16, #tpu.memory_space<vmem>>, vector<128x512xbf16>
      %cst_58 = arith.constant dense<0.000000e+00> : vector<8x512xf32>
      %126 = tpu.matmul %124, %125, %cst_58 {dimension_numbers = #tpu.dot_dimension_numbers<[1], [0], [0], [1], [0, 0, 1, 1], [], []>} : vector<8x128xbf16>, vector<128x512xbf16>, vector<8x512xf32> -> vector<8x512xf32>
      %127 = arith.addf %122, %126 : vector<8x512xf32>
      %128 = vector.extract_strided_slice %127 {offsets = [0, 0], sizes = [8, 128], strides = [1, 1]} : vector<8x512xf32> to vector<8x128xf32>
      %129 = arith.negf %128 : vector<8x128xf32>
      %130 = math.exp %129 : vector<8x128xf32>
      %cst_59 = arith.constant 1.000000e+00 : f32
      %131 = vector.broadcast %cst_59 : f32 to vector<8x128xf32>
      %132 = arith.addf %131, %130 : vector<8x128xf32>
      %133 = arith.divf %131, %132 : vector<8x128xf32>
      %134 = vector.extract_strided_slice %127 {offsets = [0, 128], sizes = [8, 128], strides = [1, 1]} : vector<8x512xf32> to vector<8x128xf32>
      %135 = arith.negf %134 : vector<8x128xf32>
      %136 = math.exp %135 : vector<8x128xf32>
      %cst_60 = arith.constant 1.000000e+00 : f32
      %137 = vector.broadcast %cst_60 : f32 to vector<8x128xf32>
      %138 = arith.addf %137, %136 : vector<8x128xf32>
      %139 = arith.divf %137, %138 : vector<8x128xf32>
      %140 = vector.extract_strided_slice %127 {offsets = [0, 256], sizes = [8, 128], strides = [1, 1]} : vector<8x512xf32> to vector<8x128xf32>
      %141 = math.tanh %140 : vector<8x128xf32>
      %142 = vector.extract_strided_slice %127 {offsets = [0, 384], sizes = [8, 128], strides = [1, 1]} : vector<8x512xf32> to vector<8x128xf32>
      %143 = arith.negf %142 : vector<8x128xf32>
      %144 = math.exp %143 : vector<8x128xf32>
      %cst_61 = arith.constant 1.000000e+00 : f32
      %145 = vector.broadcast %cst_61 : f32 to vector<8x128xf32>
      %146 = arith.addf %145, %144 : vector<8x128xf32>
      %147 = arith.divf %145, %146 : vector<8x128xf32>
      %c0_62 = arith.constant 0 : index
      %c0_63 = arith.constant 0 : index
      %148 = vector.load %arg11[%c0_62, %c0_63] : memref<8x128xf32, #tpu.memory_space<vmem>>, vector<8x128xf32>
      %149 = arith.mulf %139, %148 : vector<8x128xf32>
      %150 = arith.mulf %133, %141 : vector<8x128xf32>
      %151 = arith.addf %149, %150 : vector<8x128xf32>
      %152 = math.tanh %151 : vector<8x128xf32>
      %153 = arith.mulf %147, %152 : vector<8x128xf32>
      %c0_64 = arith.constant 0 : index
      %c0_65 = arith.constant 0 : index
      %154 = vector.load %arg10[%c0_64, %c0_65] : memref<8x128xf32, #tpu.memory_space<vmem>>, vector<8x128xf32>
      %155 = vector.shape_cast %121 : vector<8x1xi1> to vector<8x1xi1>
      %156 = vector.broadcast %155 : vector<8x1xi1> to vector<8x128xi1>
      %157 = arith.select %156, %153, %154 : vector<8x128xi1>, vector<8x128xf32>
      %c0_66 = arith.constant 0 : index
      %c0_67 = arith.constant 0 : index
      %158 = vector.load %arg10[%c0_66, %c0_67] : memref<8x128xf32, #tpu.memory_space<vmem>>, vector<8x128xf32>
      tpu.vector_store %arg10[%c0_66, %c0_67], %157 {strides = array<i32>} : memref<8x128xf32, #tpu.memory_space<vmem>>, vector<8x128xf32>,
      %c0_68 = arith.constant 0 : index
      %c0_69 = arith.constant 0 : index
      %159 = vector.load %arg11[%c0_68, %c0_69] : memref<8x128xf32, #tpu.memory_space<vmem>>, vector<8x128xf32>
      %160 = vector.shape_cast %121 : vector<8x1xi1> to vector<8x1xi1>
      %161 = vector.broadcast %160 : vector<8x1xi1> to vector<8x128xi1>
      %162 = arith.select %161, %151, %159 : vector<8x128xi1>, vector<8x128xf32>
      %c0_70 = arith.constant 0 : index
      %c0_71 = arith.constant 0 : index
      %163 = vector.load %arg11[%c0_70, %c0_71] : memref<8x128xf32, #tpu.memory_space<vmem>>, vector<8x128xf32>
      tpu.vector_store %arg11[%c0_70, %c0_71], %162 {strides = array<i32>} : memref<8x128xf32, #tpu.memory_space<vmem>>, vector<8x128xf32>,
      %164 = arith.index_cast %c1_i32_49 : i32 to index
      %c0_72 = arith.constant 0 : index
      %c0_73 = arith.constant 0 : index
      %165 = vector.load %arg3[%164, %c0_72, %c0_73] : memref<8x8x512xbf16, #tpu.memory_space<vmem>>, vector<1x8x512xbf16>
      %166 = vector.shape_cast %165 : vector<1x8x512xbf16> to vector<8x512xbf16>
      %167 = vector.broadcast %116 : i32 to vector<8x1xi32>
      %168 = arith.cmpi slt, %167, %4 : vector<8x1xi32>
      %169 = arith.extf %166 : vector<8x512xbf16> to vector<8x512xf32>
      %c0_74 = arith.constant 0 : index
      %c0_75 = arith.constant 0 : index
      %170 = vector.load %arg12[%c0_74, %c0_75] : memref<8x128xf32, #tpu.memory_space<vmem>>, vector<8x128xf32>
      %171 = arith.truncf %170 : vector<8x128xf32> to vector<8x128xbf16>
      %c0_76 = arith.constant 0 : index
      %c0_77 = arith.constant 0 : index
      %172 = vector.load %arg6[%c0_76, %c0_77] : memref<128x512xbf16, #tpu.memory_space<vmem>>, vector<128x512xbf16>
      %cst_78 = arith.constant dense<0.000000e+00> : vector<8x512xf32>
      %173 = tpu.matmul %171, %172, %cst_78 {dimension_numbers = #tpu.dot_dimension_numbers<[1], [0], [0], [1], [0, 0, 1, 1], [], []>} : vector<8x128xbf16>, vector<128x512xbf16>, vector<8x512xf32> -> vector<8x512xf32>
      %174 = arith.addf %169, %173 : vector<8x512xf32>
      %175 = vector.extract_strided_slice %174 {offsets = [0, 0], sizes = [8, 128], strides = [1, 1]} : vector<8x512xf32> to vector<8x128xf32>
      %176 = arith.negf %175 : vector<8x128xf32>
      %177 = math.exp %176 : vector<8x128xf32>
      %cst_79 = arith.constant 1.000000e+00 : f32
      %178 = vector.broadcast %cst_79 : f32 to vector<8x128xf32>
      %179 = arith.addf %178, %177 : vector<8x128xf32>
      %180 = arith.divf %178, %179 : vector<8x128xf32>
      %181 = vector.extract_strided_slice %174 {offsets = [0, 128], sizes = [8, 128], strides = [1, 1]} : vector<8x512xf32> to vector<8x128xf32>
      %182 = arith.negf %181 : vector<8x128xf32>
      %183 = math.exp %182 : vector<8x128xf32>
      %cst_80 = arith.constant 1.000000e+00 : f32
      %184 = vector.broadcast %cst_80 : f32 to vector<8x128xf32>
      %185 = arith.addf %184, %183 : vector<8x128xf32>
      %186 = arith.divf %184, %185 : vector<8x128xf32>
      %187 = vector.extract_strided_slice %174 {offsets = [0, 256], sizes = [8, 128], strides = [1, 1]} : vector<8x512xf32> to vector<8x128xf32>
      %188 = math.tanh %187 : vector<8x128xf32>
      %189 = vector.extract_strided_slice %174 {offsets = [0, 384], sizes = [8, 128], strides = [1, 1]} : vector<8x512xf32> to vector<8x128xf32>
      %190 = arith.negf %189 : vector<8x128xf32>
      %191 = math.exp %190 : vector<8x128xf32>
      %cst_81 = arith.constant 1.000000e+00 : f32
      %192 = vector.broadcast %cst_81 : f32 to vector<8x128xf32>
      %193 = arith.addf %192, %191 : vector<8x128xf32>
      %194 = arith.divf %192, %193 : vector<8x128xf32>
      %c0_82 = arith.constant 0 : index
      %c0_83 = arith.constant 0 : index
      %195 = vector.load %arg13[%c0_82, %c0_83] : memref<8x128xf32, #tpu.memory_space<vmem>>, vector<8x128xf32>
      %196 = arith.mulf %186, %195 : vector<8x128xf32>
      %197 = arith.mulf %180, %188 : vector<8x128xf32>
      %198 = arith.addf %196, %197 : vector<8x128xf32>
      %199 = math.tanh %198 : vector<8x128xf32>
      %200 = arith.mulf %194, %199 : vector<8x128xf32>
      %c0_84 = arith.constant 0 : index
      %c0_85 = arith.constant 0 : index
      %201 = vector.load %arg12[%c0_84, %c0_85] : memref<8x128xf32, #tpu.memory_space<vmem>>, vector<8x128xf32>
      %202 = vector.shape_cast %168 : vector<8x1xi1> to vector<8x1xi1>
      %203 = vector.broadcast %202 : vector<8x1xi1> to vector<8x128xi1>
      %204 = arith.select %203, %200, %201 : vector<8x128xi1>, vector<8x128xf32>
      %c0_86 = arith.constant 0 : index
      %c0_87 = arith.constant 0 : index
      %205 = vector.load %arg12[%c0_86, %c0_87] : memref<8x128xf32, #tpu.memory_space<vmem>>, vector<8x128xf32>
      tpu.vector_store %arg12[%c0_86, %c0_87], %204 {strides = array<i32>} : memref<8x128xf32, #tpu.memory_space<vmem>>, vector<8x128xf32>,
      %c0_88 = arith.constant 0 : index
      %c0_89 = arith.constant 0 : index
      %206 = vector.load %arg13[%c0_88, %c0_89] : memref<8x128xf32, #tpu.memory_space<vmem>>, vector<8x128xf32>
      %207 = vector.shape_cast %168 : vector<8x1xi1> to vector<8x1xi1>
      %208 = vector.broadcast %207 : vector<8x1xi1> to vector<8x128xi1>
      %209 = arith.select %208, %198, %206 : vector<8x128xi1>, vector<8x128xf32>
      %c0_90 = arith.constant 0 : index
      %c0_91 = arith.constant 0 : index
      %210 = vector.load %arg13[%c0_90, %c0_91] : memref<8x128xf32, #tpu.memory_space<vmem>>, vector<8x128xf32>
      tpu.vector_store %arg13[%c0_90, %c0_91], %209 {strides = array<i32>} : memref<8x128xf32, #tpu.memory_space<vmem>>, vector<8x128xf32>,
      %c2_i32 = arith.constant 2 : i32
      %c8_i32_92 = arith.constant 8 : i32
      %211 = arith.muli %arg0, %c8_i32_92 : i32
      %212 = arith.addi %211, %c2_i32 : i32
      %c7_i32_93 = arith.constant 7 : i32
      %213 = arith.subi %c7_i32_93, %212 : i32
      %214 = arith.index_cast %c2_i32 : i32 to index
      %c0_94 = arith.constant 0 : index
      %c0_95 = arith.constant 0 : index
      %215 = vector.load %arg2[%214, %c0_94, %c0_95] : memref<8x8x512xbf16, #tpu.memory_space<vmem>>, vector<1x8x512xbf16>
      %216 = vector.shape_cast %215 : vector<1x8x512xbf16> to vector<8x512xbf16>
      %217 = vector.broadcast %212 : i32 to vector<8x1xi32>
      %218 = arith.cmpi slt, %217, %4 : vector<8x1xi32>
      %219 = arith.extf %216 : vector<8x512xbf16> to vector<8x512xf32>
      %c0_96 = arith.constant 0 : index
      %c0_97 = arith.constant 0 : index
      %220 = vector.load %arg10[%c0_96, %c0_97] : memref<8x128xf32, #tpu.memory_space<vmem>>, vector<8x128xf32>
      %221 = arith.truncf %220 : vector<8x128xf32> to vector<8x128xbf16>
      %c0_98 = arith.constant 0 : index
      %c0_99 = arith.constant 0 : index
      %222 = vector.load %arg5[%c0_98, %c0_99] : memref<128x512xbf16, #tpu.memory_space<vmem>>, vector<128x512xbf16>
      %cst_100 = arith.constant dense<0.000000e+00> : vector<8x512xf32>
      %223 = tpu.matmul %221, %222, %cst_100 {dimension_numbers = #tpu.dot_dimension_numbers<[1], [0], [0], [1], [0, 0, 1, 1], [], []>} : vector<8x128xbf16>, vector<128x512xbf16>, vector<8x512xf32> -> vector<8x512xf32>
      %224 = arith.addf %219, %223 : vector<8x512xf32>
      %225 = vector.extract_strided_slice %224 {offsets = [0, 0], sizes = [8, 128], strides = [1, 1]} : vector<8x512xf32> to vector<8x128xf32>
      %226 = arith.negf %225 : vector<8x128xf32>
      %227 = math.exp %226 : vector<8x128xf32>
      %cst_101 = arith.constant 1.000000e+00 : f32
      %228 = vector.broadcast %cst_101 : f32 to vector<8x128xf32>
      %229 = arith.addf %228, %227 : vector<8x128xf32>
      %230 = arith.divf %228, %229 : vector<8x128xf32>
      %231 = vector.extract_strided_slice %224 {offsets = [0, 128], sizes = [8, 128], strides = [1, 1]} : vector<8x512xf32> to vector<8x128xf32>
      %232 = arith.negf %231 : vector<8x128xf32>
      %233 = math.exp %232 : vector<8x128xf32>
      %cst_102 = arith.constant 1.000000e+00 : f32
      %234 = vector.broadcast %cst_102 : f32 to vector<8x128xf32>
      %235 = arith.addf %234, %233 : vector<8x128xf32>
      %236 = arith.divf %234, %235 : vector<8x128xf32>
      %237 = vector.extract_strided_slice %224 {offsets = [0, 256], sizes = [8, 128], strides = [1, 1]} : vector<8x512xf32> to vector<8x128xf32>
      %238 = math.tanh %237 : vector<8x128xf32>
      %239 = vector.extract_strided_slice %224 {offsets = [0, 384], sizes = [8, 128], strides = [1, 1]} : vector<8x512xf32> to vector<8x128xf32>
      %240 = arith.negf %239 : vector<8x128xf32>
      %241 = math.exp %240 : vector<8x128xf32>
      %cst_103 = arith.constant 1.000000e+00 : f32
      %242 = vector.broadcast %cst_103 : f32 to vector<8x128xf32>
      %243 = arith.addf %242, %241 : vector<8x128xf32>
      %244 = arith.divf %242, %243 : vector<8x128xf32>
      %c0_104 = arith.constant 0 : index
      %c0_105 = arith.constant 0 : index
      %245 = vector.load %arg11[%c0_104, %c0_105] : memref<8x128xf32, #tpu.memory_space<vmem>>, vector<8x128xf32>
      %246 = arith.mulf %236, %245 : vector<8x128xf32>
      %247 = arith.mulf %230, %238 : vector<8x128xf32>
      %248 = arith.addf %246, %247 : vector<8x128xf32>
      %249 = math.tanh %248 : vector<8x128xf32>
      %250 = arith.mulf %244, %249 : vector<8x128xf32>
      %c0_106 = arith.constant 0 : index
      %c0_107 = arith.constant 0 : index
      %251 = vector.load %arg10[%c0_106, %c0_107] : memref<8x128xf32, #tpu.memory_space<vmem>>, vector<8x128xf32>
      %252 = vector.shape_cast %218 : vector<8x1xi1> to vector<8x1xi1>
      %253 = vector.broadcast %252 : vector<8x1xi1> to vector<8x128xi1>
      %254 = arith.select %253, %250, %251 : vector<8x128xi1>, vector<8x128xf32>
      %c0_108 = arith.constant 0 : index
      %c0_109 = arith.constant 0 : index
      %255 = vector.load %arg10[%c0_108, %c0_109] : memref<8x128xf32, #tpu.memory_space<vmem>>, vector<8x128xf32>
      tpu.vector_store %arg10[%c0_108, %c0_109], %254 {strides = array<i32>} : memref<8x128xf32, #tpu.memory_space<vmem>>, vector<8x128xf32>,
      %c0_110 = arith.constant 0 : index
      %c0_111 = arith.constant 0 : index
      %256 = vector.load %arg11[%c0_110, %c0_111] : memref<8x128xf32, #tpu.memory_space<vmem>>, vector<8x128xf32>
      %257 = vector.shape_cast %218 : vector<8x1xi1> to vector<8x1xi1>
      %258 = vector.broadcast %257 : vector<8x1xi1> to vector<8x128xi1>
      %259 = arith.select %258, %248, %256 : vector<8x128xi1>, vector<8x128xf32>
      %c0_112 = arith.constant 0 : index
      %c0_113 = arith.constant 0 : index
      %260 = vector.load %arg11[%c0_112, %c0_113] : memref<8x128xf32, #tpu.memory_space<vmem>>, vector<8x128xf32>
      tpu.vector_store %arg11[%c0_112, %c0_113], %259 {strides = array<i32>} : memref<8x128xf32, #tpu.memory_space<vmem>>, vector<8x128xf32>,
      %261 = arith.index_cast %c2_i32 : i32 to index
      %c0_114 = arith.constant 0 : index
      %c0_115 = arith.constant 0 : index
      %262 = vector.load %arg3[%261, %c0_114, %c0_115] : memref<8x8x512xbf16, #tpu.memory_space<vmem>>, vector<1x8x512xbf16>
      %263 = vector.shape_cast %262 : vector<1x8x512xbf16> to vector<8x512xbf16>
      %264 = vector.broadcast %213 : i32 to vector<8x1xi32>
      %265 = arith.cmpi slt, %264, %4 : vector<8x1xi32>
      %266 = arith.extf %263 : vector<8x512xbf16> to vector<8x512xf32>
      %c0_116 = arith.constant 0 : index
      %c0_117 = arith.constant 0 : index
      %267 = vector.load %arg12[%c0_116, %c0_117] : memref<8x128xf32, #tpu.memory_space<vmem>>, vector<8x128xf32>
      %268 = arith.truncf %267 : vector<8x128xf32> to vector<8x128xbf16>
      %c0_118 = arith.constant 0 : index
      %c0_119 = arith.constant 0 : index
      %269 = vector.load %arg6[%c0_118, %c0_119] : memref<128x512xbf16, #tpu.memory_space<vmem>>, vector<128x512xbf16>
      %cst_120 = arith.constant dense<0.000000e+00> : vector<8x512xf32>
      %270 = tpu.matmul %268, %269, %cst_120 {dimension_numbers = #tpu.dot_dimension_numbers<[1], [0], [0], [1], [0, 0, 1, 1], [], []>} : vector<8x128xbf16>, vector<128x512xbf16>, vector<8x512xf32> -> vector<8x512xf32>
      %271 = arith.addf %266, %270 : vector<8x512xf32>
      %272 = vector.extract_strided_slice %271 {offsets = [0, 0], sizes = [8, 128], strides = [1, 1]} : vector<8x512xf32> to vector<8x128xf32>
      %273 = arith.negf %272 : vector<8x128xf32>
      %274 = math.exp %273 : vector<8x128xf32>
      %cst_121 = arith.constant 1.000000e+00 : f32
      %275 = vector.broadcast %cst_121 : f32 to vector<8x128xf32>
      %276 = arith.addf %275, %274 : vector<8x128xf32>
      %277 = arith.divf %275, %276 : vector<8x128xf32>
      %278 = vector.extract_strided_slice %271 {offsets = [0, 128], sizes = [8, 128], strides = [1, 1]} : vector<8x512xf32> to vector<8x128xf32>
      %279 = arith.negf %278 : vector<8x128xf32>
      %280 = math.exp %279 : vector<8x128xf32>
      %cst_122 = arith.constant 1.000000e+00 : f32
      %281 = vector.broadcast %cst_122 : f32 to vector<8x128xf32>
      %282 = arith.addf %281, %280 : vector<8x128xf32>
      %283 = arith.divf %281, %282 : vector<8x128xf32>
      %284 = vector.extract_strided_slice %271 {offsets = [0, 256], sizes = [8, 128], strides = [1, 1]} : vector<8x512xf32> to vector<8x128xf32>
      %285 = math.tanh %284 : vector<8x128xf32>
      %286 = vector.extract_strided_slice %271 {offsets = [0, 384], sizes = [8, 128], strides = [1, 1]} : vector<8x512xf32> to vector<8x128xf32>
      %287 = arith.negf %286 : vector<8x128xf32>
      %288 = math.exp %287 : vector<8x128xf32>
      %cst_123 = arith.constant 1.000000e+00 : f32
      %289 = vector.broadcast %cst_123 : f32 to vector<8x128xf32>
      %290 = arith.addf %289, %288 : vector<8x128xf32>
      %291 = arith.divf %289, %290 : vector<8x128xf32>
      %c0_124 = arith.constant 0 : index
      %c0_125 = arith.constant 0 : index
      %292 = vector.load %arg13[%c0_124, %c0_125] : memref<8x128xf32, #tpu.memory_space<vmem>>, vector<8x128xf32>
      %293 = arith.mulf %283, %292 : vector<8x128xf32>
      %294 = arith.mulf %277, %285 : vector<8x128xf32>
      %295 = arith.addf %293, %294 : vector<8x128xf32>
      %296 = math.tanh %295 : vector<8x128xf32>
      %297 = arith.mulf %291, %296 : vector<8x128xf32>
      %c0_126 = arith.constant 0 : index
      %c0_127 = arith.constant 0 : index
      %298 = vector.load %arg12[%c0_126, %c0_127] : memref<8x128xf32, #tpu.memory_space<vmem>>, vector<8x128xf32>
      %299 = vector.shape_cast %265 : vector<8x1xi1> to vector<8x1xi1>
      %300 = vector.broadcast %299 : vector<8x1xi1> to vector<8x128xi1>
      %301 = arith.select %300, %297, %298 : vector<8x128xi1>, vector<8x128xf32>
      %c0_128 = arith.constant 0 : index
      %c0_129 = arith.constant 0 : index
      %302 = vector.load %arg12[%c0_128, %c0_129] : memref<8x128xf32, #tpu.memory_space<vmem>>, vector<8x128xf32>
      tpu.vector_store %arg12[%c0_128, %c0_129], %301 {strides = array<i32>} : memref<8x128xf32, #tpu.memory_space<vmem>>, vector<8x128xf32>,
      %c0_130 = arith.constant 0 : index
      %c0_131 = arith.constant 0 : index
      %303 = vector.load %arg13[%c0_130, %c0_131] : memref<8x128xf32, #tpu.memory_space<vmem>>, vector<8x128xf32>
      %304 = vector.shape_cast %265 : vector<8x1xi1> to vector<8x1xi1>
      %305 = vector.broadcast %304 : vector<8x1xi1> to vector<8x128xi1>
      %306 = arith.select %305, %295, %303 : vector<8x128xi1>, vector<8x128xf32>
      %c0_132 = arith.constant 0 : index
      %c0_133 = arith.constant 0 : index
      %307 = vector.load %arg13[%c0_132, %c0_133] : memref<8x128xf32, #tpu.memory_space<vmem>>, vector<8x128xf32>
      tpu.vector_store %arg13[%c0_132, %c0_133], %306 {strides = array<i32>} : memref<8x128xf32, #tpu.memory_space<vmem>>, vector<8x128xf32>,
      %c3_i32 = arith.constant 3 : i32
      %c8_i32_134 = arith.constant 8 : i32
      %308 = arith.muli %arg0, %c8_i32_134 : i32
      %309 = arith.addi %308, %c3_i32 : i32
      %c7_i32_135 = arith.constant 7 : i32
      %310 = arith.subi %c7_i32_135, %309 : i32
      %311 = arith.index_cast %c3_i32 : i32 to index
      %c0_136 = arith.constant 0 : index
      %c0_137 = arith.constant 0 : index
      %312 = vector.load %arg2[%311, %c0_136, %c0_137] : memref<8x8x512xbf16, #tpu.memory_space<vmem>>, vector<1x8x512xbf16>
      %313 = vector.shape_cast %312 : vector<1x8x512xbf16> to vector<8x512xbf16>
      %314 = vector.broadcast %309 : i32 to vector<8x1xi32>
      %315 = arith.cmpi slt, %314, %4 : vector<8x1xi32>
      %316 = arith.extf %313 : vector<8x512xbf16> to vector<8x512xf32>
      %c0_138 = arith.constant 0 : index
      %c0_139 = arith.constant 0 : index
      %317 = vector.load %arg10[%c0_138, %c0_139] : memref<8x128xf32, #tpu.memory_space<vmem>>, vector<8x128xf32>
      %318 = arith.truncf %317 : vector<8x128xf32> to vector<8x128xbf16>
      %c0_140 = arith.constant 0 : index
      %c0_141 = arith.constant 0 : index
      %319 = vector.load %arg5[%c0_140, %c0_141] : memref<128x512xbf16, #tpu.memory_space<vmem>>, vector<128x512xbf16>
      %cst_142 = arith.constant dense<0.000000e+00> : vector<8x512xf32>
      %320 = tpu.matmul %318, %319, %cst_142 {dimension_numbers = #tpu.dot_dimension_numbers<[1], [0], [0], [1], [0, 0, 1, 1], [], []>} : vector<8x128xbf16>, vector<128x512xbf16>, vector<8x512xf32> -> vector<8x512xf32>
      %321 = arith.addf %316, %320 : vector<8x512xf32>
      %322 = vector.extract_strided_slice %321 {offsets = [0, 0], sizes = [8, 128], strides = [1, 1]} : vector<8x512xf32> to vector<8x128xf32>
      %323 = arith.negf %322 : vector<8x128xf32>
      %324 = math.exp %323 : vector<8x128xf32>
      %cst_143 = arith.constant 1.000000e+00 : f32
      %325 = vector.broadcast %cst_143 : f32 to vector<8x128xf32>
      %326 = arith.addf %325, %324 : vector<8x128xf32>
      %327 = arith.divf %325, %326 : vector<8x128xf32>
      %328 = vector.extract_strided_slice %321 {offsets = [0, 128], sizes = [8, 128], strides = [1, 1]} : vector<8x512xf32> to vector<8x128xf32>
      %329 = arith.negf %328 : vector<8x128xf32>
      %330 = math.exp %329 : vector<8x128xf32>
      %cst_144 = arith.constant 1.000000e+00 : f32
      %331 = vector.broadcast %cst_144 : f32 to vector<8x128xf32>
      %332 = arith.addf %331, %330 : vector<8x128xf32>
      %333 = arith.divf %331, %332 : vector<8x128xf32>
      %334 = vector.extract_strided_slice %321 {offsets = [0, 256], sizes = [8, 128], strides = [1, 1]} : vector<8x512xf32> to vector<8x128xf32>
      %335 = math.tanh %334 : vector<8x128xf32>
      %336 = vector.extract_strided_slice %321 {offsets = [0, 384], sizes = [8, 128], strides = [1, 1]} : vector<8x512xf32> to vector<8x128xf32>
      %337 = arith.negf %336 : vector<8x128xf32>
      %338 = math.exp %337 : vector<8x128xf32>
      %cst_145 = arith.constant 1.000000e+00 : f32
      %339 = vector.broadcast %cst_145 : f32 to vector<8x128xf32>
      %340 = arith.addf %339, %338 : vector<8x128xf32>
      %341 = arith.divf %339, %340 : vector<8x128xf32>
      %c0_146 = arith.constant 0 : index
      %c0_147 = arith.constant 0 : index
      %342 = vector.load %arg11[%c0_146, %c0_147] : memref<8x128xf32, #tpu.memory_space<vmem>>, vector<8x128xf32>
      %343 = arith.mulf %333, %342 : vector<8x128xf32>
      %344 = arith.mulf %327, %335 : vector<8x128xf32>
      %345 = arith.addf %343, %344 : vector<8x128xf32>
      %346 = math.tanh %345 : vector<8x128xf32>
      %347 = arith.mulf %341, %346 : vector<8x128xf32>
      %c0_148 = arith.constant 0 : index
      %c0_149 = arith.constant 0 : index
      %348 = vector.load %arg10[%c0_148, %c0_149] : memref<8x128xf32, #tpu.memory_space<vmem>>, vector<8x128xf32>
      %349 = vector.shape_cast %315 : vector<8x1xi1> to vector<8x1xi1>
      %350 = vector.broadcast %349 : vector<8x1xi1> to vector<8x128xi1>
      %351 = arith.select %350, %347, %348 : vector<8x128xi1>, vector<8x128xf32>
      %c0_150 = arith.constant 0 : index
      %c0_151 = arith.constant 0 : index
      %352 = vector.load %arg10[%c0_150, %c0_151] : memref<8x128xf32, #tpu.memory_space<vmem>>, vector<8x128xf32>
      tpu.vector_store %arg10[%c0_150, %c0_151], %351 {strides = array<i32>} : memref<8x128xf32, #tpu.memory_space<vmem>>, vector<8x128xf32>,
      %c0_152 = arith.constant 0 : index
      %c0_153 = arith.constant 0 : index
      %353 = vector.load %arg11[%c0_152, %c0_153] : memref<8x128xf32, #tpu.memory_space<vmem>>, vector<8x128xf32>
      %354 = vector.shape_cast %315 : vector<8x1xi1> to vector<8x1xi1>
      %355 = vector.broadcast %354 : vector<8x1xi1> to vector<8x128xi1>
      %356 = arith.select %355, %345, %353 : vector<8x128xi1>, vector<8x128xf32>
      %c0_154 = arith.constant 0 : index
      %c0_155 = arith.constant 0 : index
      %357 = vector.load %arg11[%c0_154, %c0_155] : memref<8x128xf32, #tpu.memory_space<vmem>>, vector<8x128xf32>
      tpu.vector_store %arg11[%c0_154, %c0_155], %356 {strides = array<i32>} : memref<8x128xf32, #tpu.memory_space<vmem>>, vector<8x128xf32>,
      %358 = arith.index_cast %c3_i32 : i32 to index
      %c0_156 = arith.constant 0 : index
      %c0_157 = arith.constant 0 : index
      %359 = vector.load %arg3[%358, %c0_156, %c0_157] : memref<8x8x512xbf16, #tpu.memory_space<vmem>>, vector<1x8x512xbf16>
      %360 = vector.shape_cast %359 : vector<1x8x512xbf16> to vector<8x512xbf16>
      %361 = vector.broadcast %310 : i32 to vector<8x1xi32>
      %362 = arith.cmpi slt, %361, %4 : vector<8x1xi32>
      %363 = arith.extf %360 : vector<8x512xbf16> to vector<8x512xf32>
      %c0_158 = arith.constant 0 : index
      %c0_159 = arith.constant 0 : index
      %364 = vector.load %arg12[%c0_158, %c0_159] : memref<8x128xf32, #tpu.memory_space<vmem>>, vector<8x128xf32>
      %365 = arith.truncf %364 : vector<8x128xf32> to vector<8x128xbf16>
      %c0_160 = arith.constant 0 : index
      %c0_161 = arith.constant 0 : index
      %366 = vector.load %arg6[%c0_160, %c0_161] : memref<128x512xbf16, #tpu.memory_space<vmem>>, vector<128x512xbf16>
      %cst_162 = arith.constant dense<0.000000e+00> : vector<8x512xf32>
      %367 = tpu.matmul %365, %366, %cst_162 {dimension_numbers = #tpu.dot_dimension_numbers<[1], [0], [0], [1], [0, 0, 1, 1], [], []>} : vector<8x128xbf16>, vector<128x512xbf16>, vector<8x512xf32> -> vector<8x512xf32>
      %368 = arith.addf %363, %367 : vector<8x512xf32>
      %369 = vector.extract_strided_slice %368 {offsets = [0, 0], sizes = [8, 128], strides = [1, 1]} : vector<8x512xf32> to vector<8x128xf32>
      %370 = arith.negf %369 : vector<8x128xf32>
      %371 = math.exp %370 : vector<8x128xf32>
      %cst_163 = arith.constant 1.000000e+00 : f32
      %372 = vector.broadcast %cst_163 : f32 to vector<8x128xf32>
      %373 = arith.addf %372, %371 : vector<8x128xf32>
      %374 = arith.divf %372, %373 : vector<8x128xf32>
      %375 = vector.extract_strided_slice %368 {offsets = [0, 128], sizes = [8, 128], strides = [1, 1]} : vector<8x512xf32> to vector<8x128xf32>
      %376 = arith.negf %375 : vector<8x128xf32>
      %377 = math.exp %376 : vector<8x128xf32>
      %cst_164 = arith.constant 1.000000e+00 : f32
      %378 = vector.broadcast %cst_164 : f32 to vector<8x128xf32>
      %379 = arith.addf %378, %377 : vector<8x128xf32>
      %380 = arith.divf %378, %379 : vector<8x128xf32>
      %381 = vector.extract_strided_slice %368 {offsets = [0, 256], sizes = [8, 128], strides = [1, 1]} : vector<8x512xf32> to vector<8x128xf32>
      %382 = math.tanh %381 : vector<8x128xf32>
      %383 = vector.extract_strided_slice %368 {offsets = [0, 384], sizes = [8, 128], strides = [1, 1]} : vector<8x512xf32> to vector<8x128xf32>
      %384 = arith.negf %383 : vector<8x128xf32>
      %385 = math.exp %384 : vector<8x128xf32>
      %cst_165 = arith.constant 1.000000e+00 : f32
      %386 = vector.broadcast %cst_165 : f32 to vector<8x128xf32>
      %387 = arith.addf %386, %385 : vector<8x128xf32>
      %388 = arith.divf %386, %387 : vector<8x128xf32>
      %c0_166 = arith.constant 0 : index
      %c0_167 = arith.constant 0 : index
      %389 = vector.load %arg13[%c0_166, %c0_167] : memref<8x128xf32, #tpu.memory_space<vmem>>, vector<8x128xf32>
      %390 = arith.mulf %380, %389 : vector<8x128xf32>
      %391 = arith.mulf %374, %382 : vector<8x128xf32>
      %392 = arith.addf %390, %391 : vector<8x128xf32>
      %393 = math.tanh %392 : vector<8x128xf32>
      %394 = arith.mulf %388, %393 : vector<8x128xf32>
      %c0_168 = arith.constant 0 : index
      %c0_169 = arith.constant 0 : index
      %395 = vector.load %arg12[%c0_168, %c0_169] : memref<8x128xf32, #tpu.memory_space<vmem>>, vector<8x128xf32>
      %396 = vector.shape_cast %362 : vector<8x1xi1> to vector<8x1xi1>
      %397 = vector.broadcast %396 : vector<8x1xi1> to vector<8x128xi1>
      %398 = arith.select %397, %394, %395 : vector<8x128xi1>, vector<8x128xf32>
      %c0_170 = arith.constant 0 : index
      %c0_171 = arith.constant 0 : index
      %399 = vector.load %arg12[%c0_170, %c0_171] : memref<8x128xf32, #tpu.memory_space<vmem>>, vector<8x128xf32>
      tpu.vector_store %arg12[%c0_170, %c0_171], %398 {strides = array<i32>} : memref<8x128xf32, #tpu.memory_space<vmem>>, vector<8x128xf32>,
      %c0_172 = arith.constant 0 : index
      %c0_173 = arith.constant 0 : index
      %400 = vector.load %arg13[%c0_172, %c0_173] : memref<8x128xf32, #tpu.memory_space<vmem>>, vector<8x128xf32>
      %401 = vector.shape_cast %362 : vector<8x1xi1> to vector<8x1xi1>
      %402 = vector.broadcast %401 : vector<8x1xi1> to vector<8x128xi1>
      %403 = arith.select %402, %392, %400 : vector<8x128xi1>, vector<8x128xf32>
      %c0_174 = arith.constant 0 : index
      %c0_175 = arith.constant 0 : index
      %404 = vector.load %arg13[%c0_174, %c0_175] : memref<8x128xf32, #tpu.memory_space<vmem>>, vector<8x128xf32>
      tpu.vector_store %arg13[%c0_174, %c0_175], %403 {strides = array<i32>} : memref<8x128xf32, #tpu.memory_space<vmem>>, vector<8x128xf32>,
      %c4_i32 = arith.constant 4 : i32
      %c8_i32_176 = arith.constant 8 : i32
      %405 = arith.muli %arg0, %c8_i32_176 : i32
      %406 = arith.addi %405, %c4_i32 : i32
      %c7_i32_177 = arith.constant 7 : i32
      %407 = arith.subi %c7_i32_177, %406 : i32
      %408 = arith.index_cast %c4_i32 : i32 to index
      %c0_178 = arith.constant 0 : index
      %c0_179 = arith.constant 0 : index
      %409 = vector.load %arg2[%408, %c0_178, %c0_179] : memref<8x8x512xbf16, #tpu.memory_space<vmem>>, vector<1x8x512xbf16>
      %410 = vector.shape_cast %409 : vector<1x8x512xbf16> to vector<8x512xbf16>
      %411 = vector.broadcast %406 : i32 to vector<8x1xi32>
      %412 = arith.cmpi slt, %411, %4 : vector<8x1xi32>
      %413 = arith.extf %410 : vector<8x512xbf16> to vector<8x512xf32>
      %c0_180 = arith.constant 0 : index
      %c0_181 = arith.constant 0 : index
      %414 = vector.load %arg10[%c0_180, %c0_181] : memref<8x128xf32, #tpu.memory_space<vmem>>, vector<8x128xf32>
      %415 = arith.truncf %414 : vector<8x128xf32> to vector<8x128xbf16>
      %c0_182 = arith.constant 0 : index
      %c0_183 = arith.constant 0 : index
      %416 = vector.load %arg5[%c0_182, %c0_183] : memref<128x512xbf16, #tpu.memory_space<vmem>>, vector<128x512xbf16>
      %cst_184 = arith.constant dense<0.000000e+00> : vector<8x512xf32>
      %417 = tpu.matmul %415, %416, %cst_184 {dimension_numbers = #tpu.dot_dimension_numbers<[1], [0], [0], [1], [0, 0, 1, 1], [], []>} : vector<8x128xbf16>, vector<128x512xbf16>, vector<8x512xf32> -> vector<8x512xf32>
      %418 = arith.addf %413, %417 : vector<8x512xf32>
      %419 = vector.extract_strided_slice %418 {offsets = [0, 0], sizes = [8, 128], strides = [1, 1]} : vector<8x512xf32> to vector<8x128xf32>
      %420 = arith.negf %419 : vector<8x128xf32>
      %421 = math.exp %420 : vector<8x128xf32>
      %cst_185 = arith.constant 1.000000e+00 : f32
      %422 = vector.broadcast %cst_185 : f32 to vector<8x128xf32>
      %423 = arith.addf %422, %421 : vector<8x128xf32>
      %424 = arith.divf %422, %423 : vector<8x128xf32>
      %425 = vector.extract_strided_slice %418 {offsets = [0, 128], sizes = [8, 128], strides = [1, 1]} : vector<8x512xf32> to vector<8x128xf32>
      %426 = arith.negf %425 : vector<8x128xf32>
      %427 = math.exp %426 : vector<8x128xf32>
      %cst_186 = arith.constant 1.000000e+00 : f32
      %428 = vector.broadcast %cst_186 : f32 to vector<8x128xf32>
      %429 = arith.addf %428, %427 : vector<8x128xf32>
      %430 = arith.divf %428, %429 : vector<8x128xf32>
      %431 = vector.extract_strided_slice %418 {offsets = [0, 256], sizes = [8, 128], strides = [1, 1]} : vector<8x512xf32> to vector<8x128xf32>
      %432 = math.tanh %431 : vector<8x128xf32>
      %433 = vector.extract_strided_slice %418 {offsets = [0, 384], sizes = [8, 128], strides = [1, 1]} : vector<8x512xf32> to vector<8x128xf32>
      %434 = arith.negf %433 : vector<8x128xf32>
      %435 = math.exp %434 : vector<8x128xf32>
      %cst_187 = arith.constant 1.000000e+00 : f32
      %436 = vector.broadcast %cst_187 : f32 to vector<8x128xf32>
      %437 = arith.addf %436, %435 : vector<8x128xf32>
      %438 = arith.divf %436, %437 : vector<8x128xf32>
      %c0_188 = arith.constant 0 : index
      %c0_189 = arith.constant 0 : index
      %439 = vector.load %arg11[%c0_188, %c0_189] : memref<8x128xf32, #tpu.memory_space<vmem>>, vector<8x128xf32>
      %440 = arith.mulf %430, %439 : vector<8x128xf32>
      %441 = arith.mulf %424, %432 : vector<8x128xf32>
      %442 = arith.addf %440, %441 : vector<8x128xf32>
      %443 = math.tanh %442 : vector<8x128xf32>
      %444 = arith.mulf %438, %443 : vector<8x128xf32>
      %c0_190 = arith.constant 0 : index
      %c0_191 = arith.constant 0 : index
      %445 = vector.load %arg10[%c0_190, %c0_191] : memref<8x128xf32, #tpu.memory_space<vmem>>, vector<8x128xf32>
      %446 = vector.shape_cast %412 : vector<8x1xi1> to vector<8x1xi1>
      %447 = vector.broadcast %446 : vector<8x1xi1> to vector<8x128xi1>
      %448 = arith.select %447, %444, %445 : vector<8x128xi1>, vector<8x128xf32>
      %c0_192 = arith.constant 0 : index
      %c0_193 = arith.constant 0 : index
      %449 = vector.load %arg10[%c0_192, %c0_193] : memref<8x128xf32, #tpu.memory_space<vmem>>, vector<8x128xf32>
      tpu.vector_store %arg10[%c0_192, %c0_193], %448 {strides = array<i32>} : memref<8x128xf32, #tpu.memory_space<vmem>>, vector<8x128xf32>,
      %c0_194 = arith.constant 0 : index
      %c0_195 = arith.constant 0 : index
      %450 = vector.load %arg11[%c0_194, %c0_195] : memref<8x128xf32, #tpu.memory_space<vmem>>, vector<8x128xf32>
      %451 = vector.shape_cast %412 : vector<8x1xi1> to vector<8x1xi1>
      %452 = vector.broadcast %451 : vector<8x1xi1> to vector<8x128xi1>
      %453 = arith.select %452, %442, %450 : vector<8x128xi1>, vector<8x128xf32>
      %c0_196 = arith.constant 0 : index
      %c0_197 = arith.constant 0 : index
      %454 = vector.load %arg11[%c0_196, %c0_197] : memref<8x128xf32, #tpu.memory_space<vmem>>, vector<8x128xf32>
      tpu.vector_store %arg11[%c0_196, %c0_197], %453 {strides = array<i32>} : memref<8x128xf32, #tpu.memory_space<vmem>>, vector<8x128xf32>,
      %455 = arith.index_cast %c4_i32 : i32 to index
      %c0_198 = arith.constant 0 : index
      %c0_199 = arith.constant 0 : index
      %456 = vector.load %arg3[%455, %c0_198, %c0_199] : memref<8x8x512xbf16, #tpu.memory_space<vmem>>, vector<1x8x512xbf16>
      %457 = vector.shape_cast %456 : vector<1x8x512xbf16> to vector<8x512xbf16>
      %458 = vector.broadcast %407 : i32 to vector<8x1xi32>
      %459 = arith.cmpi slt, %458, %4 : vector<8x1xi32>
      %460 = arith.extf %457 : vector<8x512xbf16> to vector<8x512xf32>
      %c0_200 = arith.constant 0 : index
      %c0_201 = arith.constant 0 : index
      %461 = vector.load %arg12[%c0_200, %c0_201] : memref<8x128xf32, #tpu.memory_space<vmem>>, vector<8x128xf32>
      %462 = arith.truncf %461 : vector<8x128xf32> to vector<8x128xbf16>
      %c0_202 = arith.constant 0 : index
      %c0_203 = arith.constant 0 : index
      %463 = vector.load %arg6[%c0_202, %c0_203] : memref<128x512xbf16, #tpu.memory_space<vmem>>, vector<128x512xbf16>
      %cst_204 = arith.constant dense<0.000000e+00> : vector<8x512xf32>
      %464 = tpu.matmul %462, %463, %cst_204 {dimension_numbers = #tpu.dot_dimension_numbers<[1], [0], [0], [1], [0, 0, 1, 1], [], []>} : vector<8x128xbf16>, vector<128x512xbf16>, vector<8x512xf32> -> vector<8x512xf32>
      %465 = arith.addf %460, %464 : vector<8x512xf32>
      %466 = vector.extract_strided_slice %465 {offsets = [0, 0], sizes = [8, 128], strides = [1, 1]} : vector<8x512xf32> to vector<8x128xf32>
      %467 = arith.negf %466 : vector<8x128xf32>
      %468 = math.exp %467 : vector<8x128xf32>
      %cst_205 = arith.constant 1.000000e+00 : f32
      %469 = vector.broadcast %cst_205 : f32 to vector<8x128xf32>
      %470 = arith.addf %469, %468 : vector<8x128xf32>
      %471 = arith.divf %469, %470 : vector<8x128xf32>
      %472 = vector.extract_strided_slice %465 {offsets = [0, 128], sizes = [8, 128], strides = [1, 1]} : vector<8x512xf32> to vector<8x128xf32>
      %473 = arith.negf %472 : vector<8x128xf32>
      %474 = math.exp %473 : vector<8x128xf32>
      %cst_206 = arith.constant 1.000000e+00 : f32
      %475 = vector.broadcast %cst_206 : f32 to vector<8x128xf32>
      %476 = arith.addf %475, %474 : vector<8x128xf32>
      %477 = arith.divf %475, %476 : vector<8x128xf32>
      %478 = vector.extract_strided_slice %465 {offsets = [0, 256], sizes = [8, 128], strides = [1, 1]} : vector<8x512xf32> to vector<8x128xf32>
      %479 = math.tanh %478 : vector<8x128xf32>
      %480 = vector.extract_strided_slice %465 {offsets = [0, 384], sizes = [8, 128], strides = [1, 1]} : vector<8x512xf32> to vector<8x128xf32>
      %481 = arith.negf %480 : vector<8x128xf32>
      %482 = math.exp %481 : vector<8x128xf32>
      %cst_207 = arith.constant 1.000000e+00 : f32
      %483 = vector.broadcast %cst_207 : f32 to vector<8x128xf32>
      %484 = arith.addf %483, %482 : vector<8x128xf32>
      %485 = arith.divf %483, %484 : vector<8x128xf32>
      %c0_208 = arith.constant 0 : index
      %c0_209 = arith.constant 0 : index
      %486 = vector.load %arg13[%c0_208, %c0_209] : memref<8x128xf32, #tpu.memory_space<vmem>>, vector<8x128xf32>
      %487 = arith.mulf %477, %486 : vector<8x128xf32>
      %488 = arith.mulf %471, %479 : vector<8x128xf32>
      %489 = arith.addf %487, %488 : vector<8x128xf32>
      %490 = math.tanh %489 : vector<8x128xf32>
      %491 = arith.mulf %485, %490 : vector<8x128xf32>
      %c0_210 = arith.constant 0 : index
      %c0_211 = arith.constant 0 : index
      %492 = vector.load %arg12[%c0_210, %c0_211] : memref<8x128xf32, #tpu.memory_space<vmem>>, vector<8x128xf32>
      %493 = vector.shape_cast %459 : vector<8x1xi1> to vector<8x1xi1>
      %494 = vector.broadcast %493 : vector<8x1xi1> to vector<8x128xi1>
      %495 = arith.select %494, %491, %492 : vector<8x128xi1>, vector<8x128xf32>
      %c0_212 = arith.constant 0 : index
      %c0_213 = arith.constant 0 : index
      %496 = vector.load %arg12[%c0_212, %c0_213] : memref<8x128xf32, #tpu.memory_space<vmem>>, vector<8x128xf32>
      tpu.vector_store %arg12[%c0_212, %c0_213], %495 {strides = array<i32>} : memref<8x128xf32, #tpu.memory_space<vmem>>, vector<8x128xf32>,
      %c0_214 = arith.constant 0 : index
      %c0_215 = arith.constant 0 : index
      %497 = vector.load %arg13[%c0_214, %c0_215] : memref<8x128xf32, #tpu.memory_space<vmem>>, vector<8x128xf32>
      %498 = vector.shape_cast %459 : vector<8x1xi1> to vector<8x1xi1>
      %499 = vector.broadcast %498 : vector<8x1xi1> to vector<8x128xi1>
      %500 = arith.select %499, %489, %497 : vector<8x128xi1>, vector<8x128xf32>
      %c0_216 = arith.constant 0 : index
      %c0_217 = arith.constant 0 : index
      %501 = vector.load %arg13[%c0_216, %c0_217] : memref<8x128xf32, #tpu.memory_space<vmem>>, vector<8x128xf32>
      tpu.vector_store %arg13[%c0_216, %c0_217], %500 {strides = array<i32>} : memref<8x128xf32, #tpu.memory_space<vmem>>, vector<8x128xf32>,
      %c5_i32 = arith.constant 5 : i32
      %c8_i32_218 = arith.constant 8 : i32
      %502 = arith.muli %arg0, %c8_i32_218 : i32
      %503 = arith.addi %502, %c5_i32 : i32
      %c7_i32_219 = arith.constant 7 : i32
      %504 = arith.subi %c7_i32_219, %503 : i32
      %505 = arith.index_cast %c5_i32 : i32 to index
      %c0_220 = arith.constant 0 : index
      %c0_221 = arith.constant 0 : index
      %506 = vector.load %arg2[%505, %c0_220, %c0_221] : memref<8x8x512xbf16, #tpu.memory_space<vmem>>, vector<1x8x512xbf16>
      %507 = vector.shape_cast %506 : vector<1x8x512xbf16> to vector<8x512xbf16>
      %508 = vector.broadcast %503 : i32 to vector<8x1xi32>
      %509 = arith.cmpi slt, %508, %4 : vector<8x1xi32>
      %510 = arith.extf %507 : vector<8x512xbf16> to vector<8x512xf32>
      %c0_222 = arith.constant 0 : index
      %c0_223 = arith.constant 0 : index
      %511 = vector.load %arg10[%c0_222, %c0_223] : memref<8x128xf32, #tpu.memory_space<vmem>>, vector<8x128xf32>
      %512 = arith.truncf %511 : vector<8x128xf32> to vector<8x128xbf16>
      %c0_224 = arith.constant 0 : index
      %c0_225 = arith.constant 0 : index
      %513 = vector.load %arg5[%c0_224, %c0_225] : memref<128x512xbf16, #tpu.memory_space<vmem>>, vector<128x512xbf16>
      %cst_226 = arith.constant dense<0.000000e+00> : vector<8x512xf32>
      %514 = tpu.matmul %512, %513, %cst_226 {dimension_numbers = #tpu.dot_dimension_numbers<[1], [0], [0], [1], [0, 0, 1, 1], [], []>} : vector<8x128xbf16>, vector<128x512xbf16>, vector<8x512xf32> -> vector<8x512xf32>
      %515 = arith.addf %510, %514 : vector<8x512xf32>
      %516 = vector.extract_strided_slice %515 {offsets = [0, 0], sizes = [8, 128], strides = [1, 1]} : vector<8x512xf32> to vector<8x128xf32>
      %517 = arith.negf %516 : vector<8x128xf32>
      %518 = math.exp %517 : vector<8x128xf32>
      %cst_227 = arith.constant 1.000000e+00 : f32
      %519 = vector.broadcast %cst_227 : f32 to vector<8x128xf32>
      %520 = arith.addf %519, %518 : vector<8x128xf32>
      %521 = arith.divf %519, %520 : vector<8x128xf32>
      %522 = vector.extract_strided_slice %515 {offsets = [0, 128], sizes = [8, 128], strides = [1, 1]} : vector<8x512xf32> to vector<8x128xf32>
      %523 = arith.negf %522 : vector<8x128xf32>
      %524 = math.exp %523 : vector<8x128xf32>
      %cst_228 = arith.constant 1.000000e+00 : f32
      %525 = vector.broadcast %cst_228 : f32 to vector<8x128xf32>
      %526 = arith.addf %525, %524 : vector<8x128xf32>
      %527 = arith.divf %525, %526 : vector<8x128xf32>
      %528 = vector.extract_strided_slice %515 {offsets = [0, 256], sizes = [8, 128], strides = [1, 1]} : vector<8x512xf32> to vector<8x128xf32>
      %529 = math.tanh %528 : vector<8x128xf32>
      %530 = vector.extract_strided_slice %515 {offsets = [0, 384], sizes = [8, 128], strides = [1, 1]} : vector<8x512xf32> to vector<8x128xf32>
      %531 = arith.negf %530 : vector<8x128xf32>
      %532 = math.exp %531 : vector<8x128xf32>
      %cst_229 = arith.constant 1.000000e+00 : f32
      %533 = vector.broadcast %cst_229 : f32 to vector<8x128xf32>
      %534 = arith.addf %533, %532 : vector<8x128xf32>
      %535 = arith.divf %533, %534 : vector<8x128xf32>
      %c0_230 = arith.constant 0 : index
      %c0_231 = arith.constant 0 : index
      %536 = vector.load %arg11[%c0_230, %c0_231] : memref<8x128xf32, #tpu.memory_space<vmem>>, vector<8x128xf32>
      %537 = arith.mulf %527, %536 : vector<8x128xf32>
      %538 = arith.mulf %521, %529 : vector<8x128xf32>
      %539 = arith.addf %537, %538 : vector<8x128xf32>
      %540 = math.tanh %539 : vector<8x128xf32>
      %541 = arith.mulf %535, %540 : vector<8x128xf32>
      %c0_232 = arith.constant 0 : index
      %c0_233 = arith.constant 0 : index
      %542 = vector.load %arg10[%c0_232, %c0_233] : memref<8x128xf32, #tpu.memory_space<vmem>>, vector<8x128xf32>
      %543 = vector.shape_cast %509 : vector<8x1xi1> to vector<8x1xi1>
      %544 = vector.broadcast %543 : vector<8x1xi1> to vector<8x128xi1>
      %545 = arith.select %544, %541, %542 : vector<8x128xi1>, vector<8x128xf32>
      %c0_234 = arith.constant 0 : index
      %c0_235 = arith.constant 0 : index
      %546 = vector.load %arg10[%c0_234, %c0_235] : memref<8x128xf32, #tpu.memory_space<vmem>>, vector<8x128xf32>
      tpu.vector_store %arg10[%c0_234, %c0_235], %545 {strides = array<i32>} : memref<8x128xf32, #tpu.memory_space<vmem>>, vector<8x128xf32>,
      %c0_236 = arith.constant 0 : index
      %c0_237 = arith.constant 0 : index
      %547 = vector.load %arg11[%c0_236, %c0_237] : memref<8x128xf32, #tpu.memory_space<vmem>>, vector<8x128xf32>
      %548 = vector.shape_cast %509 : vector<8x1xi1> to vector<8x1xi1>
      %549 = vector.broadcast %548 : vector<8x1xi1> to vector<8x128xi1>
      %550 = arith.select %549, %539, %547 : vector<8x128xi1>, vector<8x128xf32>
      %c0_238 = arith.constant 0 : index
      %c0_239 = arith.constant 0 : index
      %551 = vector.load %arg11[%c0_238, %c0_239] : memref<8x128xf32, #tpu.memory_space<vmem>>, vector<8x128xf32>
      tpu.vector_store %arg11[%c0_238, %c0_239], %550 {strides = array<i32>} : memref<8x128xf32, #tpu.memory_space<vmem>>, vector<8x128xf32>,
      %552 = arith.index_cast %c5_i32 : i32 to index
      %c0_240 = arith.constant 0 : index
      %c0_241 = arith.constant 0 : index
      %553 = vector.load %arg3[%552, %c0_240, %c0_241] : memref<8x8x512xbf16, #tpu.memory_space<vmem>>, vector<1x8x512xbf16>
      %554 = vector.shape_cast %553 : vector<1x8x512xbf16> to vector<8x512xbf16>
      %555 = vector.broadcast %504 : i32 to vector<8x1xi32>
      %556 = arith.cmpi slt, %555, %4 : vector<8x1xi32>
      %557 = arith.extf %554 : vector<8x512xbf16> to vector<8x512xf32>
      %c0_242 = arith.constant 0 : index
      %c0_243 = arith.constant 0 : index
      %558 = vector.load %arg12[%c0_242, %c0_243] : memref<8x128xf32, #tpu.memory_space<vmem>>, vector<8x128xf32>
      %559 = arith.truncf %558 : vector<8x128xf32> to vector<8x128xbf16>
      %c0_244 = arith.constant 0 : index
      %c0_245 = arith.constant 0 : index
      %560 = vector.load %arg6[%c0_244, %c0_245] : memref<128x512xbf16, #tpu.memory_space<vmem>>, vector<128x512xbf16>
      %cst_246 = arith.constant dense<0.000000e+00> : vector<8x512xf32>
      %561 = tpu.matmul %559, %560, %cst_246 {dimension_numbers = #tpu.dot_dimension_numbers<[1], [0], [0], [1], [0, 0, 1, 1], [], []>} : vector<8x128xbf16>, vector<128x512xbf16>, vector<8x512xf32> -> vector<8x512xf32>
      %562 = arith.addf %557, %561 : vector<8x512xf32>
      %563 = vector.extract_strided_slice %562 {offsets = [0, 0], sizes = [8, 128], strides = [1, 1]} : vector<8x512xf32> to vector<8x128xf32>
      %564 = arith.negf %563 : vector<8x128xf32>
      %565 = math.exp %564 : vector<8x128xf32>
      %cst_247 = arith.constant 1.000000e+00 : f32
      %566 = vector.broadcast %cst_247 : f32 to vector<8x128xf32>
      %567 = arith.addf %566, %565 : vector<8x128xf32>
      %568 = arith.divf %566, %567 : vector<8x128xf32>
      %569 = vector.extract_strided_slice %562 {offsets = [0, 128], sizes = [8, 128], strides = [1, 1]} : vector<8x512xf32> to vector<8x128xf32>
      %570 = arith.negf %569 : vector<8x128xf32>
      %571 = math.exp %570 : vector<8x128xf32>
      %cst_248 = arith.constant 1.000000e+00 : f32
      %572 = vector.broadcast %cst_248 : f32 to vector<8x128xf32>
      %573 = arith.addf %572, %571 : vector<8x128xf32>
      %574 = arith.divf %572, %573 : vector<8x128xf32>
      %575 = vector.extract_strided_slice %562 {offsets = [0, 256], sizes = [8, 128], strides = [1, 1]} : vector<8x512xf32> to vector<8x128xf32>
      %576 = math.tanh %575 : vector<8x128xf32>
      %577 = vector.extract_strided_slice %562 {offsets = [0, 384], sizes = [8, 128], strides = [1, 1]} : vector<8x512xf32> to vector<8x128xf32>
      %578 = arith.negf %577 : vector<8x128xf32>
      %579 = math.exp %578 : vector<8x128xf32>
      %cst_249 = arith.constant 1.000000e+00 : f32
      %580 = vector.broadcast %cst_249 : f32 to vector<8x128xf32>
      %581 = arith.addf %580, %579 : vector<8x128xf32>
      %582 = arith.divf %580, %581 : vector<8x128xf32>
      %c0_250 = arith.constant 0 : index
      %c0_251 = arith.constant 0 : index
      %583 = vector.load %arg13[%c0_250, %c0_251] : memref<8x128xf32, #tpu.memory_space<vmem>>, vector<8x128xf32>
      %584 = arith.mulf %574, %583 : vector<8x128xf32>
      %585 = arith.mulf %568, %576 : vector<8x128xf32>
      %586 = arith.addf %584, %585 : vector<8x128xf32>
      %587 = math.tanh %586 : vector<8x128xf32>
      %588 = arith.mulf %582, %587 : vector<8x128xf32>
      %c0_252 = arith.constant 0 : index
      %c0_253 = arith.constant 0 : index
      %589 = vector.load %arg12[%c0_252, %c0_253] : memref<8x128xf32, #tpu.memory_space<vmem>>, vector<8x128xf32>
      %590 = vector.shape_cast %556 : vector<8x1xi1> to vector<8x1xi1>
      %591 = vector.broadcast %590 : vector<8x1xi1> to vector<8x128xi1>
      %592 = arith.select %591, %588, %589 : vector<8x128xi1>, vector<8x128xf32>
      %c0_254 = arith.constant 0 : index
      %c0_255 = arith.constant 0 : index
      %593 = vector.load %arg12[%c0_254, %c0_255] : memref<8x128xf32, #tpu.memory_space<vmem>>, vector<8x128xf32>
      tpu.vector_store %arg12[%c0_254, %c0_255], %592 {strides = array<i32>} : memref<8x128xf32, #tpu.memory_space<vmem>>, vector<8x128xf32>,
      %c0_256 = arith.constant 0 : index
      %c0_257 = arith.constant 0 : index
      %594 = vector.load %arg13[%c0_256, %c0_257] : memref<8x128xf32, #tpu.memory_space<vmem>>, vector<8x128xf32>
      %595 = vector.shape_cast %556 : vector<8x1xi1> to vector<8x1xi1>
      %596 = vector.broadcast %595 : vector<8x1xi1> to vector<8x128xi1>
      %597 = arith.select %596, %586, %594 : vector<8x128xi1>, vector<8x128xf32>
      %c0_258 = arith.constant 0 : index
      %c0_259 = arith.constant 0 : index
      %598 = vector.load %arg13[%c0_258, %c0_259] : memref<8x128xf32, #tpu.memory_space<vmem>>, vector<8x128xf32>
      tpu.vector_store %arg13[%c0_258, %c0_259], %597 {strides = array<i32>} : memref<8x128xf32, #tpu.memory_space<vmem>>, vector<8x128xf32>,
      %c6_i32 = arith.constant 6 : i32
      %c8_i32_260 = arith.constant 8 : i32
      %599 = arith.muli %arg0, %c8_i32_260 : i32
      %600 = arith.addi %599, %c6_i32 : i32
      %c7_i32_261 = arith.constant 7 : i32
      %601 = arith.subi %c7_i32_261, %600 : i32
      %602 = arith.index_cast %c6_i32 : i32 to index
      %c0_262 = arith.constant 0 : index
      %c0_263 = arith.constant 0 : index
      %603 = vector.load %arg2[%602, %c0_262, %c0_263] : memref<8x8x512xbf16, #tpu.memory_space<vmem>>, vector<1x8x512xbf16>
      %604 = vector.shape_cast %603 : vector<1x8x512xbf16> to vector<8x512xbf16>
      %605 = vector.broadcast %600 : i32 to vector<8x1xi32>
      %606 = arith.cmpi slt, %605, %4 : vector<8x1xi32>
      %607 = arith.extf %604 : vector<8x512xbf16> to vector<8x512xf32>
      %c0_264 = arith.constant 0 : index
      %c0_265 = arith.constant 0 : index
      %608 = vector.load %arg10[%c0_264, %c0_265] : memref<8x128xf32, #tpu.memory_space<vmem>>, vector<8x128xf32>
      %609 = arith.truncf %608 : vector<8x128xf32> to vector<8x128xbf16>
      %c0_266 = arith.constant 0 : index
      %c0_267 = arith.constant 0 : index
      %610 = vector.load %arg5[%c0_266, %c0_267] : memref<128x512xbf16, #tpu.memory_space<vmem>>, vector<128x512xbf16>
      %cst_268 = arith.constant dense<0.000000e+00> : vector<8x512xf32>
      %611 = tpu.matmul %609, %610, %cst_268 {dimension_numbers = #tpu.dot_dimension_numbers<[1], [0], [0], [1], [0, 0, 1, 1], [], []>} : vector<8x128xbf16>, vector<128x512xbf16>, vector<8x512xf32> -> vector<8x512xf32>
      %612 = arith.addf %607, %611 : vector<8x512xf32>
      %613 = vector.extract_strided_slice %612 {offsets = [0, 0], sizes = [8, 128], strides = [1, 1]} : vector<8x512xf32> to vector<8x128xf32>
      %614 = arith.negf %613 : vector<8x128xf32>
      %615 = math.exp %614 : vector<8x128xf32>
      %cst_269 = arith.constant 1.000000e+00 : f32
      %616 = vector.broadcast %cst_269 : f32 to vector<8x128xf32>
      %617 = arith.addf %616, %615 : vector<8x128xf32>
      %618 = arith.divf %616, %617 : vector<8x128xf32>
      %619 = vector.extract_strided_slice %612 {offsets = [0, 128], sizes = [8, 128], strides = [1, 1]} : vector<8x512xf32> to vector<8x128xf32>
      %620 = arith.negf %619 : vector<8x128xf32>
      %621 = math.exp %620 : vector<8x128xf32>
      %cst_270 = arith.constant 1.000000e+00 : f32
      %622 = vector.broadcast %cst_270 : f32 to vector<8x128xf32>
      %623 = arith.addf %622, %621 : vector<8x128xf32>
      %624 = arith.divf %622, %623 : vector<8x128xf32>
      %625 = vector.extract_strided_slice %612 {offsets = [0, 256], sizes = [8, 128], strides = [1, 1]} : vector<8x512xf32> to vector<8x128xf32>
      %626 = math.tanh %625 : vector<8x128xf32>
      %627 = vector.extract_strided_slice %612 {offsets = [0, 384], sizes = [8, 128], strides = [1, 1]} : vector<8x512xf32> to vector<8x128xf32>
      %628 = arith.negf %627 : vector<8x128xf32>
      %629 = math.exp %628 : vector<8x128xf32>
      %cst_271 = arith.constant 1.000000e+00 : f32
      %630 = vector.broadcast %cst_271 : f32 to vector<8x128xf32>
      %631 = arith.addf %630, %629 : vector<8x128xf32>
      %632 = arith.divf %630, %631 : vector<8x128xf32>
      %c0_272 = arith.constant 0 : index
      %c0_273 = arith.constant 0 : index
      %633 = vector.load %arg11[%c0_272, %c0_273] : memref<8x128xf32, #tpu.memory_space<vmem>>, vector<8x128xf32>
      %634 = arith.mulf %624, %633 : vector<8x128xf32>
      %635 = arith.mulf %618, %626 : vector<8x128xf32>
      %636 = arith.addf %634, %635 : vector<8x128xf32>
      %637 = math.tanh %636 : vector<8x128xf32>
      %638 = arith.mulf %632, %637 : vector<8x128xf32>
      %c0_274 = arith.constant 0 : index
      %c0_275 = arith.constant 0 : index
      %639 = vector.load %arg10[%c0_274, %c0_275] : memref<8x128xf32, #tpu.memory_space<vmem>>, vector<8x128xf32>
      %640 = vector.shape_cast %606 : vector<8x1xi1> to vector<8x1xi1>
      %641 = vector.broadcast %640 : vector<8x1xi1> to vector<8x128xi1>
      %642 = arith.select %641, %638, %639 : vector<8x128xi1>, vector<8x128xf32>
      %c0_276 = arith.constant 0 : index
      %c0_277 = arith.constant 0 : index
      %643 = vector.load %arg10[%c0_276, %c0_277] : memref<8x128xf32, #tpu.memory_space<vmem>>, vector<8x128xf32>
      tpu.vector_store %arg10[%c0_276, %c0_277], %642 {strides = array<i32>} : memref<8x128xf32, #tpu.memory_space<vmem>>, vector<8x128xf32>,
      %c0_278 = arith.constant 0 : index
      %c0_279 = arith.constant 0 : index
      %644 = vector.load %arg11[%c0_278, %c0_279] : memref<8x128xf32, #tpu.memory_space<vmem>>, vector<8x128xf32>
      %645 = vector.shape_cast %606 : vector<8x1xi1> to vector<8x1xi1>
      %646 = vector.broadcast %645 : vector<8x1xi1> to vector<8x128xi1>
      %647 = arith.select %646, %636, %644 : vector<8x128xi1>, vector<8x128xf32>
      %c0_280 = arith.constant 0 : index
      %c0_281 = arith.constant 0 : index
      %648 = vector.load %arg11[%c0_280, %c0_281] : memref<8x128xf32, #tpu.memory_space<vmem>>, vector<8x128xf32>
      tpu.vector_store %arg11[%c0_280, %c0_281], %647 {strides = array<i32>} : memref<8x128xf32, #tpu.memory_space<vmem>>, vector<8x128xf32>,
      %649 = arith.index_cast %c6_i32 : i32 to index
      %c0_282 = arith.constant 0 : index
      %c0_283 = arith.constant 0 : index
      %650 = vector.load %arg3[%649, %c0_282, %c0_283] : memref<8x8x512xbf16, #tpu.memory_space<vmem>>, vector<1x8x512xbf16>
      %651 = vector.shape_cast %650 : vector<1x8x512xbf16> to vector<8x512xbf16>
      %652 = vector.broadcast %601 : i32 to vector<8x1xi32>
      %653 = arith.cmpi slt, %652, %4 : vector<8x1xi32>
      %654 = arith.extf %651 : vector<8x512xbf16> to vector<8x512xf32>
      %c0_284 = arith.constant 0 : index
      %c0_285 = arith.constant 0 : index
      %655 = vector.load %arg12[%c0_284, %c0_285] : memref<8x128xf32, #tpu.memory_space<vmem>>, vector<8x128xf32>
      %656 = arith.truncf %655 : vector<8x128xf32> to vector<8x128xbf16>
      %c0_286 = arith.constant 0 : index
      %c0_287 = arith.constant 0 : index
      %657 = vector.load %arg6[%c0_286, %c0_287] : memref<128x512xbf16, #tpu.memory_space<vmem>>, vector<128x512xbf16>
      %cst_288 = arith.constant dense<0.000000e+00> : vector<8x512xf32>
      %658 = tpu.matmul %656, %657, %cst_288 {dimension_numbers = #tpu.dot_dimension_numbers<[1], [0], [0], [1], [0, 0, 1, 1], [], []>} : vector<8x128xbf16>, vector<128x512xbf16>, vector<8x512xf32> -> vector<8x512xf32>
      %659 = arith.addf %654, %658 : vector<8x512xf32>
      %660 = vector.extract_strided_slice %659 {offsets = [0, 0], sizes = [8, 128], strides = [1, 1]} : vector<8x512xf32> to vector<8x128xf32>
      %661 = arith.negf %660 : vector<8x128xf32>
      %662 = math.exp %661 : vector<8x128xf32>
      %cst_289 = arith.constant 1.000000e+00 : f32
      %663 = vector.broadcast %cst_289 : f32 to vector<8x128xf32>
      %664 = arith.addf %663, %662 : vector<8x128xf32>
      %665 = arith.divf %663, %664 : vector<8x128xf32>
      %666 = vector.extract_strided_slice %659 {offsets = [0, 128], sizes = [8, 128], strides = [1, 1]} : vector<8x512xf32> to vector<8x128xf32>
      %667 = arith.negf %666 : vector<8x128xf32>
      %668 = math.exp %667 : vector<8x128xf32>
      %cst_290 = arith.constant 1.000000e+00 : f32
      %669 = vector.broadcast %cst_290 : f32 to vector<8x128xf32>
      %670 = arith.addf %669, %668 : vector<8x128xf32>
      %671 = arith.divf %669, %670 : vector<8x128xf32>
      %672 = vector.extract_strided_slice %659 {offsets = [0, 256], sizes = [8, 128], strides = [1, 1]} : vector<8x512xf32> to vector<8x128xf32>
      %673 = math.tanh %672 : vector<8x128xf32>
      %674 = vector.extract_strided_slice %659 {offsets = [0, 384], sizes = [8, 128], strides = [1, 1]} : vector<8x512xf32> to vector<8x128xf32>
      %675 = arith.negf %674 : vector<8x128xf32>
      %676 = math.exp %675 : vector<8x128xf32>
      %cst_291 = arith.constant 1.000000e+00 : f32
      %677 = vector.broadcast %cst_291 : f32 to vector<8x128xf32>
      %678 = arith.addf %677, %676 : vector<8x128xf32>
      %679 = arith.divf %677, %678 : vector<8x128xf32>
      %c0_292 = arith.constant 0 : index
      %c0_293 = arith.constant 0 : index
      %680 = vector.load %arg13[%c0_292, %c0_293] : memref<8x128xf32, #tpu.memory_space<vmem>>, vector<8x128xf32>
      %681 = arith.mulf %671, %680 : vector<8x128xf32>
      %682 = arith.mulf %665, %673 : vector<8x128xf32>
      %683 = arith.addf %681, %682 : vector<8x128xf32>
      %684 = math.tanh %683 : vector<8x128xf32>
      %685 = arith.mulf %679, %684 : vector<8x128xf32>
      %c0_294 = arith.constant 0 : index
      %c0_295 = arith.constant 0 : index
      %686 = vector.load %arg12[%c0_294, %c0_295] : memref<8x128xf32, #tpu.memory_space<vmem>>, vector<8x128xf32>
      %687 = vector.shape_cast %653 : vector<8x1xi1> to vector<8x1xi1>
      %688 = vector.broadcast %687 : vector<8x1xi1> to vector<8x128xi1>
      %689 = arith.select %688, %685, %686 : vector<8x128xi1>, vector<8x128xf32>
      %c0_296 = arith.constant 0 : index
      %c0_297 = arith.constant 0 : index
      %690 = vector.load %arg12[%c0_296, %c0_297] : memref<8x128xf32, #tpu.memory_space<vmem>>, vector<8x128xf32>
      tpu.vector_store %arg12[%c0_296, %c0_297], %689 {strides = array<i32>} : memref<8x128xf32, #tpu.memory_space<vmem>>, vector<8x128xf32>,
      %c0_298 = arith.constant 0 : index
      %c0_299 = arith.constant 0 : index
      %691 = vector.load %arg13[%c0_298, %c0_299] : memref<8x128xf32, #tpu.memory_space<vmem>>, vector<8x128xf32>
      %692 = vector.shape_cast %653 : vector<8x1xi1> to vector<8x1xi1>
      %693 = vector.broadcast %692 : vector<8x1xi1> to vector<8x128xi1>
      %694 = arith.select %693, %683, %691 : vector<8x128xi1>, vector<8x128xf32>
      %c0_300 = arith.constant 0 : index
      %c0_301 = arith.constant 0 : index
      %695 = vector.load %arg13[%c0_300, %c0_301] : memref<8x128xf32, #tpu.memory_space<vmem>>, vector<8x128xf32>
      tpu.vector_store %arg13[%c0_300, %c0_301], %694 {strides = array<i32>} : memref<8x128xf32, #tpu.memory_space<vmem>>, vector<8x128xf32>,
      %c7_i32_302 = arith.constant 7 : i32
      %c8_i32_303 = arith.constant 8 : i32
      %696 = arith.muli %arg0, %c8_i32_303 : i32
      %697 = arith.addi %696, %c7_i32_302 : i32
      %c7_i32_304 = arith.constant 7 : i32
      %698 = arith.subi %c7_i32_304, %697 : i32
      %699 = arith.index_cast %c7_i32_302 : i32 to index
      %c0_305 = arith.constant 0 : index
      %c0_306 = arith.constant 0 : index
      %700 = vector.load %arg2[%699, %c0_305, %c0_306] : memref<8x8x512xbf16, #tpu.memory_space<vmem>>, vector<1x8x512xbf16>
      %701 = vector.shape_cast %700 : vector<1x8x512xbf16> to vector<8x512xbf16>
      %702 = vector.broadcast %697 : i32 to vector<8x1xi32>
      %703 = arith.cmpi slt, %702, %4 : vector<8x1xi32>
      %704 = arith.extf %701 : vector<8x512xbf16> to vector<8x512xf32>
      %c0_307 = arith.constant 0 : index
      %c0_308 = arith.constant 0 : index
      %705 = vector.load %arg10[%c0_307, %c0_308] : memref<8x128xf32, #tpu.memory_space<vmem>>, vector<8x128xf32>
      %706 = arith.truncf %705 : vector<8x128xf32> to vector<8x128xbf16>
      %c0_309 = arith.constant 0 : index
      %c0_310 = arith.constant 0 : index
      %707 = vector.load %arg5[%c0_309, %c0_310] : memref<128x512xbf16, #tpu.memory_space<vmem>>, vector<128x512xbf16>
      %cst_311 = arith.constant dense<0.000000e+00> : vector<8x512xf32>
      %708 = tpu.matmul %706, %707, %cst_311 {dimension_numbers = #tpu.dot_dimension_numbers<[1], [0], [0], [1], [0, 0, 1, 1], [], []>} : vector<8x128xbf16>, vector<128x512xbf16>, vector<8x512xf32> -> vector<8x512xf32>
      %709 = arith.addf %704, %708 : vector<8x512xf32>
      %710 = vector.extract_strided_slice %709 {offsets = [0, 0], sizes = [8, 128], strides = [1, 1]} : vector<8x512xf32> to vector<8x128xf32>
      %711 = arith.negf %710 : vector<8x128xf32>
      %712 = math.exp %711 : vector<8x128xf32>
      %cst_312 = arith.constant 1.000000e+00 : f32
      %713 = vector.broadcast %cst_312 : f32 to vector<8x128xf32>
      %714 = arith.addf %713, %712 : vector<8x128xf32>
      %715 = arith.divf %713, %714 : vector<8x128xf32>
      %716 = vector.extract_strided_slice %709 {offsets = [0, 128], sizes = [8, 128], strides = [1, 1]} : vector<8x512xf32> to vector<8x128xf32>
      %717 = arith.negf %716 : vector<8x128xf32>
      %718 = math.exp %717 : vector<8x128xf32>
      %cst_313 = arith.constant 1.000000e+00 : f32
      %719 = vector.broadcast %cst_313 : f32 to vector<8x128xf32>
      %720 = arith.addf %719, %718 : vector<8x128xf32>
      %721 = arith.divf %719, %720 : vector<8x128xf32>
      %722 = vector.extract_strided_slice %709 {offsets = [0, 256], sizes = [8, 128], strides = [1, 1]} : vector<8x512xf32> to vector<8x128xf32>
      %723 = math.tanh %722 : vector<8x128xf32>
      %724 = vector.extract_strided_slice %709 {offsets = [0, 384], sizes = [8, 128], strides = [1, 1]} : vector<8x512xf32> to vector<8x128xf32>
      %725 = arith.negf %724 : vector<8x128xf32>
      %726 = math.exp %725 : vector<8x128xf32>
      %cst_314 = arith.constant 1.000000e+00 : f32
      %727 = vector.broadcast %cst_314 : f32 to vector<8x128xf32>
      %728 = arith.addf %727, %726 : vector<8x128xf32>
      %729 = arith.divf %727, %728 : vector<8x128xf32>
      %c0_315 = arith.constant 0 : index
      %c0_316 = arith.constant 0 : index
      %730 = vector.load %arg11[%c0_315, %c0_316] : memref<8x128xf32, #tpu.memory_space<vmem>>, vector<8x128xf32>
      %731 = arith.mulf %721, %730 : vector<8x128xf32>
      %732 = arith.mulf %715, %723 : vector<8x128xf32>
      %733 = arith.addf %731, %732 : vector<8x128xf32>
      %734 = math.tanh %733 : vector<8x128xf32>
      %735 = arith.mulf %729, %734 : vector<8x128xf32>
      %c0_317 = arith.constant 0 : index
      %c0_318 = arith.constant 0 : index
      %736 = vector.load %arg10[%c0_317, %c0_318] : memref<8x128xf32, #tpu.memory_space<vmem>>, vector<8x128xf32>
      %737 = vector.shape_cast %703 : vector<8x1xi1> to vector<8x1xi1>
      %738 = vector.broadcast %737 : vector<8x1xi1> to vector<8x128xi1>
      %739 = arith.select %738, %735, %736 : vector<8x128xi1>, vector<8x128xf32>
      %c0_319 = arith.constant 0 : index
      %c0_320 = arith.constant 0 : index
      %740 = vector.load %arg10[%c0_319, %c0_320] : memref<8x128xf32, #tpu.memory_space<vmem>>, vector<8x128xf32>
      tpu.vector_store %arg10[%c0_319, %c0_320], %739 {strides = array<i32>} : memref<8x128xf32, #tpu.memory_space<vmem>>, vector<8x128xf32>,
      %c0_321 = arith.constant 0 : index
      %c0_322 = arith.constant 0 : index
      %741 = vector.load %arg11[%c0_321, %c0_322] : memref<8x128xf32, #tpu.memory_space<vmem>>, vector<8x128xf32>
      %742 = vector.shape_cast %703 : vector<8x1xi1> to vector<8x1xi1>
      %743 = vector.broadcast %742 : vector<8x1xi1> to vector<8x128xi1>
      %744 = arith.select %743, %733, %741 : vector<8x128xi1>, vector<8x128xf32>
      %c0_323 = arith.constant 0 : index
      %c0_324 = arith.constant 0 : index
      %745 = vector.load %arg11[%c0_323, %c0_324] : memref<8x128xf32, #tpu.memory_space<vmem>>, vector<8x128xf32>
      tpu.vector_store %arg11[%c0_323, %c0_324], %744 {strides = array<i32>} : memref<8x128xf32, #tpu.memory_space<vmem>>, vector<8x128xf32>,
      %746 = arith.index_cast %c7_i32_302 : i32 to index
      %c0_325 = arith.constant 0 : index
      %c0_326 = arith.constant 0 : index
      %747 = vector.load %arg3[%746, %c0_325, %c0_326] : memref<8x8x512xbf16, #tpu.memory_space<vmem>>, vector<1x8x512xbf16>
      %748 = vector.shape_cast %747 : vector<1x8x512xbf16> to vector<8x512xbf16>
      %749 = vector.broadcast %698 : i32 to vector<8x1xi32>
      %750 = arith.cmpi slt, %749, %4 : vector<8x1xi32>
      %751 = arith.extf %748 : vector<8x512xbf16> to vector<8x512xf32>
      %c0_327 = arith.constant 0 : index
      %c0_328 = arith.constant 0 : index
      %752 = vector.load %arg12[%c0_327, %c0_328] : memref<8x128xf32, #tpu.memory_space<vmem>>, vector<8x128xf32>
      %753 = arith.truncf %752 : vector<8x128xf32> to vector<8x128xbf16>
      %c0_329 = arith.constant 0 : index
      %c0_330 = arith.constant 0 : index
      %754 = vector.load %arg6[%c0_329, %c0_330] : memref<128x512xbf16, #tpu.memory_space<vmem>>, vector<128x512xbf16>
      %cst_331 = arith.constant dense<0.000000e+00> : vector<8x512xf32>
      %755 = tpu.matmul %753, %754, %cst_331 {dimension_numbers = #tpu.dot_dimension_numbers<[1], [0], [0], [1], [0, 0, 1, 1], [], []>} : vector<8x128xbf16>, vector<128x512xbf16>, vector<8x512xf32> -> vector<8x512xf32>
      %756 = arith.addf %751, %755 : vector<8x512xf32>
      %757 = vector.extract_strided_slice %756 {offsets = [0, 0], sizes = [8, 128], strides = [1, 1]} : vector<8x512xf32> to vector<8x128xf32>
      %758 = arith.negf %757 : vector<8x128xf32>
      %759 = math.exp %758 : vector<8x128xf32>
      %cst_332 = arith.constant 1.000000e+00 : f32
      %760 = vector.broadcast %cst_332 : f32 to vector<8x128xf32>
      %761 = arith.addf %760, %759 : vector<8x128xf32>
      %762 = arith.divf %760, %761 : vector<8x128xf32>
      %763 = vector.extract_strided_slice %756 {offsets = [0, 128], sizes = [8, 128], strides = [1, 1]} : vector<8x512xf32> to vector<8x128xf32>
      %764 = arith.negf %763 : vector<8x128xf32>
      %765 = math.exp %764 : vector<8x128xf32>
      %cst_333 = arith.constant 1.000000e+00 : f32
      %766 = vector.broadcast %cst_333 : f32 to vector<8x128xf32>
      %767 = arith.addf %766, %765 : vector<8x128xf32>
      %768 = arith.divf %766, %767 : vector<8x128xf32>
      %769 = vector.extract_strided_slice %756 {offsets = [0, 256], sizes = [8, 128], strides = [1, 1]} : vector<8x512xf32> to vector<8x128xf32>
      %770 = math.tanh %769 : vector<8x128xf32>
      %771 = vector.extract_strided_slice %756 {offsets = [0, 384], sizes = [8, 128], strides = [1, 1]} : vector<8x512xf32> to vector<8x128xf32>
      %772 = arith.negf %771 : vector<8x128xf32>
      %773 = math.exp %772 : vector<8x128xf32>
      %cst_334 = arith.constant 1.000000e+00 : f32
      %774 = vector.broadcast %cst_334 : f32 to vector<8x128xf32>
      %775 = arith.addf %774, %773 : vector<8x128xf32>
      %776 = arith.divf %774, %775 : vector<8x128xf32>
      %c0_335 = arith.constant 0 : index
      %c0_336 = arith.constant 0 : index
      %777 = vector.load %arg13[%c0_335, %c0_336] : memref<8x128xf32, #tpu.memory_space<vmem>>, vector<8x128xf32>
      %778 = arith.mulf %768, %777 : vector<8x128xf32>
      %779 = arith.mulf %762, %770 : vector<8x128xf32>
      %780 = arith.addf %778, %779 : vector<8x128xf32>
      %781 = math.tanh %780 : vector<8x128xf32>
      %782 = arith.mulf %776, %781 : vector<8x128xf32>
      %c0_337 = arith.constant 0 : index
      %c0_338 = arith.constant 0 : index
      %783 = vector.load %arg12[%c0_337, %c0_338] : memref<8x128xf32, #tpu.memory_space<vmem>>, vector<8x128xf32>
      %784 = vector.shape_cast %750 : vector<8x1xi1> to vector<8x1xi1>
      %785 = vector.broadcast %784 : vector<8x1xi1> to vector<8x128xi1>
      %786 = arith.select %785, %782, %783 : vector<8x128xi1>, vector<8x128xf32>
      %c0_339 = arith.constant 0 : index
      %c0_340 = arith.constant 0 : index
      %787 = vector.load %arg12[%c0_339, %c0_340] : memref<8x128xf32, #tpu.memory_space<vmem>>, vector<8x128xf32>
      tpu.vector_store %arg12[%c0_339, %c0_340], %786 {strides = array<i32>} : memref<8x128xf32, #tpu.memory_space<vmem>>, vector<8x128xf32>,
      %c0_341 = arith.constant 0 : index
      %c0_342 = arith.constant 0 : index
      %788 = vector.load %arg13[%c0_341, %c0_342] : memref<8x128xf32, #tpu.memory_space<vmem>>, vector<8x128xf32>
      %789 = vector.shape_cast %750 : vector<8x1xi1> to vector<8x1xi1>
      %790 = vector.broadcast %789 : vector<8x1xi1> to vector<8x128xi1>
      %791 = arith.select %790, %780, %788 : vector<8x128xi1>, vector<8x128xf32>
      %c0_343 = arith.constant 0 : index
      %c0_344 = arith.constant 0 : index
      %792 = vector.load %arg13[%c0_343, %c0_344] : memref<8x128xf32, #tpu.memory_space<vmem>>, vector<8x128xf32>
      tpu.vector_store %arg13[%c0_343, %c0_344], %791 {strides = array<i32>} : memref<8x128xf32, #tpu.memory_space<vmem>>, vector<8x128xf32>,
      %c8_i32_345 = arith.constant 8 : i32
    } else {
    }
    %c0_i32_6 = arith.constant 0 : i32
    %14 = arith.cmpi eq, %arg0, %c0_i32_6 : i32
    %15 = arith.extui %14 : i1 to i32
    %c0_i32_7 = arith.constant 0 : i32
    %16 = arith.cmpi ne, %15, %c0_i32_7 : i32
    scf.if %16 {
      %c0_8 = arith.constant 0 : index
      %c0_9 = arith.constant 0 : index
      %17 = vector.load %arg10[%c0_8, %c0_9] : memref<8x128xf32, #tpu.memory_space<vmem>>, vector<8x128xf32>
      %c0_10 = arith.constant 0 : index
      %c0_11 = arith.constant 0 : index
      %18 = vector.load %arg7[%c0_10, %c0_11] : memref<256x1xf32, #tpu.memory_space<vmem>>, vector<128x1xf32>
      %cst = arith.constant dense<0.000000e+00> : vector<8x1xf32>
      %19 = tpu.matmul %17, %18, %cst {dimension_numbers = #tpu.dot_dimension_numbers<[1], [0], [0], [1], [0, 0, 1, 1], [], []>} : vector<8x128xf32>, vector<128x1xf32>, vector<8x1xf32> -> vector<8x1xf32>
      %c0_12 = arith.constant 0 : index
      %c0_13 = arith.constant 0 : index
      %20 = vector.load %arg12[%c0_12, %c0_13] : memref<8x128xf32, #tpu.memory_space<vmem>>, vector<8x128xf32>
      %c128 = arith.constant 128 : index
      %c0_14 = arith.constant 0 : index
      %21 = vector.load %arg7[%c128, %c0_14] : memref<256x1xf32, #tpu.memory_space<vmem>>, vector<128x1xf32>
      %cst_15 = arith.constant dense<0.000000e+00> : vector<8x1xf32>
      %22 = tpu.matmul %20, %21, %cst_15 {dimension_numbers = #tpu.dot_dimension_numbers<[1], [0], [0], [1], [0, 0, 1, 1], [], []>} : vector<8x128xf32>, vector<128x1xf32>, vector<8x1xf32> -> vector<8x1xf32>
      %23 = arith.addf %19, %22 : vector<8x1xf32>
      %c0_16 = arith.constant 0 : index
      %c0_17 = arith.constant 0 : index
      %24 = vector.load %arg8[%c0_16, %c0_17] : memref<1x1xf32, #tpu.memory_space<vmem>>, vector<1x1xf32>
      %25 = vector.broadcast %24 : vector<1x1xf32> to vector<8x1xf32>
      %26 = arith.addf %23, %25 : vector<8x1xf32>
      %c0_18 = arith.constant 0 : index
      %c0_19 = arith.constant 0 : index
      %27 = vector.load %arg9[%c0_18, %c0_19] : memref<8x1xf32, #tpu.memory_space<vmem>>, vector<8x1xf32>
      tpu.vector_store %arg9[%c0_18, %c0_19], %26 {strides = array<i32>} : memref<8x1xf32, #tpu.memory_space<vmem>>, vector<8x1xf32>,
    } else {
    }
    return
  }
  func.func @transform_0(%arg0: i32, %arg1: memref<1xi32, #tpu.memory_space<smem>>) -> (i32, i32, i32) {
    %c0_i32 = arith.constant 0 : i32
    %c0_i32_0 = arith.constant 0 : i32
    %c0_i32_1 = arith.constant 0 : i32
    return %arg0, %c0_i32, %c0_i32_0 : i32, i32, i32
  }
  func.func @transform_1(%arg0: i32, %arg1: memref<1xi32, #tpu.memory_space<smem>>) -> (i32, i32, i32) {
    %c0_i32 = arith.constant 0 : i32
    %c0_i32_0 = arith.constant 0 : i32
    %c0_i32_1 = arith.constant 0 : i32
    return %arg0, %c0_i32, %c0_i32_0 : i32, i32, i32
  }
  func.func @transform_2(%arg0: i32, %arg1: memref<1xi32, #tpu.memory_space<smem>>) -> (i32, i32) {
    %c0_i32 = arith.constant 0 : i32
    %c0_i32_0 = arith.constant 0 : i32
    %c0_i32_1 = arith.constant 0 : i32
    return %c0_i32, %c0_i32_0 : i32, i32
  }
  func.func @transform_3(%arg0: i32, %arg1: memref<1xi32, #tpu.memory_space<smem>>) -> (i32, i32) {
    %c0_i32 = arith.constant 0 : i32
    %c0_i32_0 = arith.constant 0 : i32
    %c0_i32_1 = arith.constant 0 : i32
    return %c0_i32, %c0_i32_0 : i32, i32
  }
  func.func @transform_4(%arg0: i32, %arg1: memref<1xi32, #tpu.memory_space<smem>>) -> (i32, i32) {
    %c0_i32 = arith.constant 0 : i32
    %c0_i32_0 = arith.constant 0 : i32
    %c0_i32_1 = arith.constant 0 : i32
    return %c0_i32, %c0_i32_0 : i32, i32
  }
  func.func @transform_5(%arg0: i32, %arg1: memref<1xi32, #tpu.memory_space<smem>>) -> (i32, i32) {
    %c0_i32 = arith.constant 0 : i32
    %c0_i32_0 = arith.constant 0 : i32
    %c0_i32_1 = arith.constant 0 : i32
    return %c0_i32, %c0_i32_0 : i32, i32
  }
  func.func @transform_6(%arg0: i32, %arg1: memref<1xi32, #tpu.memory_space<smem>>) -> (i32, i32) {
    %c0_i32 = arith.constant 0 : i32
    %c0_i32_0 = arith.constant 0 : i32
    %c0_i32_1 = arith.constant 0 : i32
    return %c0_i32, %c0_i32_0 : i32, i32
  }
  func.func @transform_7(%arg0: i32, %arg1: memref<1xi32, #tpu.memory_space<smem>>) -> (i32, i32) {
    %c0_i32 = arith.constant 0 : i32
    %c0_i32_0 = arith.constant 0 : i32
    %c0_i32_1 = arith.constant 0 : i32
    return %c0_i32, %c0_i32_0 : i32, i32
  }
}

</mosaic_0001>

<llo_original>
// kernel: tpu_custom_call.1
$region0: #{tpu_custom_call.1}
  #allocation0 [shape = 'u32[]', space=smem, size = 0x4, offset = 0x4, fixed_abs, tag = 'smem constant byte address 0x4 - core index']
  #allocation1 [shape = 'u32[72,128]{1,0:T(1,128)}', space=vmem, size = 0x9000, scoped, tag = 'internal scratch']
  #allocation2 [shape = 'f32[8,128]{1,0:T(8,128)}', space=vmem, size = 0x1000, scoped, tag = 'scratch operand']
  #allocation3 [shape = 'f32[8,128]{1,0:T(8,128)}', space=vmem, size = 0x1000, scoped, tag = 'scratch operand']
  #allocation4 [shape = 'f32[8,128]{1,0:T(8,128)}', space=vmem, size = 0x1000, scoped, tag = 'scratch operand']
  #allocation5 [shape = 'f32[8,128]{1,0:T(8,128)}', space=vmem, size = 0x1000, scoped, tag = 'scratch operand']
  #allocation6 [shape = 's32[1]{0}', space=sflag, size = 0x4, scoped, tag = 'scoped memory for tpu_custom_call.1']
  #allocation7 [shape = 's32[1]{0:T(128)S(6)}', space=smem, size = 0x200, scoped, tag = 'prefetched SMEM operand 0']
  #allocation8 [shape = 'f32[1,1]{1,0:T(1,128)S(1)}', space=vmem, size = 0x200, scoped, tag = 'scoped memory for tpu_custom_call.1']
  %s0 = inlined_call_operand.<no memory space> [shape: s32[1], index: 0, kind: input, shape index: {}]
  %s1 = inlined_call_operand.hbm [shape: bf16[8,8,512], index: 1, kind: input, shape index: {}]
  %s2 = inlined_call_operand.hbm [shape: bf16[8,8,512], index: 2, kind: input, shape index: {}]
  %s3 = inlined_call_operand.vmem [shape: s32[8,1], index: 3, kind: input, shape index: {}]
  %s4 = inlined_call_operand.vmem [shape: bf16[128,512], index: 4, kind: input, shape index: {}]
  %s5 = inlined_call_operand.hbm [shape: bf16[128,512], index: 5, kind: input, shape index: {}]
  %s6 = inlined_call_operand.vmem [shape: f32[256,1], index: 6, kind: input, shape index: {}]
  %s7 = inlined_call_operand.<no memory space> [shape: f32[1,1], index: 7, kind: input, shape index: {}]
  %s8 = inlined_call_operand.vmem [shape: f32[8,1], index: 8, kind: output, shape index: {}]
  %s9 = sld [smem:[#allocation0]]
  $region62: #{tpu_custom_call.1} parent=0
    _
  %s11 = ssub.s32 1, %s9
  %s12 = scalar_select 0, %s11, %s9
  %13 = sst [smem:[#allocation7]] %s0
  %v14 = vstv %s7
  %15 = vst [vmem:[#allocation8] sm:$0x1] %v14
  $region1: #{tpu_custom_call.1} parent=0
    #allocation9 [shape = 'u8[65536]{0}', space=vmem, size = 0x10000, scoped, tag = 'input window, operand 1, single buffered']
    #allocation10 [shape = 's32[1]{0}', space=sflag, size = 0x4, scoped, tag = 'scoped memory for tpu_custom_call.1']
    #allocation11 [shape = 'u8[65536]{0}', space=vmem, size = 0x10000, scoped, tag = 'input window, operand 2, single buffered']
    #allocation12 [shape = 's32[1]{0}', space=sflag, size = 0x4, scoped, tag = 'scoped memory for tpu_custom_call.1']
    #allocation13 [shape = 'u8[131072]{0}', space=vmem, size = 0x20000, scoped, tag = 'input window, operand 5, single buffered']
    %16 = vsyncpa [#allocation10], 0
    %17 = vsyncpa [#allocation12], 0
    // Predicated region
    $region2: #{tpu_custom_call.1} parent=1 // pred_check
      _
    $region3: #{tpu_custom_call.1} parent=1 // pred_check_branch
      %19 = sbr.rel (0) target = $region5
    $region4: #{tpu_custom_call.1} parent=1 // pred_region
      %21 = vsyncadd [#allocation10], 0
      %s22 = sshll.u32 %s1, 4
      %s23 = int_to_ptr.hbm [resolvable:$true] %s22
      %s24 = sshll.u32 [#allocation9], 4
      %s25 = int_to_ptr.vmem [resolvable:$true] %s24
      %30 = dma.hbm_to_vmem [thread:$0]  %s23, 2048, %s25, [#allocation10], 256, 256, 16
    $region5: #{tpu_custom_call.1} parent=1 // pred_fallthru
      _
    // Predicated region
    $region6: #{tpu_custom_call.1} parent=1 // pred_check
      _
    $region7: #{tpu_custom_call.1} parent=1 // pred_check_branch
      %32 = sbr.rel (0) target = $region9
    $region8: #{tpu_custom_call.1} parent=1 // pred_region
      %34 = vsyncadd [#allocation12], 0
      %s35 = sshll.u32 %s2, 4
      %s36 = int_to_ptr.hbm [resolvable:$true] %s35
      %s37 = sshll.u32 [#allocation11], 4
      %s38 = int_to_ptr.vmem [resolvable:$true] %s37
      %43 = dma.hbm_to_vmem [thread:$0]  %s36, 2048, %s38, [#allocation12], 256, 256, 16
    $region9: #{tpu_custom_call.1} parent=1 // pred_fallthru
      _
    // Predicated region
    $region10: #{tpu_custom_call.1} parent=1 // pred_check
      _
    $region11: #{tpu_custom_call.1} parent=1 // pred_check_branch
      %45 = sbr.rel (0) target = $region13
    $region12: #{tpu_custom_call.1} parent=1 // pred_region
      _
    $region13: #{tpu_custom_call.1} parent=1 // pred_fallthru
      _
    // Predicated region
    $region14: #{tpu_custom_call.1} parent=1 // pred_check
      _
    $region15: #{tpu_custom_call.1} parent=1 // pred_check_branch
      %47 = sbr.rel (0) target = $region17
    $region16: #{tpu_custom_call.1} parent=1 // pred_region
      _
    $region17: #{tpu_custom_call.1} parent=1 // pred_fallthru
      _
    // Predicated region
    $region18: #{tpu_custom_call.1} parent=1 // pred_check
      _
    $region19: #{tpu_custom_call.1} parent=1 // pred_check_branch
      %49 = sbr.rel (0) target = $region21
    $region20: #{tpu_custom_call.1} parent=1 // pred_region
      %51 = vsyncadd [#allocation12], 0
      %s52 = sshll.u32 %s5, 4
      %s53 = int_to_ptr.hbm [resolvable:$true] %s52
      %s54 = sshll.u32 [#allocation13], 4
      %s55 = int_to_ptr.vmem [resolvable:$true] %s54
      %60 = dma.hbm_to_vmem [thread:$0]  %s53, 4096, %s55, [#allocation12], 256, 256, 16
    $region21: #{tpu_custom_call.1} parent=1 // pred_fallthru
      _
    // Predicated region
    $region22: #{tpu_custom_call.1} parent=1 // pred_check
      _
    $region23: #{tpu_custom_call.1} parent=1 // pred_check_branch
      %62 = sbr.rel (0) target = $region25
    $region24: #{tpu_custom_call.1} parent=1 // pred_region
      _
    $region25: #{tpu_custom_call.1} parent=1 // pred_fallthru
      _
    // Predicated region
    $region26: #{tpu_custom_call.1} parent=1 // pred_check
      _
    $region27: #{tpu_custom_call.1} parent=1 // pred_check_branch
      %64 = sbr.rel (0) target = $region29
    $region28: #{tpu_custom_call.1} parent=1 // pred_region
      _
    $region29: #{tpu_custom_call.1} parent=1 // pred_fallthru
      _
    // Predicated region
    $region30: #{tpu_custom_call.1} parent=1 // pred_check
      _
    $region31: #{tpu_custom_call.1} parent=1 // pred_check_branch
      %66 = sbr.rel (0) target = $region33
    $region32: #{tpu_custom_call.1} parent=1 // pred_region
      %68 = dma.done [#allocation10], 2048
    $region33: #{tpu_custom_call.1} parent=1 // pred_fallthru
      _
    // Predicated region
    $region34: #{tpu_custom_call.1} parent=1 // pred_check
      _
    $region35: #{tpu_custom_call.1} parent=1 // pred_check_branch
      %70 = sbr.rel (0) target = $region37
    $region36: #{tpu_custom_call.1} parent=1 // pred_region
      %72 = dma.done [#allocation12], 2048
    $region37: #{tpu_custom_call.1} parent=1 // pred_fallthru
      _
    // Predicated region
    $region38: #{tpu_custom_call.1} parent=1 // pred_check
      _
    $region39: #{tpu_custom_call.1} parent=1 // pred_check_branch
      %74 = sbr.rel (0) target = $region41
    $region40: #{tpu_custom_call.1} parent=1 // pred_region
      %76 = dma.done [#allocation12], 4096
    $region41: #{tpu_custom_call.1} parent=1 // pred_fallthru
      _
    %p77 = scmp.eq.s32.totalorder 0, 0
    // Predicated region
    $region42: #{tpu_custom_call.1} parent=1 // pred_check
      %p78 = pneg %p77
    $region43: #{tpu_custom_call.1} parent=1 // pred_check_branch
      %80 = sbr.rel (%p78) target = $region45
    $region44: #{tpu_custom_call.1} parent=1 // pred_region
      %81 = vst [vmem:[#allocation2] sm:$0xff] 0.0
      %82 = vst [vmem:[#allocation3] sm:$0xff] 0.0
      %83 = vst [vmem:[#allocation4] sm:$0xff] 0.0
      %84 = vst [vmem:[#allocation5] sm:$0xff] 0.0
    $region45: #{tpu_custom_call.1} parent=1 // pred_fallthru
      _
    %s85 = sld [smem:[#allocation7]]
    %v86 = vld [vmem:[%s3] sm:$0xff]
    %s87 = smul.u32 0, 8
    %p88 = scmp.lt.s32.totalorder %s87, %s85
    %s89 = sadd.s32 0, 1
    %s90 = smul.u32 %s89, 8
    %s91 = ssub.s32 8, %s90
    %p92 = scmp.lt.s32.totalorder %s91, %s85
    %p93 = por %p88, %p92
    // Predicated region
    $region46: #{tpu_custom_call.1} parent=1 // pred_check
      %p94 = pneg %p93
    $region47: #{tpu_custom_call.1} parent=1 // pred_check_branch
      %96 = sbr.rel (%p94) target = $region49
    $region48: #{tpu_custom_call.1} parent=1 // pred_region
      %s97 = ssub.s32 7, %s87
      %v98 = vld [vmem:[#allocation9] sm:$0xff]
      %v99 = vld [vmem:[#allocation9 + $0x8] sm:$0xff]
      %v100 = vstv %s87
      %vm101 = vcmp.lt.s32.totalorder %v100, %v86
      %v102 = vunpack.c.l.bf16 %v98
      %v103 = vunpack.c.h.bf16 %v98
      %v104 = vunpack.c.l.bf16 %v99
      %v105 = vunpack.c.h.bf16 %v99
      %v106 = vld [vmem:[#allocation2] sm:$0xff]
      %v107 = vpack.c.bf16 %v106, %v106
      %v108 = vld [vmem:[%s4] sm:$0xff]
      %v109 = vld [vmem:[%s4 + $0x8] sm:$0xff]
      %v110 = vld [vmem:[%s4 + $0x10] sm:$0xff]
      %v111 = vld [vmem:[%s4 + $0x18] sm:$0xff]
      %v112 = vld [vmem:[%s4 + $0x20] sm:$0xff]
      %v113 = vld [vmem:[%s4 + $0x28] sm:$0xff]
      %v114 = vld [vmem:[%s4 + $0x30] sm:$0xff]
      %v115 = vld [vmem:[%s4 + $0x38] sm:$0xff]
      %v116 = vld [vmem:[%s4 + $0x40] sm:$0xff]
      %v117 = vld [vmem:[%s4 + $0x48] sm:$0xff]
      %v118 = vld [vmem:[%s4 + $0x50] sm:$0xff]
      %v119 = vld [vmem:[%s4 + $0x58] sm:$0xff]
      %v120 = vld [vmem:[%s4 + $0x60] sm:$0xff]
      %v121 = vld [vmem:[%s4 + $0x68] sm:$0xff]
      %v122 = vld [vmem:[%s4 + $0x70] sm:$0xff]
      %v123 = vld [vmem:[%s4 + $0x78] sm:$0xff]
      %v124 = vld [vmem:[%s4 + $0x80] sm:$0xff]
      %v125 = vld [vmem:[%s4 + $0x88] sm:$0xff]
      %v126 = vld [vmem:[%s4 + $0x90] sm:$0xff]
      %v127 = vld [vmem:[%s4 + $0x98] sm:$0xff]
      %v128 = vld [vmem:[%s4 + $0xa0] sm:$0xff]
      %v129 = vld [vmem:[%s4 + $0xa8] sm:$0xff]
      %v130 = vld [vmem:[%s4 + $0xb0] sm:$0xff]
      %v131 = vld [vmem:[%s4 + $0xb8] sm:$0xff]
      %v132 = vld [vmem:[%s4 + $0xc0] sm:$0xff]
      %v133 = vld [vmem:[%s4 + $0xc8] sm:$0xff]
      %v134 = vld [vmem:[%s4 + $0xd0] sm:$0xff]
      %v135 = vld [vmem:[%s4 + $0xd8] sm:$0xff]
      %v136 = vld [vmem:[%s4 + $0xe0] sm:$0xff]
      %v137 = vld [vmem:[%s4 + $0xe8] sm:$0xff]
      %v138 = vld [vmem:[%s4 + $0xf0] sm:$0xff]
      %v139 = vld [vmem:[%s4 + $0xf8] sm:$0xff]
      %v172 = vunpack.c.l.b16 %v108
      %v173 = vunpack.c.h.b16 %v108
      %v174 = vunpack.c.l.b16 %v109
      %v175 = vunpack.c.h.b16 %v109
      %v176 = vunpack.c.l.b16 %v110
      %v177 = vunpack.c.h.b16 %v110
      %v178 = vunpack.c.l.b16 %v111
      %v179 = vunpack.c.h.b16 %v111
      %v180 = vunpack.c.l.b16 %v112
      %v181 = vunpack.c.h.b16 %v112
      %v182 = vunpack.c.l.b16 %v113
      %v183 = vunpack.c.h.b16 %v113
      %v184 = vunpack.c.l.b16 %v114
      %v185 = vunpack.c.h.b16 %v114
      %v186 = vunpack.c.l.b16 %v115
      %v187 = vunpack.c.h.b16 %v115
      %v188 = vunpack.c.l.b16 %v116
      %v189 = vunpack.c.h.b16 %v116
      %v190 = vunpack.c.l.b16 %v117
      %v191 = vunpack.c.h.b16 %v117
      %v192 = vunpack.c.l.b16 %v118
      %v193 = vunpack.c.h.b16 %v118
      %v194 = vunpack.c.l.b16 %v119
      %v195 = vunpack.c.h.b16 %v119
      %v196 = vunpack.c.l.b16 %v120
      %v197 = vunpack.c.h.b16 %v120
      %v198 = vunpack.c.l.b16 %v121
      %v199 = vunpack.c.h.b16 %v121
      %v200 = vunpack.c.l.b16 %v122
      %v201 = vunpack.c.h.b16 %v122
      %v202 = vunpack.c.l.b16 %v123
      %v203 = vunpack.c.h.b16 %v123
      %v204 = vunpack.c.l.b16 %v124
      %v205 = vunpack.c.h.b16 %v124
      %v206 = vunpack.c.l.b16 %v125
      %v207 = vunpack.c.h.b16 %v125
      %v208 = vunpack.c.l.b16 %v126
      %v209 = vunpack.c.h.b16 %v126
      %v210 = vunpack.c.l.b16 %v127
      %v211 = vunpack.c.h.b16 %v127
      %v212 = vunpack.c.l.b16 %v128
      %v213 = vunpack.c.h.b16 %v128
      %v214 = vunpack.c.l.b16 %v129
      %v215 = vunpack.c.h.b16 %v129
      %v216 = vunpack.c.l.b16 %v130
      %v217 = vunpack.c.h.b16 %v130
      %v218 = vunpack.c.l.b16 %v131
      %v219 = vunpack.c.h.b16 %v131
      %v220 = vunpack.c.l.b16 %v132
      %v221 = vunpack.c.h.b16 %v132
      %v222 = vunpack.c.l.b16 %v133
      %v223 = vunpack.c.h.b16 %v133
      %v224 = vunpack.c.l.b16 %v134
      %v225 = vunpack.c.h.b16 %v134
      %v226 = vunpack.c.l.b16 %v135
      %v227 = vunpack.c.h.b16 %v135
      %v228 = vunpack.c.l.b16 %v136
      %v229 = vunpack.c.h.b16 %v136
      %v230 = vunpack.c.l.b16 %v137
      %v231 = vunpack.c.h.b16 %v137
      %v232 = vunpack.c.l.b16 %v138
      %v233 = vunpack.c.h.b16 %v138
      %v234 = vunpack.c.l.b16 %v139
      %v235 = vunpack.c.h.b16 %v139
      %v236 = vpack.c.b16 %v176, %v172
      %v237 = vpack.c.b16 %v177, %v173
      %v238 = vpack.c.b16 %v178, %v174
      %v239 = vpack.c.b16 %v179, %v175
      %v240 = vpack.c.b16 %v184, %v180
      %v241 = vpack.c.b16 %v185, %v181
      %v242 = vpack.c.b16 %v186, %v182
      %v243 = vpack.c.b16 %v187, %v183
      %v244 = vpack.c.b16 %v192, %v188
      %v245 = vpack.c.b16 %v193, %v189
      %v246 = vpack.c.b16 %v194, %v190
      %v247 = vpack.c.b16 %v195, %v191
      %v248 = vpack.c.b16 %v200, %v196
      %v249 = vpack.c.b16 %v201, %v197
      %v250 = vpack.c.b16 %v202, %v198
      %v251 = vpack.c.b16 %v203, %v199
      %v252 = vpack.c.b16 %v208, %v204
      %v253 = vpack.c.b16 %v209, %v205
      %v254 = vpack.c.b16 %v210, %v206
      %v255 = vpack.c.b16 %v211, %v207
      %v256 = vpack.c.b16 %v216, %v212
      %v257 = vpack.c.b16 %v217, %v213
      %v258 = vpack.c.b16 %v218, %v214
      %v259 = vpack.c.b16 %v219, %v215
      %v260 = vpack.c.b16 %v224, %v220
      %v261 = vpack.c.b16 %v225, %v221
      %v262 = vpack.c.b16 %v226, %v222
      %v263 = vpack.c.b16 %v227, %v223
      %v264 = vpack.c.b16 %v232, %v228
      %v265 = vpack.c.b16 %v233, %v229
      %v266 = vpack.c.b16 %v234, %v230
      %v267 = vpack.c.b16 %v235, %v231
      %300 = vmatpush.bf16.msra.mxu0 %v264
      %301 = vmatpush.bf16.msra.mxu0 %v260
      %302 = vmatpush.bf16.msra.mxu0 %v256
      %303 = vmatpush.bf16.msra.mxu0 %v252
      %304 = vmatpush.bf16.msra.mxu0 %v248
      %305 = vmatpush.bf16.msra.mxu0 %v244
      %306 = vmatpush.bf16.msra.mxu0 %v240
      %307 = vmatpush.bf16.msra.mxu0 %v236
      %308 = vmatmul.bf16.gmra.mxu0 %v107
      %v309 = vpop.f32.mrf.mxu0
      %v310 = vadd.f32 0.0, %v309
      %v311 = vpop.f32.mrf.mxu0
      %312 = vdwg.mxu0
      %313 = vmatpush.bf16.msra.mxu0 %v265
      %314 = vmatpush.bf16.msra.mxu0 %v261
      %315 = vmatpush.bf16.msra.mxu0 %v257
      %316 = vmatpush.bf16.msra.mxu0 %v253
      %317 = vmatpush.bf16.msra.mxu0 %v249
      %318 = vmatpush.bf16.msra.mxu0 %v245
      %319 = vmatpush.bf16.msra.mxu0 %v241
      %320 = vmatpush.bf16.msra.mxu0 %v237
      %321 = vmatmul.bf16.gmra.mxu0 %v107
      %v322 = vpop.f32.mrf.mxu0
      %v323 = vadd.f32 0.0, %v322
      %v324 = vpop.f32.mrf.mxu0
      %325 = vdwg.mxu0
      %326 = vmatpush.bf16.msra.mxu0 %v266
      %327 = vmatpush.bf16.msra.mxu0 %v262
      %328 = vmatpush.bf16.msra.mxu0 %v258
      %329 = vmatpush.bf16.msra.mxu0 %v254
      %330 = vmatpush.bf16.msra.mxu0 %v250
      %331 = vmatpush.bf16.msra.mxu0 %v246
      %332 = vmatpush.bf16.msra.mxu0 %v242
      %333 = vmatpush.bf16.msra.mxu0 %v238
      %334 = vmatmul.bf16.gmra.mxu0 %v107
      %v335 = vpop.f32.mrf.mxu0
      %v336 = vadd.f32 0.0, %v335
      %v337 = vpop.f32.mrf.mxu0
      %338 = vdwg.mxu0
      %339 = vmatpush.bf16.msra.mxu0 %v267
      %340 = vmatpush.bf16.msra.mxu0 %v263
      %341 = vmatpush.bf16.msra.mxu0 %v259
      %342 = vmatpush.bf16.msra.mxu0 %v255
      %343 = vmatpush.bf16.msra.mxu0 %v251
      %344 = vmatpush.bf16.msra.mxu0 %v247
      %345 = vmatpush.bf16.msra.mxu0 %v243
      %346 = vmatpush.bf16.msra.mxu0 %v239
      %347 = vmatmul.bf16.gmra.mxu0 %v107
      %v348 = vpop.f32.mrf.mxu0
      %v349 = vadd.f32 0.0, %v348
      %v350 = vpop.f32.mrf.mxu0
      %351 = vdwg.mxu0
      %v352 = vadd.f32 %v102, %v310
      %v353 = vadd.f32 %v103, %v323
      %v354 = vadd.f32 %v104, %v336
      %v355 = vadd.f32 %v105, %v349
      %v356 = vxor.u32 %v352, 2147483648
      %v357 = vmul.f32 %v356, 1.442695
      %v358 = vpow.pop %v357
      %v359 = vadd.f32 %v358, 1.0
      %v360 = vrcp.pop %v359
      %v361 = vmul.f32 %v359, %v360
      %v362 = vsub.f32 1.0, %v361
      %v363 = vmul.f32 %v360, %v362
      %v364 = vadd.f32 %v360, %v363
      %vm365 = vweird.f32 %v359
      %vm366 = vweird.f32 %v360
      %vm367 = vmor %vm365, %vm366
      %v368 = vsel %vm367, %v360, %v364
      %v369 = vand.u32 2147483647, %v359
      %vm370 = vcmp.eq.f32.partialorder %v369, 8.507059e+37
      %v371 = vand.u32 %v359, 2147483648
      %v372 = vor.u32 1.1754944e-38, %v371
      %v373 = vsel %vm370, %v372, %v368
      %v374 = vmul.f32 1.0, %v373
      %v375 = vxor.u32 %v353, 2147483648
      %v376 = vmul.f32 %v375, 1.442695
      %v377 = vpow.pop %v376
      %v378 = vadd.f32 %v377, 1.0
      %v379 = vrcp.pop %v378
      %v380 = vmul.f32 %v378, %v379
      %v381 = vsub.f32 1.0, %v380
      %v382 = vmul.f32 %v379, %v381
      %v383 = vadd.f32 %v379, %v382
      %vm384 = vweird.f32 %v378
      %vm385 = vweird.f32 %v379
      %vm386 = vmor %vm384, %vm385
      %v387 = vsel %vm386, %v379, %v383
      %v388 = vand.u32 2147483647, %v378
      %vm389 = vcmp.eq.f32.partialorder %v388, 8.507059e+37
      %v390 = vand.u32 %v378, 2147483648
      %v391 = vor.u32 1.1754944e-38, %v390
      %v392 = vsel %vm389, %v391, %v387
      %v393 = vmul.f32 1.0, %v392
      %v394 = vtanh.pop %v354
      %v395 = vxor.u32 %v355, 2147483648
      %v396 = vmul.f32 %v395, 1.442695
      %v397 = vpow.pop %v396
      %v398 = vadd.f32 %v397, 1.0
      %v399 = vrcp.pop %v398
      %v400 = vmul.f32 %v398, %v399
      %v401 = vsub.f32 1.0, %v400
      %v402 = vmul.f32 %v399, %v401
      %v403 = vadd.f32 %v399, %v402
      %vm404 = vweird.f32 %v398
      %vm405 = vweird.f32 %v399
      %vm406 = vmor %vm404, %vm405
      %v407 = vsel %vm406, %v399, %v403
      %v408 = vand.u32 2147483647, %v398
      %vm409 = vcmp.eq.f32.partialorder %v408, 8.507059e+37
      %v410 = vand.u32 %v398, 2147483648
      %v411 = vor.u32 1.1754944e-38, %v410
      %v412 = vsel %vm409, %v411, %v407
      %v413 = vmul.f32 1.0, %v412
      %v414 = vld [vmem:[#allocation3] sm:$0xff]
      %v415 = vmul.f32 %v393, %v414
      %v416 = vmul.f32 %v374, %v394
      %v417 = vadd.f32 %v415, %v416
      %v418 = vtanh.pop %v417
      %v419 = vmul.f32 %v413, %v418
      %v420 = vsel %vm101, 1, 0
      %421 = vset.pattern.permute.xlu0 0
      %422 = vperm.xlu0 %421, %v420
      %v423 = vpop.permute.xlu0 %422
      %vm424 = vcmp.eq.s32.totalorder %v423, 1
      %v425 = vsel %vm424, %v419, %v106
      %426 = vst [vmem:[#allocation2] sm:$0xff] %v425
      %v427 = vld [vmem:[#allocation3] sm:$0xff]
      %v428 = vsel %vm424, %v417, %v427
      %429 = vst [vmem:[#allocation3] sm:$0xff] %v428
      %v430 = vld [vmem:[#allocation11] sm:$0xff]
      %v431 = vld [vmem:[#allocation11 + $0x8] sm:$0xff]
      %v432 = vstv %s97
      %vm433 = vcmp.lt.s32.totalorder %v432, %v86
      %v434 = vunpack.c.l.bf16 %v430
      %v435 = vunpack.c.h.bf16 %v430
      %v436 = vunpack.c.l.bf16 %v431
      %v437 = vunpack.c.h.bf16 %v431
      %v438 = vld [vmem:[#allocation4] sm:$0xff]
      %v439 = vpack.c.bf16 %v438, %v438
      %v440 = vld [vmem:[#allocation13] sm:$0xff]
      %v441 = vld [vmem:[#allocation13 + $0x8] sm:$0xff]
      %v442 = vld [vmem:[#allocation13 + $0x10] sm:$0xff]
      %v443 = vld [vmem:[#allocation13 + $0x18] sm:$0xff]
      %v444 = vld [vmem:[#allocation13 + $0x20] sm:$0xff]
      %v445 = vld [vmem:[#allocation13 + $0x28] sm:$0xff]
      %v446 = vld [vmem:[#allocation13 + $0x30] sm:$0xff]
      %v447 = vld [vmem:[#allocation13 + $0x38] sm:$0xff]
      %v448 = vld [vmem:[#allocation13 + $0x40] sm:$0xff]
      %v449 = vld [vmem:[#allocation13 + $0x48] sm:$0xff]
      %v450 = vld [vmem:[#allocation13 + $0x50] sm:$0xff]
      %v451 = vld [vmem:[#allocation13 + $0x58] sm:$0xff]
      %v452 = vld [vmem:[#allocation13 + $0x60] sm:$0xff]
      %v453 = vld [vmem:[#allocation13 + $0x68] sm:$0xff]
      %v454 = vld [vmem:[#allocation13 + $0x70] sm:$0xff]
      %v455 = vld [vmem:[#allocation13 + $0x78] sm:$0xff]
      %v456 = vld [vmem:[#allocation13 + $0x80] sm:$0xff]
      %v457 = vld [vmem:[#allocation13 + $0x88] sm:$0xff]
      %v458 = vld [vmem:[#allocation13 + $0x90] sm:$0xff]
      %v459 = vld [vmem:[#allocation13 + $0x98] sm:$0xff]
      %v460 = vld [vmem:[#allocation13 + $0xa0] sm:$0xff]
      %v461 = vld [vmem:[#allocation13 + $0xa8] sm:$0xff]
      %v462 = vld [vmem:[#allocation13 + $0xb0] sm:$0xff]
      %v463 = vld [vmem:[#allocation13 + $0xb8] sm:$0xff]
      %v464 = vld [vmem:[#allocation13 + $0xc0] sm:$0xff]
      %v465 = vld [vmem:[#allocation13 + $0xc8] sm:$0xff]
      %v466 = vld [vmem:[#allocation13 + $0xd0] sm:$0xff]
      %v467 = vld [vmem:[#allocation13 + $0xd8] sm:$0xff]
      %v468 = vld [vmem:[#allocation13 + $0xe0] sm:$0xff]
      %v469 = vld [vmem:[#allocation13 + $0xe8] sm:$0xff]
      %v470 = vld [vmem:[#allocation13 + $0xf0] sm:$0xff]
      %v471 = vld [vmem:[#allocation13 + $0xf8] sm:$0xff]
      %v504 = vunpack.c.l.b16 %v440
      %v505 = vunpack.c.h.b16 %v440
      %v506 = vunpack.c.l.b16 %v441
      %v507 = vunpack.c.h.b16 %v441
      %v508 = vunpack.c.l.b16 %v442
      %v509 = vunpack.c.h.b16 %v442
      %v510 = vunpack.c.l.b16 %v443
      %v511 = vunpack.c.h.b16 %v443
      %v512 = vunpack.c.l.b16 %v444
      %v513 = vunpack.c.h.b16 %v444
      %v514 = vunpack.c.l.b16 %v445
      %v515 = vunpack.c.h.b16 %v445
      %v516 = vunpack.c.l.b16 %v446
      %v517 = vunpack.c.h.b16 %v446
      %v518 = vunpack.c.l.b16 %v447
      %v519 = vunpack.c.h.b16 %v447
      %v520 = vunpack.c.l.b16 %v448
      %v521 = vunpack.c.h.b16 %v448
      %v522 = vunpack.c.l.b16 %v449
      %v523 = vunpack.c.h.b16 %v449
      %v524 = vunpack.c.l.b16 %v450
      %v525 = vunpack.c.h.b16 %v450
      %v526 = vunpack.c.l.b16 %v451
      %v527 = vunpack.c.h.b16 %v451
      %v528 = vunpack.c.l.b16 %v452
      %v529 = vunpack.c.h.b16 %v452
      %v530 = vunpack.c.l.b16 %v453
      %v531 = vunpack.c.h.b16 %v453
      %v532 = vunpack.c.l.b16 %v454
      %v533 = vunpack.c.h.b16 %v454
      %v534 = vunpack.c.l.b16 %v455
      %v535 = vunpack.c.h.b16 %v455
      %v536 = vunpack.c.l.b16 %v456
      %v537 = vunpack.c.h.b16 %v456
      %v538 = vunpack.c.l.b16 %v457
      %v539 = vunpack.c.h.b16 %v457
      %v540 = vunpack.c.l.b16 %v458
      %v541 = vunpack.c.h.b16 %v458
      %v542 = vunpack.c.l.b16 %v459
      %v543 = vunpack.c.h.b16 %v459
      %v544 = vunpack.c.l.b16 %v460
      %v545 = vunpack.c.h.b16 %v460
      %v546 = vunpack.c.l.b16 %v461
      %v547 = vunpack.c.h.b16 %v461
      %v548 = vunpack.c.l.b16 %v462
      %v549 = vunpack.c.h.b16 %v462
      %v550 = vunpack.c.l.b16 %v463
      %v551 = vunpack.c.h.b16 %v463
      %v552 = vunpack.c.l.b16 %v464
      %v553 = vunpack.c.h.b16 %v464
      %v554 = vunpack.c.l.b16 %v465
      %v555 = vunpack.c.h.b16 %v465
      %v556 = vunpack.c.l.b16 %v466
      %v557 = vunpack.c.h.b16 %v466
      %v558 = vunpack.c.l.b16 %v467
      %v559 = vunpack.c.h.b16 %v467
      %v560 = vunpack.c.l.b16 %v468
      %v561 = vunpack.c.h.b16 %v468
      %v562 = vunpack.c.l.b16 %v469
      %v563 = vunpack.c.h.b16 %v469
      %v564 = vunpack.c.l.b16 %v470
      %v565 = vunpack.c.h.b16 %v470
      %v566 = vunpack.c.l.b16 %v471
      %v567 = vunpack.c.h.b16 %v471
      %v568 = vpack.c.b16 %v508, %v504
      %v569 = vpack.c.b16 %v509, %v505
      %v570 = vpack.c.b16 %v510, %v506
      %v571 = vpack.c.b16 %v511, %v507
      %v572 = vpack.c.b16 %v516, %v512
      %v573 = vpack.c.b16 %v517, %v513
      %v574 = vpack.c.b16 %v518, %v514
      %v575 = vpack.c.b16 %v519, %v515
      %v576 = vpack.c.b16 %v524, %v520
      %v577 = vpack.c.b16 %v525, %v521
      %v578 = vpack.c.b16 %v526, %v522
      %v579 = vpack.c.b16 %v527, %v523
      %v580 = vpack.c.b16 %v532, %v528
      %v581 = vpack.c.b16 %v533, %v529
      %v582 = vpack.c.b16 %v534, %v530
      %v583 = vpack.c.b16 %v535, %v531
      %v584 = vpack.c.b16 %v540, %v536
      %v585 = vpack.c.b16 %v541, %v537
      %v586 = vpack.c.b16 %v542, %v538
      %v587 = vpack.c.b16 %v543, %v539
      %v588 = vpack.c.b16 %v548, %v544
      %v589 = vpack.c.b16 %v549, %v545
      %v590 = vpack.c.b16 %v550, %v546
      %v591 = vpack.c.b16 %v551, %v547
      %v592 = vpack.c.b16 %v556, %v552
      %v593 = vpack.c.b16 %v557, %v553
      %v594 = vpack.c.b16 %v558, %v554
      %v595 = vpack.c.b16 %v559, %v555
      %v596 = vpack.c.b16 %v564, %v560
      %v597 = vpack.c.b16 %v565, %v561
      %v598 = vpack.c.b16 %v566, %v562
      %v599 = vpack.c.b16 %v567, %v563
      %632 = vmatpush.bf16.msra.mxu0 %v596
      %633 = vmatpush.bf16.msra.mxu0 %v592
      %634 = vmatpush.bf16.msra.mxu0 %v588
      %635 = vmatpush.bf16.msra.mxu0 %v584
      %636 = vmatpush.bf16.msra.mxu0 %v580
      %637 = vmatpush.bf16.msra.mxu0 %v576
      %638 = vmatpush.bf16.msra.mxu0 %v572
      %639 = vmatpush.bf16.msra.mxu0 %v568
      %640 = vmatmul.bf16.gmra.mxu0 %v439
      %v641 = vpop.f32.mrf.mxu0
      %v642 = vadd.f32 0.0, %v641
      %v643 = vpop.f32.mrf.mxu0
      %644 = vdwg.mxu0
      %645 = vmatpush.bf16.msra.mxu0 %v597
      %646 = vmatpush.bf16.msra.mxu0 %v593
      %647 = vmatpush.bf16.msra.mxu0 %v589
      %648 = vmatpush.bf16.msra.mxu0 %v585
      %649 = vmatpush.bf16.msra.mxu0 %v581
      %650 = vmatpush.bf16.msra.mxu0 %v577
      %651 = vmatpush.bf16.msra.mxu0 %v573
      %652 = vmatpush.bf16.msra.mxu0 %v569
      %653 = vmatmul.bf16.gmra.mxu0 %v439
      %v654 = vpop.f32.mrf.mxu0
      %v655 = vadd.f32 0.0, %v654
      %v656 = vpop.f32.mrf.mxu0
      %657 = vdwg.mxu0
      %658 = vmatpush.bf16.msra.mxu0 %v598
      %659 = vmatpush.bf16.msra.mxu0 %v594
      %660 = vmatpush.bf16.msra.mxu0 %v590
      %661 = vmatpush.bf16.msra.mxu0 %v586
      %662 = vmatpush.bf16.msra.mxu0 %v582
      %663 = vmatpush.bf16.msra.mxu0 %v578
      %664 = vmatpush.bf16.msra.mxu0 %v574
      %665 = vmatpush.bf16.msra.mxu0 %v570
      %666 = vmatmul.bf16.gmra.mxu0 %v439
      %v667 = vpop.f32.mrf.mxu0
      %v668 = vadd.f32 0.0, %v667
      %v669 = vpop.f32.mrf.mxu0
      %670 = vdwg.mxu0
      %671 = vmatpush.bf16.msra.mxu0 %v599
      %672 = vmatpush.bf16.msra.mxu0 %v595
      %673 = vmatpush.bf16.msra.mxu0 %v591
      %674 = vmatpush.bf16.msra.mxu0 %v587
      %675 = vmatpush.bf16.msra.mxu0 %v583
      %676 = vmatpush.bf16.msra.mxu0 %v579
      %677 = vmatpush.bf16.msra.mxu0 %v575
      %678 = vmatpush.bf16.msra.mxu0 %v571
      %679 = vmatmul.bf16.gmra.mxu0 %v439
      %v680 = vpop.f32.mrf.mxu0
      %v681 = vadd.f32 0.0, %v680
      %v682 = vpop.f32.mrf.mxu0
      %683 = vdwg.mxu0
      %v684 = vadd.f32 %v434, %v642
      %v685 = vadd.f32 %v435, %v655
      %v686 = vadd.f32 %v436, %v668
      %v687 = vadd.f32 %v437, %v681
      %v688 = vxor.u32 %v684, 2147483648
      %v689 = vmul.f32 %v688, 1.442695
      %v690 = vpow.pop %v689
      %v691 = vadd.f32 %v690, 1.0
      %v692 = vrcp.pop %v691
      %v693 = vmul.f32 %v691, %v692
      %v694 = vsub.f32 1.0, %v693
      %v695 = vmul.f32 %v692, %v694
      %v696 = vadd.f32 %v692, %v695
      %vm697 = vweird.f32 %v691
      %vm698 = vweird.f32 %v692
      %vm699 = vmor %vm697, %vm698
      %v700 = vsel %vm699, %v692, %v696
      %v701 = vand.u32 2147483647, %v691
      %vm702 = vcmp.eq.f32.partialorder %v701, 8.507059e+37
      %v703 = vand.u32 %v691, 2147483648
      %v704 = vor.u32 1.1754944e-38, %v703
      %v705 = vsel %vm702, %v704, %v700
      %v706 = vmul.f32 1.0, %v705
      %v707 = vxor.u32 %v685, 2147483648
      %v708 = vmul.f32 %v707, 1.442695
      %v709 = vpow.pop %v708
      %v710 = vadd.f32 %v709, 1.0
      %v711 = vrcp.pop %v710
      %v712 = vmul.f32 %v710, %v711
      %v713 = vsub.f32 1.0, %v712
      %v714 = vmul.f32 %v711, %v713
      %v715 = vadd.f32 %v711, %v714
      %vm716 = vweird.f32 %v710
      %vm717 = vweird.f32 %v711
      %vm718 = vmor %vm716, %vm717
      %v719 = vsel %vm718, %v711, %v715
      %v720 = vand.u32 2147483647, %v710
      %vm721 = vcmp.eq.f32.partialorder %v720, 8.507059e+37
      %v722 = vand.u32 %v710, 2147483648
      %v723 = vor.u32 1.1754944e-38, %v722
      %v724 = vsel %vm721, %v723, %v719
      %v725 = vmul.f32 1.0, %v724
      %v726 = vtanh.pop %v686
      %v727 = vxor.u32 %v687, 2147483648
      %v728 = vmul.f32 %v727, 1.442695
      %v729 = vpow.pop %v728
      %v730 = vadd.f32 %v729, 1.0
      %v731 = vrcp.pop %v730
      %v732 = vmul.f32 %v730, %v731
      %v733 = vsub.f32 1.0, %v732
      %v734 = vmul.f32 %v731, %v733
      %v735 = vadd.f32 %v731, %v734
      %vm736 = vweird.f32 %v730
      %vm737 = vweird.f32 %v731
      %vm738 = vmor %vm736, %vm737
      %v739 = vsel %vm738, %v731, %v735
      %v740 = vand.u32 2147483647, %v730
      %vm741 = vcmp.eq.f32.partialorder %v740, 8.507059e+37
      %v742 = vand.u32 %v730, 2147483648
      %v743 = vor.u32 1.1754944e-38, %v742
      %v744 = vsel %vm741, %v743, %v739
      %v745 = vmul.f32 1.0, %v744
      %v746 = vld [vmem:[#allocation5] sm:$0xff]
      %v747 = vmul.f32 %v725, %v746
      %v748 = vmul.f32 %v706, %v726
      %v749 = vadd.f32 %v747, %v748
      %v750 = vtanh.pop %v749
      %v751 = vmul.f32 %v745, %v750
      %v752 = vsel %vm433, 1, 0
      %753 = vset.pattern.permute.xlu0 0
      %754 = vperm.xlu0 %753, %v752
      %v755 = vpop.permute.xlu0 %754
      %vm756 = vcmp.eq.s32.totalorder %v755, 1
      %v757 = vsel %vm756, %v751, %v438
      %758 = vst [vmem:[#allocation4] sm:$0xff] %v757
      %v759 = vld [vmem:[#allocation5] sm:$0xff]
      %v760 = vsel %vm756, %v749, %v759
      %761 = vst [vmem:[#allocation5] sm:$0xff] %v760
      %s762 = sadd.s32 %s87, 1
      %s763 = ssub.s32 6, %s87
      %s764 = scalar_lea.vmem [#allocation9], 16
      %v765 = vld [vmem:[%s764] sm:$0xff]
      %v766 = vld [vmem:[%s764 + $0x8] sm:$0xff]
      %v767 = vstv %s762
      %vm768 = vcmp.lt.s32.totalorder %v767, %v86
      %v769 = vunpack.c.l.bf16 %v765
      %v770 = vunpack.c.h.bf16 %v765
      %v771 = vunpack.c.l.bf16 %v766
      %v772 = vunpack.c.h.bf16 %v766
      %v773 = vld [vmem:[#allocation2] sm:$0xff]
      %v774 = vpack.c.bf16 %v773, %v773
      %v775 = vld [vmem:[%s4] sm:$0xff]
      %v776 = vld [vmem:[%s4 + $0x8] sm:$0xff]
      %v777 = vld [vmem:[%s4 + $0x10] sm:$0xff]
      %v778 = vld [vmem:[%s4 + $0x18] sm:$0xff]
      %v779 = vld [vmem:[%s4 + $0x20] sm:$0xff]
      %v780 = vld [vmem:[%s4 + $0x28] sm:$0xff]
      %v781 = vld [vmem:[%s4 + $0x30] sm:$0xff]
      %v782 = vld [vmem:[%s4 + $0x38] sm:$0xff]
      %v783 = vld [vmem:[%s4 + $0x40] sm:$0xff]
      %v784 = vld [vmem:[%s4 + $0x48] sm:$0xff]
      %v785 = vld [vmem:[%s4 + $0x50] sm:$0xff]
      %v786 = vld [vmem:[%s4 + $0x58] sm:$0xff]
      %v787 = vld [vmem:[%s4 + $0x60] sm:$0xff]
      %v788 = vld [vmem:[%s4 + $0x68] sm:$0xff]
      %v789 = vld [vmem:[%s4 + $0x70] sm:$0xff]
      %v790 = vld [vmem:[%s4 + $0x78] sm:$0xff]
      %v791 = vld [vmem:[%s4 + $0x80] sm:$0xff]
      %v792 = vld [vmem:[%s4 + $0x88] sm:$0xff]
      %v793 = vld [vmem:[%s4 + $0x90] sm:$0xff]
      %v794 = vld [vmem:[%s4 + $0x98] sm:$0xff]
      %v795 = vld [vmem:[%s4 + $0xa0] sm:$0xff]
      %v796 = vld [vmem:[%s4 + $0xa8] sm:$0xff]
      %v797 = vld [vmem:[%s4 + $0xb0] sm:$0xff]
      %v798 = vld [vmem:[%s4 + $0xb8] sm:$0xff]
      %v799 = vld [vmem:[%s4 + $0xc0] sm:$0xff]
      %v800 = vld [vmem:[%s4 + $0xc8] sm:$0xff]
      %v801 = vld [vmem:[%s4 + $0xd0] sm:$0xff]
      %v802 = vld [vmem:[%s4 + $0xd8] sm:$0xff]
      %v803 = vld [vmem:[%s4 + $0xe0] sm:$0xff]
      %v804 = vld [vmem:[%s4 + $0xe8] sm:$0xff]
      %v805 = vld [vmem:[%s4 + $0xf0] sm:$0xff]
      %v806 = vld [vmem:[%s4 + $0xf8] sm:$0xff]
      %v839 = vunpack.c.l.b16 %v775
      %v840 = vunpack.c.h.b16 %v775
      %v841 = vunpack.c.l.b16 %v776
      %v842 = vunpack.c.h.b16 %v776
      %v843 = vunpack.c.l.b16 %v777
      %v844 = vunpack.c.h.b16 %v777
      %v845 = vunpack.c.l.b16 %v778
      %v846 = vunpack.c.h.b16 %v778
      %v847 = vunpack.c.l.b16 %v779
      %v848 = vunpack.c.h.b16 %v779
      %v849 = vunpack.c.l.b16 %v780
      %v850 = vunpack.c.h.b16 %v780
      %v851 = vunpack.c.l.b16 %v781
      %v852 = vunpack.c.h.b16 %v781
      %v853 = vunpack.c.l.b16 %v782
      %v854 = vunpack.c.h.b16 %v782
      %v855 = vunpack.c.l.b16 %v783
      %v856 = vunpack.c.h.b16 %v783
      %v857 = vunpack.c.l.b16 %v784
      %v858 = vunpack.c.h.b16 %v784
      %v859 = vunpack.c.l.b16 %v785
      %v860 = vunpack.c.h.b16 %v785
      %v861 = vunpack.c.l.b16 %v786
      %v862 = vunpack.c.h.b16 %v786
      %v863 = vunpack.c.l.b16 %v787
      %v864 = vunpack.c.h.b16 %v787
      %v865 = vunpack.c.l.b16 %v788
      %v866 = vunpack.c.h.b16 %v788
      %v867 = vunpack.c.l.b16 %v789
      %v868 = vunpack.c.h.b16 %v789
      %v869 = vunpack.c.l.b16 %v790
      %v870 = vunpack.c.h.b16 %v790
      %v871 = vunpack.c.l.b16 %v791
      %v872 = vunpack.c.h.b16 %v791
      %v873 = vunpack.c.l.b16 %v792
      %v874 = vunpack.c.h.b16 %v792
      %v875 = vunpack.c.l.b16 %v793
      %v876 = vunpack.c.h.b16 %v793
      %v877 = vunpack.c.l.b16 %v794
      %v878 = vunpack.c.h.b16 %v794
      %v879 = vunpack.c.l.b16 %v795
      %v880 = vunpack.c.h.b16 %v795
      %v881 = vunpack.c.l.b16 %v796
      %v882 = vunpack.c.h.b16 %v796
      %v883 = vunpack.c.l.b16 %v797
      %v884 = vunpack.c.h.b16 %v797
      %v885 = vunpack.c.l.b16 %v798
      %v886 = vunpack.c.h.b16 %v798
      %v887 = vunpack.c.l.b16 %v799
      %v888 = vunpack.c.h.b16 %v799
      %v889 = vunpack.c.l.b16 %v800
      %v890 = vunpack.c.h.b16 %v800
      %v891 = vunpack.c.l.b16 %v801
      %v892 = vunpack.c.h.b16 %v801
      %v893 = vunpack.c.l.b16 %v802
      %v894 = vunpack.c.h.b16 %v802
      %v895 = vunpack.c.l.b16 %v803
      %v896 = vunpack.c.h.b16 %v803
      %v897 = vunpack.c.l.b16 %v804
      %v898 = vunpack.c.h.b16 %v804
      %v899 = vunpack.c.l.b16 %v805
      %v900 = vunpack.c.h.b16 %v805
      %v901 = vunpack.c.l.b16 %v806
      %v902 = vunpack.c.h.b16 %v806
      %v903 = vpack.c.b16 %v843, %v839
      %v904 = vpack.c.b16 %v844, %v840
      %v905 = vpack.c.b16 %v845, %v841
      %v906 = vpack.c.b16 %v846, %v842
      %v907 = vpack.c.b16 %v851, %v847
      %v908 = vpack.c.b16 %v852, %v848
      %v909 = vpack.c.b16 %v853, %v849
      %v910 = vpack.c.b16 %v854, %v850
      %v911 = vpack.c.b16 %v859, %v855
      %v912 = vpack.c.b16 %v860, %v856
      %v913 = vpack.c.b16 %v861, %v857
      %v914 = vpack.c.b16 %v862, %v858
      %v915 = vpack.c.b16 %v867, %v863
      %v916 = vpack.c.b16 %v868, %v864
      %v917 = vpack.c.b16 %v869, %v865
      %v918 = vpack.c.b16 %v870, %v866
      %v919 = vpack.c.b16 %v875, %v871
      %v920 = vpack.c.b16 %v876, %v872
      %v921 = vpack.c.b16 %v877, %v873
      %v922 = vpack.c.b16 %v878, %v874
      %v923 = vpack.c.b16 %v883, %v879
      %v924 = vpack.c.b16 %v884, %v880
      %v925 = vpack.c.b16 %v885, %v881
      %v926 = vpack.c.b16 %v886, %v882
      %v927 = vpack.c.b16 %v891, %v887
      %v928 = vpack.c.b16 %v892, %v888
      %v929 = vpack.c.b16 %v893, %v889
      %v930 = vpack.c.b16 %v894, %v890
      %v931 = vpack.c.b16 %v899, %v895
      %v932 = vpack.c.b16 %v900, %v896
      %v933 = vpack.c.b16 %v901, %v897
      %v934 = vpack.c.b16 %v902, %v898
      %967 = vmatpush.bf16.msra.mxu0 %v931
      %968 = vmatpush.bf16.msra.mxu0 %v927
      %969 = vmatpush.bf16.msra.mxu0 %v923
      %970 = vmatpush.bf16.msra.mxu0 %v919
      %971 = vmatpush.bf16.msra.mxu0 %v915
      %972 = vmatpush.bf16.msra.mxu0 %v911
      %973 = vmatpush.bf16.msra.mxu0 %v907
      %974 = vmatpush.bf16.msra.mxu0 %v903
      %975 = vmatmul.bf16.gmra.mxu0 %v774
      %v976 = vpop.f32.mrf.mxu0
      %v977 = vadd.f32 0.0, %v976
      %v978 = vpop.f32.mrf.mxu0
      %979 = vdwg.mxu0
      %980 = vmatpush.bf16.msra.mxu0 %v932
      %981 = vmatpush.bf16.msra.mxu0 %v928
      %982 = vmatpush.bf16.msra.mxu0 %v924
      %983 = vmatpush.bf16.msra.mxu0 %v920
      %984 = vmatpush.bf16.msra.mxu0 %v916
      %985 = vmatpush.bf16.msra.mxu0 %v912
      %986 = vmatpush.bf16.msra.mxu0 %v908
      %987 = vmatpush.bf16.msra.mxu0 %v904
      %988 = vmatmul.bf16.gmra.mxu0 %v774
      %v989 = vpop.f32.mrf.mxu0
      %v990 = vadd.f32 0.0, %v989
      %v991 = vpop.f32.mrf.mxu0
      %992 = vdwg.mxu0
      %993 = vmatpush.bf16.msra.mxu0 %v933
      %994 = vmatpush.bf16.msra.mxu0 %v929
      %995 = vmatpush.bf16.msra.mxu0 %v925
      %996 = vmatpush.bf16.msra.mxu0 %v921
      %997 = vmatpush.bf16.msra.mxu0 %v917
      %998 = vmatpush.bf16.msra.mxu0 %v913
      %999 = vmatpush.bf16.msra.mxu0 %v909
      %1000 = vmatpush.bf16.msra.mxu0 %v905
      %1001 = vmatmul.bf16.gmra.mxu0 %v774
      %v1002 = vpop.f32.mrf.mxu0
      %v1003 = vadd.f32 0.0, %v1002
      %v1004 = vpop.f32.mrf.mxu0
      %1005 = vdwg.mxu0
      %1006 = vmatpush.bf16.msra.mxu0 %v934
      %1007 = vmatpush.bf16.msra.mxu0 %v930
      %1008 = vmatpush.bf16.msra.mxu0 %v926
      %1009 = vmatpush.bf16.msra.mxu0 %v922
      %1010 = vmatpush.bf16.msra.mxu0 %v918
      %1011 = vmatpush.bf16.msra.mxu0 %v914
      %1012 = vmatpush.bf16.msra.mxu0 %v910
      %1013 = vmatpush.bf16.msra.mxu0 %v906
      %1014 = vmatmul.bf16.gmra.mxu0 %v774
      %v1015 = vpop.f32.mrf.mxu0
      %v1016 = vadd.f32 0.0, %v1015
      %v1017 = vpop.f32.mrf.mxu0
      %1018 = vdwg.mxu0
      %v1019 = vadd.f32 %v769, %v977
      %v1020 = vadd.f32 %v770, %v990
      %v1021 = vadd.f32 %v771, %v1003
      %v1022 = vadd.f32 %v772, %v1016
      %v1023 = vxor.u32 %v1019, 2147483648
      %v1024 = vmul.f32 %v1023, 1.442695
      %v1025 = vpow.pop %v1024
      %v1026 = vadd.f32 %v1025, 1.0
      %v1027 = vrcp.pop %v1026
      %v1028 = vmul.f32 %v1026, %v1027
      %v1029 = vsub.f32 1.0, %v1028
      %v1030 = vmul.f32 %v1027, %v1029
      %v1031 = vadd.f32 %v1027, %v1030
      %vm1032 = vweird.f32 %v1026
      %vm1033 = vweird.f32 %v1027
      %vm1034 = vmor %vm1032, %vm1033
      %v1035 = vsel %vm1034, %v1027, %v1031
      %v1036 = vand.u32 2147483647, %v1026
      %vm1037 = vcmp.eq.f32.partialorder %v1036, 8.507059e+37
      %v1038 = vand.u32 %v1026, 2147483648
      %v1039 = vor.u32 1.1754944e-38, %v1038
      %v1040 = vsel %vm1037, %v1039, %v1035
      %v1041 = vmul.f32 1.0, %v1040
      %v1042 = vxor.u32 %v1020, 2147483648
      %v1043 = vmul.f32 %v1042, 1.442695
      %v1044 = vpow.pop %v1043
      %v1045 = vadd.f32 %v1044, 1.0
      %v1046 = vrcp.pop %v1045
      %v1047 = vmul.f32 %v1045, %v1046
      %v1048 = vsub.f32 1.0, %v1047
      %v1049 = vmul.f32 %v1046, %v1048
      %v1050 = vadd.f32 %v1046, %v1049
      %vm1051 = vweird.f32 %v1045
      %vm1052 = vweird.f32 %v1046
      %vm1053 = vmor %vm1051, %vm1052
      %v1054 = vsel %vm1053, %v1046, %v1050
      %v1055 = vand.u32 2147483647, %v1045
      %vm1056 = vcmp.eq.f32.partialorder %v1055, 8.507059e+37
      %v1057 = vand.u32 %v1045, 2147483648
      %v1058 = vor.u32 1.1754944e-38, %v1057
      %v1059 = vsel %vm1056, %v1058, %v1054
      %v1060 = vmul.f32 1.0, %v1059
      %v1061 = vtanh.pop %v1021
      %v1062 = vxor.u32 %v1022, 2147483648
      %v1063 = vmul.f32 %v1062, 1.442695
      %v1064 = vpow.pop %v1063
      %v1065 = vadd.f32 %v1064, 1.0
      %v1066 = vrcp.pop %v1065
      %v1067 = vmul.f32 %v1065, %v1066
      %v1068 = vsub.f32 1.0, %v1067
      %v1069 = vmul.f32 %v1066, %v1068
      %v1070 = vadd.f32 %v1066, %v1069
      %vm1071 = vweird.f32 %v1065
      %vm1072 = vweird.f32 %v1066
      %vm1073 = vmor %vm1071, %vm1072
      %v1074 = vsel %vm1073, %v1066, %v1070
      %v1075 = vand.u32 2147483647, %v1065
      %vm1076 = vcmp.eq.f32.partialorder %v1075, 8.507059e+37
      %v1077 = vand.u32 %v1065, 2147483648
      %v1078 = vor.u32 1.1754944e-38, %v1077
      %v1079 = vsel %vm1076, %v1078, %v1074
      %v1080 = vmul.f32 1.0, %v1079
      %v1081 = vld [vmem:[#allocation3] sm:$0xff]
      %v1082 = vmul.f32 %v1060, %v1081
      %v1083 = vmul.f32 %v1041, %v1061
      %v1084 = vadd.f32 %v1082, %v1083
      %v1085 = vtanh.pop %v1084
      %v1086 = vmul.f32 %v1080, %v1085
      %v1087 = vsel %vm768, 1, 0
      %1088 = vset.pattern.permute.xlu0 0
      %1089 = vperm.xlu0 %1088, %v1087
      %v1090 = vpop.permute.xlu0 %1089
      %vm1091 = vcmp.eq.s32.totalorder %v1090, 1
      %v1092 = vsel %vm1091, %v1086, %v773
      %1093 = vst [vmem:[#allocation2] sm:$0xff] %v1092
      %v1094 = vld [vmem:[#allocation3] sm:$0xff]
      %v1095 = vsel %vm1091, %v1084, %v1094
      %1096 = vst [vmem:[#allocation3] sm:$0xff] %v1095
      %s1097 = scalar_lea.vmem [#allocation11], 16
      %v1098 = vld [vmem:[%s1097] sm:$0xff]
      %v1099 = vld [vmem:[%s1097 + $0x8] sm:$0xff]
      %v1100 = vstv %s763
      %vm1101 = vcmp.lt.s32.totalorder %v1100, %v86
      %v1102 = vunpack.c.l.bf16 %v1098
      %v1103 = vunpack.c.h.bf16 %v1098
      %v1104 = vunpack.c.l.bf16 %v1099
      %v1105 = vunpack.c.h.bf16 %v1099
      %v1106 = vld [vmem:[#allocation4] sm:$0xff]
      %v1107 = vpack.c.bf16 %v1106, %v1106
      %v1108 = vld [vmem:[#allocation13] sm:$0xff]
      %v1109 = vld [vmem:[#allocation13 + $0x8] sm:$0xff]
      %v1110 = vld [vmem:[#allocation13 + $0x10] sm:$0xff]
      %v1111 = vld [vmem:[#allocation13 + $0x18] sm:$0xff]
      %v1112 = vld [vmem:[#allocation13 + $0x20] sm:$0xff]
      %v1113 = vld [vmem:[#allocation13 + $0x28] sm:$0xff]
      %v1114 = vld [vmem:[#allocation13 + $0x30] sm:$0xff]
      %v1115 = vld [vmem:[#allocation13 + $0x38] sm:$0xff]
      %v1116 = vld [vmem:[#allocation13 + $0x40] sm:$0xff]
      %v1117 = vld [vmem:[#allocation13 + $0x48] sm:$0xff]
      %v1118 = vld [vmem:[#allocation13 + $0x50] sm:$0xff]
      %v1119 = vld [vmem:[#allocation13 + $0x58] sm:$0xff]
      %v1120 = vld [vmem:[#allocation13 + $0x60] sm:$0xff]
      %v1121 = vld [vmem:[#allocation13 + $0x68] sm:$0xff]
      %v1122 = vld [vmem:[#allocation13 + $0x70] sm:$0xff]
      %v1123 = vld [vmem:[#allocation13 + $0x78] sm:$0xff]
      %v1124 = vld [vmem:[#allocation13 + $0x80] sm:$0xff]
      %v1125 = vld [vmem:[#allocation13 + $0x88] sm:$0xff]
      %v1126 = vld [vmem:[#allocation13 + $0x90] sm:$0xff]
      %v1127 = vld [vmem:[#allocation13 + $0x98] sm:$0xff]
      %v1128 = vld [vmem:[#allocation13 + $0xa0] sm:$0xff]
      %v1129 = vld [vmem:[#allocation13 + $0xa8] sm:$0xff]
      %v1130 = vld [vmem:[#allocation13 + $0xb0] sm:$0xff]
      %v1131 = vld [vmem:[#allocation13 + $0xb8] sm:$0xff]
      %v1132 = vld [vmem:[#allocation13 + $0xc0] sm:$0xff]
      %v1133 = vld [vmem:[#allocation13 + $0xc8] sm:$0xff]
      %v1134 = vld [vmem:[#allocation13 + $0xd0] sm:$0xff]
      %v1135 = vld [vmem:[#allocation13 + $0xd8] sm:$0xff]
      %v1136 = vld [vmem:[#allocation13 + $0xe0] sm:$0xff]
      %v1137 = vld [vmem:[#allocation13 + $0xe8] sm:$0xff]
      %v1138 = vld [vmem:[#allocation13 + $0xf0] sm:$0xff]
      %v1139 = vld [vmem:[#allocation13 + $0xf8] sm:$0xff]
      %v1172 = vunpack.c.l.b16 %v1108
      %v1173 = vunpack.c.h.b16 %v1108
      %v1174 = vunpack.c.l.b16 %v1109
      %v1175 = vunpack.c.h.b16 %v1109
      %v1176 = vunpack.c.l.b16 %v1110
      %v1177 = vunpack.c.h.b16 %v1110
      %v1178 = vunpack.c.l.b16 %v1111
      %v1179 = vunpack.c.h.b16 %v1111
      %v1180 = vunpack.c.l.b16 %v1112
      %v1181 = vunpack.c.h.b16 %v1112
      %v1182 = vunpack.c.l.b16 %v1113
      %v1183 = vunpack.c.h.b16 %v1113
      %v1184 = vunpack.c.l.b16 %v1114
      %v1185 = vunpack.c.h.b16 %v1114
      %v1186 = vunpack.c.l.b16 %v1115
      %v1187 = vunpack.c.h.b16 %v1115
      %v1188 = vunpack.c.l.b16 %v1116
      %v1189 = vunpack.c.h.b16 %v1116
      %v1190 = vunpack.c.l.b16 %v1117
      %v1191 = vunpack.c.h.b16 %v1117
      %v1192 = vunpack.c.l.b16 %v1118
      %v1193 = vunpack.c.h.b16 %v1118
      %v1194 = vunpack.c.l.b16 %v1119
      %v1195 = vunpack.c.h.b16 %v1119
      %v1196 = vunpack.c.l.b16 %v1120
      %v1197 = vunpack.c.h.b16 %v1120
      %v1198 = vunpack.c.l.b16 %v1121
      %v1199 = vunpack.c.h.b16 %v1121
      %v1200 = vunpack.c.l.b16 %v1122
      %v1201 = vunpack.c.h.b16 %v1122
      %v1202 = vunpack.c.l.b16 %v1123
      %v1203 = vunpack.c.h.b16 %v1123
      %v1204 = vunpack.c.l.b16 %v1124
      %v1205 = vunpack.c.h.b16 %v1124
      %v1206 = vunpack.c.l.b16 %v1125
      %v1207 = vunpack.c.h.b16 %v1125
      %v1208 = vunpack.c.l.b16 %v1126
      %v1209 = vunpack.c.h.b16 %v1126
      %v1210 = vunpack.c.l.b16 %v1127
      %v1211 = vunpack.c.h.b16 %v1127
      %v1212 = vunpack.c.l.b16 %v1128
      %v1213 = vunpack.c.h.b16 %v1128
      %v1214 = vunpack.c.l.b16 %v1129
      %v1215 = vunpack.c.h.b16 %v1129
      %v1216 = vunpack.c.l.b16 %v1130
      %v1217 = vunpack.c.h.b16 %v1130
      %v1218 = vunpack.c.l.b16 %v1131
      %v1219 = vunpack.c.h.b16 %v1131
      %v1220 = vunpack.c.l.b16 %v1132
      %v1221 = vunpack.c.h.b16 %v1132
      %v1222 = vunpack.c.l.b16 %v1133
      %v1223 = vunpack.c.h.b16 %v1133
      %v1224 = vunpack.c.l.b16 %v1134
      %v1225 = vunpack.c.h.b16 %v1134
      %v1226 = vunpack.c.l.b16 %v1135
      %v1227 = vunpack.c.h.b16 %v1135
      %v1228 = vunpack.c.l.b16 %v1136
      %v1229 = vunpack.c.h.b16 %v1136
      %v1230 = vunpack.c.l.b16 %v1137
      %v1231 = vunpack.c.h.b16 %v1137
      %v1232 = vunpack.c.l.b16 %v1138
      %v1233 = vunpack.c.h.b16 %v1138
      %v1234 = vunpack.c.l.b16 %v1139
      %v1235 = vunpack.c.h.b16 %v1139
      %v1236 = vpack.c.b16 %v1176, %v1172
      %v1237 = vpack.c.b16 %v1177, %v1173
      %v1238 = vpack.c.b16 %v1178, %v1174
      %v1239 = vpack.c.b16 %v1179, %v1175
      %v1240 = vpack.c.b16 %v1184, %v1180
      %v1241 = vpack.c.b16 %v1185, %v1181
      %v1242 = vpack.c.b16 %v1186, %v1182
      %v1243 = vpack.c.b16 %v1187, %v1183
      %v1244 = vpack.c.b16 %v1192, %v1188
      %v1245 = vpack.c.b16 %v1193, %v1189
      %v1246 = vpack.c.b16 %v1194, %v1190
      %v1247 = vpack.c.b16 %v1195, %v1191
      %v1248 = vpack.c.b16 %v1200, %v1196
      %v1249 = vpack.c.b16 %v1201, %v1197
      %v1250 = vpack.c.b16 %v1202, %v1198
      %v1251 = vpack.c.b16 %v1203, %v1199
      %v1252 = vpack.c.b16 %v1208, %v1204
      %v1253 = vpack.c.b16 %v1209, %v1205
      %v1254 = vpack.c.b16 %v1210, %v1206
      %v1255 = vpack.c.b16 %v1211, %v1207
      %v1256 = vpack.c.b16 %v1216, %v1212
      %v1257 = vpack.c.b16 %v1217, %v1213
      %v1258 = vpack.c.b16 %v1218, %v1214
      %v1259 = vpack.c.b16 %v1219, %v1215
      %v1260 = vpack.c.b16 %v1224, %v1220
      %v1261 = vpack.c.b16 %v1225, %v1221
      %v1262 = vpack.c.b16 %v1226, %v1222
      %v1263 = vpack.c.b16 %v1227, %v1223
      %v1264 = vpack.c.b16 %v1232, %v1228
      %v1265 = vpack.c.b16 %v1233, %v1229
      %v1266 = vpack.c.b16 %v1234, %v1230
      %v1267 = vpack.c.b16 %v1235, %v1231
      %1300 = vmatpush.bf16.msra.mxu0 %v1264
      %1301 = vmatpush.bf16.msra.mxu0 %v1260
      %1302 = vmatpush.bf16.msra.mxu0 %v1256
      %1303 = vmatpush.bf16.msra.mxu0 %v1252
      %1304 = vmatpush.bf16.msra.mxu0 %v1248
      %1305 = vmatpush.bf16.msra.mxu0 %v1244
      %1306 = vmatpush.bf16.msra.mxu0 %v1240
      %1307 = vmatpush.bf16.msra.mxu0 %v1236
      %1308 = vmatmul.bf16.gmra.mxu0 %v1107
      %v1309 = vpop.f32.mrf.mxu0
      %v1310 = vadd.f32 0.0, %v1309
      %v1311 = vpop.f32.mrf.mxu0
      %1312 = vdwg.mxu0
      %1313 = vmatpush.bf16.msra.mxu0 %v1265
      %1314 = vmatpush.bf16.msra.mxu0 %v1261
      %1315 = vmatpush.bf16.msra.mxu0 %v1257
      %1316 = vmatpush.bf16.msra.mxu0 %v1253
      %1317 = vmatpush.bf16.msra.mxu0 %v1249
      %1318 = vmatpush.bf16.msra.mxu0 %v1245
      %1319 = vmatpush.bf16.msra.mxu0 %v1241
      %1320 = vmatpush.bf16.msra.mxu0 %v1237
      %1321 = vmatmul.bf16.gmra.mxu0 %v1107
      %v1322 = vpop.f32.mrf.mxu0
      %v1323 = vadd.f32 0.0, %v1322
      %v1324 = vpop.f32.mrf.mxu0
      %1325 = vdwg.mxu0
      %1326 = vmatpush.bf16.msra.mxu0 %v1266
      %1327 = vmatpush.bf16.msra.mxu0 %v1262
      %1328 = vmatpush.bf16.msra.mxu0 %v1258
      %1329 = vmatpush.bf16.msra.mxu0 %v1254
      %1330 = vmatpush.bf16.msra.mxu0 %v1250
      %1331 = vmatpush.bf16.msra.mxu0 %v1246
      %1332 = vmatpush.bf16.msra.mxu0 %v1242
      %1333 = vmatpush.bf16.msra.mxu0 %v1238
      %1334 = vmatmul.bf16.gmra.mxu0 %v1107
      %v1335 = vpop.f32.mrf.mxu0
      %v1336 = vadd.f32 0.0, %v1335
      %v1337 = vpop.f32.mrf.mxu0
      %1338 = vdwg.mxu0
      %1339 = vmatpush.bf16.msra.mxu0 %v1267
      %1340 = vmatpush.bf16.msra.mxu0 %v1263
      %1341 = vmatpush.bf16.msra.mxu0 %v1259
      %1342 = vmatpush.bf16.msra.mxu0 %v1255
      %1343 = vmatpush.bf16.msra.mxu0 %v1251
      %1344 = vmatpush.bf16.msra.mxu0 %v1247
      %1345 = vmatpush.bf16.msra.mxu0 %v1243
      %1346 = vmatpush.bf16.msra.mxu0 %v1239
      %1347 = vmatmul.bf16.gmra.mxu0 %v1107
      %v1348 = vpop.f32.mrf.mxu0
      %v1349 = vadd.f32 0.0, %v1348
      %v1350 = vpop.f32.mrf.mxu0
      %1351 = vdwg.mxu0
      %v1352 = vadd.f32 %v1102, %v1310
      %v1353 = vadd.f32 %v1103, %v1323
      %v1354 = vadd.f32 %v1104, %v1336
      %v1355 = vadd.f32 %v1105, %v1349
      %v1356 = vxor.u32 %v1352, 2147483648
      %v1357 = vmul.f32 %v1356, 1.442695
      %v1358 = vpow.pop %v1357
      %v1359 = vadd.f32 %v1358, 1.0
      %v1360 = vrcp.pop %v1359
      %v1361 = vmul.f32 %v1359, %v1360
      %v1362 = vsub.f32 1.0, %v1361
      %v1363 = vmul.f32 %v1360, %v1362
      %v1364 = vadd.f32 %v1360, %v1363
      %vm1365 = vweird.f32 %v1359
      %vm1366 = vweird.f32 %v1360
      %vm1367 = vmor %vm1365, %vm1366
      %v1368 = vsel %vm1367, %v1360, %v1364
      %v1369 = vand.u32 2147483647, %v1359
      %vm1370 = vcmp.eq.f32.partialorder %v1369, 8.507059e+37
      %v1371 = vand.u32 %v1359, 2147483648
      %v1372 = vor.u32 1.1754944e-38, %v1371
      %v1373 = vsel %vm1370, %v1372, %v1368
      %v1374 = vmul.f32 1.0, %v1373
      %v1375 = vxor.u32 %v1353, 2147483648
      %v1376 = vmul.f32 %v1375, 1.442695
      %v1377 = vpow.pop %v1376
      %v1378 = vadd.f32 %v1377, 1.0
      %v1379 = vrcp.pop %v1378
      %v1380 = vmul.f32 %v1378, %v1379
      %v1381 = vsub.f32 1.0, %v1380
      %v1382 = vmul.f32 %v1379, %v1381
      %v1383 = vadd.f32 %v1379, %v1382
      %vm1384 = vweird.f32 %v1378
      %vm1385 = vweird.f32 %v1379
      %vm1386 = vmor %vm1384, %vm1385
      %v1387 = vsel %vm1386, %v1379, %v1383
      %v1388 = vand.u32 2147483647, %v1378
      %vm1389 = vcmp.eq.f32.partialorder %v1388, 8.507059e+37
      %v1390 = vand.u32 %v1378, 2147483648
      %v1391 = vor.u32 1.1754944e-38, %v1390
      %v1392 = vsel %vm1389, %v1391, %v1387
      %v1393 = vmul.f32 1.0, %v1392
      %v1394 = vtanh.pop %v1354
      %v1395 = vxor.u32 %v1355, 2147483648
      %v1396 = vmul.f32 %v1395, 1.442695
      %v1397 = vpow.pop %v1396
      %v1398 = vadd.f32 %v1397, 1.0
      %v1399 = vrcp.pop %v1398
      %v1400 = vmul.f32 %v1398, %v1399
      %v1401 = vsub.f32 1.0, %v1400
      %v1402 = vmul.f32 %v1399, %v1401
      %v1403 = vadd.f32 %v1399, %v1402
      %vm1404 = vweird.f32 %v1398
      %vm1405 = vweird.f32 %v1399
      %vm1406 = vmor %vm1404, %vm1405
      %v1407 = vsel %vm1406, %v1399, %v1403
      %v1408 = vand.u32 2147483647, %v1398
      %vm1409 = vcmp.eq.f32.partialorder %v1408, 8.507059e+37
      %v1410 = vand.u32 %v1398, 2147483648
      %v1411 = vor.u32 1.1754944e-38, %v1410
      %v1412 = vsel %vm1409, %v1411, %v1407
      %v1413 = vmul.f32 1.0, %v1412
      %v1414 = vld [vmem:[#allocation5] sm:$0xff]
      %v1415 = vmul.f32 %v1393, %v1414
      %v1416 = vmul.f32 %v1374, %v1394
      %v1417 = vadd.f32 %v1415, %v1416
      %v1418 = vtanh.pop %v1417
      %v1419 = vmul.f32 %v1413, %v1418
      %v1420 = vsel %vm1101, 1, 0
      %1421 = vset.pattern.permute.xlu0 0
      %1422 = vperm.xlu0 %1421, %v1420
      %v1423 = vpop.permute.xlu0 %1422
      %vm1424 = vcmp.eq.s32.totalorder %v1423, 1
      %v1425 = vsel %vm1424, %v1419, %v1106
      %1426 = vst [vmem:[#allocation4] sm:$0xff] %v1425
      %v1427 = vld [vmem:[#allocation5] sm:$0xff]
      %v1428 = vsel %vm1424, %v1417, %v1427
      %1429 = vst [vmem:[#allocation5] sm:$0xff] %v1428
      %s1430 = sadd.s32 %s87, 2
      %s1431 = ssub.s32 5, %s87
      %s1432 = scalar_lea.vmem [#allocation9], 32
      %v1433 = vld [vmem:[%s1432] sm:$0xff]
      %v1434 = vld [vmem:[%s1432 + $0x8] sm:$0xff]
      %v1435 = vstv %s1430
      %vm1436 = vcmp.lt.s32.totalorder %v1435, %v86
      %v1437 = vunpack.c.l.bf16 %v1433
      %v1438 = vunpack.c.h.bf16 %v1433
      %v1439 = vunpack.c.l.bf16 %v1434
      %v1440 = vunpack.c.h.bf16 %v1434
      %v1441 = vld [vmem:[#allocation2] sm:$0xff]
      %v1442 = vpack.c.bf16 %v1441, %v1441
      %v1443 = vld [vmem:[%s4] sm:$0xff]
      %v1444 = vld [vmem:[%s4 + $0x8] sm:$0xff]
      %v1445 = vld [vmem:[%s4 + $0x10] sm:$0xff]
      %v1446 = vld [vmem:[%s4 + $0x18] sm:$0xff]
      %v1447 = vld [vmem:[%s4 + $0x20] sm:$0xff]
      %v1448 = vld [vmem:[%s4 + $0x28] sm:$0xff]
      %v1449 = vld [vmem:[%s4 + $0x30] sm:$0xff]
      %v1450 = vld [vmem:[%s4 + $0x38] sm:$0xff]
      %v1451 = vld [vmem:[%s4 + $0x40] sm:$0xff]
      %v1452 = vld [vmem:[%s4 + $0x48] sm:$0xff]
      %v1453 = vld [vmem:[%s4 + $0x50] sm:$0xff]
      %v1454 = vld [vmem:[%s4 + $0x58] sm:$0xff]
      %v1455 = vld [vmem:[%s4 + $0x60] sm:$0xff]
      %v1456 = vld [vmem:[%s4 + $0x68] sm:$0xff]
      %v1457 = vld [vmem:[%s4 + $0x70] sm:$0xff]
      %v1458 = vld [vmem:[%s4 + $0x78] sm:$0xff]
      %v1459 = vld [vmem:[%s4 + $0x80] sm:$0xff]
      %v1460 = vld [vmem:[%s4 + $0x88] sm:$0xff]
      %v1461 = vld [vmem:[%s4 + $0x90] sm:$0xff]
      %v1462 = vld [vmem:[%s4 + $0x98] sm:$0xff]
      %v1463 = vld [vmem:[%s4 + $0xa0] sm:$0xff]
      %v1464 = vld [vmem:[%s4 + $0xa8] sm:$0xff]
      %v1465 = vld [vmem:[%s4 + $0xb0] sm:$0xff]
      %v1466 = vld [vmem:[%s4 + $0xb8] sm:$0xff]
      %v1467 = vld [vmem:[%s4 + $0xc0] sm:$0xff]
      %v1468 = vld [vmem:[%s4 + $0xc8] sm:$0xff]
      %v1469 = vld [vmem:[%s4 + $0xd0] sm:$0xff]
      %v1470 = vld [vmem:[%s4 + $0xd8] sm:$0xff]
      %v1471 = vld [vmem:[%s4 + $0xe0] sm:$0xff]
      %v1472 = vld [vmem:[%s4 + $0xe8] sm:$0xff]
      %v1473 = vld [vmem:[%s4 + $0xf0] sm:$0xff]
      %v1474 = vld [vmem:[%s4 + $0xf8] sm:$0xff]
      %v1507 = vunpack.c.l.b16 %v1443
      %v1508 = vunpack.c.h.b16 %v1443
      %v1509 = vunpack.c.l.b16 %v1444
      %v1510 = vunpack.c.h.b16 %v1444
      %v1511 = vunpack.c.l.b16 %v1445
      %v1512 = vunpack.c.h.b16 %v1445
      %v1513 = vunpack.c.l.b16 %v1446
      %v1514 = vunpack.c.h.b16 %v1446
      %v1515 = vunpack.c.l.b16 %v1447
      %v1516 = vunpack.c.h.b16 %v1447
      %v1517 = vunpack.c.l.b16 %v1448
      %v1518 = vunpack.c.h.b16 %v1448
      %v1519 = vunpack.c.l.b16 %v1449
      %v1520 = vunpack.c.h.b16 %v1449
      %v1521 = vunpack.c.l.b16 %v1450
      %v1522 = vunpack.c.h.b16 %v1450
      %v1523 = vunpack.c.l.b16 %v1451
      %v1524 = vunpack.c.h.b16 %v1451
      %v1525 = vunpack.c.l.b16 %v1452
      %v1526 = vunpack.c.h.b16 %v1452
      %v1527 = vunpack.c.l.b16 %v1453
      %v1528 = vunpack.c.h.b16 %v1453
      %v1529 = vunpack.c.l.b16 %v1454
      %v1530 = vunpack.c.h.b16 %v1454
      %v1531 = vunpack.c.l.b16 %v1455
      %v1532 = vunpack.c.h.b16 %v1455
      %v1533 = vunpack.c.l.b16 %v1456
      %v1534 = vunpack.c.h.b16 %v1456
      %v1535 = vunpack.c.l.b16 %v1457
      %v1536 = vunpack.c.h.b16 %v1457
      %v1537 = vunpack.c.l.b16 %v1458
      %v1538 = vunpack.c.h.b16 %v1458
      %v1539 = vunpack.c.l.b16 %v1459
      %v1540 = vunpack.c.h.b16 %v1459
      %v1541 = vunpack.c.l.b16 %v1460
      %v1542 = vunpack.c.h.b16 %v1460
      %v1543 = vunpack.c.l.b16 %v1461
      %v1544 = vunpack.c.h.b16 %v1461
      %v1545 = vunpack.c.l.b16 %v1462
      %v1546 = vunpack.c.h.b16 %v1462
      %v1547 = vunpack.c.l.b16 %v1463
      %v1548 = vunpack.c.h.b16 %v1463
      %v1549 = vunpack.c.l.b16 %v1464
      %v1550 = vunpack.c.h.b16 %v1464
      %v1551 = vunpack.c.l.b16 %v1465
      %v1552 = vunpack.c.h.b16 %v1465
      %v1553 = vunpack.c.l.b16 %v1466
      %v1554 = vunpack.c.h.b16 %v1466
      %v1555 = vunpack.c.l.b16 %v1467
      %v1556 = vunpack.c.h.b16 %v1467
      %v1557 = vunpack.c.l.b16 %v1468
      %v1558 = vunpack.c.h.b16 %v1468
      %v1559 = vunpack.c.l.b16 %v1469
      %v1560 = vunpack.c.h.b16 %v1469
      %v1561 = vunpack.c.l.b16 %v1470
      %v1562 = vunpack.c.h.b16 %v1470
      %v1563 = vunpack.c.l.b16 %v1471
      %v1564 = vunpack.c.h.b16 %v1471
      %v1565 = vunpack.c.l.b16 %v1472
      %v1566 = vunpack.c.h.b16 %v1472
      %v1567 = vunpack.c.l.b16 %v1473
      %v1568 = vunpack.c.h.b16 %v1473
      %v1569 = vunpack.c.l.b16 %v1474
      %v1570 = vunpack.c.h.b16 %v1474
      %v1571 = vpack.c.b16 %v1511, %v1507
      %v1572 = vpack.c.b16 %v1512, %v1508
      %v1573 = vpack.c.b16 %v1513, %v1509
      %v1574 = vpack.c.b16 %v1514, %v1510
      %v1575 = vpack.c.b16 %v1519, %v1515
      %v1576 = vpack.c.b16 %v1520, %v1516
      %v1577 = vpack.c.b16 %v1521, %v1517
      %v1578 = vpack.c.b16 %v1522, %v1518
      %v1579 = vpack.c.b16 %v1527, %v1523
      %v1580 = vpack.c.b16 %v1528, %v1524
      %v1581 = vpack.c.b16 %v1529, %v1525
      %v1582 = vpack.c.b16 %v1530, %v1526
      %v1583 = vpack.c.b16 %v1535, %v1531
      %v1584 = vpack.c.b16 %v1536, %v1532
      %v1585 = vpack.c.b16 %v1537, %v1533
      %v1586 = vpack.c.b16 %v1538, %v1534
      %v1587 = vpack.c.b16 %v1543, %v1539
      %v1588 = vpack.c.b16 %v1544, %v1540
      %v1589 = vpack.c.b16 %v1545, %v1541
      %v1590 = vpack.c.b16 %v1546, %v1542
      %v1591 = vpack.c.b16 %v1551, %v1547
      %v1592 = vpack.c.b16 %v1552, %v1548
      %v1593 = vpack.c.b16 %v1553, %v1549
      %v1594 = vpack.c.b16 %v1554, %v1550
      %v1595 = vpack.c.b16 %v1559, %v1555
      %v1596 = vpack.c.b16 %v1560, %v1556
      %v1597 = vpack.c.b16 %v1561, %v1557
      %v1598 = vpack.c.b16 %v1562, %v1558
      %v1599 = vpack.c.b16 %v1567, %v1563
      %v1600 = vpack.c.b16 %v1568, %v1564
      %v1601 = vpack.c.b16 %v1569, %v1565
      %v1602 = vpack.c.b16 %v1570, %v1566
      %1635 = vmatpush.bf16.msra.mxu0 %v1599
      %1636 = vmatpush.bf16.msra.mxu0 %v1595
      %1637 = vmatpush.bf16.msra.mxu0 %v1591
      %1638 = vmatpush.bf16.msra.mxu0 %v1587
      %1639 = vmatpush.bf16.msra.mxu0 %v1583
      %1640 = vmatpush.bf16.msra.mxu0 %v1579
      %1641 = vmatpush.bf16.msra.mxu0 %v1575
      %1642 = vmatpush.bf16.msra.mxu0 %v1571
      %1643 = vmatmul.bf16.gmra.mxu0 %v1442
      %v1644 = vpop.f32.mrf.mxu0
      %v1645 = vadd.f32 0.0, %v1644
      %v1646 = vpop.f32.mrf.mxu0
      %1647 = vdwg.mxu0
      %1648 = vmatpush.bf16.msra.mxu0 %v1600
      %1649 = vmatpush.bf16.msra.mxu0 %v1596
      %1650 = vmatpush.bf16.msra.mxu0 %v1592
      %1651 = vmatpush.bf16.msra.mxu0 %v1588
      %1652 = vmatpush.bf16.msra.mxu0 %v1584
      %1653 = vmatpush.bf16.msra.mxu0 %v1580
      %1654 = vmatpush.bf16.msra.mxu0 %v1576
      %1655 = vmatpush.bf16.msra.mxu0 %v1572
      %1656 = vmatmul.bf16.gmra.mxu0 %v1442
      %v1657 = vpop.f32.mrf.mxu0
      %v1658 = vadd.f32 0.0, %v1657
      %v1659 = vpop.f32.mrf.mxu0
      %1660 = vdwg.mxu0
      %1661 = vmatpush.bf16.msra.mxu0 %v1601
      %1662 = vmatpush.bf16.msra.mxu0 %v1597
      %1663 = vmatpush.bf16.msra.mxu0 %v1593
      %1664 = vmatpush.bf16.msra.mxu0 %v1589
      %1665 = vmatpush.bf16.msra.mxu0 %v1585
      %1666 = vmatpush.bf16.msra.mxu0 %v1581
      %1667 = vmatpush.bf16.msra.mxu0 %v1577
      %1668 = vmatpush.bf16.msra.mxu0 %v1573
      %1669 = vmatmul.bf16.gmra.mxu0 %v1442
      %v1670 = vpop.f32.mrf.mxu0
      %v1671 = vadd.f32 0.0, %v1670
      %v1672 = vpop.f32.mrf.mxu0
      %1673 = vdwg.mxu0
      %1674 = vmatpush.bf16.msra.mxu0 %v1602
      %1675 = vmatpush.bf16.msra.mxu0 %v1598
      %1676 = vmatpush.bf16.msra.mxu0 %v1594
      %1677 = vmatpush.bf16.msra.mxu0 %v1590
      %1678 = vmatpush.bf16.msra.mxu0 %v1586
      %1679 = vmatpush.bf16.msra.mxu0 %v1582
      %1680 = vmatpush.bf16.msra.mxu0 %v1578
      %1681 = vmatpush.bf16.msra.mxu0 %v1574
      %1682 = vmatmul.bf16.gmra.mxu0 %v1442
      %v1683 = vpop.f32.mrf.mxu0
      %v1684 = vadd.f32 0.0, %v1683
      %v1685 = vpop.f32.mrf.mxu0
      %1686 = vdwg.mxu0
      %v1687 = vadd.f32 %v1437, %v1645
      %v1688 = vadd.f32 %v1438, %v1658
      %v1689 = vadd.f32 %v1439, %v1671
      %v1690 = vadd.f32 %v1440, %v1684
      %v1691 = vxor.u32 %v1687, 2147483648
      %v1692 = vmul.f32 %v1691, 1.442695
      %v1693 = vpow.pop %v1692
      %v1694 = vadd.f32 %v1693, 1.0
      %v1695 = vrcp.pop %v1694
      %v1696 = vmul.f32 %v1694, %v1695
      %v1697 = vsub.f32 1.0, %v1696
      %v1698 = vmul.f32 %v1695, %v1697
      %v1699 = vadd.f32 %v1695, %v1698
      %vm1700 = vweird.f32 %v1694
      %vm1701 = vweird.f32 %v1695
      %vm1702 = vmor %vm1700, %vm1701
      %v1703 = vsel %vm1702, %v1695, %v1699
      %v1704 = vand.u32 2147483647, %v1694
      %vm1705 = vcmp.eq.f32.partialorder %v1704, 8.507059e+37
      %v1706 = vand.u32 %v1694, 2147483648
      %v1707 = vor.u32 1.1754944e-38, %v1706
      %v1708 = vsel %vm1705, %v1707, %v1703
      %v1709 = vmul.f32 1.0, %v1708
      %v1710 = vxor.u32 %v1688, 2147483648
      %v1711 = vmul.f32 %v1710, 1.442695
      %v1712 = vpow.pop %v1711
      %v1713 = vadd.f32 %v1712, 1.0
      %v1714 = vrcp.pop %v1713
      %v1715 = vmul.f32 %v1713, %v1714
      %v1716 = vsub.f32 1.0, %v1715
      %v1717 = vmul.f32 %v1714, %v1716
      %v1718 = vadd.f32 %v1714, %v1717
      %vm1719 = vweird.f32 %v1713
      %vm1720 = vweird.f32 %v1714
      %vm1721 = vmor %vm1719, %vm1720
      %v1722 = vsel %vm1721, %v1714, %v1718
      %v1723 = vand.u32 2147483647, %v1713
      %vm1724 = vcmp.eq.f32.partialorder %v1723, 8.507059e+37
      %v1725 = vand.u32 %v1713, 2147483648
      %v1726 = vor.u32 1.1754944e-38, %v1725
      %v1727 = vsel %vm1724, %v1726, %v1722
      %v1728 = vmul.f32 1.0, %v1727
      %v1729 = vtanh.pop %v1689
      %v1730 = vxor.u32 %v1690, 2147483648
      %v1731 = vmul.f32 %v1730, 1.442695
      %v1732 = vpow.pop %v1731
      %v1733 = vadd.f32 %v1732, 1.0
      %v1734 = vrcp.pop %v1733
      %v1735 = vmul.f32 %v1733, %v1734
      %v1736 = vsub.f32 1.0, %v1735
      %v1737 = vmul.f32 %v1734, %v1736
      %v1738 = vadd.f32 %v1734, %v1737
      %vm1739 = vweird.f32 %v1733
      %vm1740 = vweird.f32 %v1734
      %vm1741 = vmor %vm1739, %vm1740
      %v1742 = vsel %vm1741, %v1734, %v1738
      %v1743 = vand.u32 2147483647, %v1733
      %vm1744 = vcmp.eq.f32.partialorder %v1743, 8.507059e+37
      %v1745 = vand.u32 %v1733, 2147483648
      %v1746 = vor.u32 1.1754944e-38, %v1745
      %v1747 = vsel %vm1744, %v1746, %v1742
      %v1748 = vmul.f32 1.0, %v1747
      %v1749 = vld [vmem:[#allocation3] sm:$0xff]
      %v1750 = vmul.f32 %v1728, %v1749
      %v1751 = vmul.f32 %v1709, %v1729
      %v1752 = vadd.f32 %v1750, %v1751
      %v1753 = vtanh.pop %v1752
      %v1754 = vmul.f32 %v1748, %v1753
      %v1755 = vsel %vm1436, 1, 0
      %1756 = vset.pattern.permute.xlu0 0
      %1757 = vperm.xlu0 %1756, %v1755
      %v1758 = vpop.permute.xlu0 %1757
      %vm1759 = vcmp.eq.s32.totalorder %v1758, 1
      %v1760 = vsel %vm1759, %v1754, %v1441
      %1761 = vst [vmem:[#allocation2] sm:$0xff] %v1760
      %v1762 = vld [vmem:[#allocation3] sm:$0xff]
      %v1763 = vsel %vm1759, %v1752, %v1762
      %1764 = vst [vmem:[#allocation3] sm:$0xff] %v1763
      %s1765 = scalar_lea.vmem [#allocation11], 32
      %v1766 = vld [vmem:[%s1765] sm:$0xff]
      %v1767 = vld [vmem:[%s1765 + $0x8] sm:$0xff]
      %v1768 = vstv %s1431
      %vm1769 = vcmp.lt.s32.totalorder %v1768, %v86
      %v1770 = vunpack.c.l.bf16 %v1766
      %v1771 = vunpack.c.h.bf16 %v1766
      %v1772 = vunpack.c.l.bf16 %v1767
      %v1773 = vunpack.c.h.bf16 %v1767
      %v1774 = vld [vmem:[#allocation4] sm:$0xff]
      %v1775 = vpack.c.bf16 %v1774, %v1774
      %v1776 = vld [vmem:[#allocation13] sm:$0xff]
      %v1777 = vld [vmem:[#allocation13 + $0x8] sm:$0xff]
      %v1778 = vld [vmem:[#allocation13 + $0x10] sm:$0xff]
      %v1779 = vld [vmem:[#allocation13 + $0x18] sm:$0xff]
      %v1780 = vld [vmem:[#allocation13 + $0x20] sm:$0xff]
      %v1781 = vld [vmem:[#allocation13 + $0x28] sm:$0xff]
      %v1782 = vld [vmem:[#allocation13 + $0x30] sm:$0xff]
      %v1783 = vld [vmem:[#allocation13 + $0x38] sm:$0xff]
      %v1784 = vld [vmem:[#allocation13 + $0x40] sm:$0xff]
      %v1785 = vld [vmem:[#allocation13 + $0x48] sm:$0xff]
      %v1786 = vld [vmem:[#allocation13 + $0x50] sm:$0xff]
      %v1787 = vld [vmem:[#allocation13 + $0x58] sm:$0xff]
      %v1788 = vld [vmem:[#allocation13 + $0x60] sm:$0xff]
      %v1789 = vld [vmem:[#allocation13 + $0x68] sm:$0xff]
      %v1790 = vld [vmem:[#allocation13 + $0x70] sm:$0xff]
      %v1791 = vld [vmem:[#allocation13 + $0x78] sm:$0xff]
      %v1792 = vld [vmem:[#allocation13 + $0x80] sm:$0xff]
      %v1793 = vld [vmem:[#allocation13 + $0x88] sm:$0xff]
      %v1794 = vld [vmem:[#allocation13 + $0x90] sm:$0xff]
      %v1795 = vld [vmem:[#allocation13 + $0x98] sm:$0xff]
      %v1796 = vld [vmem:[#allocation13 + $0xa0] sm:$0xff]
      %v1797 = vld [vmem:[#allocation13 + $0xa8] sm:$0xff]
      %v1798 = vld [vmem:[#allocation13 + $0xb0] sm:$0xff]
      %v1799 = vld [vmem:[#allocation13 + $0xb8] sm:$0xff]
      %v1800 = vld [vmem:[#allocation13 + $0xc0] sm:$0xff]
      %v1801 = vld [vmem:[#allocation13 + $0xc8] sm:$0xff]
      %v1802 = vld [vmem:[#allocation13 + $0xd0] sm:$0xff]
      %v1803 = vld [vmem:[#allocation13 + $0xd8] sm:$0xff]
      %v1804 = vld [vmem:[#allocation13 + $0xe0] sm:$0xff]
      %v1805 = vld [vmem:[#allocation13 + $0xe8] sm:$0xff]
      %v1806 = vld [vmem:[#allocation13 + $0xf0] sm:$0xff]
      %v1807 = vld [vmem:[#allocation13 + $0xf8] sm:$0xff]
      %v1840 = vunpack.c.l.b16 %v1776
      %v1841 = vunpack.c.h.b16 %v1776
      %v1842 = vunpack.c.l.b16 %v1777
      %v1843 = vunpack.c.h.b16 %v1777
      %v1844 = vunpack.c.l.b16 %v1778
      %v1845 = vunpack.c.h.b16 %v1778
      %v1846 = vunpack.c.l.b16 %v1779
      %v1847 = vunpack.c.h.b16 %v1779
      %v1848 = vunpack.c.l.b16 %v1780
      %v1849 = vunpack.c.h.b16 %v1780
      %v1850 = vunpack.c.l.b16 %v1781
      %v1851 = vunpack.c.h.b16 %v1781
      %v1852 = vunpack.c.l.b16 %v1782
      %v1853 = vunpack.c.h.b16 %v1782
      %v1854 = vunpack.c.l.b16 %v1783
      %v1855 = vunpack.c.h.b16 %v1783
      %v1856 = vunpack.c.l.b16 %v1784
      %v1857 = vunpack.c.h.b16 %v1784
      %v1858 = vunpack.c.l.b16 %v1785
      %v1859 = vunpack.c.h.b16 %v1785
      %v1860 = vunpack.c.l.b16 %v1786
      %v1861 = vunpack.c.h.b16 %v1786
      %v1862 = vunpack.c.l.b16 %v1787
      %v1863 = vunpack.c.h.b16 %v1787
      %v1864 = vunpack.c.l.b16 %v1788
      %v1865 = vunpack.c.h.b16 %v1788
      %v1866 = vunpack.c.l.b16 %v1789
      %v1867 = vunpack.c.h.b16 %v1789
      %v1868 = vunpack.c.l.b16 %v1790
      %v1869 = vunpack.c.h.b16 %v1790
      %v1870 = vunpack.c.l.b16 %v1791
      %v1871 = vunpack.c.h.b16 %v1791
      %v1872 = vunpack.c.l.b16 %v1792
      %v1873 = vunpack.c.h.b16 %v1792
      %v1874 = vunpack.c.l.b16 %v1793
      %v1875 = vunpack.c.h.b16 %v1793
      %v1876 = vunpack.c.l.b16 %v1794
      %v1877 = vunpack.c.h.b16 %v1794
      %v1878 = vunpack.c.l.b16 %v1795
      %v1879 = vunpack.c.h.b16 %v1795
      %v1880 = vunpack.c.l.b16 %v1796
      %v1881 = vunpack.c.h.b16 %v1796
      %v1882 = vunpack.c.l.b16 %v1797
      %v1883 = vunpack.c.h.b16 %v1797
      %v1884 = vunpack.c.l.b16 %v1798
      %v1885 = vunpack.c.h.b16 %v1798
      %v1886 = vunpack.c.l.b16 %v1799
      %v1887 = vunpack.c.h.b16 %v1799
      %v1888 = vunpack.c.l.b16 %v1800
      %v1889 = vunpack.c.h.b16 %v1800
      %v1890 = vunpack.c.l.b16 %v1801
      %v1891 = vunpack.c.h.b16 %v1801
      %v1892 = vunpack.c.l.b16 %v1802
      %v1893 = vunpack.c.h.b16 %v1802
      %v1894 = vunpack.c.l.b16 %v1803
      %v1895 = vunpack.c.h.b16 %v1803
      %v1896 = vunpack.c.l.b16 %v1804
      %v1897 = vunpack.c.h.b16 %v1804
      %v1898 = vunpack.c.l.b16 %v1805
      %v1899 = vunpack.c.h.b16 %v1805
      %v1900 = vunpack.c.l.b16 %v1806
      %v1901 = vunpack.c.h.b16 %v1806
      %v1902 = vunpack.c.l.b16 %v1807
      %v1903 = vunpack.c.h.b16 %v1807
      %v1904 = vpack.c.b16 %v1844, %v1840
      %v1905 = vpack.c.b16 %v1845, %v1841
      %v1906 = vpack.c.b16 %v1846, %v1842
      %v1907 = vpack.c.b16 %v1847, %v1843
      %v1908 = vpack.c.b16 %v1852, %v1848
      %v1909 = vpack.c.b16 %v1853, %v1849
      %v1910 = vpack.c.b16 %v1854, %v1850
      %v1911 = vpack.c.b16 %v1855, %v1851
      %v1912 = vpack.c.b16 %v1860, %v1856
      %v1913 = vpack.c.b16 %v1861, %v1857
      %v1914 = vpack.c.b16 %v1862, %v1858
      %v1915 = vpack.c.b16 %v1863, %v1859
      %v1916 = vpack.c.b16 %v1868, %v1864
      %v1917 = vpack.c.b16 %v1869, %v1865
      %v1918 = vpack.c.b16 %v1870, %v1866
      %v1919 = vpack.c.b16 %v1871, %v1867
      %v1920 = vpack.c.b16 %v1876, %v1872
      %v1921 = vpack.c.b16 %v1877, %v1873
      %v1922 = vpack.c.b16 %v1878, %v1874
      %v1923 = vpack.c.b16 %v1879, %v1875
      %v1924 = vpack.c.b16 %v1884, %v1880
      %v1925 = vpack.c.b16 %v1885, %v1881
      %v1926 = vpack.c.b16 %v1886, %v1882
      %v1927 = vpack.c.b16 %v1887, %v1883
      %v1928 = vpack.c.b16 %v1892, %v1888
      %v1929 = vpack.c.b16 %v1893, %v1889
      %v1930 = vpack.c.b16 %v1894, %v1890
      %v1931 = vpack.c.b16 %v1895, %v1891
      %v1932 = vpack.c.b16 %v1900, %v1896
      %v1933 = vpack.c.b16 %v1901, %v1897
      %v1934 = vpack.c.b16 %v1902, %v1898
      %v1935 = vpack.c.b16 %v1903, %v1899
      %1968 = vmatpush.bf16.msra.mxu0 %v1932
      %1969 = vmatpush.bf16.msra.mxu0 %v1928
      %1970 = vmatpush.bf16.msra.mxu0 %v1924
      %1971 = vmatpush.bf16.msra.mxu0 %v1920
      %1972 = vmatpush.bf16.msra.mxu0 %v1916
      %1973 = vmatpush.bf16.msra.mxu0 %v1912
      %1974 = vmatpush.bf16.msra.mxu0 %v1908
      %1975 = vmatpush.bf16.msra.mxu0 %v1904
      %1976 = vmatmul.bf16.gmra.mxu0 %v1775
      %v1977 = vpop.f32.mrf.mxu0
      %v1978 = vadd.f32 0.0, %v1977
      %v1979 = vpop.f32.mrf.mxu0
      %1980 = vdwg.mxu0
      %1981 = vmatpush.bf16.msra.mxu0 %v1933
      %1982 = vmatpush.bf16.msra.mxu0 %v1929
      %1983 = vmatpush.bf16.msra.mxu0 %v1925
      %1984 = vmatpush.bf16.msra.mxu0 %v1921
      %1985 = vmatpush.bf16.msra.mxu0 %v1917
      %1986 = vmatpush.bf16.msra.mxu0 %v1913
      %1987 = vmatpush.bf16.msra.mxu0 %v1909
      %1988 = vmatpush.bf16.msra.mxu0 %v1905
      %1989 = vmatmul.bf16.gmra.mxu0 %v1775
      %v1990 = vpop.f32.mrf.mxu0
      %v1991 = vadd.f32 0.0, %v1990
      %v1992 = vpop.f32.mrf.mxu0
      %1993 = vdwg.mxu0
      %1994 = vmatpush.bf16.msra.mxu0 %v1934
      %1995 = vmatpush.bf16.msra.mxu0 %v1930
      %1996 = vmatpush.bf16.msra.mxu0 %v1926
      %1997 = vmatpush.bf16.msra.mxu0 %v1922
      %1998 = vmatpush.bf16.msra.mxu0 %v1918
      %1999 = vmatpush.bf16.msra.mxu0 %v1914
      %2000 = vmatpush.bf16.msra.mxu0 %v1910
      %2001 = vmatpush.bf16.msra.mxu0 %v1906
      %2002 = vmatmul.bf16.gmra.mxu0 %v1775
      %v2003 = vpop.f32.mrf.mxu0
      %v2004 = vadd.f32 0.0, %v2003
      %v2005 = vpop.f32.mrf.mxu0
      %2006 = vdwg.mxu0
      %2007 = vmatpush.bf16.msra.mxu0 %v1935
      %2008 = vmatpush.bf16.msra.mxu0 %v1931
      %2009 = vmatpush.bf16.msra.mxu0 %v1927
      %2010 = vmatpush.bf16.msra.mxu0 %v1923
      %2011 = vmatpush.bf16.msra.mxu0 %v1919
      %2012 = vmatpush.bf16.msra.mxu0 %v1915
      %2013 = vmatpush.bf16.msra.mxu0 %v1911
      %2014 = vmatpush.bf16.msra.mxu0 %v1907
      %2015 = vmatmul.bf16.gmra.mxu0 %v1775
      %v2016 = vpop.f32.mrf.mxu0
      %v2017 = vadd.f32 0.0, %v2016
      %v2018 = vpop.f32.mrf.mxu0
      %2019 = vdwg.mxu0
      %v2020 = vadd.f32 %v1770, %v1978
      %v2021 = vadd.f32 %v1771, %v1991
      %v2022 = vadd.f32 %v1772, %v2004
      %v2023 = vadd.f32 %v1773, %v2017
      %v2024 = vxor.u32 %v2020, 2147483648
      %v2025 = vmul.f32 %v2024, 1.442695
      %v2026 = vpow.pop %v2025
      %v2027 = vadd.f32 %v2026, 1.0
      %v2028 = vrcp.pop %v2027
      %v2029 = vmul.f32 %v2027, %v2028
      %v2030 = vsub.f32 1.0, %v2029
      %v2031 = vmul.f32 %v2028, %v2030
      %v2032 = vadd.f32 %v2028, %v2031
      %vm2033 = vweird.f32 %v2027
      %vm2034 = vweird.f32 %v2028
      %vm2035 = vmor %vm2033, %vm2034
      %v2036 = vsel %vm2035, %v2028, %v2032
      %v2037 = vand.u32 2147483647, %v2027
      %vm2038 = vcmp.eq.f32.partialorder %v2037, 8.507059e+37
      %v2039 = vand.u32 %v2027, 2147483648
      %v2040 = vor.u32 1.1754944e-38, %v2039
      %v2041 = vsel %vm2038, %v2040, %v2036
      %v2042 = vmul.f32 1.0, %v2041
      %v2043 = vxor.u32 %v2021, 2147483648
      %v2044 = vmul.f32 %v2043, 1.442695
      %v2045 = vpow.pop %v2044
      %v2046 = vadd.f32 %v2045, 1.0
      %v2047 = vrcp.pop %v2046
      %v2048 = vmul.f32 %v2046, %v2047
      %v2049 = vsub.f32 1.0, %v2048
      %v2050 = vmul.f32 %v2047, %v2049
      %v2051 = vadd.f32 %v2047, %v2050
      %vm2052 = vweird.f32 %v2046
      %vm2053 = vweird.f32 %v2047
      %vm2054 = vmor %vm2052, %vm2053
      %v2055 = vsel %vm2054, %v2047, %v2051
      %v2056 = vand.u32 2147483647, %v2046
      %vm2057 = vcmp.eq.f32.partialorder %v2056, 8.507059e+37
      %v2058 = vand.u32 %v2046, 2147483648
      %v2059 = vor.u32 1.1754944e-38, %v2058
      %v2060 = vsel %vm2057, %v2059, %v2055
      %v2061 = vmul.f32 1.0, %v2060
      %v2062 = vtanh.pop %v2022
      %v2063 = vxor.u32 %v2023, 2147483648
      %v2064 = vmul.f32 %v2063, 1.442695
      %v2065 = vpow.pop %v2064
      %v2066 = vadd.f32 %v2065, 1.0
      %v2067 = vrcp.pop %v2066
      %v2068 = vmul.f32 %v2066, %v2067
      %v2069 = vsub.f32 1.0, %v2068
      %v2070 = vmul.f32 %v2067, %v2069
      %v2071 = vadd.f32 %v2067, %v2070
      %vm2072 = vweird.f32 %v2066
      %vm2073 = vweird.f32 %v2067
      %vm2074 = vmor %vm2072, %vm2073
      %v2075 = vsel %vm2074, %v2067, %v2071
      %v2076 = vand.u32 2147483647, %v2066
      %vm2077 = vcmp.eq.f32.partialorder %v2076, 8.507059e+37
      %v2078 = vand.u32 %v2066, 2147483648
      %v2079 = vor.u32 1.1754944e-38, %v2078
      %v2080 = vsel %vm2077, %v2079, %v2075
      %v2081 = vmul.f32 1.0, %v2080
      %v2082 = vld [vmem:[#allocation5] sm:$0xff]
      %v2083 = vmul.f32 %v2061, %v2082
      %v2084 = vmul.f32 %v2042, %v2062
      %v2085 = vadd.f32 %v2083, %v2084
      %v2086 = vtanh.pop %v2085
      %v2087 = vmul.f32 %v2081, %v2086
      %v2088 = vsel %vm1769, 1, 0
      %2089 = vset.pattern.permute.xlu0 0
      %2090 = vperm.xlu0 %2089, %v2088
      %v2091 = vpop.permute.xlu0 %2090
      %vm2092 = vcmp.eq.s32.totalorder %v2091, 1
      %v2093 = vsel %vm2092, %v2087, %v1774
      %2094 = vst [vmem:[#allocation4] sm:$0xff] %v2093
      %v2095 = vld [vmem:[#allocation5] sm:$0xff]
      %v2096 = vsel %vm2092, %v2085, %v2095
      %2097 = vst [vmem:[#allocation5] sm:$0xff] %v2096
      %s2098 = sadd.s32 %s87, 3
      %s2099 = ssub.s32 4, %s87
      %s2100 = scalar_lea.vmem [#allocation9], 48
      %v2101 = vld [vmem:[%s2100] sm:$0xff]
      %v2102 = vld [vmem:[%s2100 + $0x8] sm:$0xff]
      %v2103 = vstv %s2098
      %vm2104 = vcmp.lt.s32.totalorder %v2103, %v86
      %v2105 = vunpack.c.l.bf16 %v2101
      %v2106 = vunpack.c.h.bf16 %v2101
      %v2107 = vunpack.c.l.bf16 %v2102
      %v2108 = vunpack.c.h.bf16 %v2102
      %v2109 = vld [vmem:[#allocation2] sm:$0xff]
      %v2110 = vpack.c.bf16 %v2109, %v2109
      %v2111 = vld [vmem:[%s4] sm:$0xff]
      %v2112 = vld [vmem:[%s4 + $0x8] sm:$0xff]
      %v2113 = vld [vmem:[%s4 + $0x10] sm:$0xff]
      %v2114 = vld [vmem:[%s4 + $0x18] sm:$0xff]
      %v2115 = vld [vmem:[%s4 + $0x20] sm:$0xff]
      %v2116 = vld [vmem:[%s4 + $0x28] sm:$0xff]
      %v2117 = vld [vmem:[%s4 + $0x30] sm:$0xff]
      %v2118 = vld [vmem:[%s4 + $0x38] sm:$0xff]
      %v2119 = vld [vmem:[%s4 + $0x40] sm:$0xff]
      %v2120 = vld [vmem:[%s4 + $0x48] sm:$0xff]
      %v2121 = vld [vmem:[%s4 + $0x50] sm:$0xff]
      %v2122 = vld [vmem:[%s4 + $0x58] sm:$0xff]
      %v2123 = vld [vmem:[%s4 + $0x60] sm:$0xff]
      %v2124 = vld [vmem:[%s4 + $0x68] sm:$0xff]
      %v2125 = vld [vmem:[%s4 + $0x70] sm:$0xff]
      %v2126 = vld [vmem:[%s4 + $0x78] sm:$0xff]
      %v2127 = vld [vmem:[%s4 + $0x80] sm:$0xff]
      %v2128 = vld [vmem:[%s4 + $0x88] sm:$0xff]
      %v2129 = vld [vmem:[%s4 + $0x90] sm:$0xff]
      %v2130 = vld [vmem:[%s4 + $0x98] sm:$0xff]
      %v2131 = vld [vmem:[%s4 + $0xa0] sm:$0xff]
      %v2132 = vld [vmem:[%s4 + $0xa8] sm:$0xff]
      %v2133 = vld [vmem:[%s4 + $0xb0] sm:$0xff]
      %v2134 = vld [vmem:[%s4 + $0xb8] sm:$0xff]
      %v2135 = vld [vmem:[%s4 + $0xc0] sm:$0xff]
      %v2136 = vld [vmem:[%s4 + $0xc8] sm:$0xff]
      %v2137 = vld [vmem:[%s4 + $0xd0] sm:$0xff]
      %v2138 = vld [vmem:[%s4 + $0xd8] sm:$0xff]
      %v2139 = vld [vmem:[%s4 + $0xe0] sm:$0xff]
      %v2140 = vld [vmem:[%s4 + $0xe8] sm:$0xff]
      %v2141 = vld [vmem:[%s4 + $0xf0] sm:$0xff]
      %v2142 = vld [vmem:[%s4 + $0xf8] sm:$0xff]
      %v2175 = vunpack.c.l.b16 %v2111
      %v2176 = vunpack.c.h.b16 %v2111
      %v2177 = vunpack.c.l.b16 %v2112
      %v2178 = vunpack.c.h.b16 %v2112
      %v2179 = vunpack.c.l.b16 %v2113
      %v2180 = vunpack.c.h.b16 %v2113
      %v2181 = vunpack.c.l.b16 %v2114
      %v2182 = vunpack.c.h.b16 %v2114
      %v2183 = vunpack.c.l.b16 %v2115
      %v2184 = vunpack.c.h.b16 %v2115
      %v2185 = vunpack.c.l.b16 %v2116
      %v2186 = vunpack.c.h.b16 %v2116
      %v2187 = vunpack.c.l.b16 %v2117
      %v2188 = vunpack.c.h.b16 %v2117
      %v2189 = vunpack.c.l.b16 %v2118
      %v2190 = vunpack.c.h.b16 %v2118
      %v2191 = vunpack.c.l.b16 %v2119
      %v2192 = vunpack.c.h.b16 %v2119
      %v2193 = vunpack.c.l.b16 %v2120
      %v2194 = vunpack.c.h.b16 %v2120
      %v2195 = vunpack.c.l.b16 %v2121
      %v2196 = vunpack.c.h.b16 %v2121
      %v2197 = vunpack.c.l.b16 %v2122
      %v2198 = vunpack.c.h.b16 %v2122
      %v2199 = vunpack.c.l.b16 %v2123
      %v2200 = vunpack.c.h.b16 %v2123
      %v2201 = vunpack.c.l.b16 %v2124
      %v2202 = vunpack.c.h.b16 %v2124
      %v2203 = vunpack.c.l.b16 %v2125
      %v2204 = vunpack.c.h.b16 %v2125
      %v2205 = vunpack.c.l.b16 %v2126
      %v2206 = vunpack.c.h.b16 %v2126
      %v2207 = vunpack.c.l.b16 %v2127
      %v2208 = vunpack.c.h.b16 %v2127
      %v2209 = vunpack.c.l.b16 %v2128
      %v2210 = vunpack.c.h.b16 %v2128
      %v2211 = vunpack.c.l.b16 %v2129
      %v2212 = vunpack.c.h.b16 %v2129
      %v2213 = vunpack.c.l.b16 %v2130
      %v2214 = vunpack.c.h.b16 %v2130
      %v2215 = vunpack.c.l.b16 %v2131
      %v2216 = vunpack.c.h.b16 %v2131
      %v2217 = vunpack.c.l.b16 %v2132
      %v2218 = vunpack.c.h.b16 %v2132
      %v2219 = vunpack.c.l.b16 %v2133
      %v2220 = vunpack.c.h.b16 %v2133
      %v2221 = vunpack.c.l.b16 %v2134
      %v2222 = vunpack.c.h.b16 %v2134
      %v2223 = vunpack.c.l.b16 %v2135
      %v2224 = vunpack.c.h.b16 %v2135
      %v2225 = vunpack.c.l.b16 %v2136
      %v2226 = vunpack.c.h.b16 %v2136
      %v2227 = vunpack.c.l.b16 %v2137
      %v2228 = vunpack.c.h.b16 %v2137
      %v2229 = vunpack.c.l.b16 %v2138
      %v2230 = vunpack.c.h.b16 %v2138
      %v2231 = vunpack.c.l.b16 %v2139
      %v2232 = vunpack.c.h.b16 %v2139
      %v2233 = vunpack.c.l.b16 %v2140
      %v2234 = vunpack.c.h.b16 %v2140
      %v2235 = vunpack.c.l.b16 %v2141
      %v2236 = vunpack.c.h.b16 %v2141
      %v2237 = vunpack.c.l.b16 %v2142
      %v2238 = vunpack.c.h.b16 %v2142
      %v2239 = vpack.c.b16 %v2179, %v2175
      %v2240 = vpack.c.b16 %v2180, %v2176
      %v2241 = vpack.c.b16 %v2181, %v2177
      %v2242 = vpack.c.b16 %v2182, %v2178
      %v2243 = vpack.c.b16 %v2187, %v2183
      %v2244 = vpack.c.b16 %v2188, %v2184
      %v2245 = vpack.c.b16 %v2189, %v2185
      %v2246 = vpack.c.b16 %v2190, %v2186
      %v2247 = vpack.c.b16 %v2195, %v2191
      %v2248 = vpack.c.b16 %v2196, %v2192
      %v2249 = vpack.c.b16 %v2197, %v2193
      %v2250 = vpack.c.b16 %v2198, %v2194
      %v2251 = vpack.c.b16 %v2203, %v2199
      %v2252 = vpack.c.b16 %v2204, %v2200
      %v2253 = vpack.c.b16 %v2205, %v2201
      %v2254 = vpack.c.b16 %v2206, %v2202
      %v2255 = vpack.c.b16 %v2211, %v2207
      %v2256 = vpack.c.b16 %v2212, %v2208
      %v2257 = vpack.c.b16 %v2213, %v2209
      %v2258 = vpack.c.b16 %v2214, %v2210
      %v2259 = vpack.c.b16 %v2219, %v2215
      %v2260 = vpack.c.b16 %v2220, %v2216
      %v2261 = vpack.c.b16 %v2221, %v2217
      %v2262 = vpack.c.b16 %v2222, %v2218
      %v2263 = vpack.c.b16 %v2227, %v2223
      %v2264 = vpack.c.b16 %v2228, %v2224
      %v2265 = vpack.c.b16 %v2229, %v2225
      %v2266 = vpack.c.b16 %v2230, %v2226
      %v2267 = vpack.c.b16 %v2235, %v2231
      %v2268 = vpack.c.b16 %v2236, %v2232
      %v2269 = vpack.c.b16 %v2237, %v2233
      %v2270 = vpack.c.b16 %v2238, %v2234
      %2303 = vmatpush.bf16.msra.mxu0 %v2267
      %2304 = vmatpush.bf16.msra.mxu0 %v2263
      %2305 = vmatpush.bf16.msra.mxu0 %v2259
      %2306 = vmatpush.bf16.msra.mxu0 %v2255
      %2307 = vmatpush.bf16.msra.mxu0 %v2251
      %2308 = vmatpush.bf16.msra.mxu0 %v2247
      %2309 = vmatpush.bf16.msra.mxu0 %v2243
      %2310 = vmatpush.bf16.msra.mxu0 %v2239
      %2311 = vmatmul.bf16.gmra.mxu0 %v2110
      %v2312 = vpop.f32.mrf.mxu0
      %v2313 = vadd.f32 0.0, %v2312
      %v2314 = vpop.f32.mrf.mxu0
      %2315 = vdwg.mxu0
      %2316 = vmatpush.bf16.msra.mxu0 %v2268
      %2317 = vmatpush.bf16.msra.mxu0 %v2264
      %2318 = vmatpush.bf16.msra.mxu0 %v2260
      %2319 = vmatpush.bf16.msra.mxu0 %v2256
      %2320 = vmatpush.bf16.msra.mxu0 %v2252
      %2321 = vmatpush.bf16.msra.mxu0 %v2248
      %2322 = vmatpush.bf16.msra.mxu0 %v2244
      %2323 = vmatpush.bf16.msra.mxu0 %v2240
      %2324 = vmatmul.bf16.gmra.mxu0 %v2110
      %v2325 = vpop.f32.mrf.mxu0
      %v2326 = vadd.f32 0.0, %v2325
      %v2327 = vpop.f32.mrf.mxu0
      %2328 = vdwg.mxu0
      %2329 = vmatpush.bf16.msra.mxu0 %v2269
      %2330 = vmatpush.bf16.msra.mxu0 %v2265
      %2331 = vmatpush.bf16.msra.mxu0 %v2261
      %2332 = vmatpush.bf16.msra.mxu0 %v2257
      %2333 = vmatpush.bf16.msra.mxu0 %v2253
      %2334 = vmatpush.bf16.msra.mxu0 %v2249
      %2335 = vmatpush.bf16.msra.mxu0 %v2245
      %2336 = vmatpush.bf16.msra.mxu0 %v2241
      %2337 = vmatmul.bf16.gmra.mxu0 %v2110
      %v2338 = vpop.f32.mrf.mxu0
      %v2339 = vadd.f32 0.0, %v2338
      %v2340 = vpop.f32.mrf.mxu0
      %2341 = vdwg.mxu0
      %2342 = vmatpush.bf16.msra.mxu0 %v2270
      %2343 = vmatpush.bf16.msra.mxu0 %v2266
      %2344 = vmatpush.bf16.msra.mxu0 %v2262
      %2345 = vmatpush.bf16.msra.mxu0 %v2258
      %2346 = vmatpush.bf16.msra.mxu0 %v2254
      %2347 = vmatpush.bf16.msra.mxu0 %v2250
      %2348 = vmatpush.bf16.msra.mxu0 %v2246
      %2349 = vmatpush.bf16.msra.mxu0 %v2242
      %2350 = vmatmul.bf16.gmra.mxu0 %v2110
      %v2351 = vpop.f32.mrf.mxu0
      %v2352 = vadd.f32 0.0, %v2351
      %v2353 = vpop.f32.mrf.mxu0
      %2354 = vdwg.mxu0
      %v2355 = vadd.f32 %v2105, %v2313
      %v2356 = vadd.f32 %v2106, %v2326
      %v2357 = vadd.f32 %v2107, %v2339
      %v2358 = vadd.f32 %v2108, %v2352
      %v2359 = vxor.u32 %v2355, 2147483648
      %v2360 = vmul.f32 %v2359, 1.442695
      %v2361 = vpow.pop %v2360
      %v2362 = vadd.f32 %v2361, 1.0
      %v2363 = vrcp.pop %v2362
      %v2364 = vmul.f32 %v2362, %v2363
      %v2365 = vsub.f32 1.0, %v2364
      %v2366 = vmul.f32 %v2363, %v2365
      %v2367 = vadd.f32 %v2363, %v2366
      %vm2368 = vweird.f32 %v2362
      %vm2369 = vweird.f32 %v2363
      %vm2370 = vmor %vm2368, %vm2369
      %v2371 = vsel %vm2370, %v2363, %v2367
      %v2372 = vand.u32 2147483647, %v2362
      %vm2373 = vcmp.eq.f32.partialorder %v2372, 8.507059e+37
      %v2374 = vand.u32 %v2362, 2147483648
      %v2375 = vor.u32 1.1754944e-38, %v2374
      %v2376 = vsel %vm2373, %v2375, %v2371
      %v2377 = vmul.f32 1.0, %v2376
      %v2378 = vxor.u32 %v2356, 2147483648
      %v2379 = vmul.f32 %v2378, 1.442695
      %v2380 = vpow.pop %v2379
      %v2381 = vadd.f32 %v2380, 1.0
      %v2382 = vrcp.pop %v2381
      %v2383 = vmul.f32 %v2381, %v2382
      %v2384 = vsub.f32 1.0, %v2383
      %v2385 = vmul.f32 %v2382, %v2384
      %v2386 = vadd.f32 %v2382, %v2385
      %vm2387 = vweird.f32 %v2381
      %vm2388 = vweird.f32 %v2382
      %vm2389 = vmor %vm2387, %vm2388
      %v2390 = vsel %vm2389, %v2382, %v2386
      %v2391 = vand.u32 2147483647, %v2381
      %vm2392 = vcmp.eq.f32.partialorder %v2391, 8.507059e+37
      %v2393 = vand.u32 %v2381, 2147483648
      %v2394 = vor.u32 1.1754944e-38, %v2393
      %v2395 = vsel %vm2392, %v2394, %v2390
      %v2396 = vmul.f32 1.0, %v2395
      %v2397 = vtanh.pop %v2357
      %v2398 = vxor.u32 %v2358, 2147483648
      %v2399 = vmul.f32 %v2398, 1.442695
      %v2400 = vpow.pop %v2399
      %v2401 = vadd.f32 %v2400, 1.0
      %v2402 = vrcp.pop %v2401
      %v2403 = vmul.f32 %v2401, %v2402
      %v2404 = vsub.f32 1.0, %v2403
      %v2405 = vmul.f32 %v2402, %v2404
      %v2406 = vadd.f32 %v2402, %v2405
      %vm2407 = vweird.f32 %v2401
      %vm2408 = vweird.f32 %v2402
      %vm2409 = vmor %vm2407, %vm2408
      %v2410 = vsel %vm2409, %v2402, %v2406
      %v2411 = vand.u32 2147483647, %v2401
      %vm2412 = vcmp.eq.f32.partialorder %v2411, 8.507059e+37
      %v2413 = vand.u32 %v2401, 2147483648
      %v2414 = vor.u32 1.1754944e-38, %v2413
      %v2415 = vsel %vm2412, %v2414, %v2410
      %v2416 = vmul.f32 1.0, %v2415
      %v2417 = vld [vmem:[#allocation3] sm:$0xff]
      %v2418 = vmul.f32 %v2396, %v2417
      %v2419 = vmul.f32 %v2377, %v2397
      %v2420 = vadd.f32 %v2418, %v2419
      %v2421 = vtanh.pop %v2420
      %v2422 = vmul.f32 %v2416, %v2421
      %v2423 = vsel %vm2104, 1, 0
      %2424 = vset.pattern.permute.xlu0 0
      %2425 = vperm.xlu0 %2424, %v2423
      %v2426 = vpop.permute.xlu0 %2425
      %vm2427 = vcmp.eq.s32.totalorder %v2426, 1
      %v2428 = vsel %vm2427, %v2422, %v2109
      %2429 = vst [vmem:[#allocation2] sm:$0xff] %v2428
      %v2430 = vld [vmem:[#allocation3] sm:$0xff]
      %v2431 = vsel %vm2427, %v2420, %v2430
      %2432 = vst [vmem:[#allocation3] sm:$0xff] %v2431
      %s2433 = scalar_lea.vmem [#allocation11], 48
      %v2434 = vld [vmem:[%s2433] sm:$0xff]
      %v2435 = vld [vmem:[%s2433 + $0x8] sm:$0xff]
      %v2436 = vstv %s2099
      %vm2437 = vcmp.lt.s32.totalorder %v2436, %v86
      %v2438 = vunpack.c.l.bf16 %v2434
      %v2439 = vunpack.c.h.bf16 %v2434
      %v2440 = vunpack.c.l.bf16 %v2435
      %v2441 = vunpack.c.h.bf16 %v2435
      %v2442 = vld [vmem:[#allocation4] sm:$0xff]
      %v2443 = vpack.c.bf16 %v2442, %v2442
      %v2444 = vld [vmem:[#allocation13] sm:$0xff]
      %v2445 = vld [vmem:[#allocation13 + $0x8] sm:$0xff]
      %v2446 = vld [vmem:[#allocation13 + $0x10] sm:$0xff]
      %v2447 = vld [vmem:[#allocation13 + $0x18] sm:$0xff]
      %v2448 = vld [vmem:[#allocation13 + $0x20] sm:$0xff]
      %v2449 = vld [vmem:[#allocation13 + $0x28] sm:$0xff]
      %v2450 = vld [vmem:[#allocation13 + $0x30] sm:$0xff]
      %v2451 = vld [vmem:[#allocation13 + $0x38] sm:$0xff]
      %v2452 = vld [vmem:[#allocation13 + $0x40] sm:$0xff]
      %v2453 = vld [vmem:[#allocation13 + $0x48] sm:$0xff]
      %v2454 = vld [vmem:[#allocation13 + $0x50] sm:$0xff]
      %v2455 = vld [vmem:[#allocation13 + $0x58] sm:$0xff]
      %v2456 = vld [vmem:[#allocation13 + $0x60] sm:$0xff]
      %v2457 = vld [vmem:[#allocation13 + $0x68] sm:$0xff]
      %v2458 = vld [vmem:[#allocation13 + $0x70] sm:$0xff]
      %v2459 = vld [vmem:[#allocation13 + $0x78] sm:$0xff]
      %v2460 = vld [vmem:[#allocation13 + $0x80] sm:$0xff]
      %v2461 = vld [vmem:[#allocation13 + $0x88] sm:$0xff]
      %v2462 = vld [vmem:[#allocation13 + $0x90] sm:$0xff]
      %v2463 = vld [vmem:[#allocation13 + $0x98] sm:$0xff]
      %v2464 = vld [vmem:[#allocation13 + $0xa0] sm:$0xff]
      %v2465 = vld [vmem:[#allocation13 + $0xa8] sm:$0xff]
      %v2466 = vld [vmem:[#allocation13 + $0xb0] sm:$0xff]
      %v2467 = vld [vmem:[#allocation13 + $0xb8] sm:$0xff]
      %v2468 = vld [vmem:[#allocation13 + $0xc0] sm:$0xff]
      %v2469 = vld [vmem:[#allocation13 + $0xc8] sm:$0xff]
      %v2470 = vld [vmem:[#allocation13 + $0xd0] sm:$0xff]
      %v2471 = vld [vmem:[#allocation13 + $0xd8] sm:$0xff]
      %v2472 = vld [vmem:[#allocation13 + $0xe0] sm:$0xff]
      %v2473 = vld [vmem:[#allocation13 + $0xe8] sm:$0xff]
      %v2474 = vld [vmem:[#allocation13 + $0xf0] sm:$0xff]
      %v2475 = vld [vmem:[#allocation13 + $0xf8] sm:$0xff]
      %v2508 = vunpack.c.l.b16 %v2444
      %v2509 = vunpack.c.h.b16 %v2444
      %v2510 = vunpack.c.l.b16 %v2445
      %v2511 = vunpack.c.h.b16 %v2445
      %v2512 = vunpack.c.l.b16 %v2446
      %v2513 = vunpack.c.h.b16 %v2446
      %v2514 = vunpack.c.l.b16 %v2447
      %v2515 = vunpack.c.h.b16 %v2447
      %v2516 = vunpack.c.l.b16 %v2448
      %v2517 = vunpack.c.h.b16 %v2448
      %v2518 = vunpack.c.l.b16 %v2449
      %v2519 = vunpack.c.h.b16 %v2449
      %v2520 = vunpack.c.l.b16 %v2450
      %v2521 = vunpack.c.h.b16 %v2450
      %v2522 = vunpack.c.l.b16 %v2451
      %v2523 = vunpack.c.h.b16 %v2451
      %v2524 = vunpack.c.l.b16 %v2452
      %v2525 = vunpack.c.h.b16 %v2452
      %v2526 = vunpack.c.l.b16 %v2453
      %v2527 = vunpack.c.h.b16 %v2453
      %v2528 = vunpack.c.l.b16 %v2454
      %v2529 = vunpack.c.h.b16 %v2454
      %v2530 = vunpack.c.l.b16 %v2455
      %v2531 = vunpack.c.h.b16 %v2455
      %v2532 = vunpack.c.l.b16 %v2456
      %v2533 = vunpack.c.h.b16 %v2456
      %v2534 = vunpack.c.l.b16 %v2457
      %v2535 = vunpack.c.h.b16 %v2457
      %v2536 = vunpack.c.l.b16 %v2458
      %v2537 = vunpack.c.h.b16 %v2458
      %v2538 = vunpack.c.l.b16 %v2459
      %v2539 = vunpack.c.h.b16 %v2459
      %v2540 = vunpack.c.l.b16 %v2460
      %v2541 = vunpack.c.h.b16 %v2460
      %v2542 = vunpack.c.l.b16 %v2461
      %v2543 = vunpack.c.h.b16 %v2461
      %v2544 = vunpack.c.l.b16 %v2462
      %v2545 = vunpack.c.h.b16 %v2462
      %v2546 = vunpack.c.l.b16 %v2463
      %v2547 = vunpack.c.h.b16 %v2463
      %v2548 = vunpack.c.l.b16 %v2464
      %v2549 = vunpack.c.h.b16 %v2464
      %v2550 = vunpack.c.l.b16 %v2465
      %v2551 = vunpack.c.h.b16 %v2465
      %v2552 = vunpack.c.l.b16 %v2466
      %v2553 = vunpack.c.h.b16 %v2466
      %v2554 = vunpack.c.l.b16 %v2467
      %v2555 = vunpack.c.h.b16 %v2467
      %v2556 = vunpack.c.l.b16 %v2468
      %v2557 = vunpack.c.h.b16 %v2468
      %v2558 = vunpack.c.l.b16 %v2469
      %v2559 = vunpack.c.h.b16 %v2469
      %v2560 = vunpack.c.l.b16 %v2470
      %v2561 = vunpack.c.h.b16 %v2470
      %v2562 = vunpack.c.l.b16 %v2471
      %v2563 = vunpack.c.h.b16 %v2471
      %v2564 = vunpack.c.l.b16 %v2472
      %v2565 = vunpack.c.h.b16 %v2472
      %v2566 = vunpack.c.l.b16 %v2473
      %v2567 = vunpack.c.h.b16 %v2473
      %v2568 = vunpack.c.l.b16 %v2474
      %v2569 = vunpack.c.h.b16 %v2474
      %v2570 = vunpack.c.l.b16 %v2475
      %v2571 = vunpack.c.h.b16 %v2475
      %v2572 = vpack.c.b16 %v2512, %v2508
      %v2573 = vpack.c.b16 %v2513, %v2509
      %v2574 = vpack.c.b16 %v2514, %v2510
      %v2575 = vpack.c.b16 %v2515, %v2511
      %v2576 = vpack.c.b16 %v2520, %v2516
      %v2577 = vpack.c.b16 %v2521, %v2517
      %v2578 = vpack.c.b16 %v2522, %v2518
      %v2579 = vpack.c.b16 %v2523, %v2519
      %v2580 = vpack.c.b16 %v2528, %v2524
      %v2581 = vpack.c.b16 %v2529, %v2525
      %v2582 = vpack.c.b16 %v2530, %v2526
      %v2583 = vpack.c.b16 %v2531, %v2527
      %v2584 = vpack.c.b16 %v2536, %v2532
      %v2585 = vpack.c.b16 %v2537, %v2533
      %v2586 = vpack.c.b16 %v2538, %v2534
      %v2587 = vpack.c.b16 %v2539, %v2535
      %v2588 = vpack.c.b16 %v2544, %v2540
      %v2589 = vpack.c.b16 %v2545, %v2541
      %v2590 = vpack.c.b16 %v2546, %v2542
      %v2591 = vpack.c.b16 %v2547, %v2543
      %v2592 = vpack.c.b16 %v2552, %v2548
      %v2593 = vpack.c.b16 %v2553, %v2549
      %v2594 = vpack.c.b16 %v2554, %v2550
      %v2595 = vpack.c.b16 %v2555, %v2551
      %v2596 = vpack.c.b16 %v2560, %v2556
      %v2597 = vpack.c.b16 %v2561, %v2557
      %v2598 = vpack.c.b16 %v2562, %v2558
      %v2599 = vpack.c.b16 %v2563, %v2559
      %v2600 = vpack.c.b16 %v2568, %v2564
      %v2601 = vpack.c.b16 %v2569, %v2565
      %v2602 = vpack.c.b16 %v2570, %v2566
      %v2603 = vpack.c.b16 %v2571, %v2567
      %2636 = vmatpush.bf16.msra.mxu0 %v2600
      %2637 = vmatpush.bf16.msra.mxu0 %v2596
      %2638 = vmatpush.bf16.msra.mxu0 %v2592
      %2639 = vmatpush.bf16.msra.mxu0 %v2588
      %2640 = vmatpush.bf16.msra.mxu0 %v2584
      %2641 = vmatpush.bf16.msra.mxu0 %v2580
      %2642 = vmatpush.bf16.msra.mxu0 %v2576
      %2643 = vmatpush.bf16.msra.mxu0 %v2572
      %2644 = vmatmul.bf16.gmra.mxu0 %v2443
      %v2645 = vpop.f32.mrf.mxu0
      %v2646 = vadd.f32 0.0, %v2645
      %v2647 = vpop.f32.mrf.mxu0
      %2648 = vdwg.mxu0
      %2649 = vmatpush.bf16.msra.mxu0 %v2601
      %2650 = vmatpush.bf16.msra.mxu0 %v2597
      %2651 = vmatpush.bf16.msra.mxu0 %v2593
      %2652 = vmatpush.bf16.msra.mxu0 %v2589
      %2653 = vmatpush.bf16.msra.mxu0 %v2585
      %2654 = vmatpush.bf16.msra.mxu0 %v2581
      %2655 = vmatpush.bf16.msra.mxu0 %v2577
      %2656 = vmatpush.bf16.msra.mxu0 %v2573
      %2657 = vmatmul.bf16.gmra.mxu0 %v2443
      %v2658 = vpop.f32.mrf.mxu0
      %v2659 = vadd.f32 0.0, %v2658
      %v2660 = vpop.f32.mrf.mxu0
      %2661 = vdwg.mxu0
      %2662 = vmatpush.bf16.msra.mxu0 %v2602
      %2663 = vmatpush.bf16.msra.mxu0 %v2598
      %2664 = vmatpush.bf16.msra.mxu0 %v2594
      %2665 = vmatpush.bf16.msra.mxu0 %v2590
      %2666 = vmatpush.bf16.msra.mxu0 %v2586
      %2667 = vmatpush.bf16.msra.mxu0 %v2582
      %2668 = vmatpush.bf16.msra.mxu0 %v2578
      %2669 = vmatpush.bf16.msra.mxu0 %v2574
      %2670 = vmatmul.bf16.gmra.mxu0 %v2443
      %v2671 = vpop.f32.mrf.mxu0
      %v2672 = vadd.f32 0.0, %v2671
      %v2673 = vpop.f32.mrf.mxu0
      %2674 = vdwg.mxu0
      %2675 = vmatpush.bf16.msra.mxu0 %v2603
      %2676 = vmatpush.bf16.msra.mxu0 %v2599
      %2677 = vmatpush.bf16.msra.mxu0 %v2595
      %2678 = vmatpush.bf16.msra.mxu0 %v2591
      %2679 = vmatpush.bf16.msra.mxu0 %v2587
      %2680 = vmatpush.bf16.msra.mxu0 %v2583
      %2681 = vmatpush.bf16.msra.mxu0 %v2579
      %2682 = vmatpush.bf16.msra.mxu0 %v2575
      %2683 = vmatmul.bf16.gmra.mxu0 %v2443
      %v2684 = vpop.f32.mrf.mxu0
      %v2685 = vadd.f32 0.0, %v2684
      %v2686 = vpop.f32.mrf.mxu0
      %2687 = vdwg.mxu0
      %v2688 = vadd.f32 %v2438, %v2646
      %v2689 = vadd.f32 %v2439, %v2659
      %v2690 = vadd.f32 %v2440, %v2672
      %v2691 = vadd.f32 %v2441, %v2685
      %v2692 = vxor.u32 %v2688, 2147483648
      %v2693 = vmul.f32 %v2692, 1.442695
      %v2694 = vpow.pop %v2693
      %v2695 = vadd.f32 %v2694, 1.0
      %v2696 = vrcp.pop %v2695
      %v2697 = vmul.f32 %v2695, %v2696
      %v2698 = vsub.f32 1.0, %v2697
      %v2699 = vmul.f32 %v2696, %v2698
      %v2700 = vadd.f32 %v2696, %v2699
      %vm2701 = vweird.f32 %v2695
      %vm2702 = vweird.f32 %v2696
      %vm2703 = vmor %vm2701, %vm2702
      %v2704 = vsel %vm2703, %v2696, %v2700
      %v2705 = vand.u32 2147483647, %v2695
      %vm2706 = vcmp.eq.f32.partialorder %v2705, 8.507059e+37
      %v2707 = vand.u32 %v2695, 2147483648
      %v2708 = vor.u32 1.1754944e-38, %v2707
      %v2709 = vsel %vm2706, %v2708, %v2704
      %v2710 = vmul.f32 1.0, %v2709
      %v2711 = vxor.u32 %v2689, 2147483648
      %v2712 = vmul.f32 %v2711, 1.442695
      %v2713 = vpow.pop %v2712
      %v2714 = vadd.f32 %v2713, 1.0
      %v2715 = vrcp.pop %v2714
      %v2716 = vmul.f32 %v2714, %v2715
      %v2717 = vsub.f32 1.0, %v2716
      %v2718 = vmul.f32 %v2715, %v2717
      %v2719 = vadd.f32 %v2715, %v2718
      %vm2720 = vweird.f32 %v2714
      %vm2721 = vweird.f32 %v2715
      %vm2722 = vmor %vm2720, %vm2721
      %v2723 = vsel %vm2722, %v2715, %v2719
      %v2724 = vand.u32 2147483647, %v2714
      %vm2725 = vcmp.eq.f32.partialorder %v2724, 8.507059e+37
      %v2726 = vand.u32 %v2714, 2147483648
      %v2727 = vor.u32 1.1754944e-38, %v2726
      %v2728 = vsel %vm2725, %v2727, %v2723
      %v2729 = vmul.f32 1.0, %v2728
      %v2730 = vtanh.pop %v2690
      %v2731 = vxor.u32 %v2691, 2147483648
      %v2732 = vmul.f32 %v2731, 1.442695
      %v2733 = vpow.pop %v2732
      %v2734 = vadd.f32 %v2733, 1.0
      %v2735 = vrcp.pop %v2734
      %v2736 = vmul.f32 %v2734, %v2735
      %v2737 = vsub.f32 1.0, %v2736
      %v2738 = vmul.f32 %v2735, %v2737
      %v2739 = vadd.f32 %v2735, %v2738
      %vm2740 = vweird.f32 %v2734
      %vm2741 = vweird.f32 %v2735
      %vm2742 = vmor %vm2740, %vm2741
      %v2743 = vsel %vm2742, %v2735, %v2739
      %v2744 = vand.u32 2147483647, %v2734
      %vm2745 = vcmp.eq.f32.partialorder %v2744, 8.507059e+37
      %v2746 = vand.u32 %v2734, 2147483648
      %v2747 = vor.u32 1.1754944e-38, %v2746
      %v2748 = vsel %vm2745, %v2747, %v2743
      %v2749 = vmul.f32 1.0, %v2748
      %v2750 = vld [vmem:[#allocation5] sm:$0xff]
      %v2751 = vmul.f32 %v2729, %v2750
      %v2752 = vmul.f32 %v2710, %v2730
      %v2753 = vadd.f32 %v2751, %v2752
      %v2754 = vtanh.pop %v2753
      %v2755 = vmul.f32 %v2749, %v2754
      %v2756 = vsel %vm2437, 1, 0
      %2757 = vset.pattern.permute.xlu0 0
      %2758 = vperm.xlu0 %2757, %v2756
      %v2759 = vpop.permute.xlu0 %2758
      %vm2760 = vcmp.eq.s32.totalorder %v2759, 1
      %v2761 = vsel %vm2760, %v2755, %v2442
      %2762 = vst [vmem:[#allocation4] sm:$0xff] %v2761
      %v2763 = vld [vmem:[#allocation5] sm:$0xff]
      %v2764 = vsel %vm2760, %v2753, %v2763
      %2765 = vst [vmem:[#allocation5] sm:$0xff] %v2764
      %s2766 = sadd.s32 %s87, 4
      %s2767 = ssub.s32 3, %s87
      %s2768 = scalar_lea.vmem [#allocation9], 64
      %v2769 = vld [vmem:[%s2768] sm:$0xff]
      %v2770 = vld [vmem:[%s2768 + $0x8] sm:$0xff]
      %v2771 = vstv %s2766
      %vm2772 = vcmp.lt.s32.totalorder %v2771, %v86
      %v2773 = vunpack.c.l.bf16 %v2769
      %v2774 = vunpack.c.h.bf16 %v2769
      %v2775 = vunpack.c.l.bf16 %v2770
      %v2776 = vunpack.c.h.bf16 %v2770
      %v2777 = vld [vmem:[#allocation2] sm:$0xff]
      %v2778 = vpack.c.bf16 %v2777, %v2777
      %v2779 = vld [vmem:[%s4] sm:$0xff]
      %v2780 = vld [vmem:[%s4 + $0x8] sm:$0xff]
      %v2781 = vld [vmem:[%s4 + $0x10] sm:$0xff]
      %v2782 = vld [vmem:[%s4 + $0x18] sm:$0xff]
      %v2783 = vld [vmem:[%s4 + $0x20] sm:$0xff]
      %v2784 = vld [vmem:[%s4 + $0x28] sm:$0xff]
      %v2785 = vld [vmem:[%s4 + $0x30] sm:$0xff]
      %v2786 = vld [vmem:[%s4 + $0x38] sm:$0xff]
      %v2787 = vld [vmem:[%s4 + $0x40] sm:$0xff]
      %v2788 = vld [vmem:[%s4 + $0x48] sm:$0xff]
      %v2789 = vld [vmem:[%s4 + $0x50] sm:$0xff]
      %v2790 = vld [vmem:[%s4 + $0x58] sm:$0xff]
      %v2791 = vld [vmem:[%s4 + $0x60] sm:$0xff]
      %v2792 = vld [vmem:[%s4 + $0x68] sm:$0xff]
      %v2793 = vld [vmem:[%s4 + $0x70] sm:$0xff]
      %v2794 = vld [vmem:[%s4 + $0x78] sm:$0xff]
      %v2795 = vld [vmem:[%s4 + $0x80] sm:$0xff]
      %v2796 = vld [vmem:[%s4 + $0x88] sm:$0xff]
      %v2797 = vld [vmem:[%s4 + $0x90] sm:$0xff]
      %v2798 = vld [vmem:[%s4 + $0x98] sm:$0xff]
      %v2799 = vld [vmem:[%s4 + $0xa0] sm:$0xff]
      %v2800 = vld [vmem:[%s4 + $0xa8] sm:$0xff]
      %v2801 = vld [vmem:[%s4 + $0xb0] sm:$0xff]
      %v2802 = vld [vmem:[%s4 + $0xb8] sm:$0xff]
      %v2803 = vld [vmem:[%s4 + $0xc0] sm:$0xff]
      %v2804 = vld [vmem:[%s4 + $0xc8] sm:$0xff]
      %v2805 = vld [vmem:[%s4 + $0xd0] sm:$0xff]
      %v2806 = vld [vmem:[%s4 + $0xd8] sm:$0xff]
      %v2807 = vld [vmem:[%s4 + $0xe0] sm:$0xff]
      %v2808 = vld [vmem:[%s4 + $0xe8] sm:$0xff]
      %v2809 = vld [vmem:[%s4 + $0xf0] sm:$0xff]
      %v2810 = vld [vmem:[%s4 + $0xf8] sm:$0xff]
      %v2843 = vunpack.c.l.b16 %v2779
      %v2844 = vunpack.c.h.b16 %v2779
      %v2845 = vunpack.c.l.b16 %v2780
      %v2846 = vunpack.c.h.b16 %v2780
      %v2847 = vunpack.c.l.b16 %v2781
      %v2848 = vunpack.c.h.b16 %v2781
      %v2849 = vunpack.c.l.b16 %v2782
      %v2850 = vunpack.c.h.b16 %v2782
      %v2851 = vunpack.c.l.b16 %v2783
      %v2852 = vunpack.c.h.b16 %v2783
      %v2853 = vunpack.c.l.b16 %v2784
      %v2854 = vunpack.c.h.b16 %v2784
      %v2855 = vunpack.c.l.b16 %v2785
      %v2856 = vunpack.c.h.b16 %v2785
      %v2857 = vunpack.c.l.b16 %v2786
      %v2858 = vunpack.c.h.b16 %v2786
      %v2859 = vunpack.c.l.b16 %v2787
      %v2860 = vunpack.c.h.b16 %v2787
      %v2861 = vunpack.c.l.b16 %v2788
      %v2862 = vunpack.c.h.b16 %v2788
      %v2863 = vunpack.c.l.b16 %v2789
      %v2864 = vunpack.c.h.b16 %v2789
      %v2865 = vunpack.c.l.b16 %v2790
      %v2866 = vunpack.c.h.b16 %v2790
      %v2867 = vunpack.c.l.b16 %v2791
      %v2868 = vunpack.c.h.b16 %v2791
      %v2869 = vunpack.c.l.b16 %v2792
      %v2870 = vunpack.c.h.b16 %v2792
      %v2871 = vunpack.c.l.b16 %v2793
      %v2872 = vunpack.c.h.b16 %v2793
      %v2873 = vunpack.c.l.b16 %v2794
      %v2874 = vunpack.c.h.b16 %v2794
      %v2875 = vunpack.c.l.b16 %v2795
      %v2876 = vunpack.c.h.b16 %v2795
      %v2877 = vunpack.c.l.b16 %v2796
      %v2878 = vunpack.c.h.b16 %v2796
      %v2879 = vunpack.c.l.b16 %v2797
      %v2880 = vunpack.c.h.b16 %v2797
      %v2881 = vunpack.c.l.b16 %v2798
      %v2882 = vunpack.c.h.b16 %v2798
      %v2883 = vunpack.c.l.b16 %v2799
      %v2884 = vunpack.c.h.b16 %v2799
      %v2885 = vunpack.c.l.b16 %v2800
      %v2886 = vunpack.c.h.b16 %v2800
      %v2887 = vunpack.c.l.b16 %v2801
      %v2888 = vunpack.c.h.b16 %v2801
      %v2889 = vunpack.c.l.b16 %v2802
      %v2890 = vunpack.c.h.b16 %v2802
      %v2891 = vunpack.c.l.b16 %v2803
      %v2892 = vunpack.c.h.b16 %v2803
      %v2893 = vunpack.c.l.b16 %v2804
      %v2894 = vunpack.c.h.b16 %v2804
      %v2895 = vunpack.c.l.b16 %v2805
      %v2896 = vunpack.c.h.b16 %v2805
      %v2897 = vunpack.c.l.b16 %v2806
      %v2898 = vunpack.c.h.b16 %v2806
      %v2899 = vunpack.c.l.b16 %v2807
      %v2900 = vunpack.c.h.b16 %v2807
      %v2901 = vunpack.c.l.b16 %v2808
      %v2902 = vunpack.c.h.b16 %v2808
      %v2903 = vunpack.c.l.b16 %v2809
      %v2904 = vunpack.c.h.b16 %v2809
      %v2905 = vunpack.c.l.b16 %v2810
      %v2906 = vunpack.c.h.b16 %v2810
      %v2907 = vpack.c.b16 %v2847, %v2843
      %v2908 = vpack.c.b16 %v2848, %v2844
      %v2909 = vpack.c.b16 %v2849, %v2845
      %v2910 = vpack.c.b16 %v2850, %v2846
      %v2911 = vpack.c.b16 %v2855, %v2851
      %v2912 = vpack.c.b16 %v2856, %v2852
      %v2913 = vpack.c.b16 %v2857, %v2853
      %v2914 = vpack.c.b16 %v2858, %v2854
      %v2915 = vpack.c.b16 %v2863, %v2859
      %v2916 = vpack.c.b16 %v2864, %v2860
      %v2917 = vpack.c.b16 %v2865, %v2861
      %v2918 = vpack.c.b16 %v2866, %v2862
      %v2919 = vpack.c.b16 %v2871, %v2867
      %v2920 = vpack.c.b16 %v2872, %v2868
      %v2921 = vpack.c.b16 %v2873, %v2869
      %v2922 = vpack.c.b16 %v2874, %v2870
      %v2923 = vpack.c.b16 %v2879, %v2875
      %v2924 = vpack.c.b16 %v2880, %v2876
      %v2925 = vpack.c.b16 %v2881, %v2877
      %v2926 = vpack.c.b16 %v2882, %v2878
      %v2927 = vpack.c.b16 %v2887, %v2883
      %v2928 = vpack.c.b16 %v2888, %v2884
      %v2929 = vpack.c.b16 %v2889, %v2885
      %v2930 = vpack.c.b16 %v2890, %v2886
      %v2931 = vpack.c.b16 %v2895, %v2891
      %v2932 = vpack.c.b16 %v2896, %v2892
      %v2933 = vpack.c.b16 %v2897, %v2893
      %v2934 = vpack.c.b16 %v2898, %v2894
      %v2935 = vpack.c.b16 %v2903, %v2899
      %v2936 = vpack.c.b16 %v2904, %v2900
      %v2937 = vpack.c.b16 %v2905, %v2901
      %v2938 = vpack.c.b16 %v2906, %v2902
      %2971 = vmatpush.bf16.msra.mxu0 %v2935
      %2972 = vmatpush.bf16.msra.mxu0 %v2931
      %2973 = vmatpush.bf16.msra.mxu0 %v2927
      %2974 = vmatpush.bf16.msra.mxu0 %v2923
      %2975 = vmatpush.bf16.msra.mxu0 %v2919
      %2976 = vmatpush.bf16.msra.mxu0 %v2915
      %2977 = vmatpush.bf16.msra.mxu0 %v2911
      %2978 = vmatpush.bf16.msra.mxu0 %v2907
      %2979 = vmatmul.bf16.gmra.mxu0 %v2778
      %v2980 = vpop.f32.mrf.mxu0
      %v2981 = vadd.f32 0.0, %v2980
      %v2982 = vpop.f32.mrf.mxu0
      %2983 = vdwg.mxu0
      %2984 = vmatpush.bf16.msra.mxu0 %v2936
      %2985 = vmatpush.bf16.msra.mxu0 %v2932
      %2986 = vmatpush.bf16.msra.mxu0 %v2928
      %2987 = vmatpush.bf16.msra.mxu0 %v2924
      %2988 = vmatpush.bf16.msra.mxu0 %v2920
      %2989 = vmatpush.bf16.msra.mxu0 %v2916
      %2990 = vmatpush.bf16.msra.mxu0 %v2912
      %2991 = vmatpush.bf16.msra.mxu0 %v2908
      %2992 = vmatmul.bf16.gmra.mxu0 %v2778
      %v2993 = vpop.f32.mrf.mxu0
      %v2994 = vadd.f32 0.0, %v2993
      %v2995 = vpop.f32.mrf.mxu0
      %2996 = vdwg.mxu0
      %2997 = vmatpush.bf16.msra.mxu0 %v2937
      %2998 = vmatpush.bf16.msra.mxu0 %v2933
      %2999 = vmatpush.bf16.msra.mxu0 %v2929
      %3000 = vmatpush.bf16.msra.mxu0 %v2925
      %3001 = vmatpush.bf16.msra.mxu0 %v2921
      %3002 = vmatpush.bf16.msra.mxu0 %v2917
      %3003 = vmatpush.bf16.msra.mxu0 %v2913
      %3004 = vmatpush.bf16.msra.mxu0 %v2909
      %3005 = vmatmul.bf16.gmra.mxu0 %v2778
      %v3006 = vpop.f32.mrf.mxu0
      %v3007 = vadd.f32 0.0, %v3006
      %v3008 = vpop.f32.mrf.mxu0
      %3009 = vdwg.mxu0
      %3010 = vmatpush.bf16.msra.mxu0 %v2938
      %3011 = vmatpush.bf16.msra.mxu0 %v2934
      %3012 = vmatpush.bf16.msra.mxu0 %v2930
      %3013 = vmatpush.bf16.msra.mxu0 %v2926
      %3014 = vmatpush.bf16.msra.mxu0 %v2922
      %3015 = vmatpush.bf16.msra.mxu0 %v2918
      %3016 = vmatpush.bf16.msra.mxu0 %v2914
      %3017 = vmatpush.bf16.msra.mxu0 %v2910
      %3018 = vmatmul.bf16.gmra.mxu0 %v2778
      %v3019 = vpop.f32.mrf.mxu0
      %v3020 = vadd.f32 0.0, %v3019
      %v3021 = vpop.f32.mrf.mxu0
      %3022 = vdwg.mxu0
      %v3023 = vadd.f32 %v2773, %v2981
      %v3024 = vadd.f32 %v2774, %v2994
      %v3025 = vadd.f32 %v2775, %v3007
      %v3026 = vadd.f32 %v2776, %v3020
      %v3027 = vxor.u32 %v3023, 2147483648
      %v3028 = vmul.f32 %v3027, 1.442695
      %v3029 = vpow.pop %v3028
      %v3030 = vadd.f32 %v3029, 1.0
      %v3031 = vrcp.pop %v3030
      %v3032 = vmul.f32 %v3030, %v3031
      %v3033 = vsub.f32 1.0, %v3032
      %v3034 = vmul.f32 %v3031, %v3033
      %v3035 = vadd.f32 %v3031, %v3034
      %vm3036 = vweird.f32 %v3030
      %vm3037 = vweird.f32 %v3031
      %vm3038 = vmor %vm3036, %vm3037
      %v3039 = vsel %vm3038, %v3031, %v3035
      %v3040 = vand.u32 2147483647, %v3030
      %vm3041 = vcmp.eq.f32.partialorder %v3040, 8.507059e+37
      %v3042 = vand.u32 %v3030, 2147483648
      %v3043 = vor.u32 1.1754944e-38, %v3042
      %v3044 = vsel %vm3041, %v3043, %v3039
      %v3045 = vmul.f32 1.0, %v3044
      %v3046 = vxor.u32 %v3024, 2147483648
      %v3047 = vmul.f32 %v3046, 1.442695
      %v3048 = vpow.pop %v3047
      %v3049 = vadd.f32 %v3048, 1.0
      %v3050 = vrcp.pop %v3049
      %v3051 = vmul.f32 %v3049, %v3050
      %v3052 = vsub.f32 1.0, %v3051
      %v3053 = vmul.f32 %v3050, %v3052
      %v3054 = vadd.f32 %v3050, %v3053
      %vm3055 = vweird.f32 %v3049
      %vm3056 = vweird.f32 %v3050
      %vm3057 = vmor %vm3055, %vm3056
      %v3058 = vsel %vm3057, %v3050, %v3054
      %v3059 = vand.u32 2147483647, %v3049
      %vm3060 = vcmp.eq.f32.partialorder %v3059, 8.507059e+37
      %v3061 = vand.u32 %v3049, 2147483648
      %v3062 = vor.u32 1.1754944e-38, %v3061
      %v3063 = vsel %vm3060, %v3062, %v3058
      %v3064 = vmul.f32 1.0, %v3063
      %v3065 = vtanh.pop %v3025
      %v3066 = vxor.u32 %v3026, 2147483648
      %v3067 = vmul.f32 %v3066, 1.442695
      %v3068 = vpow.pop %v3067
      %v3069 = vadd.f32 %v3068, 1.0
      %v3070 = vrcp.pop %v3069
      %v3071 = vmul.f32 %v3069, %v3070
      %v3072 = vsub.f32 1.0, %v3071
      %v3073 = vmul.f32 %v3070, %v3072
      %v3074 = vadd.f32 %v3070, %v3073
      %vm3075 = vweird.f32 %v3069
      %vm3076 = vweird.f32 %v3070
      %vm3077 = vmor %vm3075, %vm3076
      %v3078 = vsel %vm3077, %v3070, %v3074
      %v3079 = vand.u32 2147483647, %v3069
      %vm3080 = vcmp.eq.f32.partialorder %v3079, 8.507059e+37
      %v3081 = vand.u32 %v3069, 2147483648
      %v3082 = vor.u32 1.1754944e-38, %v3081
      %v3083 = vsel %vm3080, %v3082, %v3078
      %v3084 = vmul.f32 1.0, %v3083
      %v3085 = vld [vmem:[#allocation3] sm:$0xff]
      %v3086 = vmul.f32 %v3064, %v3085
      %v3087 = vmul.f32 %v3045, %v3065
      %v3088 = vadd.f32 %v3086, %v3087
      %v3089 = vtanh.pop %v3088
      %v3090 = vmul.f32 %v3084, %v3089
      %v3091 = vsel %vm2772, 1, 0
      %3092 = vset.pattern.permute.xlu0 0
      %3093 = vperm.xlu0 %3092, %v3091
      %v3094 = vpop.permute.xlu0 %3093
      %vm3095 = vcmp.eq.s32.totalorder %v3094, 1
      %v3096 = vsel %vm3095, %v3090, %v2777
      %3097 = vst [vmem:[#allocation2] sm:$0xff] %v3096
      %v3098 = vld [vmem:[#allocation3] sm:$0xff]
      %v3099 = vsel %vm3095, %v3088, %v3098
      %3100 = vst [vmem:[#allocation3] sm:$0xff] %v3099
      %s3101 = scalar_lea.vmem [#allocation11], 64
      %v3102 = vld [vmem:[%s3101] sm:$0xff]
      %v3103 = vld [vmem:[%s3101 + $0x8] sm:$0xff]
      %v3104 = vstv %s2767
      %vm3105 = vcmp.lt.s32.totalorder %v3104, %v86
      %v3106 = vunpack.c.l.bf16 %v3102
      %v3107 = vunpack.c.h.bf16 %v3102
      %v3108 = vunpack.c.l.bf16 %v3103
      %v3109 = vunpack.c.h.bf16 %v3103
      %v3110 = vld [vmem:[#allocation4] sm:$0xff]
      %v3111 = vpack.c.bf16 %v3110, %v3110
      %v3112 = vld [vmem:[#allocation13] sm:$0xff]
      %v3113 = vld [vmem:[#allocation13 + $0x8] sm:$0xff]
      %v3114 = vld [vmem:[#allocation13 + $0x10] sm:$0xff]
      %v3115 = vld [vmem:[#allocation13 + $0x18] sm:$0xff]
      %v3116 = vld [vmem:[#allocation13 + $0x20] sm:$0xff]
      %v3117 = vld [vmem:[#allocation13 + $0x28] sm:$0xff]
      %v3118 = vld [vmem:[#allocation13 + $0x30] sm:$0xff]
      %v3119 = vld [vmem:[#allocation13 + $0x38] sm:$0xff]
      %v3120 = vld [vmem:[#allocation13 + $0x40] sm:$0xff]
      %v3121 = vld [vmem:[#allocation13 + $0x48] sm:$0xff]
      %v3122 = vld [vmem:[#allocation13 + $0x50] sm:$0xff]
      %v3123 = vld [vmem:[#allocation13 + $0x58] sm:$0xff]
      %v3124 = vld [vmem:[#allocation13 + $0x60] sm:$0xff]
      %v3125 = vld [vmem:[#allocation13 + $0x68] sm:$0xff]
      %v3126 = vld [vmem:[#allocation13 + $0x70] sm:$0xff]
      %v3127 = vld [vmem:[#allocation13 + $0x78] sm:$0xff]
      %v3128 = vld [vmem:[#allocation13 + $0x80] sm:$0xff]
      %v3129 = vld [vmem:[#allocation13 + $0x88] sm:$0xff]
      %v3130 = vld [vmem:[#allocation13 + $0x90] sm:$0xff]
      %v3131 = vld [vmem:[#allocation13 + $0x98] sm:$0xff]
      %v3132 = vld [vmem:[#allocation13 + $0xa0] sm:$0xff]
      %v3133 = vld [vmem:[#allocation13 + $0xa8] sm:$0xff]
      %v3134 = vld [vmem:[#allocation13 + $0xb0] sm:$0xff]
      %v3135 = vld [vmem:[#allocation13 + $0xb8] sm:$0xff]
      %v3136 = vld [vmem:[#allocation13 + $0xc0] sm:$0xff]
      %v3137 = vld [vmem:[#allocation13 + $0xc8] sm:$0xff]
      %v3138 = vld [vmem:[#allocation13 + $0xd0] sm:$0xff]
      %v3139 = vld [vmem:[#allocation13 + $0xd8] sm:$0xff]
      %v3140 = vld [vmem:[#allocation13 + $0xe0] sm:$0xff]
      %v3141 = vld [vmem:[#allocation13 + $0xe8] sm:$0xff]
      %v3142 = vld [vmem:[#allocation13 + $0xf0] sm:$0xff]
      %v3143 = vld [vmem:[#allocation13 + $0xf8] sm:$0xff]
      %v3176 = vunpack.c.l.b16 %v3112
      %v3177 = vunpack.c.h.b16 %v3112
      %v3178 = vunpack.c.l.b16 %v3113
      %v3179 = vunpack.c.h.b16 %v3113
      %v3180 = vunpack.c.l.b16 %v3114
      %v3181 = vunpack.c.h.b16 %v3114
      %v3182 = vunpack.c.l.b16 %v3115
      %v3183 = vunpack.c.h.b16 %v3115
      %v3184 = vunpack.c.l.b16 %v3116
      %v3185 = vunpack.c.h.b16 %v3116
      %v3186 = vunpack.c.l.b16 %v3117
      %v3187 = vunpack.c.h.b16 %v3117
      %v3188 = vunpack.c.l.b16 %v3118
      %v3189 = vunpack.c.h.b16 %v3118
      %v3190 = vunpack.c.l.b16 %v3119
      %v3191 = vunpack.c.h.b16 %v3119
      %v3192 = vunpack.c.l.b16 %v3120
      %v3193 = vunpack.c.h.b16 %v3120
      %v3194 = vunpack.c.l.b16 %v3121
      %v3195 = vunpack.c.h.b16 %v3121
      %v3196 = vunpack.c.l.b16 %v3122
      %v3197 = vunpack.c.h.b16 %v3122
      %v3198 = vunpack.c.l.b16 %v3123
      %v3199 = vunpack.c.h.b16 %v3123
      %v3200 = vunpack.c.l.b16 %v3124
      %v3201 = vunpack.c.h.b16 %v3124
      %v3202 = vunpack.c.l.b16 %v3125
      %v3203 = vunpack.c.h.b16 %v3125
      %v3204 = vunpack.c.l.b16 %v3126
      %v3205 = vunpack.c.h.b16 %v3126
      %v3206 = vunpack.c.l.b16 %v3127
      %v3207 = vunpack.c.h.b16 %v3127
      %v3208 = vunpack.c.l.b16 %v3128
      %v3209 = vunpack.c.h.b16 %v3128
      %v3210 = vunpack.c.l.b16 %v3129
      %v3211 = vunpack.c.h.b16 %v3129
      %v3212 = vunpack.c.l.b16 %v3130
      %v3213 = vunpack.c.h.b16 %v3130
      %v3214 = vunpack.c.l.b16 %v3131
      %v3215 = vunpack.c.h.b16 %v3131
      %v3216 = vunpack.c.l.b16 %v3132
      %v3217 = vunpack.c.h.b16 %v3132
      %v3218 = vunpack.c.l.b16 %v3133
      %v3219 = vunpack.c.h.b16 %v3133
      %v3220 = vunpack.c.l.b16 %v3134
      %v3221 = vunpack.c.h.b16 %v3134
      %v3222 = vunpack.c.l.b16 %v3135
      %v3223 = vunpack.c.h.b16 %v3135
      %v3224 = vunpack.c.l.b16 %v3136
      %v3225 = vunpack.c.h.b16 %v3136
      %v3226 = vunpack.c.l.b16 %v3137
      %v3227 = vunpack.c.h.b16 %v3137
      %v3228 = vunpack.c.l.b16 %v3138
      %v3229 = vunpack.c.h.b16 %v3138
      %v3230 = vunpack.c.l.b16 %v3139
      %v3231 = vunpack.c.h.b16 %v3139
      %v3232 = vunpack.c.l.b16 %v3140
      %v3233 = vunpack.c.h.b16 %v3140
      %v3234 = vunpack.c.l.b16 %v3141
      %v3235 = vunpack.c.h.b16 %v3141
      %v3236 = vunpack.c.l.b16 %v3142
      %v3237 = vunpack.c.h.b16 %v3142
      %v3238 = vunpack.c.l.b16 %v3143
      %v3239 = vunpack.c.h.b16 %v3143
      %v3240 = vpack.c.b16 %v3180, %v3176
      %v3241 = vpack.c.b16 %v3181, %v3177
      %v3242 = vpack.c.b16 %v3182, %v3178
      %v3243 = vpack.c.b16 %v3183, %v3179
      %v3244 = vpack.c.b16 %v3188, %v3184
      %v3245 = vpack.c.b16 %v3189, %v3185
      %v3246 = vpack.c.b16 %v3190, %v3186
      %v3247 = vpack.c.b16 %v3191, %v3187
      %v3248 = vpack.c.b16 %v3196, %v3192
      %v3249 = vpack.c.b16 %v3197, %v3193
      %v3250 = vpack.c.b16 %v3198, %v3194
      %v3251 = vpack.c.b16 %v3199, %v3195
      %v3252 = vpack.c.b16 %v3204, %v3200
      %v3253 = vpack.c.b16 %v3205, %v3201
      %v3254 = vpack.c.b16 %v3206, %v3202
      %v3255 = vpack.c.b16 %v3207, %v3203
      %v3256 = vpack.c.b16 %v3212, %v3208
      %v3257 = vpack.c.b16 %v3213, %v3209
      %v3258 = vpack.c.b16 %v3214, %v3210
      %v3259 = vpack.c.b16 %v3215, %v3211
      %v3260 = vpack.c.b16 %v3220, %v3216
      %v3261 = vpack.c.b16 %v3221, %v3217
      %v3262 = vpack.c.b16 %v3222, %v3218
      %v3263 = vpack.c.b16 %v3223, %v3219
      %v3264 = vpack.c.b16 %v3228, %v3224
      %v3265 = vpack.c.b16 %v3229, %v3225
      %v3266 = vpack.c.b16 %v3230, %v3226
      %v3267 = vpack.c.b16 %v3231, %v3227
      %v3268 = vpack.c.b16 %v3236, %v3232
      %v3269 = vpack.c.b16 %v3237, %v3233
      %v3270 = vpack.c.b16 %v3238, %v3234
      %v3271 = vpack.c.b16 %v3239, %v3235
      %3304 = vmatpush.bf16.msra.mxu0 %v3268
      %3305 = vmatpush.bf16.msra.mxu0 %v3264
      %3306 = vmatpush.bf16.msra.mxu0 %v3260
      %3307 = vmatpush.bf16.msra.mxu0 %v3256
      %3308 = vmatpush.bf16.msra.mxu0 %v3252
      %3309 = vmatpush.bf16.msra.mxu0 %v3248
      %3310 = vmatpush.bf16.msra.mxu0 %v3244
      %3311 = vmatpush.bf16.msra.mxu0 %v3240
      %3312 = vmatmul.bf16.gmra.mxu0 %v3111
      %v3313 = vpop.f32.mrf.mxu0
      %v3314 = vadd.f32 0.0, %v3313
      %v3315 = vpop.f32.mrf.mxu0
      %3316 = vdwg.mxu0
      %3317 = vmatpush.bf16.msra.mxu0 %v3269
      %3318 = vmatpush.bf16.msra.mxu0 %v3265
      %3319 = vmatpush.bf16.msra.mxu0 %v3261
      %3320 = vmatpush.bf16.msra.mxu0 %v3257
      %3321 = vmatpush.bf16.msra.mxu0 %v3253
      %3322 = vmatpush.bf16.msra.mxu0 %v3249
      %3323 = vmatpush.bf16.msra.mxu0 %v3245
      %3324 = vmatpush.bf16.msra.mxu0 %v3241
      %3325 = vmatmul.bf16.gmra.mxu0 %v3111
      %v3326 = vpop.f32.mrf.mxu0
      %v3327 = vadd.f32 0.0, %v3326
      %v3328 = vpop.f32.mrf.mxu0
      %3329 = vdwg.mxu0
      %3330 = vmatpush.bf16.msra.mxu0 %v3270
      %3331 = vmatpush.bf16.msra.mxu0 %v3266
      %3332 = vmatpush.bf16.msra.mxu0 %v3262
      %3333 = vmatpush.bf16.msra.mxu0 %v3258
      %3334 = vmatpush.bf16.msra.mxu0 %v3254
      %3335 = vmatpush.bf16.msra.mxu0 %v3250
      %3336 = vmatpush.bf16.msra.mxu0 %v3246
      %3337 = vmatpush.bf16.msra.mxu0 %v3242
      %3338 = vmatmul.bf16.gmra.mxu0 %v3111
      %v3339 = vpop.f32.mrf.mxu0
      %v3340 = vadd.f32 0.0, %v3339
      %v3341 = vpop.f32.mrf.mxu0
      %3342 = vdwg.mxu0
      %3343 = vmatpush.bf16.msra.mxu0 %v3271
      %3344 = vmatpush.bf16.msra.mxu0 %v3267
      %3345 = vmatpush.bf16.msra.mxu0 %v3263
      %3346 = vmatpush.bf16.msra.mxu0 %v3259
      %3347 = vmatpush.bf16.msra.mxu0 %v3255
      %3348 = vmatpush.bf16.msra.mxu0 %v3251
      %3349 = vmatpush.bf16.msra.mxu0 %v3247
      %3350 = vmatpush.bf16.msra.mxu0 %v3243
      %3351 = vmatmul.bf16.gmra.mxu0 %v3111
      %v3352 = vpop.f32.mrf.mxu0
      %v3353 = vadd.f32 0.0, %v3352
      %v3354 = vpop.f32.mrf.mxu0
      %3355 = vdwg.mxu0
      %v3356 = vadd.f32 %v3106, %v3314
      %v3357 = vadd.f32 %v3107, %v3327
      %v3358 = vadd.f32 %v3108, %v3340
      %v3359 = vadd.f32 %v3109, %v3353
      %v3360 = vxor.u32 %v3356, 2147483648
      %v3361 = vmul.f32 %v3360, 1.442695
      %v3362 = vpow.pop %v3361
      %v3363 = vadd.f32 %v3362, 1.0
      %v3364 = vrcp.pop %v3363
      %v3365 = vmul.f32 %v3363, %v3364
      %v3366 = vsub.f32 1.0, %v3365
      %v3367 = vmul.f32 %v3364, %v3366
      %v3368 = vadd.f32 %v3364, %v3367
      %vm3369 = vweird.f32 %v3363
      %vm3370 = vweird.f32 %v3364
      %vm3371 = vmor %vm3369, %vm3370
      %v3372 = vsel %vm3371, %v3364, %v3368
      %v3373 = vand.u32 2147483647, %v3363
      %vm3374 = vcmp.eq.f32.partialorder %v3373, 8.507059e+37
      %v3375 = vand.u32 %v3363, 2147483648
      %v3376 = vor.u32 1.1754944e-38, %v3375
      %v3377 = vsel %vm3374, %v3376, %v3372
      %v3378 = vmul.f32 1.0, %v3377
      %v3379 = vxor.u32 %v3357, 2147483648
      %v3380 = vmul.f32 %v3379, 1.442695
      %v3381 = vpow.pop %v3380
      %v3382 = vadd.f32 %v3381, 1.0
      %v3383 = vrcp.pop %v3382
      %v3384 = vmul.f32 %v3382, %v3383
      %v3385 = vsub.f32 1.0, %v3384
      %v3386 = vmul.f32 %v3383, %v3385
      %v3387 = vadd.f32 %v3383, %v3386
      %vm3388 = vweird.f32 %v3382
      %vm3389 = vweird.f32 %v3383
      %vm3390 = vmor %vm3388, %vm3389
      %v3391 = vsel %vm3390, %v3383, %v3387
      %v3392 = vand.u32 2147483647, %v3382
      %vm3393 = vcmp.eq.f32.partialorder %v3392, 8.507059e+37
      %v3394 = vand.u32 %v3382, 2147483648
      %v3395 = vor.u32 1.1754944e-38, %v3394
      %v3396 = vsel %vm3393, %v3395, %v3391
      %v3397 = vmul.f32 1.0, %v3396
      %v3398 = vtanh.pop %v3358
      %v3399 = vxor.u32 %v3359, 2147483648
      %v3400 = vmul.f32 %v3399, 1.442695
      %v3401 = vpow.pop %v3400
      %v3402 = vadd.f32 %v3401, 1.0
      %v3403 = vrcp.pop %v3402
      %v3404 = vmul.f32 %v3402, %v3403
      %v3405 = vsub.f32 1.0, %v3404
      %v3406 = vmul.f32 %v3403, %v3405
      %v3407 = vadd.f32 %v3403, %v3406
      %vm3408 = vweird.f32 %v3402
      %vm3409 = vweird.f32 %v3403
      %vm3410 = vmor %vm3408, %vm3409
      %v3411 = vsel %vm3410, %v3403, %v3407
      %v3412 = vand.u32 2147483647, %v3402
      %vm3413 = vcmp.eq.f32.partialorder %v3412, 8.507059e+37
      %v3414 = vand.u32 %v3402, 2147483648
      %v3415 = vor.u32 1.1754944e-38, %v3414
      %v3416 = vsel %vm3413, %v3415, %v3411
      %v3417 = vmul.f32 1.0, %v3416
      %v3418 = vld [vmem:[#allocation5] sm:$0xff]
      %v3419 = vmul.f32 %v3397, %v3418
      %v3420 = vmul.f32 %v3378, %v3398
      %v3421 = vadd.f32 %v3419, %v3420
      %v3422 = vtanh.pop %v3421
      %v3423 = vmul.f32 %v3417, %v3422
      %v3424 = vsel %vm3105, 1, 0
      %3425 = vset.pattern.permute.xlu0 0
      %3426 = vperm.xlu0 %3425, %v3424
      %v3427 = vpop.permute.xlu0 %3426
      %vm3428 = vcmp.eq.s32.totalorder %v3427, 1
      %v3429 = vsel %vm3428, %v3423, %v3110
      %3430 = vst [vmem:[#allocation4] sm:$0xff] %v3429
      %v3431 = vld [vmem:[#allocation5] sm:$0xff]
      %v3432 = vsel %vm3428, %v3421, %v3431
      %3433 = vst [vmem:[#allocation5] sm:$0xff] %v3432
      %s3434 = sadd.s32 %s87, 5
      %s3435 = ssub.s32 2, %s87
      %s3436 = scalar_lea.vmem [#allocation9], 80
      %v3437 = vld [vmem:[%s3436] sm:$0xff]
      %v3438 = vld [vmem:[%s3436 + $0x8] sm:$0xff]
      %v3439 = vstv %s3434
      %vm3440 = vcmp.lt.s32.totalorder %v3439, %v86
      %v3441 = vunpack.c.l.bf16 %v3437
      %v3442 = vunpack.c.h.bf16 %v3437
      %v3443 = vunpack.c.l.bf16 %v3438
      %v3444 = vunpack.c.h.bf16 %v3438
      %v3445 = vld [vmem:[#allocation2] sm:$0xff]
      %v3446 = vpack.c.bf16 %v3445, %v3445
      %v3447 = vld [vmem:[%s4] sm:$0xff]
      %v3448 = vld [vmem:[%s4 + $0x8] sm:$0xff]
      %v3449 = vld [vmem:[%s4 + $0x10] sm:$0xff]
      %v3450 = vld [vmem:[%s4 + $0x18] sm:$0xff]
      %v3451 = vld [vmem:[%s4 + $0x20] sm:$0xff]
      %v3452 = vld [vmem:[%s4 + $0x28] sm:$0xff]
      %v3453 = vld [vmem:[%s4 + $0x30] sm:$0xff]
      %v3454 = vld [vmem:[%s4 + $0x38] sm:$0xff]
      %v3455 = vld [vmem:[%s4 + $0x40] sm:$0xff]
      %v3456 = vld [vmem:[%s4 + $0x48] sm:$0xff]
      %v3457 = vld [vmem:[%s4 + $0x50] sm:$0xff]
      %v3458 = vld [vmem:[%s4 + $0x58] sm:$0xff]
      %v3459 = vld [vmem:[%s4 + $0x60] sm:$0xff]
      %v3460 = vld [vmem:[%s4 + $0x68] sm:$0xff]
      %v3461 = vld [vmem:[%s4 + $0x70] sm:$0xff]
      %v3462 = vld [vmem:[%s4 + $0x78] sm:$0xff]
      %v3463 = vld [vmem:[%s4 + $0x80] sm:$0xff]
      %v3464 = vld [vmem:[%s4 + $0x88] sm:$0xff]
      %v3465 = vld [vmem:[%s4 + $0x90] sm:$0xff]
      %v3466 = vld [vmem:[%s4 + $0x98] sm:$0xff]
      %v3467 = vld [vmem:[%s4 + $0xa0] sm:$0xff]
      %v3468 = vld [vmem:[%s4 + $0xa8] sm:$0xff]
      %v3469 = vld [vmem:[%s4 + $0xb0] sm:$0xff]
      %v3470 = vld [vmem:[%s4 + $0xb8] sm:$0xff]
      %v3471 = vld [vmem:[%s4 + $0xc0] sm:$0xff]
      %v3472 = vld [vmem:[%s4 + $0xc8] sm:$0xff]
      %v3473 = vld [vmem:[%s4 + $0xd0] sm:$0xff]
      %v3474 = vld [vmem:[%s4 + $0xd8] sm:$0xff]
      %v3475 = vld [vmem:[%s4 + $0xe0] sm:$0xff]
      %v3476 = vld [vmem:[%s4 + $0xe8] sm:$0xff]
      %v3477 = vld [vmem:[%s4 + $0xf0] sm:$0xff]
      %v3478 = vld [vmem:[%s4 + $0xf8] sm:$0xff]
      %v3511 = vunpack.c.l.b16 %v3447
      %v3512 = vunpack.c.h.b16 %v3447
      %v3513 = vunpack.c.l.b16 %v3448
      %v3514 = vunpack.c.h.b16 %v3448
      %v3515 = vunpack.c.l.b16 %v3449
      %v3516 = vunpack.c.h.b16 %v3449
      %v3517 = vunpack.c.l.b16 %v3450
      %v3518 = vunpack.c.h.b16 %v3450
      %v3519 = vunpack.c.l.b16 %v3451
      %v3520 = vunpack.c.h.b16 %v3451
      %v3521 = vunpack.c.l.b16 %v3452
      %v3522 = vunpack.c.h.b16 %v3452
      %v3523 = vunpack.c.l.b16 %v3453
      %v3524 = vunpack.c.h.b16 %v3453
      %v3525 = vunpack.c.l.b16 %v3454
      %v3526 = vunpack.c.h.b16 %v3454
      %v3527 = vunpack.c.l.b16 %v3455
      %v3528 = vunpack.c.h.b16 %v3455
      %v3529 = vunpack.c.l.b16 %v3456
      %v3530 = vunpack.c.h.b16 %v3456
      %v3531 = vunpack.c.l.b16 %v3457
      %v3532 = vunpack.c.h.b16 %v3457
      %v3533 = vunpack.c.l.b16 %v3458
      %v3534 = vunpack.c.h.b16 %v3458
      %v3535 = vunpack.c.l.b16 %v3459
      %v3536 = vunpack.c.h.b16 %v3459
      %v3537 = vunpack.c.l.b16 %v3460
      %v3538 = vunpack.c.h.b16 %v3460
      %v3539 = vunpack.c.l.b16 %v3461
      %v3540 = vunpack.c.h.b16 %v3461
      %v3541 = vunpack.c.l.b16 %v3462
      %v3542 = vunpack.c.h.b16 %v3462
      %v3543 = vunpack.c.l.b16 %v3463
      %v3544 = vunpack.c.h.b16 %v3463
      %v3545 = vunpack.c.l.b16 %v3464
      %v3546 = vunpack.c.h.b16 %v3464
      %v3547 = vunpack.c.l.b16 %v3465
      %v3548 = vunpack.c.h.b16 %v3465
      %v3549 = vunpack.c.l.b16 %v3466
      %v3550 = vunpack.c.h.b16 %v3466
      %v3551 = vunpack.c.l.b16 %v3467
      %v3552 = vunpack.c.h.b16 %v3467
      %v3553 = vunpack.c.l.b16 %v3468
      %v3554 = vunpack.c.h.b16 %v3468
      %v3555 = vunpack.c.l.b16 %v3469
      %v3556 = vunpack.c.h.b16 %v3469
      %v3557 = vunpack.c.l.b16 %v3470
      %v3558 = vunpack.c.h.b16 %v3470
      %v3559 = vunpack.c.l.b16 %v3471
      %v3560 = vunpack.c.h.b16 %v3471
      %v3561 = vunpack.c.l.b16 %v3472
      %v3562 = vunpack.c.h.b16 %v3472
      %v3563 = vunpack.c.l.b16 %v3473
      %v3564 = vunpack.c.h.b16 %v3473
      %v3565 = vunpack.c.l.b16 %v3474
      %v3566 = vunpack.c.h.b16 %v3474
      %v3567 = vunpack.c.l.b16 %v3475
      %v3568 = vunpack.c.h.b16 %v3475
      %v3569 = vunpack.c.l.b16 %v3476
      %v3570 = vunpack.c.h.b16 %v3476
      %v3571 = vunpack.c.l.b16 %v3477
      %v3572 = vunpack.c.h.b16 %v3477
      %v3573 = vunpack.c.l.b16 %v3478
      %v3574 = vunpack.c.h.b16 %v3478
      %v3575 = vpack.c.b16 %v3515, %v3511
      %v3576 = vpack.c.b16 %v3516, %v3512
      %v3577 = vpack.c.b16 %v3517, %v3513
      %v3578 = vpack.c.b16 %v3518, %v3514
      %v3579 = vpack.c.b16 %v3523, %v3519
      %v3580 = vpack.c.b16 %v3524, %v3520
      %v3581 = vpack.c.b16 %v3525, %v3521
      %v3582 = vpack.c.b16 %v3526, %v3522
      %v3583 = vpack.c.b16 %v3531, %v3527
      %v3584 = vpack.c.b16 %v3532, %v3528
      %v3585 = vpack.c.b16 %v3533, %v3529
      %v3586 = vpack.c.b16 %v3534, %v3530
      %v3587 = vpack.c.b16 %v3539, %v3535
      %v3588 = vpack.c.b16 %v3540, %v3536
      %v3589 = vpack.c.b16 %v3541, %v3537
      %v3590 = vpack.c.b16 %v3542, %v3538
      %v3591 = vpack.c.b16 %v3547, %v3543
      %v3592 = vpack.c.b16 %v3548, %v3544
      %v3593 = vpack.c.b16 %v3549, %v3545
      %v3594 = vpack.c.b16 %v3550, %v3546
      %v3595 = vpack.c.b16 %v3555, %v3551
      %v3596 = vpack.c.b16 %v3556, %v3552
      %v3597 = vpack.c.b16 %v3557, %v3553
      %v3598 = vpack.c.b16 %v3558, %v3554
      %v3599 = vpack.c.b16 %v3563, %v3559
      %v3600 = vpack.c.b16 %v3564, %v3560
      %v3601 = vpack.c.b16 %v3565, %v3561
      %v3602 = vpack.c.b16 %v3566, %v3562
      %v3603 = vpack.c.b16 %v3571, %v3567
      %v3604 = vpack.c.b16 %v3572, %v3568
      %v3605 = vpack.c.b16 %v3573, %v3569
      %v3606 = vpack.c.b16 %v3574, %v3570
      %3639 = vmatpush.bf16.msra.mxu0 %v3603
      %3640 = vmatpush.bf16.msra.mxu0 %v3599
      %3641 = vmatpush.bf16.msra.mxu0 %v3595
      %3642 = vmatpush.bf16.msra.mxu0 %v3591
      %3643 = vmatpush.bf16.msra.mxu0 %v3587
      %3644 = vmatpush.bf16.msra.mxu0 %v3583
      %3645 = vmatpush.bf16.msra.mxu0 %v3579
      %3646 = vmatpush.bf16.msra.mxu0 %v3575
      %3647 = vmatmul.bf16.gmra.mxu0 %v3446
      %v3648 = vpop.f32.mrf.mxu0
      %v3649 = vadd.f32 0.0, %v3648
      %v3650 = vpop.f32.mrf.mxu0
      %3651 = vdwg.mxu0
      %3652 = vmatpush.bf16.msra.mxu0 %v3604
      %3653 = vmatpush.bf16.msra.mxu0 %v3600
      %3654 = vmatpush.bf16.msra.mxu0 %v3596
      %3655 = vmatpush.bf16.msra.mxu0 %v3592
      %3656 = vmatpush.bf16.msra.mxu0 %v3588
      %3657 = vmatpush.bf16.msra.mxu0 %v3584
      %3658 = vmatpush.bf16.msra.mxu0 %v3580
      %3659 = vmatpush.bf16.msra.mxu0 %v3576
      %3660 = vmatmul.bf16.gmra.mxu0 %v3446
      %v3661 = vpop.f32.mrf.mxu0
      %v3662 = vadd.f32 0.0, %v3661
      %v3663 = vpop.f32.mrf.mxu0
      %3664 = vdwg.mxu0
      %3665 = vmatpush.bf16.msra.mxu0 %v3605
      %3666 = vmatpush.bf16.msra.mxu0 %v3601
      %3667 = vmatpush.bf16.msra.mxu0 %v3597
      %3668 = vmatpush.bf16.msra.mxu0 %v3593
      %3669 = vmatpush.bf16.msra.mxu0 %v3589
      %3670 = vmatpush.bf16.msra.mxu0 %v3585
      %3671 = vmatpush.bf16.msra.mxu0 %v3581
      %3672 = vmatpush.bf16.msra.mxu0 %v3577
      %3673 = vmatmul.bf16.gmra.mxu0 %v3446
      %v3674 = vpop.f32.mrf.mxu0
      %v3675 = vadd.f32 0.0, %v3674
      %v3676 = vpop.f32.mrf.mxu0
      %3677 = vdwg.mxu0
      %3678 = vmatpush.bf16.msra.mxu0 %v3606
      %3679 = vmatpush.bf16.msra.mxu0 %v3602
      %3680 = vmatpush.bf16.msra.mxu0 %v3598
      %3681 = vmatpush.bf16.msra.mxu0 %v3594
      %3682 = vmatpush.bf16.msra.mxu0 %v3590
      %3683 = vmatpush.bf16.msra.mxu0 %v3586
      %3684 = vmatpush.bf16.msra.mxu0 %v3582
      %3685 = vmatpush.bf16.msra.mxu0 %v3578
      %3686 = vmatmul.bf16.gmra.mxu0 %v3446
      %v3687 = vpop.f32.mrf.mxu0
      %v3688 = vadd.f32 0.0, %v3687
      %v3689 = vpop.f32.mrf.mxu0
      %3690 = vdwg.mxu0
      %v3691 = vadd.f32 %v3441, %v3649
      %v3692 = vadd.f32 %v3442, %v3662
      %v3693 = vadd.f32 %v3443, %v3675
      %v3694 = vadd.f32 %v3444, %v3688
      %v3695 = vxor.u32 %v3691, 2147483648
      %v3696 = vmul.f32 %v3695, 1.442695
      %v3697 = vpow.pop %v3696
      %v3698 = vadd.f32 %v3697, 1.0
      %v3699 = vrcp.pop %v3698
      %v3700 = vmul.f32 %v3698, %v3699
      %v3701 = vsub.f32 1.0, %v3700
      %v3702 = vmul.f32 %v3699, %v3701
      %v3703 = vadd.f32 %v3699, %v3702
      %vm3704 = vweird.f32 %v3698
      %vm3705 = vweird.f32 %v3699
      %vm3706 = vmor %vm3704, %vm3705
      %v3707 = vsel %vm3706, %v3699, %v3703
      %v3708 = vand.u32 2147483647, %v3698
      %vm3709 = vcmp.eq.f32.partialorder %v3708, 8.507059e+37
      %v3710 = vand.u32 %v3698, 2147483648
      %v3711 = vor.u32 1.1754944e-38, %v3710
      %v3712 = vsel %vm3709, %v3711, %v3707
      %v3713 = vmul.f32 1.0, %v3712
      %v3714 = vxor.u32 %v3692, 2147483648
      %v3715 = vmul.f32 %v3714, 1.442695
      %v3716 = vpow.pop %v3715
      %v3717 = vadd.f32 %v3716, 1.0
      %v3718 = vrcp.pop %v3717
      %v3719 = vmul.f32 %v3717, %v3718
      %v3720 = vsub.f32 1.0, %v3719
      %v3721 = vmul.f32 %v3718, %v3720
      %v3722 = vadd.f32 %v3718, %v3721
      %vm3723 = vweird.f32 %v3717
      %vm3724 = vweird.f32 %v3718
      %vm3725 = vmor %vm3723, %vm3724
      %v3726 = vsel %vm3725, %v3718, %v3722
      %v3727 = vand.u32 2147483647, %v3717
      %vm3728 = vcmp.eq.f32.partialorder %v3727, 8.507059e+37
      %v3729 = vand.u32 %v3717, 2147483648
      %v3730 = vor.u32 1.1754944e-38, %v3729
      %v3731 = vsel %vm3728, %v3730, %v3726
      %v3732 = vmul.f32 1.0, %v3731
      %v3733 = vtanh.pop %v3693
      %v3734 = vxor.u32 %v3694, 2147483648
      %v3735 = vmul.f32 %v3734, 1.442695
      %v3736 = vpow.pop %v3735
      %v3737 = vadd.f32 %v3736, 1.0
      %v3738 = vrcp.pop %v3737
      %v3739 = vmul.f32 %v3737, %v3738
      %v3740 = vsub.f32 1.0, %v3739
      %v3741 = vmul.f32 %v3738, %v3740
      %v3742 = vadd.f32 %v3738, %v3741
      %vm3743 = vweird.f32 %v3737
      %vm3744 = vweird.f32 %v3738
      %vm3745 = vmor %vm3743, %vm3744
      %v3746 = vsel %vm3745, %v3738, %v3742
      %v3747 = vand.u32 2147483647, %v3737
      %vm3748 = vcmp.eq.f32.partialorder %v3747, 8.507059e+37
      %v3749 = vand.u32 %v3737, 2147483648
      %v3750 = vor.u32 1.1754944e-38, %v3749
      %v3751 = vsel %vm3748, %v3750, %v3746
      %v3752 = vmul.f32 1.0, %v3751
      %v3753 = vld [vmem:[#allocation3] sm:$0xff]
      %v3754 = vmul.f32 %v3732, %v3753
      %v3755 = vmul.f32 %v3713, %v3733
      %v3756 = vadd.f32 %v3754, %v3755
      %v3757 = vtanh.pop %v3756
      %v3758 = vmul.f32 %v3752, %v3757
      %v3759 = vsel %vm3440, 1, 0
      %3760 = vset.pattern.permute.xlu0 0
      %3761 = vperm.xlu0 %3760, %v3759
      %v3762 = vpop.permute.xlu0 %3761
      %vm3763 = vcmp.eq.s32.totalorder %v3762, 1
      %v3764 = vsel %vm3763, %v3758, %v3445
      %3765 = vst [vmem:[#allocation2] sm:$0xff] %v3764
      %v3766 = vld [vmem:[#allocation3] sm:$0xff]
      %v3767 = vsel %vm3763, %v3756, %v3766
      %3768 = vst [vmem:[#allocation3] sm:$0xff] %v3767
      %s3769 = scalar_lea.vmem [#allocation11], 80
      %v3770 = vld [vmem:[%s3769] sm:$0xff]
      %v3771 = vld [vmem:[%s3769 + $0x8] sm:$0xff]
      %v3772 = vstv %s3435
      %vm3773 = vcmp.lt.s32.totalorder %v3772, %v86
      %v3774 = vunpack.c.l.bf16 %v3770
      %v3775 = vunpack.c.h.bf16 %v3770
      %v3776 = vunpack.c.l.bf16 %v3771
      %v3777 = vunpack.c.h.bf16 %v3771
      %v3778 = vld [vmem:[#allocation4] sm:$0xff]
      %v3779 = vpack.c.bf16 %v3778, %v3778
      %v3780 = vld [vmem:[#allocation13] sm:$0xff]
      %v3781 = vld [vmem:[#allocation13 + $0x8] sm:$0xff]
      %v3782 = vld [vmem:[#allocation13 + $0x10] sm:$0xff]
      %v3783 = vld [vmem:[#allocation13 + $0x18] sm:$0xff]
      %v3784 = vld [vmem:[#allocation13 + $0x20] sm:$0xff]
      %v3785 = vld [vmem:[#allocation13 + $0x28] sm:$0xff]
      %v3786 = vld [vmem:[#allocation13 + $0x30] sm:$0xff]
      %v3787 = vld [vmem:[#allocation13 + $0x38] sm:$0xff]
      %v3788 = vld [vmem:[#allocation13 + $0x40] sm:$0xff]
      %v3789 = vld [vmem:[#allocation13 + $0x48] sm:$0xff]
      %v3790 = vld [vmem:[#allocation13 + $0x50] sm:$0xff]
      %v3791 = vld [vmem:[#allocation13 + $0x58] sm:$0xff]
      %v3792 = vld [vmem:[#allocation13 + $0x60] sm:$0xff]
      %v3793 = vld [vmem:[#allocation13 + $0x68] sm:$0xff]
      %v3794 = vld [vmem:[#allocation13 + $0x70] sm:$0xff]
      %v3795 = vld [vmem:[#allocation13 + $0x78] sm:$0xff]
      %v3796 = vld [vmem:[#allocation13 + $0x80] sm:$0xff]
      %v3797 = vld [vmem:[#allocation13 + $0x88] sm:$0xff]
      %v3798 = vld [vmem:[#allocation13 + $0x90] sm:$0xff]
      %v3799 = vld [vmem:[#allocation13 + $0x98] sm:$0xff]
      %v3800 = vld [vmem:[#allocation13 + $0xa0] sm:$0xff]
      %v3801 = vld [vmem:[#allocation13 + $0xa8] sm:$0xff]
      %v3802 = vld [vmem:[#allocation13 + $0xb0] sm:$0xff]
      %v3803 = vld [vmem:[#allocation13 + $0xb8] sm:$0xff]
      %v3804 = vld [vmem:[#allocation13 + $0xc0] sm:$0xff]
      %v3805 = vld [vmem:[#allocation13 + $0xc8] sm:$0xff]
      %v3806 = vld [vmem:[#allocation13 + $0xd0] sm:$0xff]
      %v3807 = vld [vmem:[#allocation13 + $0xd8] sm:$0xff]
      %v3808 = vld [vmem:[#allocation13 + $0xe0] sm:$0xff]
      %v3809 = vld [vmem:[#allocation13 + $0xe8] sm:$0xff]
      %v3810 = vld [vmem:[#allocation13 + $0xf0] sm:$0xff]
      %v3811 = vld [vmem:[#allocation13 + $0xf8] sm:$0xff]
      %v3844 = vunpack.c.l.b16 %v3780
      %v3845 = vunpack.c.h.b16 %v3780
      %v3846 = vunpack.c.l.b16 %v3781
      %v3847 = vunpack.c.h.b16 %v3781
      %v3848 = vunpack.c.l.b16 %v3782
      %v3849 = vunpack.c.h.b16 %v3782
      %v3850 = vunpack.c.l.b16 %v3783
      %v3851 = vunpack.c.h.b16 %v3783
      %v3852 = vunpack.c.l.b16 %v3784
      %v3853 = vunpack.c.h.b16 %v3784
      %v3854 = vunpack.c.l.b16 %v3785
      %v3855 = vunpack.c.h.b16 %v3785
      %v3856 = vunpack.c.l.b16 %v3786
      %v3857 = vunpack.c.h.b16 %v3786
      %v3858 = vunpack.c.l.b16 %v3787
      %v3859 = vunpack.c.h.b16 %v3787
      %v3860 = vunpack.c.l.b16 %v3788
      %v3861 = vunpack.c.h.b16 %v3788
      %v3862 = vunpack.c.l.b16 %v3789
      %v3863 = vunpack.c.h.b16 %v3789
      %v3864 = vunpack.c.l.b16 %v3790
      %v3865 = vunpack.c.h.b16 %v3790
      %v3866 = vunpack.c.l.b16 %v3791
      %v3867 = vunpack.c.h.b16 %v3791
      %v3868 = vunpack.c.l.b16 %v3792
      %v3869 = vunpack.c.h.b16 %v3792
      %v3870 = vunpack.c.l.b16 %v3793
      %v3871 = vunpack.c.h.b16 %v3793
      %v3872 = vunpack.c.l.b16 %v3794
      %v3873 = vunpack.c.h.b16 %v3794
      %v3874 = vunpack.c.l.b16 %v3795
      %v3875 = vunpack.c.h.b16 %v3795
      %v3876 = vunpack.c.l.b16 %v3796
      %v3877 = vunpack.c.h.b16 %v3796
      %v3878 = vunpack.c.l.b16 %v3797
      %v3879 = vunpack.c.h.b16 %v3797
      %v3880 = vunpack.c.l.b16 %v3798
      %v3881 = vunpack.c.h.b16 %v3798
      %v3882 = vunpack.c.l.b16 %v3799
      %v3883 = vunpack.c.h.b16 %v3799
      %v3884 = vunpack.c.l.b16 %v3800
      %v3885 = vunpack.c.h.b16 %v3800
      %v3886 = vunpack.c.l.b16 %v3801
      %v3887 = vunpack.c.h.b16 %v3801
      %v3888 = vunpack.c.l.b16 %v3802
      %v3889 = vunpack.c.h.b16 %v3802
      %v3890 = vunpack.c.l.b16 %v3803
      %v3891 = vunpack.c.h.b16 %v3803
      %v3892 = vunpack.c.l.b16 %v3804
      %v3893 = vunpack.c.h.b16 %v3804
      %v3894 = vunpack.c.l.b16 %v3805
      %v3895 = vunpack.c.h.b16 %v3805
      %v3896 = vunpack.c.l.b16 %v3806
      %v3897 = vunpack.c.h.b16 %v3806
      %v3898 = vunpack.c.l.b16 %v3807
      %v3899 = vunpack.c.h.b16 %v3807
      %v3900 = vunpack.c.l.b16 %v3808
      %v3901 = vunpack.c.h.b16 %v3808
      %v3902 = vunpack.c.l.b16 %v3809
      %v3903 = vunpack.c.h.b16 %v3809
      %v3904 = vunpack.c.l.b16 %v3810
      %v3905 = vunpack.c.h.b16 %v3810
      %v3906 = vunpack.c.l.b16 %v3811
      %v3907 = vunpack.c.h.b16 %v3811
      %v3908 = vpack.c.b16 %v3848, %v3844
      %v3909 = vpack.c.b16 %v3849, %v3845
      %v3910 = vpack.c.b16 %v3850, %v3846
      %v3911 = vpack.c.b16 %v3851, %v3847
      %v3912 = vpack.c.b16 %v3856, %v3852
      %v3913 = vpack.c.b16 %v3857, %v3853
      %v3914 = vpack.c.b16 %v3858, %v3854
      %v3915 = vpack.c.b16 %v3859, %v3855
      %v3916 = vpack.c.b16 %v3864, %v3860
      %v3917 = vpack.c.b16 %v3865, %v3861
      %v3918 = vpack.c.b16 %v3866, %v3862
      %v3919 = vpack.c.b16 %v3867, %v3863
      %v3920 = vpack.c.b16 %v3872, %v3868
      %v3921 = vpack.c.b16 %v3873, %v3869
      %v3922 = vpack.c.b16 %v3874, %v3870
      %v3923 = vpack.c.b16 %v3875, %v3871
      %v3924 = vpack.c.b16 %v3880, %v3876
      %v3925 = vpack.c.b16 %v3881, %v3877
      %v3926 = vpack.c.b16 %v3882, %v3878
      %v3927 = vpack.c.b16 %v3883, %v3879
      %v3928 = vpack.c.b16 %v3888, %v3884
      %v3929 = vpack.c.b16 %v3889, %v3885
      %v3930 = vpack.c.b16 %v3890, %v3886
      %v3931 = vpack.c.b16 %v3891, %v3887
      %v3932 = vpack.c.b16 %v3896, %v3892
      %v3933 = vpack.c.b16 %v3897, %v3893
      %v3934 = vpack.c.b16 %v3898, %v3894
      %v3935 = vpack.c.b16 %v3899, %v3895
      %v3936 = vpack.c.b16 %v3904, %v3900
      %v3937 = vpack.c.b16 %v3905, %v3901
      %v3938 = vpack.c.b16 %v3906, %v3902
      %v3939 = vpack.c.b16 %v3907, %v3903
      %3972 = vmatpush.bf16.msra.mxu0 %v3936
      %3973 = vmatpush.bf16.msra.mxu0 %v3932
      %3974 = vmatpush.bf16.msra.mxu0 %v3928
      %3975 = vmatpush.bf16.msra.mxu0 %v3924
      %3976 = vmatpush.bf16.msra.mxu0 %v3920
      %3977 = vmatpush.bf16.msra.mxu0 %v3916
      %3978 = vmatpush.bf16.msra.mxu0 %v3912
      %3979 = vmatpush.bf16.msra.mxu0 %v3908
      %3980 = vmatmul.bf16.gmra.mxu0 %v3779
      %v3981 = vpop.f32.mrf.mxu0
      %v3982 = vadd.f32 0.0, %v3981
      %v3983 = vpop.f32.mrf.mxu0
      %3984 = vdwg.mxu0
      %3985 = vmatpush.bf16.msra.mxu0 %v3937
      %3986 = vmatpush.bf16.msra.mxu0 %v3933
      %3987 = vmatpush.bf16.msra.mxu0 %v3929
      %3988 = vmatpush.bf16.msra.mxu0 %v3925
      %3989 = vmatpush.bf16.msra.mxu0 %v3921
      %3990 = vmatpush.bf16.msra.mxu0 %v3917
      %3991 = vmatpush.bf16.msra.mxu0 %v3913
      %3992 = vmatpush.bf16.msra.mxu0 %v3909
      %3993 = vmatmul.bf16.gmra.mxu0 %v3779
      %v3994 = vpop.f32.mrf.mxu0
      %v3995 = vadd.f32 0.0, %v3994
      %v3996 = vpop.f32.mrf.mxu0
      %3997 = vdwg.mxu0
      %3998 = vmatpush.bf16.msra.mxu0 %v3938
      %3999 = vmatpush.bf16.msra.mxu0 %v3934
      %4000 = vmatpush.bf16.msra.mxu0 %v3930
      %4001 = vmatpush.bf16.msra.mxu0 %v3926
      %4002 = vmatpush.bf16.msra.mxu0 %v3922
      %4003 = vmatpush.bf16.msra.mxu0 %v3918
      %4004 = vmatpush.bf16.msra.mxu0 %v3914
      %4005 = vmatpush.bf16.msra.mxu0 %v3910
      %4006 = vmatmul.bf16.gmra.mxu0 %v3779
      %v4007 = vpop.f32.mrf.mxu0
      %v4008 = vadd.f32 0.0, %v4007
      %v4009 = vpop.f32.mrf.mxu0
      %4010 = vdwg.mxu0
      %4011 = vmatpush.bf16.msra.mxu0 %v3939
      %4012 = vmatpush.bf16.msra.mxu0 %v3935
      %4013 = vmatpush.bf16.msra.mxu0 %v3931
      %4014 = vmatpush.bf16.msra.mxu0 %v3927
      %4015 = vmatpush.bf16.msra.mxu0 %v3923
      %4016 = vmatpush.bf16.msra.mxu0 %v3919
      %4017 = vmatpush.bf16.msra.mxu0 %v3915
      %4018 = vmatpush.bf16.msra.mxu0 %v3911
      %4019 = vmatmul.bf16.gmra.mxu0 %v3779
      %v4020 = vpop.f32.mrf.mxu0
      %v4021 = vadd.f32 0.0, %v4020
      %v4022 = vpop.f32.mrf.mxu0
      %4023 = vdwg.mxu0
      %v4024 = vadd.f32 %v3774, %v3982
      %v4025 = vadd.f32 %v3775, %v3995
      %v4026 = vadd.f32 %v3776, %v4008
      %v4027 = vadd.f32 %v3777, %v4021
      %v4028 = vxor.u32 %v4024, 2147483648
      %v4029 = vmul.f32 %v4028, 1.442695
      %v4030 = vpow.pop %v4029
      %v4031 = vadd.f32 %v4030, 1.0
      %v4032 = vrcp.pop %v4031
      %v4033 = vmul.f32 %v4031, %v4032
      %v4034 = vsub.f32 1.0, %v4033
      %v4035 = vmul.f32 %v4032, %v4034
      %v4036 = vadd.f32 %v4032, %v4035
      %vm4037 = vweird.f32 %v4031
      %vm4038 = vweird.f32 %v4032
      %vm4039 = vmor %vm4037, %vm4038
      %v4040 = vsel %vm4039, %v4032, %v4036
      %v4041 = vand.u32 2147483647, %v4031
      %vm4042 = vcmp.eq.f32.partialorder %v4041, 8.507059e+37
      %v4043 = vand.u32 %v4031, 2147483648
      %v4044 = vor.u32 1.1754944e-38, %v4043
      %v4045 = vsel %vm4042, %v4044, %v4040
      %v4046 = vmul.f32 1.0, %v4045
      %v4047 = vxor.u32 %v4025, 2147483648
      %v4048 = vmul.f32 %v4047, 1.442695
      %v4049 = vpow.pop %v4048
      %v4050 = vadd.f32 %v4049, 1.0
      %v4051 = vrcp.pop %v4050
      %v4052 = vmul.f32 %v4050, %v4051
      %v4053 = vsub.f32 1.0, %v4052
      %v4054 = vmul.f32 %v4051, %v4053
      %v4055 = vadd.f32 %v4051, %v4054
      %vm4056 = vweird.f32 %v4050
      %vm4057 = vweird.f32 %v4051
      %vm4058 = vmor %vm4056, %vm4057
      %v4059 = vsel %vm4058, %v4051, %v4055
      %v4060 = vand.u32 2147483647, %v4050
      %vm4061 = vcmp.eq.f32.partialorder %v4060, 8.507059e+37
      %v4062 = vand.u32 %v4050, 2147483648
      %v4063 = vor.u32 1.1754944e-38, %v4062
      %v4064 = vsel %vm4061, %v4063, %v4059
      %v4065 = vmul.f32 1.0, %v4064
      %v4066 = vtanh.pop %v4026
      %v4067 = vxor.u32 %v4027, 2147483648
      %v4068 = vmul.f32 %v4067, 1.442695
      %v4069 = vpow.pop %v4068
      %v4070 = vadd.f32 %v4069, 1.0
      %v4071 = vrcp.pop %v4070
      %v4072 = vmul.f32 %v4070, %v4071
      %v4073 = vsub.f32 1.0, %v4072
      %v4074 = vmul.f32 %v4071, %v4073
      %v4075 = vadd.f32 %v4071, %v4074
      %vm4076 = vweird.f32 %v4070
      %vm4077 = vweird.f32 %v4071
      %vm4078 = vmor %vm4076, %vm4077
      %v4079 = vsel %vm4078, %v4071, %v4075
      %v4080 = vand.u32 2147483647, %v4070
      %vm4081 = vcmp.eq.f32.partialorder %v4080, 8.507059e+37
      %v4082 = vand.u32 %v4070, 2147483648
      %v4083 = vor.u32 1.1754944e-38, %v4082
      %v4084 = vsel %vm4081, %v4083, %v4079
      %v4085 = vmul.f32 1.0, %v4084
      %v4086 = vld [vmem:[#allocation5] sm:$0xff]
      %v4087 = vmul.f32 %v4065, %v4086
      %v4088 = vmul.f32 %v4046, %v4066
      %v4089 = vadd.f32 %v4087, %v4088
      %v4090 = vtanh.pop %v4089
      %v4091 = vmul.f32 %v4085, %v4090
      %v4092 = vsel %vm3773, 1, 0
      %4093 = vset.pattern.permute.xlu0 0
      %4094 = vperm.xlu0 %4093, %v4092
      %v4095 = vpop.permute.xlu0 %4094
      %vm4096 = vcmp.eq.s32.totalorder %v4095, 1
      %v4097 = vsel %vm4096, %v4091, %v3778
      %4098 = vst [vmem:[#allocation4] sm:$0xff] %v4097
      %v4099 = vld [vmem:[#allocation5] sm:$0xff]
      %v4100 = vsel %vm4096, %v4089, %v4099
      %4101 = vst [vmem:[#allocation5] sm:$0xff] %v4100
      %s4102 = sadd.s32 %s87, 6
      %s4103 = ssub.s32 1, %s87
      %s4104 = scalar_lea.vmem [#allocation9], 96
      %v4105 = vld [vmem:[%s4104] sm:$0xff]
      %v4106 = vld [vmem:[%s4104 + $0x8] sm:$0xff]
      %v4107 = vstv %s4102
      %vm4108 = vcmp.lt.s32.totalorder %v4107, %v86
      %v4109 = vunpack.c.l.bf16 %v4105
      %v4110 = vunpack.c.h.bf16 %v4105
      %v4111 = vunpack.c.l.bf16 %v4106
      %v4112 = vunpack.c.h.bf16 %v4106
      %v4113 = vld [vmem:[#allocation2] sm:$0xff]
      %v4114 = vpack.c.bf16 %v4113, %v4113
      %v4115 = vld [vmem:[%s4] sm:$0xff]
      %v4116 = vld [vmem:[%s4 + $0x8] sm:$0xff]
      %v4117 = vld [vmem:[%s4 + $0x10] sm:$0xff]
      %v4118 = vld [vmem:[%s4 + $0x18] sm:$0xff]
      %v4119 = vld [vmem:[%s4 + $0x20] sm:$0xff]
      %v4120 = vld [vmem:[%s4 + $0x28] sm:$0xff]
      %v4121 = vld [vmem:[%s4 + $0x30] sm:$0xff]
      %v4122 = vld [vmem:[%s4 + $0x38] sm:$0xff]
      %v4123 = vld [vmem:[%s4 + $0x40] sm:$0xff]
      %v4124 = vld [vmem:[%s4 + $0x48] sm:$0xff]
      %v4125 = vld [vmem:[%s4 + $0x50] sm:$0xff]
      %v4126 = vld [vmem:[%s4 + $0x58] sm:$0xff]
      %v4127 = vld [vmem:[%s4 + $0x60] sm:$0xff]
      %v4128 = vld [vmem:[%s4 + $0x68] sm:$0xff]
      %v4129 = vld [vmem:[%s4 + $0x70] sm:$0xff]
      %v4130 = vld [vmem:[%s4 + $0x78] sm:$0xff]
      %v4131 = vld [vmem:[%s4 + $0x80] sm:$0xff]
      %v4132 = vld [vmem:[%s4 + $0x88] sm:$0xff]
      %v4133 = vld [vmem:[%s4 + $0x90] sm:$0xff]
      %v4134 = vld [vmem:[%s4 + $0x98] sm:$0xff]
      %v4135 = vld [vmem:[%s4 + $0xa0] sm:$0xff]
      %v4136 = vld [vmem:[%s4 + $0xa8] sm:$0xff]
      %v4137 = vld [vmem:[%s4 + $0xb0] sm:$0xff]
      %v4138 = vld [vmem:[%s4 + $0xb8] sm:$0xff]
      %v4139 = vld [vmem:[%s4 + $0xc0] sm:$0xff]
      %v4140 = vld [vmem:[%s4 + $0xc8] sm:$0xff]
      %v4141 = vld [vmem:[%s4 + $0xd0] sm:$0xff]
      %v4142 = vld [vmem:[%s4 + $0xd8] sm:$0xff]
      %v4143 = vld [vmem:[%s4 + $0xe0] sm:$0xff]
      %v4144 = vld [vmem:[%s4 + $0xe8] sm:$0xff]
      %v4145 = vld [vmem:[%s4 + $0xf0] sm:$0xff]
      %v4146 = vld [vmem:[%s4 + $0xf8] sm:$0xff]
      %v4179 = vunpack.c.l.b16 %v4115
      %v4180 = vunpack.c.h.b16 %v4115
      %v4181 = vunpack.c.l.b16 %v4116
      %v4182 = vunpack.c.h.b16 %v4116
      %v4183 = vunpack.c.l.b16 %v4117
      %v4184 = vunpack.c.h.b16 %v4117
      %v4185 = vunpack.c.l.b16 %v4118
      %v4186 = vunpack.c.h.b16 %v4118
      %v4187 = vunpack.c.l.b16 %v4119
      %v4188 = vunpack.c.h.b16 %v4119
      %v4189 = vunpack.c.l.b16 %v4120
      %v4190 = vunpack.c.h.b16 %v4120
      %v4191 = vunpack.c.l.b16 %v4121
      %v4192 = vunpack.c.h.b16 %v4121
      %v4193 = vunpack.c.l.b16 %v4122
      %v4194 = vunpack.c.h.b16 %v4122
      %v4195 = vunpack.c.l.b16 %v4123
      %v4196 = vunpack.c.h.b16 %v4123
      %v4197 = vunpack.c.l.b16 %v4124
      %v4198 = vunpack.c.h.b16 %v4124
      %v4199 = vunpack.c.l.b16 %v4125
      %v4200 = vunpack.c.h.b16 %v4125
      %v4201 = vunpack.c.l.b16 %v4126
      %v4202 = vunpack.c.h.b16 %v4126
      %v4203 = vunpack.c.l.b16 %v4127
      %v4204 = vunpack.c.h.b16 %v4127
      %v4205 = vunpack.c.l.b16 %v4128
      %v4206 = vunpack.c.h.b16 %v4128
      %v4207 = vunpack.c.l.b16 %v4129
      %v4208 = vunpack.c.h.b16 %v4129
      %v4209 = vunpack.c.l.b16 %v4130
      %v4210 = vunpack.c.h.b16 %v4130
      %v4211 = vunpack.c.l.b16 %v4131
      %v4212 = vunpack.c.h.b16 %v4131
      %v4213 = vunpack.c.l.b16 %v4132
      %v4214 = vunpack.c.h.b16 %v4132
      %v4215 = vunpack.c.l.b16 %v4133
      %v4216 = vunpack.c.h.b16 %v4133
      %v4217 = vunpack.c.l.b16 %v4134
      %v4218 = vunpack.c.h.b16 %v4134
      %v4219 = vunpack.c.l.b16 %v4135
      %v4220 = vunpack.c.h.b16 %v4135
      %v4221 = vunpack.c.l.b16 %v4136
      %v4222 = vunpack.c.h.b16 %v4136
      %v4223 = vunpack.c.l.b16 %v4137
      %v4224 = vunpack.c.h.b16 %v4137
      %v4225 = vunpack.c.l.b16 %v4138
      %v4226 = vunpack.c.h.b16 %v4138
      %v4227 = vunpack.c.l.b16 %v4139
      %v4228 = vunpack.c.h.b16 %v4139
      %v4229 = vunpack.c.l.b16 %v4140
      %v4230 = vunpack.c.h.b16 %v4140
      %v4231 = vunpack.c.l.b16 %v4141
      %v4232 = vunpack.c.h.b16 %v4141
      %v4233 = vunpack.c.l.b16 %v4142
      %v4234 = vunpack.c.h.b16 %v4142
      %v4235 = vunpack.c.l.b16 %v4143
      %v4236 = vunpack.c.h.b16 %v4143
      %v4237 = vunpack.c.l.b16 %v4144
      %v4238 = vunpack.c.h.b16 %v4144
      %v4239 = vunpack.c.l.b16 %v4145
      %v4240 = vunpack.c.h.b16 %v4145
      %v4241 = vunpack.c.l.b16 %v4146
      %v4242 = vunpack.c.h.b16 %v4146
      %v4243 = vpack.c.b16 %v4183, %v4179
      %v4244 = vpack.c.b16 %v4184, %v4180
      %v4245 = vpack.c.b16 %v4185, %v4181
      %v4246 = vpack.c.b16 %v4186, %v4182
      %v4247 = vpack.c.b16 %v4191, %v4187
      %v4248 = vpack.c.b16 %v4192, %v4188
      %v4249 = vpack.c.b16 %v4193, %v4189
      %v4250 = vpack.c.b16 %v4194, %v4190
      %v4251 = vpack.c.b16 %v4199, %v4195
      %v4252 = vpack.c.b16 %v4200, %v4196
      %v4253 = vpack.c.b16 %v4201, %v4197
      %v4254 = vpack.c.b16 %v4202, %v4198
      %v4255 = vpack.c.b16 %v4207, %v4203
      %v4256 = vpack.c.b16 %v4208, %v4204
      %v4257 = vpack.c.b16 %v4209, %v4205
      %v4258 = vpack.c.b16 %v4210, %v4206
      %v4259 = vpack.c.b16 %v4215, %v4211
      %v4260 = vpack.c.b16 %v4216, %v4212
      %v4261 = vpack.c.b16 %v4217, %v4213
      %v4262 = vpack.c.b16 %v4218, %v4214
      %v4263 = vpack.c.b16 %v4223, %v4219
      %v4264 = vpack.c.b16 %v4224, %v4220
      %v4265 = vpack.c.b16 %v4225, %v4221
      %v4266 = vpack.c.b16 %v4226, %v4222
      %v4267 = vpack.c.b16 %v4231, %v4227
      %v4268 = vpack.c.b16 %v4232, %v4228
      %v4269 = vpack.c.b16 %v4233, %v4229
      %v4270 = vpack.c.b16 %v4234, %v4230
      %v4271 = vpack.c.b16 %v4239, %v4235
      %v4272 = vpack.c.b16 %v4240, %v4236
      %v4273 = vpack.c.b16 %v4241, %v4237
      %v4274 = vpack.c.b16 %v4242, %v4238
      %4307 = vmatpush.bf16.msra.mxu0 %v4271
      %4308 = vmatpush.bf16.msra.mxu0 %v4267
      %4309 = vmatpush.bf16.msra.mxu0 %v4263
      %4310 = vmatpush.bf16.msra.mxu0 %v4259
      %4311 = vmatpush.bf16.msra.mxu0 %v4255
      %4312 = vmatpush.bf16.msra.mxu0 %v4251
      %4313 = vmatpush.bf16.msra.mxu0 %v4247
      %4314 = vmatpush.bf16.msra.mxu0 %v4243
      %4315 = vmatmul.bf16.gmra.mxu0 %v4114
      %v4316 = vpop.f32.mrf.mxu0
      %v4317 = vadd.f32 0.0, %v4316
      %v4318 = vpop.f32.mrf.mxu0
      %4319 = vdwg.mxu0
      %4320 = vmatpush.bf16.msra.mxu0 %v4272
      %4321 = vmatpush.bf16.msra.mxu0 %v4268
      %4322 = vmatpush.bf16.msra.mxu0 %v4264
      %4323 = vmatpush.bf16.msra.mxu0 %v4260
      %4324 = vmatpush.bf16.msra.mxu0 %v4256
      %4325 = vmatpush.bf16.msra.mxu0 %v4252
      %4326 = vmatpush.bf16.msra.mxu0 %v4248
      %4327 = vmatpush.bf16.msra.mxu0 %v4244
      %4328 = vmatmul.bf16.gmra.mxu0 %v4114
      %v4329 = vpop.f32.mrf.mxu0
      %v4330 = vadd.f32 0.0, %v4329
      %v4331 = vpop.f32.mrf.mxu0
      %4332 = vdwg.mxu0
      %4333 = vmatpush.bf16.msra.mxu0 %v4273
      %4334 = vmatpush.bf16.msra.mxu0 %v4269
      %4335 = vmatpush.bf16.msra.mxu0 %v4265
      %4336 = vmatpush.bf16.msra.mxu0 %v4261
      %4337 = vmatpush.bf16.msra.mxu0 %v4257
      %4338 = vmatpush.bf16.msra.mxu0 %v4253
      %4339 = vmatpush.bf16.msra.mxu0 %v4249
      %4340 = vmatpush.bf16.msra.mxu0 %v4245
      %4341 = vmatmul.bf16.gmra.mxu0 %v4114
      %v4342 = vpop.f32.mrf.mxu0
      %v4343 = vadd.f32 0.0, %v4342
      %v4344 = vpop.f32.mrf.mxu0
      %4345 = vdwg.mxu0
      %4346 = vmatpush.bf16.msra.mxu0 %v4274
      %4347 = vmatpush.bf16.msra.mxu0 %v4270
      %4348 = vmatpush.bf16.msra.mxu0 %v4266
      %4349 = vmatpush.bf16.msra.mxu0 %v4262
      %4350 = vmatpush.bf16.msra.mxu0 %v4258
      %4351 = vmatpush.bf16.msra.mxu0 %v4254
      %4352 = vmatpush.bf16.msra.mxu0 %v4250
      %4353 = vmatpush.bf16.msra.mxu0 %v4246
      %4354 = vmatmul.bf16.gmra.mxu0 %v4114
      %v4355 = vpop.f32.mrf.mxu0
      %v4356 = vadd.f32 0.0, %v4355
      %v4357 = vpop.f32.mrf.mxu0
      %4358 = vdwg.mxu0
      %v4359 = vadd.f32 %v4109, %v4317
      %v4360 = vadd.f32 %v4110, %v4330
      %v4361 = vadd.f32 %v4111, %v4343
      %v4362 = vadd.f32 %v4112, %v4356
      %v4363 = vxor.u32 %v4359, 2147483648
      %v4364 = vmul.f32 %v4363, 1.442695
      %v4365 = vpow.pop %v4364
      %v4366 = vadd.f32 %v4365, 1.0
      %v4367 = vrcp.pop %v4366
      %v4368 = vmul.f32 %v4366, %v4367
      %v4369 = vsub.f32 1.0, %v4368
      %v4370 = vmul.f32 %v4367, %v4369
      %v4371 = vadd.f32 %v4367, %v4370
      %vm4372 = vweird.f32 %v4366
      %vm4373 = vweird.f32 %v4367
      %vm4374 = vmor %vm4372, %vm4373
      %v4375 = vsel %vm4374, %v4367, %v4371
      %v4376 = vand.u32 2147483647, %v4366
      %vm4377 = vcmp.eq.f32.partialorder %v4376, 8.507059e+37
      %v4378 = vand.u32 %v4366, 2147483648
      %v4379 = vor.u32 1.1754944e-38, %v4378
      %v4380 = vsel %vm4377, %v4379, %v4375
      %v4381 = vmul.f32 1.0, %v4380
      %v4382 = vxor.u32 %v4360, 2147483648
      %v4383 = vmul.f32 %v4382, 1.442695
      %v4384 = vpow.pop %v4383
      %v4385 = vadd.f32 %v4384, 1.0
      %v4386 = vrcp.pop %v4385
      %v4387 = vmul.f32 %v4385, %v4386
      %v4388 = vsub.f32 1.0, %v4387
      %v4389 = vmul.f32 %v4386, %v4388
      %v4390 = vadd.f32 %v4386, %v4389
      %vm4391 = vweird.f32 %v4385
      %vm4392 = vweird.f32 %v4386
      %vm4393 = vmor %vm4391, %vm4392
      %v4394 = vsel %vm4393, %v4386, %v4390
      %v4395 = vand.u32 2147483647, %v4385
      %vm4396 = vcmp.eq.f32.partialorder %v4395, 8.507059e+37
      %v4397 = vand.u32 %v4385, 2147483648
      %v4398 = vor.u32 1.1754944e-38, %v4397
      %v4399 = vsel %vm4396, %v4398, %v4394
      %v4400 = vmul.f32 1.0, %v4399
      %v4401 = vtanh.pop %v4361
      %v4402 = vxor.u32 %v4362, 2147483648
      %v4403 = vmul.f32 %v4402, 1.442695
      %v4404 = vpow.pop %v4403
      %v4405 = vadd.f32 %v4404, 1.0
      %v4406 = vrcp.pop %v4405
      %v4407 = vmul.f32 %v4405, %v4406
      %v4408 = vsub.f32 1.0, %v4407
      %v4409 = vmul.f32 %v4406, %v4408
      %v4410 = vadd.f32 %v4406, %v4409
      %vm4411 = vweird.f32 %v4405
      %vm4412 = vweird.f32 %v4406
      %vm4413 = vmor %vm4411, %vm4412
      %v4414 = vsel %vm4413, %v4406, %v4410
      %v4415 = vand.u32 2147483647, %v4405
      %vm4416 = vcmp.eq.f32.partialorder %v4415, 8.507059e+37
      %v4417 = vand.u32 %v4405, 2147483648
      %v4418 = vor.u32 1.1754944e-38, %v4417
      %v4419 = vsel %vm4416, %v4418, %v4414
      %v4420 = vmul.f32 1.0, %v4419
      %v4421 = vld [vmem:[#allocation3] sm:$0xff]
      %v4422 = vmul.f32 %v4400, %v4421
      %v4423 = vmul.f32 %v4381, %v4401
      %v4424 = vadd.f32 %v4422, %v4423
      %v4425 = vtanh.pop %v4424
      %v4426 = vmul.f32 %v4420, %v4425
      %v4427 = vsel %vm4108, 1, 0
      %4428 = vset.pattern.permute.xlu0 0
      %4429 = vperm.xlu0 %4428, %v4427
      %v4430 = vpop.permute.xlu0 %4429
      %vm4431 = vcmp.eq.s32.totalorder %v4430, 1
      %v4432 = vsel %vm4431, %v4426, %v4113
      %4433 = vst [vmem:[#allocation2] sm:$0xff] %v4432
      %v4434 = vld [vmem:[#allocation3] sm:$0xff]
      %v4435 = vsel %vm4431, %v4424, %v4434
      %4436 = vst [vmem:[#allocation3] sm:$0xff] %v4435
      %s4437 = scalar_lea.vmem [#allocation11], 96
      %v4438 = vld [vmem:[%s4437] sm:$0xff]
      %v4439 = vld [vmem:[%s4437 + $0x8] sm:$0xff]
      %v4440 = vstv %s4103
      %vm4441 = vcmp.lt.s32.totalorder %v4440, %v86
      %v4442 = vunpack.c.l.bf16 %v4438
      %v4443 = vunpack.c.h.bf16 %v4438
      %v4444 = vunpack.c.l.bf16 %v4439
      %v4445 = vunpack.c.h.bf16 %v4439
      %v4446 = vld [vmem:[#allocation4] sm:$0xff]
      %v4447 = vpack.c.bf16 %v4446, %v4446
      %v4448 = vld [vmem:[#allocation13] sm:$0xff]
      %v4449 = vld [vmem:[#allocation13 + $0x8] sm:$0xff]
      %v4450 = vld [vmem:[#allocation13 + $0x10] sm:$0xff]
      %v4451 = vld [vmem:[#allocation13 + $0x18] sm:$0xff]
      %v4452 = vld [vmem:[#allocation13 + $0x20] sm:$0xff]
      %v4453 = vld [vmem:[#allocation13 + $0x28] sm:$0xff]
      %v4454 = vld [vmem:[#allocation13 + $0x30] sm:$0xff]
      %v4455 = vld [vmem:[#allocation13 + $0x38] sm:$0xff]
      %v4456 = vld [vmem:[#allocation13 + $0x40] sm:$0xff]
      %v4457 = vld [vmem:[#allocation13 + $0x48] sm:$0xff]
      %v4458 = vld [vmem:[#allocation13 + $0x50] sm:$0xff]
      %v4459 = vld [vmem:[#allocation13 + $0x58] sm:$0xff]
      %v4460 = vld [vmem:[#allocation13 + $0x60] sm:$0xff]
      %v4461 = vld [vmem:[#allocation13 + $0x68] sm:$0xff]
      %v4462 = vld [vmem:[#allocation13 + $0x70] sm:$0xff]
      %v4463 = vld [vmem:[#allocation13 + $0x78] sm:$0xff]
      %v4464 = vld [vmem:[#allocation13 + $0x80] sm:$0xff]
      %v4465 = vld [vmem:[#allocation13 + $0x88] sm:$0xff]
      %v4466 = vld [vmem:[#allocation13 + $0x90] sm:$0xff]
      %v4467 = vld [vmem:[#allocation13 + $0x98] sm:$0xff]
      %v4468 = vld [vmem:[#allocation13 + $0xa0] sm:$0xff]
      %v4469 = vld [vmem:[#allocation13 + $0xa8] sm:$0xff]
      %v4470 = vld [vmem:[#allocation13 + $0xb0] sm:$0xff]
      %v4471 = vld [vmem:[#allocation13 + $0xb8] sm:$0xff]
      %v4472 = vld [vmem:[#allocation13 + $0xc0] sm:$0xff]
      %v4473 = vld [vmem:[#allocation13 + $0xc8] sm:$0xff]
      %v4474 = vld [vmem:[#allocation13 + $0xd0] sm:$0xff]
      %v4475 = vld [vmem:[#allocation13 + $0xd8] sm:$0xff]
      %v4476 = vld [vmem:[#allocation13 + $0xe0] sm:$0xff]
      %v4477 = vld [vmem:[#allocation13 + $0xe8] sm:$0xff]
      %v4478 = vld [vmem:[#allocation13 + $0xf0] sm:$0xff]
      %v4479 = vld [vmem:[#allocation13 + $0xf8] sm:$0xff]
      %v4512 = vunpack.c.l.b16 %v4448
      %v4513 = vunpack.c.h.b16 %v4448
      %v4514 = vunpack.c.l.b16 %v4449
      %v4515 = vunpack.c.h.b16 %v4449
      %v4516 = vunpack.c.l.b16 %v4450
      %v4517 = vunpack.c.h.b16 %v4450
      %v4518 = vunpack.c.l.b16 %v4451
      %v4519 = vunpack.c.h.b16 %v4451
      %v4520 = vunpack.c.l.b16 %v4452
      %v4521 = vunpack.c.h.b16 %v4452
      %v4522 = vunpack.c.l.b16 %v4453
      %v4523 = vunpack.c.h.b16 %v4453
      %v4524 = vunpack.c.l.b16 %v4454
      %v4525 = vunpack.c.h.b16 %v4454
      %v4526 = vunpack.c.l.b16 %v4455
      %v4527 = vunpack.c.h.b16 %v4455
      %v4528 = vunpack.c.l.b16 %v4456
      %v4529 = vunpack.c.h.b16 %v4456
      %v4530 = vunpack.c.l.b16 %v4457
      %v4531 = vunpack.c.h.b16 %v4457
      %v4532 = vunpack.c.l.b16 %v4458
      %v4533 = vunpack.c.h.b16 %v4458
      %v4534 = vunpack.c.l.b16 %v4459
      %v4535 = vunpack.c.h.b16 %v4459
      %v4536 = vunpack.c.l.b16 %v4460
      %v4537 = vunpack.c.h.b16 %v4460
      %v4538 = vunpack.c.l.b16 %v4461
      %v4539 = vunpack.c.h.b16 %v4461
      %v4540 = vunpack.c.l.b16 %v4462
      %v4541 = vunpack.c.h.b16 %v4462
      %v4542 = vunpack.c.l.b16 %v4463
      %v4543 = vunpack.c.h.b16 %v4463
      %v4544 = vunpack.c.l.b16 %v4464
      %v4545 = vunpack.c.h.b16 %v4464
      %v4546 = vunpack.c.l.b16 %v4465
      %v4547 = vunpack.c.h.b16 %v4465
      %v4548 = vunpack.c.l.b16 %v4466
      %v4549 = vunpack.c.h.b16 %v4466
      %v4550 = vunpack.c.l.b16 %v4467
      %v4551 = vunpack.c.h.b16 %v4467
      %v4552 = vunpack.c.l.b16 %v4468
      %v4553 = vunpack.c.h.b16 %v4468
      %v4554 = vunpack.c.l.b16 %v4469
      %v4555 = vunpack.c.h.b16 %v4469
      %v4556 = vunpack.c.l.b16 %v4470
      %v4557 = vunpack.c.h.b16 %v4470
      %v4558 = vunpack.c.l.b16 %v4471
      %v4559 = vunpack.c.h.b16 %v4471
      %v4560 = vunpack.c.l.b16 %v4472
      %v4561 = vunpack.c.h.b16 %v4472
      %v4562 = vunpack.c.l.b16 %v4473
      %v4563 = vunpack.c.h.b16 %v4473
      %v4564 = vunpack.c.l.b16 %v4474
      %v4565 = vunpack.c.h.b16 %v4474
      %v4566 = vunpack.c.l.b16 %v4475
      %v4567 = vunpack.c.h.b16 %v4475
      %v4568 = vunpack.c.l.b16 %v4476
      %v4569 = vunpack.c.h.b16 %v4476
      %v4570 = vunpack.c.l.b16 %v4477
      %v4571 = vunpack.c.h.b16 %v4477
      %v4572 = vunpack.c.l.b16 %v4478
      %v4573 = vunpack.c.h.b16 %v4478
      %v4574 = vunpack.c.l.b16 %v4479
      %v4575 = vunpack.c.h.b16 %v4479
      %v4576 = vpack.c.b16 %v4516, %v4512
      %v4577 = vpack.c.b16 %v4517, %v4513
      %v4578 = vpack.c.b16 %v4518, %v4514
      %v4579 = vpack.c.b16 %v4519, %v4515
      %v4580 = vpack.c.b16 %v4524, %v4520
      %v4581 = vpack.c.b16 %v4525, %v4521
      %v4582 = vpack.c.b16 %v4526, %v4522
      %v4583 = vpack.c.b16 %v4527, %v4523
      %v4584 = vpack.c.b16 %v4532, %v4528
      %v4585 = vpack.c.b16 %v4533, %v4529
      %v4586 = vpack.c.b16 %v4534, %v4530
      %v4587 = vpack.c.b16 %v4535, %v4531
      %v4588 = vpack.c.b16 %v4540, %v4536
      %v4589 = vpack.c.b16 %v4541, %v4537
      %v4590 = vpack.c.b16 %v4542, %v4538
      %v4591 = vpack.c.b16 %v4543, %v4539
      %v4592 = vpack.c.b16 %v4548, %v4544
      %v4593 = vpack.c.b16 %v4549, %v4545
      %v4594 = vpack.c.b16 %v4550, %v4546
      %v4595 = vpack.c.b16 %v4551, %v4547
      %v4596 = vpack.c.b16 %v4556, %v4552
      %v4597 = vpack.c.b16 %v4557, %v4553
      %v4598 = vpack.c.b16 %v4558, %v4554
      %v4599 = vpack.c.b16 %v4559, %v4555
      %v4600 = vpack.c.b16 %v4564, %v4560
      %v4601 = vpack.c.b16 %v4565, %v4561
      %v4602 = vpack.c.b16 %v4566, %v4562
      %v4603 = vpack.c.b16 %v4567, %v4563
      %v4604 = vpack.c.b16 %v4572, %v4568
      %v4605 = vpack.c.b16 %v4573, %v4569
      %v4606 = vpack.c.b16 %v4574, %v4570
      %v4607 = vpack.c.b16 %v4575, %v4571
      %4640 = vmatpush.bf16.msra.mxu0 %v4604
      %4641 = vmatpush.bf16.msra.mxu0 %v4600
      %4642 = vmatpush.bf16.msra.mxu0 %v4596
      %4643 = vmatpush.bf16.msra.mxu0 %v4592
      %4644 = vmatpush.bf16.msra.mxu0 %v4588
      %4645 = vmatpush.bf16.msra.mxu0 %v4584
      %4646 = vmatpush.bf16.msra.mxu0 %v4580
      %4647 = vmatpush.bf16.msra.mxu0 %v4576
      %4648 = vmatmul.bf16.gmra.mxu0 %v4447
      %v4649 = vpop.f32.mrf.mxu0
      %v4650 = vadd.f32 0.0, %v4649
      %v4651 = vpop.f32.mrf.mxu0
      %4652 = vdwg.mxu0
      %4653 = vmatpush.bf16.msra.mxu0 %v4605
      %4654 = vmatpush.bf16.msra.mxu0 %v4601
      %4655 = vmatpush.bf16.msra.mxu0 %v4597
      %4656 = vmatpush.bf16.msra.mxu0 %v4593
      %4657 = vmatpush.bf16.msra.mxu0 %v4589
      %4658 = vmatpush.bf16.msra.mxu0 %v4585
      %4659 = vmatpush.bf16.msra.mxu0 %v4581
      %4660 = vmatpush.bf16.msra.mxu0 %v4577
      %4661 = vmatmul.bf16.gmra.mxu0 %v4447
      %v4662 = vpop.f32.mrf.mxu0
      %v4663 = vadd.f32 0.0, %v4662
      %v4664 = vpop.f32.mrf.mxu0
      %4665 = vdwg.mxu0
      %4666 = vmatpush.bf16.msra.mxu0 %v4606
      %4667 = vmatpush.bf16.msra.mxu0 %v4602
      %4668 = vmatpush.bf16.msra.mxu0 %v4598
      %4669 = vmatpush.bf16.msra.mxu0 %v4594
      %4670 = vmatpush.bf16.msra.mxu0 %v4590
      %4671 = vmatpush.bf16.msra.mxu0 %v4586
      %4672 = vmatpush.bf16.msra.mxu0 %v4582
      %4673 = vmatpush.bf16.msra.mxu0 %v4578
      %4674 = vmatmul.bf16.gmra.mxu0 %v4447
      %v4675 = vpop.f32.mrf.mxu0
      %v4676 = vadd.f32 0.0, %v4675
      %v4677 = vpop.f32.mrf.mxu0
      %4678 = vdwg.mxu0
      %4679 = vmatpush.bf16.msra.mxu0 %v4607
      %4680 = vmatpush.bf16.msra.mxu0 %v4603
      %4681 = vmatpush.bf16.msra.mxu0 %v4599
      %4682 = vmatpush.bf16.msra.mxu0 %v4595
      %4683 = vmatpush.bf16.msra.mxu0 %v4591
      %4684 = vmatpush.bf16.msra.mxu0 %v4587
      %4685 = vmatpush.bf16.msra.mxu0 %v4583
      %4686 = vmatpush.bf16.msra.mxu0 %v4579
      %4687 = vmatmul.bf16.gmra.mxu0 %v4447
      %v4688 = vpop.f32.mrf.mxu0
      %v4689 = vadd.f32 0.0, %v4688
      %v4690 = vpop.f32.mrf.mxu0
      %4691 = vdwg.mxu0
      %v4692 = vadd.f32 %v4442, %v4650
      %v4693 = vadd.f32 %v4443, %v4663
      %v4694 = vadd.f32 %v4444, %v4676
      %v4695 = vadd.f32 %v4445, %v4689
      %v4696 = vxor.u32 %v4692, 2147483648
      %v4697 = vmul.f32 %v4696, 1.442695
      %v4698 = vpow.pop %v4697
      %v4699 = vadd.f32 %v4698, 1.0
      %v4700 = vrcp.pop %v4699
      %v4701 = vmul.f32 %v4699, %v4700
      %v4702 = vsub.f32 1.0, %v4701
      %v4703 = vmul.f32 %v4700, %v4702
      %v4704 = vadd.f32 %v4700, %v4703
      %vm4705 = vweird.f32 %v4699
      %vm4706 = vweird.f32 %v4700
      %vm4707 = vmor %vm4705, %vm4706
      %v4708 = vsel %vm4707, %v4700, %v4704
      %v4709 = vand.u32 2147483647, %v4699
      %vm4710 = vcmp.eq.f32.partialorder %v4709, 8.507059e+37
      %v4711 = vand.u32 %v4699, 2147483648
      %v4712 = vor.u32 1.1754944e-38, %v4711
      %v4713 = vsel %vm4710, %v4712, %v4708
      %v4714 = vmul.f32 1.0, %v4713
      %v4715 = vxor.u32 %v4693, 2147483648
      %v4716 = vmul.f32 %v4715, 1.442695
      %v4717 = vpow.pop %v4716
      %v4718 = vadd.f32 %v4717, 1.0
      %v4719 = vrcp.pop %v4718
      %v4720 = vmul.f32 %v4718, %v4719
      %v4721 = vsub.f32 1.0, %v4720
      %v4722 = vmul.f32 %v4719, %v4721
      %v4723 = vadd.f32 %v4719, %v4722
      %vm4724 = vweird.f32 %v4718
      %vm4725 = vweird.f32 %v4719
      %vm4726 = vmor %vm4724, %vm4725
      %v4727 = vsel %vm4726, %v4719, %v4723
      %v4728 = vand.u32 2147483647, %v4718
      %vm4729 = vcmp.eq.f32.partialorder %v4728, 8.507059e+37
      %v4730 = vand.u32 %v4718, 2147483648
      %v4731 = vor.u32 1.1754944e-38, %v4730
      %v4732 = vsel %vm4729, %v4731, %v4727
      %v4733 = vmul.f32 1.0, %v4732
      %v4734 = vtanh.pop %v4694
      %v4735 = vxor.u32 %v4695, 2147483648
      %v4736 = vmul.f32 %v4735, 1.442695
      %v4737 = vpow.pop %v4736
      %v4738 = vadd.f32 %v4737, 1.0
      %v4739 = vrcp.pop %v4738
      %v4740 = vmul.f32 %v4738, %v4739
      %v4741 = vsub.f32 1.0, %v4740
      %v4742 = vmul.f32 %v4739, %v4741
      %v4743 = vadd.f32 %v4739, %v4742
      %vm4744 = vweird.f32 %v4738
      %vm4745 = vweird.f32 %v4739
      %vm4746 = vmor %vm4744, %vm4745
      %v4747 = vsel %vm4746, %v4739, %v4743
      %v4748 = vand.u32 2147483647, %v4738
      %vm4749 = vcmp.eq.f32.partialorder %v4748, 8.507059e+37
      %v4750 = vand.u32 %v4738, 2147483648
      %v4751 = vor.u32 1.1754944e-38, %v4750
      %v4752 = vsel %vm4749, %v4751, %v4747
      %v4753 = vmul.f32 1.0, %v4752
      %v4754 = vld [vmem:[#allocation5] sm:$0xff]
      %v4755 = vmul.f32 %v4733, %v4754
      %v4756 = vmul.f32 %v4714, %v4734
      %v4757 = vadd.f32 %v4755, %v4756
      %v4758 = vtanh.pop %v4757
      %v4759 = vmul.f32 %v4753, %v4758
      %v4760 = vsel %vm4441, 1, 0
      %4761 = vset.pattern.permute.xlu0 0
      %4762 = vperm.xlu0 %4761, %v4760
      %v4763 = vpop.permute.xlu0 %4762
      %vm4764 = vcmp.eq.s32.totalorder %v4763, 1
      %v4765 = vsel %vm4764, %v4759, %v4446
      %4766 = vst [vmem:[#allocation4] sm:$0xff] %v4765
      %v4767 = vld [vmem:[#allocation5] sm:$0xff]
      %v4768 = vsel %vm4764, %v4757, %v4767
      %4769 = vst [vmem:[#allocation5] sm:$0xff] %v4768
      %s4770 = sadd.s32 %s87, 7
      %s4771 = ssub.s32 0, %s87
      %s4772 = scalar_lea.vmem [#allocation9], 112
      %v4773 = vld [vmem:[%s4772] sm:$0xff]
      %v4774 = vld [vmem:[%s4772 + $0x8] sm:$0xff]
      %v4775 = vstv %s4770
      %vm4776 = vcmp.lt.s32.totalorder %v4775, %v86
      %v4777 = vunpack.c.l.bf16 %v4773
      %v4778 = vunpack.c.h.bf16 %v4773
      %v4779 = vunpack.c.l.bf16 %v4774
      %v4780 = vunpack.c.h.bf16 %v4774
      %v4781 = vld [vmem:[#allocation2] sm:$0xff]
      %v4782 = vpack.c.bf16 %v4781, %v4781
      %v4783 = vld [vmem:[%s4] sm:$0xff]
      %v4784 = vld [vmem:[%s4 + $0x8] sm:$0xff]
      %v4785 = vld [vmem:[%s4 + $0x10] sm:$0xff]
      %v4786 = vld [vmem:[%s4 + $0x18] sm:$0xff]
      %v4787 = vld [vmem:[%s4 + $0x20] sm:$0xff]
      %v4788 = vld [vmem:[%s4 + $0x28] sm:$0xff]
      %v4789 = vld [vmem:[%s4 + $0x30] sm:$0xff]
      %v4790 = vld [vmem:[%s4 + $0x38] sm:$0xff]
      %v4791 = vld [vmem:[%s4 + $0x40] sm:$0xff]
      %v4792 = vld [vmem:[%s4 + $0x48] sm:$0xff]
      %v4793 = vld [vmem:[%s4 + $0x50] sm:$0xff]
      %v4794 = vld [vmem:[%s4 + $0x58] sm:$0xff]
      %v4795 = vld [vmem:[%s4 + $0x60] sm:$0xff]
      %v4796 = vld [vmem:[%s4 + $0x68] sm:$0xff]
      %v4797 = vld [vmem:[%s4 + $0x70] sm:$0xff]
      %v4798 = vld [vmem:[%s4 + $0x78] sm:$0xff]
      %v4799 = vld [vmem:[%s4 + $0x80] sm:$0xff]
      %v4800 = vld [vmem:[%s4 + $0x88] sm:$0xff]
      %v4801 = vld [vmem:[%s4 + $0x90] sm:$0xff]
      %v4802 = vld [vmem:[%s4 + $0x98] sm:$0xff]
      %v4803 = vld [vmem:[%s4 + $0xa0] sm:$0xff]
      %v4804 = vld [vmem:[%s4 + $0xa8] sm:$0xff]
      %v4805 = vld [vmem:[%s4 + $0xb0] sm:$0xff]
      %v4806 = vld [vmem:[%s4 + $0xb8] sm:$0xff]
      %v4807 = vld [vmem:[%s4 + $0xc0] sm:$0xff]
      %v4808 = vld [vmem:[%s4 + $0xc8] sm:$0xff]
      %v4809 = vld [vmem:[%s4 + $0xd0] sm:$0xff]
      %v4810 = vld [vmem:[%s4 + $0xd8] sm:$0xff]
      %v4811 = vld [vmem:[%s4 + $0xe0] sm:$0xff]
      %v4812 = vld [vmem:[%s4 + $0xe8] sm:$0xff]
      %v4813 = vld [vmem:[%s4 + $0xf0] sm:$0xff]
      %v4814 = vld [vmem:[%s4 + $0xf8] sm:$0xff]
      %v4847 = vunpack.c.l.b16 %v4783
      %v4848 = vunpack.c.h.b16 %v4783
      %v4849 = vunpack.c.l.b16 %v4784
      %v4850 = vunpack.c.h.b16 %v4784
      %v4851 = vunpack.c.l.b16 %v4785
      %v4852 = vunpack.c.h.b16 %v4785
      %v4853 = vunpack.c.l.b16 %v4786
      %v4854 = vunpack.c.h.b16 %v4786
      %v4855 = vunpack.c.l.b16 %v4787
      %v4856 = vunpack.c.h.b16 %v4787
      %v4857 = vunpack.c.l.b16 %v4788
      %v4858 = vunpack.c.h.b16 %v4788
      %v4859 = vunpack.c.l.b16 %v4789
      %v4860 = vunpack.c.h.b16 %v4789
      %v4861 = vunpack.c.l.b16 %v4790
      %v4862 = vunpack.c.h.b16 %v4790
      %v4863 = vunpack.c.l.b16 %v4791
      %v4864 = vunpack.c.h.b16 %v4791
      %v4865 = vunpack.c.l.b16 %v4792
      %v4866 = vunpack.c.h.b16 %v4792
      %v4867 = vunpack.c.l.b16 %v4793
      %v4868 = vunpack.c.h.b16 %v4793
      %v4869 = vunpack.c.l.b16 %v4794
      %v4870 = vunpack.c.h.b16 %v4794
      %v4871 = vunpack.c.l.b16 %v4795
      %v4872 = vunpack.c.h.b16 %v4795
      %v4873 = vunpack.c.l.b16 %v4796
      %v4874 = vunpack.c.h.b16 %v4796
      %v4875 = vunpack.c.l.b16 %v4797
      %v4876 = vunpack.c.h.b16 %v4797
      %v4877 = vunpack.c.l.b16 %v4798
      %v4878 = vunpack.c.h.b16 %v4798
      %v4879 = vunpack.c.l.b16 %v4799
      %v4880 = vunpack.c.h.b16 %v4799
      %v4881 = vunpack.c.l.b16 %v4800
      %v4882 = vunpack.c.h.b16 %v4800
      %v4883 = vunpack.c.l.b16 %v4801
      %v4884 = vunpack.c.h.b16 %v4801
      %v4885 = vunpack.c.l.b16 %v4802
      %v4886 = vunpack.c.h.b16 %v4802
      %v4887 = vunpack.c.l.b16 %v4803
      %v4888 = vunpack.c.h.b16 %v4803
      %v4889 = vunpack.c.l.b16 %v4804
      %v4890 = vunpack.c.h.b16 %v4804
      %v4891 = vunpack.c.l.b16 %v4805
      %v4892 = vunpack.c.h.b16 %v4805
      %v4893 = vunpack.c.l.b16 %v4806
      %v4894 = vunpack.c.h.b16 %v4806
      %v4895 = vunpack.c.l.b16 %v4807
      %v4896 = vunpack.c.h.b16 %v4807
      %v4897 = vunpack.c.l.b16 %v4808
      %v4898 = vunpack.c.h.b16 %v4808
      %v4899 = vunpack.c.l.b16 %v4809
      %v4900 = vunpack.c.h.b16 %v4809
      %v4901 = vunpack.c.l.b16 %v4810
      %v4902 = vunpack.c.h.b16 %v4810
      %v4903 = vunpack.c.l.b16 %v4811
      %v4904 = vunpack.c.h.b16 %v4811
      %v4905 = vunpack.c.l.b16 %v4812
      %v4906 = vunpack.c.h.b16 %v4812
      %v4907 = vunpack.c.l.b16 %v4813
      %v4908 = vunpack.c.h.b16 %v4813
      %v4909 = vunpack.c.l.b16 %v4814
      %v4910 = vunpack.c.h.b16 %v4814
      %v4911 = vpack.c.b16 %v4851, %v4847
      %v4912 = vpack.c.b16 %v4852, %v4848
      %v4913 = vpack.c.b16 %v4853, %v4849
      %v4914 = vpack.c.b16 %v4854, %v4850
      %v4915 = vpack.c.b16 %v4859, %v4855
      %v4916 = vpack.c.b16 %v4860, %v4856
      %v4917 = vpack.c.b16 %v4861, %v4857
      %v4918 = vpack.c.b16 %v4862, %v4858
      %v4919 = vpack.c.b16 %v4867, %v4863
      %v4920 = vpack.c.b16 %v4868, %v4864
      %v4921 = vpack.c.b16 %v4869, %v4865
      %v4922 = vpack.c.b16 %v4870, %v4866
      %v4923 = vpack.c.b16 %v4875, %v4871
      %v4924 = vpack.c.b16 %v4876, %v4872
      %v4925 = vpack.c.b16 %v4877, %v4873
      %v4926 = vpack.c.b16 %v4878, %v4874
      %v4927 = vpack.c.b16 %v4883, %v4879
      %v4928 = vpack.c.b16 %v4884, %v4880
      %v4929 = vpack.c.b16 %v4885, %v4881
      %v4930 = vpack.c.b16 %v4886, %v4882
      %v4931 = vpack.c.b16 %v4891, %v4887
      %v4932 = vpack.c.b16 %v4892, %v4888
      %v4933 = vpack.c.b16 %v4893, %v4889
      %v4934 = vpack.c.b16 %v4894, %v4890
      %v4935 = vpack.c.b16 %v4899, %v4895
      %v4936 = vpack.c.b16 %v4900, %v4896
      %v4937 = vpack.c.b16 %v4901, %v4897
      %v4938 = vpack.c.b16 %v4902, %v4898
      %v4939 = vpack.c.b16 %v4907, %v4903
      %v4940 = vpack.c.b16 %v4908, %v4904
      %v4941 = vpack.c.b16 %v4909, %v4905
      %v4942 = vpack.c.b16 %v4910, %v4906
      %4975 = vmatpush.bf16.msra.mxu0 %v4939
      %4976 = vmatpush.bf16.msra.mxu0 %v4935
      %4977 = vmatpush.bf16.msra.mxu0 %v4931
      %4978 = vmatpush.bf16.msra.mxu0 %v4927
      %4979 = vmatpush.bf16.msra.mxu0 %v4923
      %4980 = vmatpush.bf16.msra.mxu0 %v4919
      %4981 = vmatpush.bf16.msra.mxu0 %v4915
      %4982 = vmatpush.bf16.msra.mxu0 %v4911
      %4983 = vmatmul.bf16.gmra.mxu0 %v4782
      %v4984 = vpop.f32.mrf.mxu0
      %v4985 = vadd.f32 0.0, %v4984
      %v4986 = vpop.f32.mrf.mxu0
      %4987 = vdwg.mxu0
      %4988 = vmatpush.bf16.msra.mxu0 %v4940
      %4989 = vmatpush.bf16.msra.mxu0 %v4936
      %4990 = vmatpush.bf16.msra.mxu0 %v4932
      %4991 = vmatpush.bf16.msra.mxu0 %v4928
      %4992 = vmatpush.bf16.msra.mxu0 %v4924
      %4993 = vmatpush.bf16.msra.mxu0 %v4920
      %4994 = vmatpush.bf16.msra.mxu0 %v4916
      %4995 = vmatpush.bf16.msra.mxu0 %v4912
      %4996 = vmatmul.bf16.gmra.mxu0 %v4782
      %v4997 = vpop.f32.mrf.mxu0
      %v4998 = vadd.f32 0.0, %v4997
      %v4999 = vpop.f32.mrf.mxu0
      %5000 = vdwg.mxu0
      %5001 = vmatpush.bf16.msra.mxu0 %v4941
      %5002 = vmatpush.bf16.msra.mxu0 %v4937
      %5003 = vmatpush.bf16.msra.mxu0 %v4933
      %5004 = vmatpush.bf16.msra.mxu0 %v4929
      %5005 = vmatpush.bf16.msra.mxu0 %v4925
      %5006 = vmatpush.bf16.msra.mxu0 %v4921
      %5007 = vmatpush.bf16.msra.mxu0 %v4917
      %5008 = vmatpush.bf16.msra.mxu0 %v4913
      %5009 = vmatmul.bf16.gmra.mxu0 %v4782
      %v5010 = vpop.f32.mrf.mxu0
      %v5011 = vadd.f32 0.0, %v5010
      %v5012 = vpop.f32.mrf.mxu0
      %5013 = vdwg.mxu0
      %5014 = vmatpush.bf16.msra.mxu0 %v4942
      %5015 = vmatpush.bf16.msra.mxu0 %v4938
      %5016 = vmatpush.bf16.msra.mxu0 %v4934
      %5017 = vmatpush.bf16.msra.mxu0 %v4930
      %5018 = vmatpush.bf16.msra.mxu0 %v4926
      %5019 = vmatpush.bf16.msra.mxu0 %v4922
      %5020 = vmatpush.bf16.msra.mxu0 %v4918
      %5021 = vmatpush.bf16.msra.mxu0 %v4914
      %5022 = vmatmul.bf16.gmra.mxu0 %v4782
      %v5023 = vpop.f32.mrf.mxu0
      %v5024 = vadd.f32 0.0, %v5023
      %v5025 = vpop.f32.mrf.mxu0
      %5026 = vdwg.mxu0
      %v5027 = vadd.f32 %v4777, %v4985
      %v5028 = vadd.f32 %v4778, %v4998
      %v5029 = vadd.f32 %v4779, %v5011
      %v5030 = vadd.f32 %v4780, %v5024
      %v5031 = vxor.u32 %v5027, 2147483648
      %v5032 = vmul.f32 %v5031, 1.442695
      %v5033 = vpow.pop %v5032
      %v5034 = vadd.f32 %v5033, 1.0
      %v5035 = vrcp.pop %v5034
      %v5036 = vmul.f32 %v5034, %v5035
      %v5037 = vsub.f32 1.0, %v5036
      %v5038 = vmul.f32 %v5035, %v5037
      %v5039 = vadd.f32 %v5035, %v5038
      %vm5040 = vweird.f32 %v5034
      %vm5041 = vweird.f32 %v5035
      %vm5042 = vmor %vm5040, %vm5041
      %v5043 = vsel %vm5042, %v5035, %v5039
      %v5044 = vand.u32 2147483647, %v5034
      %vm5045 = vcmp.eq.f32.partialorder %v5044, 8.507059e+37
      %v5046 = vand.u32 %v5034, 2147483648
      %v5047 = vor.u32 1.1754944e-38, %v5046
      %v5048 = vsel %vm5045, %v5047, %v5043
      %v5049 = vmul.f32 1.0, %v5048
      %v5050 = vxor.u32 %v5028, 2147483648
      %v5051 = vmul.f32 %v5050, 1.442695
      %v5052 = vpow.pop %v5051
      %v5053 = vadd.f32 %v5052, 1.0
      %v5054 = vrcp.pop %v5053
      %v5055 = vmul.f32 %v5053, %v5054
      %v5056 = vsub.f32 1.0, %v5055
      %v5057 = vmul.f32 %v5054, %v5056
      %v5058 = vadd.f32 %v5054, %v5057
      %vm5059 = vweird.f32 %v5053
      %vm5060 = vweird.f32 %v5054
      %vm5061 = vmor %vm5059, %vm5060
      %v5062 = vsel %vm5061, %v5054, %v5058
      %v5063 = vand.u32 2147483647, %v5053
      %vm5064 = vcmp.eq.f32.partialorder %v5063, 8.507059e+37
      %v5065 = vand.u32 %v5053, 2147483648
      %v5066 = vor.u32 1.1754944e-38, %v5065
      %v5067 = vsel %vm5064, %v5066, %v5062
      %v5068 = vmul.f32 1.0, %v5067
      %v5069 = vtanh.pop %v5029
      %v5070 = vxor.u32 %v5030, 2147483648
      %v5071 = vmul.f32 %v5070, 1.442695
      %v5072 = vpow.pop %v5071
      %v5073 = vadd.f32 %v5072, 1.0
      %v5074 = vrcp.pop %v5073
      %v5075 = vmul.f32 %v5073, %v5074
      %v5076 = vsub.f32 1.0, %v5075
      %v5077 = vmul.f32 %v5074, %v5076
      %v5078 = vadd.f32 %v5074, %v5077
      %vm5079 = vweird.f32 %v5073
      %vm5080 = vweird.f32 %v5074
      %vm5081 = vmor %vm5079, %vm5080
      %v5082 = vsel %vm5081, %v5074, %v5078
      %v5083 = vand.u32 2147483647, %v5073
      %vm5084 = vcmp.eq.f32.partialorder %v5083, 8.507059e+37
      %v5085 = vand.u32 %v5073, 2147483648
      %v5086 = vor.u32 1.1754944e-38, %v5085
      %v5087 = vsel %vm5084, %v5086, %v5082
      %v5088 = vmul.f32 1.0, %v5087
      %v5089 = vld [vmem:[#allocation3] sm:$0xff]
      %v5090 = vmul.f32 %v5068, %v5089
      %v5091 = vmul.f32 %v5049, %v5069
      %v5092 = vadd.f32 %v5090, %v5091
      %v5093 = vtanh.pop %v5092
      %v5094 = vmul.f32 %v5088, %v5093
      %v5095 = vsel %vm4776, 1, 0
      %5096 = vset.pattern.permute.xlu0 0
      %5097 = vperm.xlu0 %5096, %v5095
      %v5098 = vpop.permute.xlu0 %5097
      %vm5099 = vcmp.eq.s32.totalorder %v5098, 1
      %v5100 = vsel %vm5099, %v5094, %v4781
      %5101 = vst [vmem:[#allocation2] sm:$0xff] %v5100
      %v5102 = vld [vmem:[#allocation3] sm:$0xff]
      %v5103 = vsel %vm5099, %v5092, %v5102
      %5104 = vst [vmem:[#allocation3] sm:$0xff] %v5103
      %s5105 = scalar_lea.vmem [#allocation11], 112
      %v5106 = vld [vmem:[%s5105] sm:$0xff]
      %v5107 = vld [vmem:[%s5105 + $0x8] sm:$0xff]
      %v5108 = vstv %s4771
      %vm5109 = vcmp.lt.s32.totalorder %v5108, %v86
      %v5110 = vunpack.c.l.bf16 %v5106
      %v5111 = vunpack.c.h.bf16 %v5106
      %v5112 = vunpack.c.l.bf16 %v5107
      %v5113 = vunpack.c.h.bf16 %v5107
      %v5114 = vld [vmem:[#allocation4] sm:$0xff]
      %v5115 = vpack.c.bf16 %v5114, %v5114
      %v5116 = vld [vmem:[#allocation13] sm:$0xff]
      %v5117 = vld [vmem:[#allocation13 + $0x8] sm:$0xff]
      %v5118 = vld [vmem:[#allocation13 + $0x10] sm:$0xff]
      %v5119 = vld [vmem:[#allocation13 + $0x18] sm:$0xff]
      %v5120 = vld [vmem:[#allocation13 + $0x20] sm:$0xff]
      %v5121 = vld [vmem:[#allocation13 + $0x28] sm:$0xff]
      %v5122 = vld [vmem:[#allocation13 + $0x30] sm:$0xff]
      %v5123 = vld [vmem:[#allocation13 + $0x38] sm:$0xff]
      %v5124 = vld [vmem:[#allocation13 + $0x40] sm:$0xff]
      %v5125 = vld [vmem:[#allocation13 + $0x48] sm:$0xff]
      %v5126 = vld [vmem:[#allocation13 + $0x50] sm:$0xff]
      %v5127 = vld [vmem:[#allocation13 + $0x58] sm:$0xff]
      %v5128 = vld [vmem:[#allocation13 + $0x60] sm:$0xff]
      %v5129 = vld [vmem:[#allocation13 + $0x68] sm:$0xff]
      %v5130 = vld [vmem:[#allocation13 + $0x70] sm:$0xff]
      %v5131 = vld [vmem:[#allocation13 + $0x78] sm:$0xff]
      %v5132 = vld [vmem:[#allocation13 + $0x80] sm:$0xff]
      %v5133 = vld [vmem:[#allocation13 + $0x88] sm:$0xff]
      %v5134 = vld [vmem:[#allocation13 + $0x90] sm:$0xff]
      %v5135 = vld [vmem:[#allocation13 + $0x98] sm:$0xff]
      %v5136 = vld [vmem:[#allocation13 + $0xa0] sm:$0xff]
      %v5137 = vld [vmem:[#allocation13 + $0xa8] sm:$0xff]
      %v5138 = vld [vmem:[#allocation13 + $0xb0] sm:$0xff]
      %v5139 = vld [vmem:[#allocation13 + $0xb8] sm:$0xff]
      %v5140 = vld [vmem:[#allocation13 + $0xc0] sm:$0xff]
      %v5141 = vld [vmem:[#allocation13 + $0xc8] sm:$0xff]
      %v5142 = vld [vmem:[#allocation13 + $0xd0] sm:$0xff]
      %v5143 = vld [vmem:[#allocation13 + $0xd8] sm:$0xff]
      %v5144 = vld [vmem:[#allocation13 + $0xe0] sm:$0xff]
      %v5145 = vld [vmem:[#allocation13 + $0xe8] sm:$0xff]
      %v5146 = vld [vmem:[#allocation13 + $0xf0] sm:$0xff]
      %v5147 = vld [vmem:[#allocation13 + $0xf8] sm:$0xff]
      %v5180 = vunpack.c.l.b16 %v5116
      %v5181 = vunpack.c.h.b16 %v5116
      %v5182 = vunpack.c.l.b16 %v5117
      %v5183 = vunpack.c.h.b16 %v5117
      %v5184 = vunpack.c.l.b16 %v5118
      %v5185 = vunpack.c.h.b16 %v5118
      %v5186 = vunpack.c.l.b16 %v5119
      %v5187 = vunpack.c.h.b16 %v5119
      %v5188 = vunpack.c.l.b16 %v5120
      %v5189 = vunpack.c.h.b16 %v5120
      %v5190 = vunpack.c.l.b16 %v5121
      %v5191 = vunpack.c.h.b16 %v5121
      %v5192 = vunpack.c.l.b16 %v5122
      %v5193 = vunpack.c.h.b16 %v5122
      %v5194 = vunpack.c.l.b16 %v5123
      %v5195 = vunpack.c.h.b16 %v5123
      %v5196 = vunpack.c.l.b16 %v5124
      %v5197 = vunpack.c.h.b16 %v5124
      %v5198 = vunpack.c.l.b16 %v5125
      %v5199 = vunpack.c.h.b16 %v5125
      %v5200 = vunpack.c.l.b16 %v5126
      %v5201 = vunpack.c.h.b16 %v5126
      %v5202 = vunpack.c.l.b16 %v5127
      %v5203 = vunpack.c.h.b16 %v5127
      %v5204 = vunpack.c.l.b16 %v5128
      %v5205 = vunpack.c.h.b16 %v5128
      %v5206 = vunpack.c.l.b16 %v5129
      %v5207 = vunpack.c.h.b16 %v5129
      %v5208 = vunpack.c.l.b16 %v5130
      %v5209 = vunpack.c.h.b16 %v5130
      %v5210 = vunpack.c.l.b16 %v5131
      %v5211 = vunpack.c.h.b16 %v5131
      %v5212 = vunpack.c.l.b16 %v5132
      %v5213 = vunpack.c.h.b16 %v5132
      %v5214 = vunpack.c.l.b16 %v5133
      %v5215 = vunpack.c.h.b16 %v5133
      %v5216 = vunpack.c.l.b16 %v5134
      %v5217 = vunpack.c.h.b16 %v5134
      %v5218 = vunpack.c.l.b16 %v5135
      %v5219 = vunpack.c.h.b16 %v5135
      %v5220 = vunpack.c.l.b16 %v5136
      %v5221 = vunpack.c.h.b16 %v5136
      %v5222 = vunpack.c.l.b16 %v5137
      %v5223 = vunpack.c.h.b16 %v5137
      %v5224 = vunpack.c.l.b16 %v5138
      %v5225 = vunpack.c.h.b16 %v5138
      %v5226 = vunpack.c.l.b16 %v5139
      %v5227 = vunpack.c.h.b16 %v5139
      %v5228 = vunpack.c.l.b16 %v5140
      %v5229 = vunpack.c.h.b16 %v5140
      %v5230 = vunpack.c.l.b16 %v5141
      %v5231 = vunpack.c.h.b16 %v5141
      %v5232 = vunpack.c.l.b16 %v5142
      %v5233 = vunpack.c.h.b16 %v5142
      %v5234 = vunpack.c.l.b16 %v5143
      %v5235 = vunpack.c.h.b16 %v5143
      %v5236 = vunpack.c.l.b16 %v5144
      %v5237 = vunpack.c.h.b16 %v5144
      %v5238 = vunpack.c.l.b16 %v5145
      %v5239 = vunpack.c.h.b16 %v5145
      %v5240 = vunpack.c.l.b16 %v5146
      %v5241 = vunpack.c.h.b16 %v5146
      %v5242 = vunpack.c.l.b16 %v5147
      %v5243 = vunpack.c.h.b16 %v5147
      %v5244 = vpack.c.b16 %v5184, %v5180
      %v5245 = vpack.c.b16 %v5185, %v5181
      %v5246 = vpack.c.b16 %v5186, %v5182
      %v5247 = vpack.c.b16 %v5187, %v5183
      %v5248 = vpack.c.b16 %v5192, %v5188
      %v5249 = vpack.c.b16 %v5193, %v5189
      %v5250 = vpack.c.b16 %v5194, %v5190
      %v5251 = vpack.c.b16 %v5195, %v5191
      %v5252 = vpack.c.b16 %v5200, %v5196
      %v5253 = vpack.c.b16 %v5201, %v5197
      %v5254 = vpack.c.b16 %v5202, %v5198
      %v5255 = vpack.c.b16 %v5203, %v5199
      %v5256 = vpack.c.b16 %v5208, %v5204
      %v5257 = vpack.c.b16 %v5209, %v5205
      %v5258 = vpack.c.b16 %v5210, %v5206
      %v5259 = vpack.c.b16 %v5211, %v5207
      %v5260 = vpack.c.b16 %v5216, %v5212
      %v5261 = vpack.c.b16 %v5217, %v5213
      %v5262 = vpack.c.b16 %v5218, %v5214
      %v5263 = vpack.c.b16 %v5219, %v5215
      %v5264 = vpack.c.b16 %v5224, %v5220
      %v5265 = vpack.c.b16 %v5225, %v5221
      %v5266 = vpack.c.b16 %v5226, %v5222
      %v5267 = vpack.c.b16 %v5227, %v5223
      %v5268 = vpack.c.b16 %v5232, %v5228
      %v5269 = vpack.c.b16 %v5233, %v5229
      %v5270 = vpack.c.b16 %v5234, %v5230
      %v5271 = vpack.c.b16 %v5235, %v5231
      %v5272 = vpack.c.b16 %v5240, %v5236
      %v5273 = vpack.c.b16 %v5241, %v5237
      %v5274 = vpack.c.b16 %v5242, %v5238
      %v5275 = vpack.c.b16 %v5243, %v5239
      %5308 = vmatpush.bf16.msra.mxu0 %v5272
      %5309 = vmatpush.bf16.msra.mxu0 %v5268
      %5310 = vmatpush.bf16.msra.mxu0 %v5264
      %5311 = vmatpush.bf16.msra.mxu0 %v5260
      %5312 = vmatpush.bf16.msra.mxu0 %v5256
      %5313 = vmatpush.bf16.msra.mxu0 %v5252
      %5314 = vmatpush.bf16.msra.mxu0 %v5248
      %5315 = vmatpush.bf16.msra.mxu0 %v5244
      %5316 = vmatmul.bf16.gmra.mxu0 %v5115
      %v5317 = vpop.f32.mrf.mxu0
      %v5318 = vadd.f32 0.0, %v5317
      %v5319 = vpop.f32.mrf.mxu0
      %5320 = vdwg.mxu0
      %5321 = vmatpush.bf16.msra.mxu0 %v5273
      %5322 = vmatpush.bf16.msra.mxu0 %v5269
      %5323 = vmatpush.bf16.msra.mxu0 %v5265
      %5324 = vmatpush.bf16.msra.mxu0 %v5261
      %5325 = vmatpush.bf16.msra.mxu0 %v5257
      %5326 = vmatpush.bf16.msra.mxu0 %v5253
      %5327 = vmatpush.bf16.msra.mxu0 %v5249
      %5328 = vmatpush.bf16.msra.mxu0 %v5245
      %5329 = vmatmul.bf16.gmra.mxu0 %v5115
      %v5330 = vpop.f32.mrf.mxu0
      %v5331 = vadd.f32 0.0, %v5330
      %v5332 = vpop.f32.mrf.mxu0
      %5333 = vdwg.mxu0
      %5334 = vmatpush.bf16.msra.mxu0 %v5274
      %5335 = vmatpush.bf16.msra.mxu0 %v5270
      %5336 = vmatpush.bf16.msra.mxu0 %v5266
      %5337 = vmatpush.bf16.msra.mxu0 %v5262
      %5338 = vmatpush.bf16.msra.mxu0 %v5258
      %5339 = vmatpush.bf16.msra.mxu0 %v5254
      %5340 = vmatpush.bf16.msra.mxu0 %v5250
      %5341 = vmatpush.bf16.msra.mxu0 %v5246
      %5342 = vmatmul.bf16.gmra.mxu0 %v5115
      %v5343 = vpop.f32.mrf.mxu0
      %v5344 = vadd.f32 0.0, %v5343
      %v5345 = vpop.f32.mrf.mxu0
      %5346 = vdwg.mxu0
      %5347 = vmatpush.bf16.msra.mxu0 %v5275
      %5348 = vmatpush.bf16.msra.mxu0 %v5271
      %5349 = vmatpush.bf16.msra.mxu0 %v5267
      %5350 = vmatpush.bf16.msra.mxu0 %v5263
      %5351 = vmatpush.bf16.msra.mxu0 %v5259
      %5352 = vmatpush.bf16.msra.mxu0 %v5255
      %5353 = vmatpush.bf16.msra.mxu0 %v5251
      %5354 = vmatpush.bf16.msra.mxu0 %v5247
      %5355 = vmatmul.bf16.gmra.mxu0 %v5115
      %v5356 = vpop.f32.mrf.mxu0
      %v5357 = vadd.f32 0.0, %v5356
      %v5358 = vpop.f32.mrf.mxu0
      %5359 = vdwg.mxu0
      %v5360 = vadd.f32 %v5110, %v5318
      %v5361 = vadd.f32 %v5111, %v5331
      %v5362 = vadd.f32 %v5112, %v5344
      %v5363 = vadd.f32 %v5113, %v5357
      %v5364 = vxor.u32 %v5360, 2147483648
      %v5365 = vmul.f32 %v5364, 1.442695
      %v5366 = vpow.pop %v5365
      %v5367 = vadd.f32 %v5366, 1.0
      %v5368 = vrcp.pop %v5367
      %v5369 = vmul.f32 %v5367, %v5368
      %v5370 = vsub.f32 1.0, %v5369
      %v5371 = vmul.f32 %v5368, %v5370
      %v5372 = vadd.f32 %v5368, %v5371
      %vm5373 = vweird.f32 %v5367
      %vm5374 = vweird.f32 %v5368
      %vm5375 = vmor %vm5373, %vm5374
      %v5376 = vsel %vm5375, %v5368, %v5372
      %v5377 = vand.u32 2147483647, %v5367
      %vm5378 = vcmp.eq.f32.partialorder %v5377, 8.507059e+37
      %v5379 = vand.u32 %v5367, 2147483648
      %v5380 = vor.u32 1.1754944e-38, %v5379
      %v5381 = vsel %vm5378, %v5380, %v5376
      %v5382 = vmul.f32 1.0, %v5381
      %v5383 = vxor.u32 %v5361, 2147483648
      %v5384 = vmul.f32 %v5383, 1.442695
      %v5385 = vpow.pop %v5384
      %v5386 = vadd.f32 %v5385, 1.0
      %v5387 = vrcp.pop %v5386
      %v5388 = vmul.f32 %v5386, %v5387
      %v5389 = vsub.f32 1.0, %v5388
      %v5390 = vmul.f32 %v5387, %v5389
      %v5391 = vadd.f32 %v5387, %v5390
      %vm5392 = vweird.f32 %v5386
      %vm5393 = vweird.f32 %v5387
      %vm5394 = vmor %vm5392, %vm5393
      %v5395 = vsel %vm5394, %v5387, %v5391
      %v5396 = vand.u32 2147483647, %v5386
      %vm5397 = vcmp.eq.f32.partialorder %v5396, 8.507059e+37
      %v5398 = vand.u32 %v5386, 2147483648
      %v5399 = vor.u32 1.1754944e-38, %v5398
      %v5400 = vsel %vm5397, %v5399, %v5395
      %v5401 = vmul.f32 1.0, %v5400
      %v5402 = vtanh.pop %v5362
      %v5403 = vxor.u32 %v5363, 2147483648
      %v5404 = vmul.f32 %v5403, 1.442695
      %v5405 = vpow.pop %v5404
      %v5406 = vadd.f32 %v5405, 1.0
      %v5407 = vrcp.pop %v5406
      %v5408 = vmul.f32 %v5406, %v5407
      %v5409 = vsub.f32 1.0, %v5408
      %v5410 = vmul.f32 %v5407, %v5409
      %v5411 = vadd.f32 %v5407, %v5410
      %vm5412 = vweird.f32 %v5406
      %vm5413 = vweird.f32 %v5407
      %vm5414 = vmor %vm5412, %vm5413
      %v5415 = vsel %vm5414, %v5407, %v5411
      %v5416 = vand.u32 2147483647, %v5406
      %vm5417 = vcmp.eq.f32.partialorder %v5416, 8.507059e+37
      %v5418 = vand.u32 %v5406, 2147483648
      %v5419 = vor.u32 1.1754944e-38, %v5418
      %v5420 = vsel %vm5417, %v5419, %v5415
      %v5421 = vmul.f32 1.0, %v5420
      %v5422 = vld [vmem:[#allocation5] sm:$0xff]
      %v5423 = vmul.f32 %v5401, %v5422
      %v5424 = vmul.f32 %v5382, %v5402
      %v5425 = vadd.f32 %v5423, %v5424
      %v5426 = vtanh.pop %v5425
      %v5427 = vmul.f32 %v5421, %v5426
      %v5428 = vsel %vm5109, 1, 0
      %5429 = vset.pattern.permute.xlu0 0
      %5430 = vperm.xlu0 %5429, %v5428
      %v5431 = vpop.permute.xlu0 %5430
      %vm5432 = vcmp.eq.s32.totalorder %v5431, 1
      %v5433 = vsel %vm5432, %v5427, %v5114
      %5434 = vst [vmem:[#allocation4] sm:$0xff] %v5433
      %v5435 = vld [vmem:[#allocation5] sm:$0xff]
      %v5436 = vsel %vm5432, %v5425, %v5435
      %5437 = vst [vmem:[#allocation5] sm:$0xff] %v5436
    $region49: #{tpu_custom_call.1} parent=1 // pred_fallthru
      _
    // Predicated region
    $region50: #{tpu_custom_call.1} parent=1 // pred_check
      %p5438 = pneg %p77
    $region51: #{tpu_custom_call.1} parent=1 // pred_check_branch
      %5440 = sbr.rel (%p5438) target = $region53
    $region52: #{tpu_custom_call.1} parent=1 // pred_region
      %v5441 = vld [vmem:[#allocation2] sm:$0xff]
      %v5442 = vld [vmem:[%s6] sm:$0xff]
      %v5443 = vld [vmem:[%s6 + $0x8] sm:$0xff]
      %v5444 = vld [vmem:[%s6 + $0x10] sm:$0xff]
      %v5445 = vld [vmem:[%s6 + $0x18] sm:$0xff]
      %v5446 = vld [vmem:[%s6 + $0x20] sm:$0xff]
      %v5447 = vld [vmem:[%s6 + $0x28] sm:$0xff]
      %v5448 = vld [vmem:[%s6 + $0x30] sm:$0xff]
      %v5449 = vld [vmem:[%s6 + $0x38] sm:$0xff]
      %v5450 = vld [vmem:[%s6 + $0x40] sm:$0xff]
      %v5451 = vld [vmem:[%s6 + $0x48] sm:$0xff]
      %v5452 = vld [vmem:[%s6 + $0x50] sm:$0xff]
      %v5453 = vld [vmem:[%s6 + $0x58] sm:$0xff]
      %v5454 = vld [vmem:[%s6 + $0x60] sm:$0xff]
      %v5455 = vld [vmem:[%s6 + $0x68] sm:$0xff]
      %v5456 = vld [vmem:[%s6 + $0x70] sm:$0xff]
      %v5457 = vld [vmem:[%s6 + $0x78] sm:$0xff]
      %v5458 = vld [vmem:[#allocation4] sm:$0xff]
      %v5459 = vld [vmem:[%s6 + $0x80] sm:$0xff]
      %v5460 = vld [vmem:[%s6 + $0x88] sm:$0xff]
      %v5461 = vld [vmem:[%s6 + $0x90] sm:$0xff]
      %v5462 = vld [vmem:[%s6 + $0x98] sm:$0xff]
      %v5463 = vld [vmem:[%s6 + $0xa0] sm:$0xff]
      %v5464 = vld [vmem:[%s6 + $0xa8] sm:$0xff]
      %v5465 = vld [vmem:[%s6 + $0xb0] sm:$0xff]
      %v5466 = vld [vmem:[%s6 + $0xb8] sm:$0xff]
      %v5467 = vld [vmem:[%s6 + $0xc0] sm:$0xff]
      %v5468 = vld [vmem:[%s6 + $0xc8] sm:$0xff]
      %v5469 = vld [vmem:[%s6 + $0xd0] sm:$0xff]
      %v5470 = vld [vmem:[%s6 + $0xd8] sm:$0xff]
      %v5471 = vld [vmem:[%s6 + $0xe0] sm:$0xff]
      %v5472 = vld [vmem:[%s6 + $0xe8] sm:$0xff]
      %v5473 = vld [vmem:[%s6 + $0xf0] sm:$0xff]
      %v5474 = vld [vmem:[%s6 + $0xf8] sm:$0xff]
      %5475 = vmatpush.msra.mxu0 %v5474
      %5476 = vmatpush.msra.mxu0 %v5473
      %5477 = vmatpush.msra.mxu0 %v5472
      %5478 = vmatpush.msra.mxu0 %v5471
      %5479 = vmatpush.msra.mxu0 %v5470
      %5480 = vmatpush.msra.mxu0 %v5469
      %5481 = vmatpush.msra.mxu0 %v5468
      %5482 = vmatpush.msra.mxu0 %v5467
      %5483 = vmatpush.msra.mxu0 %v5466
      %5484 = vmatpush.msra.mxu0 %v5465
      %5485 = vmatpush.msra.mxu0 %v5464
      %5486 = vmatpush.msra.mxu0 %v5463
      %5487 = vmatpush.msra.mxu0 %v5462
      %5488 = vmatpush.msra.mxu0 %v5461
      %5489 = vmatpush.msra.mxu0 %v5460
      %5490 = vmatpush.msra.mxu0 %v5459
      %5491 = vmatmul.f32.gmra.mxu0 %v5458
      %v5492 = vpop.f32.mrf.mxu0
      %v5493 = vadd.f32 0.0, %v5492
      %5494 = vdwg.mxu0
      %5495 = vmatpush.msra.mxu0 %v5457
      %5496 = vmatpush.msra.mxu0 %v5456
      %5497 = vmatpush.msra.mxu0 %v5455
      %5498 = vmatpush.msra.mxu0 %v5454
      %5499 = vmatpush.msra.mxu0 %v5453
      %5500 = vmatpush.msra.mxu0 %v5452
      %5501 = vmatpush.msra.mxu0 %v5451
      %5502 = vmatpush.msra.mxu0 %v5450
      %5503 = vmatpush.msra.mxu0 %v5449
      %5504 = vmatpush.msra.mxu0 %v5448
      %5505 = vmatpush.msra.mxu0 %v5447
      %5506 = vmatpush.msra.mxu0 %v5446
      %5507 = vmatpush.msra.mxu0 %v5445
      %5508 = vmatpush.msra.mxu0 %v5444
      %5509 = vmatpush.msra.mxu0 %v5443
      %5510 = vmatpush.msra.mxu0 %v5442
      %5511 = vmatmul.f32.gmra.mxu0 %v5441
      %v5512 = vpop.f32.mrf.mxu0
      %v5513 = vadd.f32 %v5493, %v5512
      %5514 = vdwg.mxu0
      %v5515 = vld [vmem:[#allocation8] sm:$0x1]
      %v5517 = vperm.slane %v5515, 0
      %v5519 = vadd.f32 %v5513, %v5517
      %vm5520 = vcmask 7168
      %5521 = vst.msk [vmem:[%s8] sm:$0xff] %vm5520, %v5519
    $region53: #{tpu_custom_call.1} parent=1 // pred_fallthru
      _
    // Predicated region
    $region54: #{tpu_custom_call.1} parent=1 // pred_check
      _
    $region55: #{tpu_custom_call.1} parent=1 // pred_check_branch
      %5523 = sbr.rel (0) target = $region57
    $region56: #{tpu_custom_call.1} parent=1 // pred_region
      _
    $region57: #{tpu_custom_call.1} parent=1 // pred_fallthru
      _
    // Predicated region
    $region58: #{tpu_custom_call.1} parent=1 // pred_check
      _
    $region59: #{tpu_custom_call.1} parent=1 // pred_check_branch
      %5525 = sbr.rel (0) target = $region61
    $region60: #{tpu_custom_call.1} parent=1 // pred_region
      _
    $region61: #{tpu_custom_call.1} parent=1 // pred_fallthru
      _
    %5526 = vsyncpa [#allocation10], 1
    %5527 = vsyncpa [#allocation12], 1

</llo_original>
